<compile_context>
chip_gen: v7x
topology: tpu7x:2x2x1
jax: 0.10.0
libtpu: 0.0.40
codegen_flags: <defaults>
</compile_context>

<pallas_src>
import functools

import jax
import jax.numpy as jnp
from jax.experimental import pallas as pl
from jax.experimental.pallas import tpu as pltpu


def _resblock_v2_kernel(x_ref, s1_ref, t1_ref, w1_ref, b1_ref,
                        s2_ref, t2_ref, w2_ref, b2_ref,
                        o_ref, *, N, C_in, C_out, H, W):
    """Whole batch in one invocation.

    x_ref   : VMEM (N, C_in, H, W)
    s*/t*   : SMEM (C,)   folded BatchNorm scale / shift
    w*_ref  : SMEM (C_out*C_in*9,) flattened OIHW conv weights
    b*_ref  : SMEM (C_out,) conv biases
    o_ref   : VMEM (N, C_out, H, W)
    """

    def reflect_pad_hw(a):
        # a: (N, H, W) f32 value -> (N, H+2, W+2), 1-px reflect pad, registers only.
        rows = jnp.concatenate([a[:, 1:2, :], a, a[:, H - 2:H - 1, :]], axis=1)
        return jnp.concatenate([rows[:, :, 1:2], rows, rows[:, :, W - 2:W - 1]],
                               axis=2)

    def conv3x3(apad, n_in, n_out, w_ref, b_ref):
        # apad: list of n_in reflect-padded activations, each (N, H+2, W+2).
        # Each shifted tap is sliced once and reused for every output channel.
        acc = [jnp.full((N, H, W), b_ref[o], jnp.float32) for o in range(n_out)]
        for i in range(n_in):
            ap = apad[i]
            for di in range(3):
                for dj in range(3):
                    tap = ap[:, di:di + H, dj:dj + W]          # (N, H, W)
                    for o in range(n_out):
                        widx = ((o * n_in + i) * 3 + di) * 3 + dj
                        acc[o] = acc[o] + w_ref[widx] * tap
        return acc

    # ---- BN1 + ReLU + reflect pad (per input channel, all in registers) ----
    a1 = [
        reflect_pad_hw(
            jnp.maximum(x_ref[:, i, :, :].astype(jnp.float32) * s1_ref[i]
                        + t1_ref[i], 0.0))
        for i in range(C_in)
    ]

    # ---- conv1 (3x3, reflect padding, bias) ----
    y1 = conv3x3(a1, C_in, C_out, w1_ref, b1_ref)

    # ---- BN2 + ReLU + reflect pad ----
    a2 = [
        reflect_pad_hw(jnp.maximum(y1[o] * s2_ref[o] + t2_ref[o], 0.0))
        for o in range(C_out)
    ]

    # ---- conv2 (3x3, reflect padding, bias) + identity shortcut ----
    y2 = conv3x3(a2, C_out, C_out, w2_ref, b2_ref)

    out = jnp.stack(y2, axis=1) + x_ref[...].astype(jnp.float32)
    o_ref[...] = out.astype(o_ref.dtype)          # one full-block store


def resblock_v2_forward(x, params):
    """x: (N, C, H, W). params: conv weights/biases and folded BN scale/shift."""
    N, C_in, H, W = x.shape
    C_out = params["b1"].shape[0]
    assert C_in == C_out, "identity-shortcut path only (see TODO)"
    assert H >= 2 and W >= 2, "reflect padding (pad=1) requires H, W >= 2"

    s1 = params["bn1_scale"].astype(jnp.float32)
    t1 = params["bn1_shift"].astype(jnp.float32)
    s2 = params["bn2_scale"].astype(jnp.float32)
    t2 = params["bn2_shift"].astype(jnp.float32)
    w1f = params["w1"].reshape(-1).astype(jnp.float32)   # flat 1-D -> SMEM friendly
    w2f = params["w2"].reshape(-1).astype(jnp.float32)
    b1 = params["b1"].astype(jnp.float32)
    b2 = params["b2"].astype(jnp.float32)

    kernel = functools.partial(_resblock_v2_kernel,
                               N=N, C_in=C_in, C_out=C_out, H=H, W=W)
    vmem = pl.BlockSpec(memory_space=pltpu.MemorySpace.VMEM)
    smem = pl.BlockSpec(memory_space=pltpu.MemorySpace.SMEM)

    # Single invocation (no grid): total footprint here is a few hundred KiB,
    # far below any VMEM limit.  For large N one would reintroduce an N grid
    # axis marked "parallel" (only pays on v7x's 2 TensorCores).
    return pl.pallas_call(
        kernel,
        out_shape=jax.ShapeDtypeStruct((N, C_out, H, W), x.dtype),
        in_specs=[
            vmem,                       # x
            smem, smem, smem, smem,     # bn1 scale/shift, w1 flat, b1
            smem, smem, smem, smem,     # bn2 scale/shift, w2 flat, b2
        ],
        out_specs=vmem,
    )(x, s1, t1, w1f, b1, s2, t2, w2f, b2)


# ----------------------------- pure-JAX reference -----------------------------
def _resblock_v2_ref(x, params):
    def bn(v, scale, shift):
        return v * scale[None, :, None, None] + shift[None, :, None, None]

    def conv3x3_reflect(v, w, b):
        vp = jnp.pad(v, ((0, 0), (0, 0), (1, 1), (1, 1)), mode="reflect")
        y = jax.lax.conv_general_dilated(
            vp, w, window_strides=(1, 1), padding="VALID",
            dimension_numbers=("NCHW", "OIHW", "NCHW"))
        return y + b[None, :, None, None]

    a1 = jax.nn.relu(bn(x, params["bn1_scale"], params["bn1_shift"]))
    y1 = conv3x3_reflect(a1, params["w1"], params["b1"])
    a2 = jax.nn.relu(bn(y1, params["bn2_scale"], params["bn2_shift"]))
    y2 = conv3x3_reflect(a2, params["w2"], params["b2"])
    return x + y2


if __name__ == "__main__":
    key = jax.random.PRNGKey(0)
    ks = jax.random.split(key, 12)
    N, C, H, W = 2, 4, 16, 16
    eps = 1e-5

    x = jax.random.normal(ks[0], (N, C, H, W), dtype=jnp.float32)

    # conv params (bias=True, as in ResBlockV2's nn.Conv2d defaults)
    w1 = jax.random.normal(ks[1], (C, C, 3, 3), jnp.float32) / jnp.sqrt(C * 9.0)
    b1 = 0.1 * jax.random.normal(ks[2], (C,), jnp.float32)
    w2 = jax.random.normal(ks[3], (C, C, 3, 3), jnp.float32) / jnp.sqrt(C * 9.0)
    b2 = 0.1 * jax.random.normal(ks[4], (C,), jnp.float32)

    # BatchNorm (inference mode): fold gamma/beta/running stats into scale/shift
    def make_bn(kg, kb, km, kv):
        gamma = 1.0 + 0.1 * jax.random.normal(kg, (C,), jnp.float32)
        beta = 0.1 * jax.random.normal(kb, (C,), jnp.float32)
        mean = 0.1 * jax.random.normal(km, (C,), jnp.float32)
        var = jax.random.uniform(kv, (C,), jnp.float32, minval=0.5, maxval=1.5)
        scale = gamma / jnp.sqrt(var + eps)
        shift = beta - mean * scale
        return scale, shift

    s1, t1 = make_bn(ks[5], ks[6], ks[7], ks[8])
    s2, t2 = make_bn(ks[9], ks[10], ks[11], ks[0])

    params = dict(w1=w1, b1=b1, w2=w2, b2=b2,
                  bn1_scale=s1, bn1_shift=t1, bn2_scale=s2, bn2_shift=t2)

    out = resblock_v2_forward(x, params)
    out = jax.block_until_ready(out)
    assert out.shape == (N, C, H, W) and out.dtype == jnp.float32

    ref = jax.block_until_ready(_resblock_v2_ref(x, params))
    assert jnp.allclose(out, ref, rtol=1e-4, atol=1e-4), \
        f"max abs err {float(jnp.max(jnp.abs(out - ref)))}"

    print("KERNEL_OK")
</pallas_src>

<mosaic_0001>
module attributes {stable_mosaic.version = 11 : i64} {
  func.func @_resblock_v2_kernel(%arg0: memref<2x4x16x16xf32, #tpu.memory_space<vmem>>, %arg1: memref<4xf32, #tpu.memory_space<smem>>, %arg2: memref<4xf32, #tpu.memory_space<smem>>, %arg3: memref<144xf32, #tpu.memory_space<smem>>, %arg4: memref<4xf32, #tpu.memory_space<smem>>, %arg5: memref<4xf32, #tpu.memory_space<smem>>, %arg6: memref<4xf32, #tpu.memory_space<smem>>, %arg7: memref<144xf32, #tpu.memory_space<smem>>, %arg8: memref<4xf32, #tpu.memory_space<smem>>, %arg9: memref<2x4x16x16xf32, #tpu.memory_space<vmem>>) attributes {dimension_semantics = [], scalar_prefetch = 0 : i64, scratch_operands = 0 : i64, tpu.core_type = #tpu.core_type<tc>} {
    %c0 = arith.constant 0 : index
    %c0_0 = arith.constant 0 : index
    %c0_1 = arith.constant 0 : index
    %c0_2 = arith.constant 0 : index
    %0 = vector.load %arg0[%c0, %c0_0, %c0_1, %c0_2] : memref<2x4x16x16xf32, #tpu.memory_space<vmem>>, vector<2x1x16x16xf32>
    %1 = vector.shape_cast %0 : vector<2x1x16x16xf32> to vector<2x16x16xf32>
    %c0_3 = arith.constant 0 : index
    %2 = memref.load %arg1[%c0_3] : memref<4xf32, #tpu.memory_space<smem>>
    %3 = vector.broadcast %2 : f32 to vector<2x16x16xf32>
    %4 = arith.mulf %1, %3 : vector<2x16x16xf32>
    %c0_4 = arith.constant 0 : index
    %5 = memref.load %arg2[%c0_4] : memref<4xf32, #tpu.memory_space<smem>>
    %6 = vector.broadcast %5 : f32 to vector<2x16x16xf32>
    %7 = arith.addf %4, %6 : vector<2x16x16xf32>
    %cst = arith.constant 0.000000e+00 : f32
    %8 = vector.broadcast %cst : f32 to vector<2x16x16xf32>
    %9 = arith.maximumf %7, %8 : vector<2x16x16xf32>
    %10 = vector.extract_strided_slice %9 {offsets = [0, 1, 0], sizes = [2, 1, 16], strides = [1, 1, 1]} : vector<2x16x16xf32> to vector<2x1x16xf32>
    %11 = vector.extract_strided_slice %9 {offsets = [0, 14, 0], sizes = [2, 1, 16], strides = [1, 1, 1]} : vector<2x16x16xf32> to vector<2x1x16xf32>
    %12 = tpu.concatenate %10, %9, %11 in 1 : vector<2x1x16xf32>, vector<2x16x16xf32>, vector<2x1x16xf32> -> vector<2x18x16xf32>
    %13 = vector.extract_strided_slice %12 {offsets = [0, 0, 1], sizes = [2, 18, 1], strides = [1, 1, 1]} : vector<2x18x16xf32> to vector<2x18x1xf32>
    %14 = vector.extract_strided_slice %12 {offsets = [0, 0, 14], sizes = [2, 18, 1], strides = [1, 1, 1]} : vector<2x18x16xf32> to vector<2x18x1xf32>
    %15 = tpu.concatenate %13, %12, %14 in 2 : vector<2x18x1xf32>, vector<2x18x16xf32>, vector<2x18x1xf32> -> vector<2x18x18xf32>
    %c0_5 = arith.constant 0 : index
    %c1 = arith.constant 1 : index
    %c0_6 = arith.constant 0 : index
    %c0_7 = arith.constant 0 : index
    %16 = vector.load %arg0[%c0_5, %c1, %c0_6, %c0_7] : memref<2x4x16x16xf32, #tpu.memory_space<vmem>>, vector<2x1x16x16xf32>
    %17 = vector.shape_cast %16 : vector<2x1x16x16xf32> to vector<2x16x16xf32>
    %c1_8 = arith.constant 1 : index
    %18 = memref.load %arg1[%c1_8] : memref<4xf32, #tpu.memory_space<smem>>
    %19 = vector.broadcast %18 : f32 to vector<2x16x16xf32>
    %20 = arith.mulf %17, %19 : vector<2x16x16xf32>
    %c1_9 = arith.constant 1 : index
    %21 = memref.load %arg2[%c1_9] : memref<4xf32, #tpu.memory_space<smem>>
    %22 = vector.broadcast %21 : f32 to vector<2x16x16xf32>
    %23 = arith.addf %20, %22 : vector<2x16x16xf32>
    %cst_10 = arith.constant 0.000000e+00 : f32
    %24 = vector.broadcast %cst_10 : f32 to vector<2x16x16xf32>
    %25 = arith.maximumf %23, %24 : vector<2x16x16xf32>
    %26 = vector.extract_strided_slice %25 {offsets = [0, 1, 0], sizes = [2, 1, 16], strides = [1, 1, 1]} : vector<2x16x16xf32> to vector<2x1x16xf32>
    %27 = vector.extract_strided_slice %25 {offsets = [0, 14, 0], sizes = [2, 1, 16], strides = [1, 1, 1]} : vector<2x16x16xf32> to vector<2x1x16xf32>
    %28 = tpu.concatenate %26, %25, %27 in 1 : vector<2x1x16xf32>, vector<2x16x16xf32>, vector<2x1x16xf32> -> vector<2x18x16xf32>
    %29 = vector.extract_strided_slice %28 {offsets = [0, 0, 1], sizes = [2, 18, 1], strides = [1, 1, 1]} : vector<2x18x16xf32> to vector<2x18x1xf32>
    %30 = vector.extract_strided_slice %28 {offsets = [0, 0, 14], sizes = [2, 18, 1], strides = [1, 1, 1]} : vector<2x18x16xf32> to vector<2x18x1xf32>
    %31 = tpu.concatenate %29, %28, %30 in 2 : vector<2x18x1xf32>, vector<2x18x16xf32>, vector<2x18x1xf32> -> vector<2x18x18xf32>
    %c0_11 = arith.constant 0 : index
    %c2 = arith.constant 2 : index
    %c0_12 = arith.constant 0 : index
    %c0_13 = arith.constant 0 : index
    %32 = vector.load %arg0[%c0_11, %c2, %c0_12, %c0_13] : memref<2x4x16x16xf32, #tpu.memory_space<vmem>>, vector<2x1x16x16xf32>
    %33 = vector.shape_cast %32 : vector<2x1x16x16xf32> to vector<2x16x16xf32>
    %c2_14 = arith.constant 2 : index
    %34 = memref.load %arg1[%c2_14] : memref<4xf32, #tpu.memory_space<smem>>
    %35 = vector.broadcast %34 : f32 to vector<2x16x16xf32>
    %36 = arith.mulf %33, %35 : vector<2x16x16xf32>
    %c2_15 = arith.constant 2 : index
    %37 = memref.load %arg2[%c2_15] : memref<4xf32, #tpu.memory_space<smem>>
    %38 = vector.broadcast %37 : f32 to vector<2x16x16xf32>
    %39 = arith.addf %36, %38 : vector<2x16x16xf32>
    %cst_16 = arith.constant 0.000000e+00 : f32
    %40 = vector.broadcast %cst_16 : f32 to vector<2x16x16xf32>
    %41 = arith.maximumf %39, %40 : vector<2x16x16xf32>
    %42 = vector.extract_strided_slice %41 {offsets = [0, 1, 0], sizes = [2, 1, 16], strides = [1, 1, 1]} : vector<2x16x16xf32> to vector<2x1x16xf32>
    %43 = vector.extract_strided_slice %41 {offsets = [0, 14, 0], sizes = [2, 1, 16], strides = [1, 1, 1]} : vector<2x16x16xf32> to vector<2x1x16xf32>
    %44 = tpu.concatenate %42, %41, %43 in 1 : vector<2x1x16xf32>, vector<2x16x16xf32>, vector<2x1x16xf32> -> vector<2x18x16xf32>
    %45 = vector.extract_strided_slice %44 {offsets = [0, 0, 1], sizes = [2, 18, 1], strides = [1, 1, 1]} : vector<2x18x16xf32> to vector<2x18x1xf32>
    %46 = vector.extract_strided_slice %44 {offsets = [0, 0, 14], sizes = [2, 18, 1], strides = [1, 1, 1]} : vector<2x18x16xf32> to vector<2x18x1xf32>
    %47 = tpu.concatenate %45, %44, %46 in 2 : vector<2x18x1xf32>, vector<2x18x16xf32>, vector<2x18x1xf32> -> vector<2x18x18xf32>
    %c0_17 = arith.constant 0 : index
    %c3 = arith.constant 3 : index
    %c0_18 = arith.constant 0 : index
    %c0_19 = arith.constant 0 : index
    %48 = vector.load %arg0[%c0_17, %c3, %c0_18, %c0_19] : memref<2x4x16x16xf32, #tpu.memory_space<vmem>>, vector<2x1x16x16xf32>
    %49 = vector.shape_cast %48 : vector<2x1x16x16xf32> to vector<2x16x16xf32>
    %c3_20 = arith.constant 3 : index
    %50 = memref.load %arg1[%c3_20] : memref<4xf32, #tpu.memory_space<smem>>
    %51 = vector.broadcast %50 : f32 to vector<2x16x16xf32>
    %52 = arith.mulf %49, %51 : vector<2x16x16xf32>
    %c3_21 = arith.constant 3 : index
    %53 = memref.load %arg2[%c3_21] : memref<4xf32, #tpu.memory_space<smem>>
    %54 = vector.broadcast %53 : f32 to vector<2x16x16xf32>
    %55 = arith.addf %52, %54 : vector<2x16x16xf32>
    %cst_22 = arith.constant 0.000000e+00 : f32
    %56 = vector.broadcast %cst_22 : f32 to vector<2x16x16xf32>
    %57 = arith.maximumf %55, %56 : vector<2x16x16xf32>
    %58 = vector.extract_strided_slice %57 {offsets = [0, 1, 0], sizes = [2, 1, 16], strides = [1, 1, 1]} : vector<2x16x16xf32> to vector<2x1x16xf32>
    %59 = vector.extract_strided_slice %57 {offsets = [0, 14, 0], sizes = [2, 1, 16], strides = [1, 1, 1]} : vector<2x16x16xf32> to vector<2x1x16xf32>
    %60 = tpu.concatenate %58, %57, %59 in 1 : vector<2x1x16xf32>, vector<2x16x16xf32>, vector<2x1x16xf32> -> vector<2x18x16xf32>
    %61 = vector.extract_strided_slice %60 {offsets = [0, 0, 1], sizes = [2, 18, 1], strides = [1, 1, 1]} : vector<2x18x16xf32> to vector<2x18x1xf32>
    %62 = vector.extract_strided_slice %60 {offsets = [0, 0, 14], sizes = [2, 18, 1], strides = [1, 1, 1]} : vector<2x18x16xf32> to vector<2x18x1xf32>
    %63 = tpu.concatenate %61, %60, %62 in 2 : vector<2x18x1xf32>, vector<2x18x16xf32>, vector<2x18x1xf32> -> vector<2x18x18xf32>
    %c0_23 = arith.constant 0 : index
    %64 = memref.load %arg4[%c0_23] : memref<4xf32, #tpu.memory_space<smem>>
    %65 = vector.broadcast %64 : f32 to vector<2x16x16xf32>
    %c1_24 = arith.constant 1 : index
    %66 = memref.load %arg4[%c1_24] : memref<4xf32, #tpu.memory_space<smem>>
    %67 = vector.broadcast %66 : f32 to vector<2x16x16xf32>
    %c2_25 = arith.constant 2 : index
    %68 = memref.load %arg4[%c2_25] : memref<4xf32, #tpu.memory_space<smem>>
    %69 = vector.broadcast %68 : f32 to vector<2x16x16xf32>
    %c3_26 = arith.constant 3 : index
    %70 = memref.load %arg4[%c3_26] : memref<4xf32, #tpu.memory_space<smem>>
    %71 = vector.broadcast %70 : f32 to vector<2x16x16xf32>
    %72 = vector.extract_strided_slice %15 {offsets = [0, 0, 0], sizes = [2, 16, 16], strides = [1, 1, 1]} : vector<2x18x18xf32> to vector<2x16x16xf32>
    %c0_27 = arith.constant 0 : index
    %73 = memref.load %arg3[%c0_27] : memref<144xf32, #tpu.memory_space<smem>>
    %74 = vector.broadcast %73 : f32 to vector<2x16x16xf32>
    %75 = arith.mulf %74, %72 : vector<2x16x16xf32>
    %76 = arith.addf %65, %75 : vector<2x16x16xf32>
    %c36 = arith.constant 36 : index
    %77 = memref.load %arg3[%c36] : memref<144xf32, #tpu.memory_space<smem>>
    %78 = vector.broadcast %77 : f32 to vector<2x16x16xf32>
    %79 = arith.mulf %78, %72 : vector<2x16x16xf32>
    %80 = arith.addf %67, %79 : vector<2x16x16xf32>
    %c72 = arith.constant 72 : index
    %81 = memref.load %arg3[%c72] : memref<144xf32, #tpu.memory_space<smem>>
    %82 = vector.broadcast %81 : f32 to vector<2x16x16xf32>
    %83 = arith.mulf %82, %72 : vector<2x16x16xf32>
    %84 = arith.addf %69, %83 : vector<2x16x16xf32>
    %c108 = arith.constant 108 : index
    %85 = memref.load %arg3[%c108] : memref<144xf32, #tpu.memory_space<smem>>
    %86 = vector.broadcast %85 : f32 to vector<2x16x16xf32>
    %87 = arith.mulf %86, %72 : vector<2x16x16xf32>
    %88 = arith.addf %71, %87 : vector<2x16x16xf32>
    %89 = vector.extract_strided_slice %15 {offsets = [0, 0, 1], sizes = [2, 16, 16], strides = [1, 1, 1]} : vector<2x18x18xf32> to vector<2x16x16xf32>
    %c1_28 = arith.constant 1 : index
    %90 = memref.load %arg3[%c1_28] : memref<144xf32, #tpu.memory_space<smem>>
    %91 = vector.broadcast %90 : f32 to vector<2x16x16xf32>
    %92 = arith.mulf %91, %89 : vector<2x16x16xf32>
    %93 = arith.addf %76, %92 : vector<2x16x16xf32>
    %c37 = arith.constant 37 : index
    %94 = memref.load %arg3[%c37] : memref<144xf32, #tpu.memory_space<smem>>
    %95 = vector.broadcast %94 : f32 to vector<2x16x16xf32>
    %96 = arith.mulf %95, %89 : vector<2x16x16xf32>
    %97 = arith.addf %80, %96 : vector<2x16x16xf32>
    %c73 = arith.constant 73 : index
    %98 = memref.load %arg3[%c73] : memref<144xf32, #tpu.memory_space<smem>>
    %99 = vector.broadcast %98 : f32 to vector<2x16x16xf32>
    %100 = arith.mulf %99, %89 : vector<2x16x16xf32>
    %101 = arith.addf %84, %100 : vector<2x16x16xf32>
    %c109 = arith.constant 109 : index
    %102 = memref.load %arg3[%c109] : memref<144xf32, #tpu.memory_space<smem>>
    %103 = vector.broadcast %102 : f32 to vector<2x16x16xf32>
    %104 = arith.mulf %103, %89 : vector<2x16x16xf32>
    %105 = arith.addf %88, %104 : vector<2x16x16xf32>
    %106 = vector.extract_strided_slice %15 {offsets = [0, 0, 2], sizes = [2, 16, 16], strides = [1, 1, 1]} : vector<2x18x18xf32> to vector<2x16x16xf32>
    %c2_29 = arith.constant 2 : index
    %107 = memref.load %arg3[%c2_29] : memref<144xf32, #tpu.memory_space<smem>>
    %108 = vector.broadcast %107 : f32 to vector<2x16x16xf32>
    %109 = arith.mulf %108, %106 : vector<2x16x16xf32>
    %110 = arith.addf %93, %109 : vector<2x16x16xf32>
    %c38 = arith.constant 38 : index
    %111 = memref.load %arg3[%c38] : memref<144xf32, #tpu.memory_space<smem>>
    %112 = vector.broadcast %111 : f32 to vector<2x16x16xf32>
    %113 = arith.mulf %112, %106 : vector<2x16x16xf32>
    %114 = arith.addf %97, %113 : vector<2x16x16xf32>
    %c74 = arith.constant 74 : index
    %115 = memref.load %arg3[%c74] : memref<144xf32, #tpu.memory_space<smem>>
    %116 = vector.broadcast %115 : f32 to vector<2x16x16xf32>
    %117 = arith.mulf %116, %106 : vector<2x16x16xf32>
    %118 = arith.addf %101, %117 : vector<2x16x16xf32>
    %c110 = arith.constant 110 : index
    %119 = memref.load %arg3[%c110] : memref<144xf32, #tpu.memory_space<smem>>
    %120 = vector.broadcast %119 : f32 to vector<2x16x16xf32>
    %121 = arith.mulf %120, %106 : vector<2x16x16xf32>
    %122 = arith.addf %105, %121 : vector<2x16x16xf32>
    %123 = vector.extract_strided_slice %15 {offsets = [0, 1, 0], sizes = [2, 16, 16], strides = [1, 1, 1]} : vector<2x18x18xf32> to vector<2x16x16xf32>
    %c3_30 = arith.constant 3 : index
    %124 = memref.load %arg3[%c3_30] : memref<144xf32, #tpu.memory_space<smem>>
    %125 = vector.broadcast %124 : f32 to vector<2x16x16xf32>
    %126 = arith.mulf %125, %123 : vector<2x16x16xf32>
    %127 = arith.addf %110, %126 : vector<2x16x16xf32>
    %c39 = arith.constant 39 : index
    %128 = memref.load %arg3[%c39] : memref<144xf32, #tpu.memory_space<smem>>
    %129 = vector.broadcast %128 : f32 to vector<2x16x16xf32>
    %130 = arith.mulf %129, %123 : vector<2x16x16xf32>
    %131 = arith.addf %114, %130 : vector<2x16x16xf32>
    %c75 = arith.constant 75 : index
    %132 = memref.load %arg3[%c75] : memref<144xf32, #tpu.memory_space<smem>>
    %133 = vector.broadcast %132 : f32 to vector<2x16x16xf32>
    %134 = arith.mulf %133, %123 : vector<2x16x16xf32>
    %135 = arith.addf %118, %134 : vector<2x16x16xf32>
    %c111 = arith.constant 111 : index
    %136 = memref.load %arg3[%c111] : memref<144xf32, #tpu.memory_space<smem>>
    %137 = vector.broadcast %136 : f32 to vector<2x16x16xf32>
    %138 = arith.mulf %137, %123 : vector<2x16x16xf32>
    %139 = arith.addf %122, %138 : vector<2x16x16xf32>
    %140 = vector.extract_strided_slice %15 {offsets = [0, 1, 1], sizes = [2, 16, 16], strides = [1, 1, 1]} : vector<2x18x18xf32> to vector<2x16x16xf32>
    %c4 = arith.constant 4 : index
    %141 = memref.load %arg3[%c4] : memref<144xf32, #tpu.memory_space<smem>>
    %142 = vector.broadcast %141 : f32 to vector<2x16x16xf32>
    %143 = arith.mulf %142, %140 : vector<2x16x16xf32>
    %144 = arith.addf %127, %143 : vector<2x16x16xf32>
    %c40 = arith.constant 40 : index
    %145 = memref.load %arg3[%c40] : memref<144xf32, #tpu.memory_space<smem>>
    %146 = vector.broadcast %145 : f32 to vector<2x16x16xf32>
    %147 = arith.mulf %146, %140 : vector<2x16x16xf32>
    %148 = arith.addf %131, %147 : vector<2x16x16xf32>
    %c76 = arith.constant 76 : index
    %149 = memref.load %arg3[%c76] : memref<144xf32, #tpu.memory_space<smem>>
    %150 = vector.broadcast %149 : f32 to vector<2x16x16xf32>
    %151 = arith.mulf %150, %140 : vector<2x16x16xf32>
    %152 = arith.addf %135, %151 : vector<2x16x16xf32>
    %c112 = arith.constant 112 : index
    %153 = memref.load %arg3[%c112] : memref<144xf32, #tpu.memory_space<smem>>
    %154 = vector.broadcast %153 : f32 to vector<2x16x16xf32>
    %155 = arith.mulf %154, %140 : vector<2x16x16xf32>
    %156 = arith.addf %139, %155 : vector<2x16x16xf32>
    %157 = vector.extract_strided_slice %15 {offsets = [0, 1, 2], sizes = [2, 16, 16], strides = [1, 1, 1]} : vector<2x18x18xf32> to vector<2x16x16xf32>
    %c5 = arith.constant 5 : index
    %158 = memref.load %arg3[%c5] : memref<144xf32, #tpu.memory_space<smem>>
    %159 = vector.broadcast %158 : f32 to vector<2x16x16xf32>
    %160 = arith.mulf %159, %157 : vector<2x16x16xf32>
    %161 = arith.addf %144, %160 : vector<2x16x16xf32>
    %c41 = arith.constant 41 : index
    %162 = memref.load %arg3[%c41] : memref<144xf32, #tpu.memory_space<smem>>
    %163 = vector.broadcast %162 : f32 to vector<2x16x16xf32>
    %164 = arith.mulf %163, %157 : vector<2x16x16xf32>
    %165 = arith.addf %148, %164 : vector<2x16x16xf32>
    %c77 = arith.constant 77 : index
    %166 = memref.load %arg3[%c77] : memref<144xf32, #tpu.memory_space<smem>>
    %167 = vector.broadcast %166 : f32 to vector<2x16x16xf32>
    %168 = arith.mulf %167, %157 : vector<2x16x16xf32>
    %169 = arith.addf %152, %168 : vector<2x16x16xf32>
    %c113 = arith.constant 113 : index
    %170 = memref.load %arg3[%c113] : memref<144xf32, #tpu.memory_space<smem>>
    %171 = vector.broadcast %170 : f32 to vector<2x16x16xf32>
    %172 = arith.mulf %171, %157 : vector<2x16x16xf32>
    %173 = arith.addf %156, %172 : vector<2x16x16xf32>
    %174 = vector.extract_strided_slice %15 {offsets = [0, 2, 0], sizes = [2, 16, 16], strides = [1, 1, 1]} : vector<2x18x18xf32> to vector<2x16x16xf32>
    %c6 = arith.constant 6 : index
    %175 = memref.load %arg3[%c6] : memref<144xf32, #tpu.memory_space<smem>>
    %176 = vector.broadcast %175 : f32 to vector<2x16x16xf32>
    %177 = arith.mulf %176, %174 : vector<2x16x16xf32>
    %178 = arith.addf %161, %177 : vector<2x16x16xf32>
    %c42 = arith.constant 42 : index
    %179 = memref.load %arg3[%c42] : memref<144xf32, #tpu.memory_space<smem>>
    %180 = vector.broadcast %179 : f32 to vector<2x16x16xf32>
    %181 = arith.mulf %180, %174 : vector<2x16x16xf32>
    %182 = arith.addf %165, %181 : vector<2x16x16xf32>
    %c78 = arith.constant 78 : index
    %183 = memref.load %arg3[%c78] : memref<144xf32, #tpu.memory_space<smem>>
    %184 = vector.broadcast %183 : f32 to vector<2x16x16xf32>
    %185 = arith.mulf %184, %174 : vector<2x16x16xf32>
    %186 = arith.addf %169, %185 : vector<2x16x16xf32>
    %c114 = arith.constant 114 : index
    %187 = memref.load %arg3[%c114] : memref<144xf32, #tpu.memory_space<smem>>
    %188 = vector.broadcast %187 : f32 to vector<2x16x16xf32>
    %189 = arith.mulf %188, %174 : vector<2x16x16xf32>
    %190 = arith.addf %173, %189 : vector<2x16x16xf32>
    %191 = vector.extract_strided_slice %15 {offsets = [0, 2, 1], sizes = [2, 16, 16], strides = [1, 1, 1]} : vector<2x18x18xf32> to vector<2x16x16xf32>
    %c7 = arith.constant 7 : index
    %192 = memref.load %arg3[%c7] : memref<144xf32, #tpu.memory_space<smem>>
    %193 = vector.broadcast %192 : f32 to vector<2x16x16xf32>
    %194 = arith.mulf %193, %191 : vector<2x16x16xf32>
    %195 = arith.addf %178, %194 : vector<2x16x16xf32>
    %c43 = arith.constant 43 : index
    %196 = memref.load %arg3[%c43] : memref<144xf32, #tpu.memory_space<smem>>
    %197 = vector.broadcast %196 : f32 to vector<2x16x16xf32>
    %198 = arith.mulf %197, %191 : vector<2x16x16xf32>
    %199 = arith.addf %182, %198 : vector<2x16x16xf32>
    %c79 = arith.constant 79 : index
    %200 = memref.load %arg3[%c79] : memref<144xf32, #tpu.memory_space<smem>>
    %201 = vector.broadcast %200 : f32 to vector<2x16x16xf32>
    %202 = arith.mulf %201, %191 : vector<2x16x16xf32>
    %203 = arith.addf %186, %202 : vector<2x16x16xf32>
    %c115 = arith.constant 115 : index
    %204 = memref.load %arg3[%c115] : memref<144xf32, #tpu.memory_space<smem>>
    %205 = vector.broadcast %204 : f32 to vector<2x16x16xf32>
    %206 = arith.mulf %205, %191 : vector<2x16x16xf32>
    %207 = arith.addf %190, %206 : vector<2x16x16xf32>
    %208 = vector.extract_strided_slice %15 {offsets = [0, 2, 2], sizes = [2, 16, 16], strides = [1, 1, 1]} : vector<2x18x18xf32> to vector<2x16x16xf32>
    %c8 = arith.constant 8 : index
    %209 = memref.load %arg3[%c8] : memref<144xf32, #tpu.memory_space<smem>>
    %210 = vector.broadcast %209 : f32 to vector<2x16x16xf32>
    %211 = arith.mulf %210, %208 : vector<2x16x16xf32>
    %212 = arith.addf %195, %211 : vector<2x16x16xf32>
    %c44 = arith.constant 44 : index
    %213 = memref.load %arg3[%c44] : memref<144xf32, #tpu.memory_space<smem>>
    %214 = vector.broadcast %213 : f32 to vector<2x16x16xf32>
    %215 = arith.mulf %214, %208 : vector<2x16x16xf32>
    %216 = arith.addf %199, %215 : vector<2x16x16xf32>
    %c80 = arith.constant 80 : index
    %217 = memref.load %arg3[%c80] : memref<144xf32, #tpu.memory_space<smem>>
    %218 = vector.broadcast %217 : f32 to vector<2x16x16xf32>
    %219 = arith.mulf %218, %208 : vector<2x16x16xf32>
    %220 = arith.addf %203, %219 : vector<2x16x16xf32>
    %c116 = arith.constant 116 : index
    %221 = memref.load %arg3[%c116] : memref<144xf32, #tpu.memory_space<smem>>
    %222 = vector.broadcast %221 : f32 to vector<2x16x16xf32>
    %223 = arith.mulf %222, %208 : vector<2x16x16xf32>
    %224 = arith.addf %207, %223 : vector<2x16x16xf32>
    %225 = vector.extract_strided_slice %31 {offsets = [0, 0, 0], sizes = [2, 16, 16], strides = [1, 1, 1]} : vector<2x18x18xf32> to vector<2x16x16xf32>
    %c9 = arith.constant 9 : index
    %226 = memref.load %arg3[%c9] : memref<144xf32, #tpu.memory_space<smem>>
    %227 = vector.broadcast %226 : f32 to vector<2x16x16xf32>
    %228 = arith.mulf %227, %225 : vector<2x16x16xf32>
    %229 = arith.addf %212, %228 : vector<2x16x16xf32>
    %c45 = arith.constant 45 : index
    %230 = memref.load %arg3[%c45] : memref<144xf32, #tpu.memory_space<smem>>
    %231 = vector.broadcast %230 : f32 to vector<2x16x16xf32>
    %232 = arith.mulf %231, %225 : vector<2x16x16xf32>
    %233 = arith.addf %216, %232 : vector<2x16x16xf32>
    %c81 = arith.constant 81 : index
    %234 = memref.load %arg3[%c81] : memref<144xf32, #tpu.memory_space<smem>>
    %235 = vector.broadcast %234 : f32 to vector<2x16x16xf32>
    %236 = arith.mulf %235, %225 : vector<2x16x16xf32>
    %237 = arith.addf %220, %236 : vector<2x16x16xf32>
    %c117 = arith.constant 117 : index
    %238 = memref.load %arg3[%c117] : memref<144xf32, #tpu.memory_space<smem>>
    %239 = vector.broadcast %238 : f32 to vector<2x16x16xf32>
    %240 = arith.mulf %239, %225 : vector<2x16x16xf32>
    %241 = arith.addf %224, %240 : vector<2x16x16xf32>
    %242 = vector.extract_strided_slice %31 {offsets = [0, 0, 1], sizes = [2, 16, 16], strides = [1, 1, 1]} : vector<2x18x18xf32> to vector<2x16x16xf32>
    %c10 = arith.constant 10 : index
    %243 = memref.load %arg3[%c10] : memref<144xf32, #tpu.memory_space<smem>>
    %244 = vector.broadcast %243 : f32 to vector<2x16x16xf32>
    %245 = arith.mulf %244, %242 : vector<2x16x16xf32>
    %246 = arith.addf %229, %245 : vector<2x16x16xf32>
    %c46 = arith.constant 46 : index
    %247 = memref.load %arg3[%c46] : memref<144xf32, #tpu.memory_space<smem>>
    %248 = vector.broadcast %247 : f32 to vector<2x16x16xf32>
    %249 = arith.mulf %248, %242 : vector<2x16x16xf32>
    %250 = arith.addf %233, %249 : vector<2x16x16xf32>
    %c82 = arith.constant 82 : index
    %251 = memref.load %arg3[%c82] : memref<144xf32, #tpu.memory_space<smem>>
    %252 = vector.broadcast %251 : f32 to vector<2x16x16xf32>
    %253 = arith.mulf %252, %242 : vector<2x16x16xf32>
    %254 = arith.addf %237, %253 : vector<2x16x16xf32>
    %c118 = arith.constant 118 : index
    %255 = memref.load %arg3[%c118] : memref<144xf32, #tpu.memory_space<smem>>
    %256 = vector.broadcast %255 : f32 to vector<2x16x16xf32>
    %257 = arith.mulf %256, %242 : vector<2x16x16xf32>
    %258 = arith.addf %241, %257 : vector<2x16x16xf32>
    %259 = vector.extract_strided_slice %31 {offsets = [0, 0, 2], sizes = [2, 16, 16], strides = [1, 1, 1]} : vector<2x18x18xf32> to vector<2x16x16xf32>
    %c11 = arith.constant 11 : index
    %260 = memref.load %arg3[%c11] : memref<144xf32, #tpu.memory_space<smem>>
    %261 = vector.broadcast %260 : f32 to vector<2x16x16xf32>
    %262 = arith.mulf %261, %259 : vector<2x16x16xf32>
    %263 = arith.addf %246, %262 : vector<2x16x16xf32>
    %c47 = arith.constant 47 : index
    %264 = memref.load %arg3[%c47] : memref<144xf32, #tpu.memory_space<smem>>
    %265 = vector.broadcast %264 : f32 to vector<2x16x16xf32>
    %266 = arith.mulf %265, %259 : vector<2x16x16xf32>
    %267 = arith.addf %250, %266 : vector<2x16x16xf32>
    %c83 = arith.constant 83 : index
    %268 = memref.load %arg3[%c83] : memref<144xf32, #tpu.memory_space<smem>>
    %269 = vector.broadcast %268 : f32 to vector<2x16x16xf32>
    %270 = arith.mulf %269, %259 : vector<2x16x16xf32>
    %271 = arith.addf %254, %270 : vector<2x16x16xf32>
    %c119 = arith.constant 119 : index
    %272 = memref.load %arg3[%c119] : memref<144xf32, #tpu.memory_space<smem>>
    %273 = vector.broadcast %272 : f32 to vector<2x16x16xf32>
    %274 = arith.mulf %273, %259 : vector<2x16x16xf32>
    %275 = arith.addf %258, %274 : vector<2x16x16xf32>
    %276 = vector.extract_strided_slice %31 {offsets = [0, 1, 0], sizes = [2, 16, 16], strides = [1, 1, 1]} : vector<2x18x18xf32> to vector<2x16x16xf32>
    %c12 = arith.constant 12 : index
    %277 = memref.load %arg3[%c12] : memref<144xf32, #tpu.memory_space<smem>>
    %278 = vector.broadcast %277 : f32 to vector<2x16x16xf32>
    %279 = arith.mulf %278, %276 : vector<2x16x16xf32>
    %280 = arith.addf %263, %279 : vector<2x16x16xf32>
    %c48 = arith.constant 48 : index
    %281 = memref.load %arg3[%c48] : memref<144xf32, #tpu.memory_space<smem>>
    %282 = vector.broadcast %281 : f32 to vector<2x16x16xf32>
    %283 = arith.mulf %282, %276 : vector<2x16x16xf32>
    %284 = arith.addf %267, %283 : vector<2x16x16xf32>
    %c84 = arith.constant 84 : index
    %285 = memref.load %arg3[%c84] : memref<144xf32, #tpu.memory_space<smem>>
    %286 = vector.broadcast %285 : f32 to vector<2x16x16xf32>
    %287 = arith.mulf %286, %276 : vector<2x16x16xf32>
    %288 = arith.addf %271, %287 : vector<2x16x16xf32>
    %c120 = arith.constant 120 : index
    %289 = memref.load %arg3[%c120] : memref<144xf32, #tpu.memory_space<smem>>
    %290 = vector.broadcast %289 : f32 to vector<2x16x16xf32>
    %291 = arith.mulf %290, %276 : vector<2x16x16xf32>
    %292 = arith.addf %275, %291 : vector<2x16x16xf32>
    %293 = vector.extract_strided_slice %31 {offsets = [0, 1, 1], sizes = [2, 16, 16], strides = [1, 1, 1]} : vector<2x18x18xf32> to vector<2x16x16xf32>
    %c13 = arith.constant 13 : index
    %294 = memref.load %arg3[%c13] : memref<144xf32, #tpu.memory_space<smem>>
    %295 = vector.broadcast %294 : f32 to vector<2x16x16xf32>
    %296 = arith.mulf %295, %293 : vector<2x16x16xf32>
    %297 = arith.addf %280, %296 : vector<2x16x16xf32>
    %c49 = arith.constant 49 : index
    %298 = memref.load %arg3[%c49] : memref<144xf32, #tpu.memory_space<smem>>
    %299 = vector.broadcast %298 : f32 to vector<2x16x16xf32>
    %300 = arith.mulf %299, %293 : vector<2x16x16xf32>
    %301 = arith.addf %284, %300 : vector<2x16x16xf32>
    %c85 = arith.constant 85 : index
    %302 = memref.load %arg3[%c85] : memref<144xf32, #tpu.memory_space<smem>>
    %303 = vector.broadcast %302 : f32 to vector<2x16x16xf32>
    %304 = arith.mulf %303, %293 : vector<2x16x16xf32>
    %305 = arith.addf %288, %304 : vector<2x16x16xf32>
    %c121 = arith.constant 121 : index
    %306 = memref.load %arg3[%c121] : memref<144xf32, #tpu.memory_space<smem>>
    %307 = vector.broadcast %306 : f32 to vector<2x16x16xf32>
    %308 = arith.mulf %307, %293 : vector<2x16x16xf32>
    %309 = arith.addf %292, %308 : vector<2x16x16xf32>
    %310 = vector.extract_strided_slice %31 {offsets = [0, 1, 2], sizes = [2, 16, 16], strides = [1, 1, 1]} : vector<2x18x18xf32> to vector<2x16x16xf32>
    %c14 = arith.constant 14 : index
    %311 = memref.load %arg3[%c14] : memref<144xf32, #tpu.memory_space<smem>>
    %312 = vector.broadcast %311 : f32 to vector<2x16x16xf32>
    %313 = arith.mulf %312, %310 : vector<2x16x16xf32>
    %314 = arith.addf %297, %313 : vector<2x16x16xf32>
    %c50 = arith.constant 50 : index
    %315 = memref.load %arg3[%c50] : memref<144xf32, #tpu.memory_space<smem>>
    %316 = vector.broadcast %315 : f32 to vector<2x16x16xf32>
    %317 = arith.mulf %316, %310 : vector<2x16x16xf32>
    %318 = arith.addf %301, %317 : vector<2x16x16xf32>
    %c86 = arith.constant 86 : index
    %319 = memref.load %arg3[%c86] : memref<144xf32, #tpu.memory_space<smem>>
    %320 = vector.broadcast %319 : f32 to vector<2x16x16xf32>
    %321 = arith.mulf %320, %310 : vector<2x16x16xf32>
    %322 = arith.addf %305, %321 : vector<2x16x16xf32>
    %c122 = arith.constant 122 : index
    %323 = memref.load %arg3[%c122] : memref<144xf32, #tpu.memory_space<smem>>
    %324 = vector.broadcast %323 : f32 to vector<2x16x16xf32>
    %325 = arith.mulf %324, %310 : vector<2x16x16xf32>
    %326 = arith.addf %309, %325 : vector<2x16x16xf32>
    %327 = vector.extract_strided_slice %31 {offsets = [0, 2, 0], sizes = [2, 16, 16], strides = [1, 1, 1]} : vector<2x18x18xf32> to vector<2x16x16xf32>
    %c15 = arith.constant 15 : index
    %328 = memref.load %arg3[%c15] : memref<144xf32, #tpu.memory_space<smem>>
    %329 = vector.broadcast %328 : f32 to vector<2x16x16xf32>
    %330 = arith.mulf %329, %327 : vector<2x16x16xf32>
    %331 = arith.addf %314, %330 : vector<2x16x16xf32>
    %c51 = arith.constant 51 : index
    %332 = memref.load %arg3[%c51] : memref<144xf32, #tpu.memory_space<smem>>
    %333 = vector.broadcast %332 : f32 to vector<2x16x16xf32>
    %334 = arith.mulf %333, %327 : vector<2x16x16xf32>
    %335 = arith.addf %318, %334 : vector<2x16x16xf32>
    %c87 = arith.constant 87 : index
    %336 = memref.load %arg3[%c87] : memref<144xf32, #tpu.memory_space<smem>>
    %337 = vector.broadcast %336 : f32 to vector<2x16x16xf32>
    %338 = arith.mulf %337, %327 : vector<2x16x16xf32>
    %339 = arith.addf %322, %338 : vector<2x16x16xf32>
    %c123 = arith.constant 123 : index
    %340 = memref.load %arg3[%c123] : memref<144xf32, #tpu.memory_space<smem>>
    %341 = vector.broadcast %340 : f32 to vector<2x16x16xf32>
    %342 = arith.mulf %341, %327 : vector<2x16x16xf32>
    %343 = arith.addf %326, %342 : vector<2x16x16xf32>
    %344 = vector.extract_strided_slice %31 {offsets = [0, 2, 1], sizes = [2, 16, 16], strides = [1, 1, 1]} : vector<2x18x18xf32> to vector<2x16x16xf32>
    %c16 = arith.constant 16 : index
    %345 = memref.load %arg3[%c16] : memref<144xf32, #tpu.memory_space<smem>>
    %346 = vector.broadcast %345 : f32 to vector<2x16x16xf32>
    %347 = arith.mulf %346, %344 : vector<2x16x16xf32>
    %348 = arith.addf %331, %347 : vector<2x16x16xf32>
    %c52 = arith.constant 52 : index
    %349 = memref.load %arg3[%c52] : memref<144xf32, #tpu.memory_space<smem>>
    %350 = vector.broadcast %349 : f32 to vector<2x16x16xf32>
    %351 = arith.mulf %350, %344 : vector<2x16x16xf32>
    %352 = arith.addf %335, %351 : vector<2x16x16xf32>
    %c88 = arith.constant 88 : index
    %353 = memref.load %arg3[%c88] : memref<144xf32, #tpu.memory_space<smem>>
    %354 = vector.broadcast %353 : f32 to vector<2x16x16xf32>
    %355 = arith.mulf %354, %344 : vector<2x16x16xf32>
    %356 = arith.addf %339, %355 : vector<2x16x16xf32>
    %c124 = arith.constant 124 : index
    %357 = memref.load %arg3[%c124] : memref<144xf32, #tpu.memory_space<smem>>
    %358 = vector.broadcast %357 : f32 to vector<2x16x16xf32>
    %359 = arith.mulf %358, %344 : vector<2x16x16xf32>
    %360 = arith.addf %343, %359 : vector<2x16x16xf32>
    %361 = vector.extract_strided_slice %31 {offsets = [0, 2, 2], sizes = [2, 16, 16], strides = [1, 1, 1]} : vector<2x18x18xf32> to vector<2x16x16xf32>
    %c17 = arith.constant 17 : index
    %362 = memref.load %arg3[%c17] : memref<144xf32, #tpu.memory_space<smem>>
    %363 = vector.broadcast %362 : f32 to vector<2x16x16xf32>
    %364 = arith.mulf %363, %361 : vector<2x16x16xf32>
    %365 = arith.addf %348, %364 : vector<2x16x16xf32>
    %c53 = arith.constant 53 : index
    %366 = memref.load %arg3[%c53] : memref<144xf32, #tpu.memory_space<smem>>
    %367 = vector.broadcast %366 : f32 to vector<2x16x16xf32>
    %368 = arith.mulf %367, %361 : vector<2x16x16xf32>
    %369 = arith.addf %352, %368 : vector<2x16x16xf32>
    %c89 = arith.constant 89 : index
    %370 = memref.load %arg3[%c89] : memref<144xf32, #tpu.memory_space<smem>>
    %371 = vector.broadcast %370 : f32 to vector<2x16x16xf32>
    %372 = arith.mulf %371, %361 : vector<2x16x16xf32>
    %373 = arith.addf %356, %372 : vector<2x16x16xf32>
    %c125 = arith.constant 125 : index
    %374 = memref.load %arg3[%c125] : memref<144xf32, #tpu.memory_space<smem>>
    %375 = vector.broadcast %374 : f32 to vector<2x16x16xf32>
    %376 = arith.mulf %375, %361 : vector<2x16x16xf32>
    %377 = arith.addf %360, %376 : vector<2x16x16xf32>
    %378 = vector.extract_strided_slice %47 {offsets = [0, 0, 0], sizes = [2, 16, 16], strides = [1, 1, 1]} : vector<2x18x18xf32> to vector<2x16x16xf32>
    %c18 = arith.constant 18 : index
    %379 = memref.load %arg3[%c18] : memref<144xf32, #tpu.memory_space<smem>>
    %380 = vector.broadcast %379 : f32 to vector<2x16x16xf32>
    %381 = arith.mulf %380, %378 : vector<2x16x16xf32>
    %382 = arith.addf %365, %381 : vector<2x16x16xf32>
    %c54 = arith.constant 54 : index
    %383 = memref.load %arg3[%c54] : memref<144xf32, #tpu.memory_space<smem>>
    %384 = vector.broadcast %383 : f32 to vector<2x16x16xf32>
    %385 = arith.mulf %384, %378 : vector<2x16x16xf32>
    %386 = arith.addf %369, %385 : vector<2x16x16xf32>
    %c90 = arith.constant 90 : index
    %387 = memref.load %arg3[%c90] : memref<144xf32, #tpu.memory_space<smem>>
    %388 = vector.broadcast %387 : f32 to vector<2x16x16xf32>
    %389 = arith.mulf %388, %378 : vector<2x16x16xf32>
    %390 = arith.addf %373, %389 : vector<2x16x16xf32>
    %c126 = arith.constant 126 : index
    %391 = memref.load %arg3[%c126] : memref<144xf32, #tpu.memory_space<smem>>
    %392 = vector.broadcast %391 : f32 to vector<2x16x16xf32>
    %393 = arith.mulf %392, %378 : vector<2x16x16xf32>
    %394 = arith.addf %377, %393 : vector<2x16x16xf32>
    %395 = vector.extract_strided_slice %47 {offsets = [0, 0, 1], sizes = [2, 16, 16], strides = [1, 1, 1]} : vector<2x18x18xf32> to vector<2x16x16xf32>
    %c19 = arith.constant 19 : index
    %396 = memref.load %arg3[%c19] : memref<144xf32, #tpu.memory_space<smem>>
    %397 = vector.broadcast %396 : f32 to vector<2x16x16xf32>
    %398 = arith.mulf %397, %395 : vector<2x16x16xf32>
    %399 = arith.addf %382, %398 : vector<2x16x16xf32>
    %c55 = arith.constant 55 : index
    %400 = memref.load %arg3[%c55] : memref<144xf32, #tpu.memory_space<smem>>
    %401 = vector.broadcast %400 : f32 to vector<2x16x16xf32>
    %402 = arith.mulf %401, %395 : vector<2x16x16xf32>
    %403 = arith.addf %386, %402 : vector<2x16x16xf32>
    %c91 = arith.constant 91 : index
    %404 = memref.load %arg3[%c91] : memref<144xf32, #tpu.memory_space<smem>>
    %405 = vector.broadcast %404 : f32 to vector<2x16x16xf32>
    %406 = arith.mulf %405, %395 : vector<2x16x16xf32>
    %407 = arith.addf %390, %406 : vector<2x16x16xf32>
    %c127 = arith.constant 127 : index
    %408 = memref.load %arg3[%c127] : memref<144xf32, #tpu.memory_space<smem>>
    %409 = vector.broadcast %408 : f32 to vector<2x16x16xf32>
    %410 = arith.mulf %409, %395 : vector<2x16x16xf32>
    %411 = arith.addf %394, %410 : vector<2x16x16xf32>
    %412 = vector.extract_strided_slice %47 {offsets = [0, 0, 2], sizes = [2, 16, 16], strides = [1, 1, 1]} : vector<2x18x18xf32> to vector<2x16x16xf32>
    %c20 = arith.constant 20 : index
    %413 = memref.load %arg3[%c20] : memref<144xf32, #tpu.memory_space<smem>>
    %414 = vector.broadcast %413 : f32 to vector<2x16x16xf32>
    %415 = arith.mulf %414, %412 : vector<2x16x16xf32>
    %416 = arith.addf %399, %415 : vector<2x16x16xf32>
    %c56 = arith.constant 56 : index
    %417 = memref.load %arg3[%c56] : memref<144xf32, #tpu.memory_space<smem>>
    %418 = vector.broadcast %417 : f32 to vector<2x16x16xf32>
    %419 = arith.mulf %418, %412 : vector<2x16x16xf32>
    %420 = arith.addf %403, %419 : vector<2x16x16xf32>
    %c92 = arith.constant 92 : index
    %421 = memref.load %arg3[%c92] : memref<144xf32, #tpu.memory_space<smem>>
    %422 = vector.broadcast %421 : f32 to vector<2x16x16xf32>
    %423 = arith.mulf %422, %412 : vector<2x16x16xf32>
    %424 = arith.addf %407, %423 : vector<2x16x16xf32>
    %c128 = arith.constant 128 : index
    %425 = memref.load %arg3[%c128] : memref<144xf32, #tpu.memory_space<smem>>
    %426 = vector.broadcast %425 : f32 to vector<2x16x16xf32>
    %427 = arith.mulf %426, %412 : vector<2x16x16xf32>
    %428 = arith.addf %411, %427 : vector<2x16x16xf32>
    %429 = vector.extract_strided_slice %47 {offsets = [0, 1, 0], sizes = [2, 16, 16], strides = [1, 1, 1]} : vector<2x18x18xf32> to vector<2x16x16xf32>
    %c21 = arith.constant 21 : index
    %430 = memref.load %arg3[%c21] : memref<144xf32, #tpu.memory_space<smem>>
    %431 = vector.broadcast %430 : f32 to vector<2x16x16xf32>
    %432 = arith.mulf %431, %429 : vector<2x16x16xf32>
    %433 = arith.addf %416, %432 : vector<2x16x16xf32>
    %c57 = arith.constant 57 : index
    %434 = memref.load %arg3[%c57] : memref<144xf32, #tpu.memory_space<smem>>
    %435 = vector.broadcast %434 : f32 to vector<2x16x16xf32>
    %436 = arith.mulf %435, %429 : vector<2x16x16xf32>
    %437 = arith.addf %420, %436 : vector<2x16x16xf32>
    %c93 = arith.constant 93 : index
    %438 = memref.load %arg3[%c93] : memref<144xf32, #tpu.memory_space<smem>>
    %439 = vector.broadcast %438 : f32 to vector<2x16x16xf32>
    %440 = arith.mulf %439, %429 : vector<2x16x16xf32>
    %441 = arith.addf %424, %440 : vector<2x16x16xf32>
    %c129 = arith.constant 129 : index
    %442 = memref.load %arg3[%c129] : memref<144xf32, #tpu.memory_space<smem>>
    %443 = vector.broadcast %442 : f32 to vector<2x16x16xf32>
    %444 = arith.mulf %443, %429 : vector<2x16x16xf32>
    %445 = arith.addf %428, %444 : vector<2x16x16xf32>
    %446 = vector.extract_strided_slice %47 {offsets = [0, 1, 1], sizes = [2, 16, 16], strides = [1, 1, 1]} : vector<2x18x18xf32> to vector<2x16x16xf32>
    %c22 = arith.constant 22 : index
    %447 = memref.load %arg3[%c22] : memref<144xf32, #tpu.memory_space<smem>>
    %448 = vector.broadcast %447 : f32 to vector<2x16x16xf32>
    %449 = arith.mulf %448, %446 : vector<2x16x16xf32>
    %450 = arith.addf %433, %449 : vector<2x16x16xf32>
    %c58 = arith.constant 58 : index
    %451 = memref.load %arg3[%c58] : memref<144xf32, #tpu.memory_space<smem>>
    %452 = vector.broadcast %451 : f32 to vector<2x16x16xf32>
    %453 = arith.mulf %452, %446 : vector<2x16x16xf32>
    %454 = arith.addf %437, %453 : vector<2x16x16xf32>
    %c94 = arith.constant 94 : index
    %455 = memref.load %arg3[%c94] : memref<144xf32, #tpu.memory_space<smem>>
    %456 = vector.broadcast %455 : f32 to vector<2x16x16xf32>
    %457 = arith.mulf %456, %446 : vector<2x16x16xf32>
    %458 = arith.addf %441, %457 : vector<2x16x16xf32>
    %c130 = arith.constant 130 : index
    %459 = memref.load %arg3[%c130] : memref<144xf32, #tpu.memory_space<smem>>
    %460 = vector.broadcast %459 : f32 to vector<2x16x16xf32>
    %461 = arith.mulf %460, %446 : vector<2x16x16xf32>
    %462 = arith.addf %445, %461 : vector<2x16x16xf32>
    %463 = vector.extract_strided_slice %47 {offsets = [0, 1, 2], sizes = [2, 16, 16], strides = [1, 1, 1]} : vector<2x18x18xf32> to vector<2x16x16xf32>
    %c23 = arith.constant 23 : index
    %464 = memref.load %arg3[%c23] : memref<144xf32, #tpu.memory_space<smem>>
    %465 = vector.broadcast %464 : f32 to vector<2x16x16xf32>
    %466 = arith.mulf %465, %463 : vector<2x16x16xf32>
    %467 = arith.addf %450, %466 : vector<2x16x16xf32>
    %c59 = arith.constant 59 : index
    %468 = memref.load %arg3[%c59] : memref<144xf32, #tpu.memory_space<smem>>
    %469 = vector.broadcast %468 : f32 to vector<2x16x16xf32>
    %470 = arith.mulf %469, %463 : vector<2x16x16xf32>
    %471 = arith.addf %454, %470 : vector<2x16x16xf32>
    %c95 = arith.constant 95 : index
    %472 = memref.load %arg3[%c95] : memref<144xf32, #tpu.memory_space<smem>>
    %473 = vector.broadcast %472 : f32 to vector<2x16x16xf32>
    %474 = arith.mulf %473, %463 : vector<2x16x16xf32>
    %475 = arith.addf %458, %474 : vector<2x16x16xf32>
    %c131 = arith.constant 131 : index
    %476 = memref.load %arg3[%c131] : memref<144xf32, #tpu.memory_space<smem>>
    %477 = vector.broadcast %476 : f32 to vector<2x16x16xf32>
    %478 = arith.mulf %477, %463 : vector<2x16x16xf32>
    %479 = arith.addf %462, %478 : vector<2x16x16xf32>
    %480 = vector.extract_strided_slice %47 {offsets = [0, 2, 0], sizes = [2, 16, 16], strides = [1, 1, 1]} : vector<2x18x18xf32> to vector<2x16x16xf32>
    %c24 = arith.constant 24 : index
    %481 = memref.load %arg3[%c24] : memref<144xf32, #tpu.memory_space<smem>>
    %482 = vector.broadcast %481 : f32 to vector<2x16x16xf32>
    %483 = arith.mulf %482, %480 : vector<2x16x16xf32>
    %484 = arith.addf %467, %483 : vector<2x16x16xf32>
    %c60 = arith.constant 60 : index
    %485 = memref.load %arg3[%c60] : memref<144xf32, #tpu.memory_space<smem>>
    %486 = vector.broadcast %485 : f32 to vector<2x16x16xf32>
    %487 = arith.mulf %486, %480 : vector<2x16x16xf32>
    %488 = arith.addf %471, %487 : vector<2x16x16xf32>
    %c96 = arith.constant 96 : index
    %489 = memref.load %arg3[%c96] : memref<144xf32, #tpu.memory_space<smem>>
    %490 = vector.broadcast %489 : f32 to vector<2x16x16xf32>
    %491 = arith.mulf %490, %480 : vector<2x16x16xf32>
    %492 = arith.addf %475, %491 : vector<2x16x16xf32>
    %c132 = arith.constant 132 : index
    %493 = memref.load %arg3[%c132] : memref<144xf32, #tpu.memory_space<smem>>
    %494 = vector.broadcast %493 : f32 to vector<2x16x16xf32>
    %495 = arith.mulf %494, %480 : vector<2x16x16xf32>
    %496 = arith.addf %479, %495 : vector<2x16x16xf32>
    %497 = vector.extract_strided_slice %47 {offsets = [0, 2, 1], sizes = [2, 16, 16], strides = [1, 1, 1]} : vector<2x18x18xf32> to vector<2x16x16xf32>
    %c25 = arith.constant 25 : index
    %498 = memref.load %arg3[%c25] : memref<144xf32, #tpu.memory_space<smem>>
    %499 = vector.broadcast %498 : f32 to vector<2x16x16xf32>
    %500 = arith.mulf %499, %497 : vector<2x16x16xf32>
    %501 = arith.addf %484, %500 : vector<2x16x16xf32>
    %c61 = arith.constant 61 : index
    %502 = memref.load %arg3[%c61] : memref<144xf32, #tpu.memory_space<smem>>
    %503 = vector.broadcast %502 : f32 to vector<2x16x16xf32>
    %504 = arith.mulf %503, %497 : vector<2x16x16xf32>
    %505 = arith.addf %488, %504 : vector<2x16x16xf32>
    %c97 = arith.constant 97 : index
    %506 = memref.load %arg3[%c97] : memref<144xf32, #tpu.memory_space<smem>>
    %507 = vector.broadcast %506 : f32 to vector<2x16x16xf32>
    %508 = arith.mulf %507, %497 : vector<2x16x16xf32>
    %509 = arith.addf %492, %508 : vector<2x16x16xf32>
    %c133 = arith.constant 133 : index
    %510 = memref.load %arg3[%c133] : memref<144xf32, #tpu.memory_space<smem>>
    %511 = vector.broadcast %510 : f32 to vector<2x16x16xf32>
    %512 = arith.mulf %511, %497 : vector<2x16x16xf32>
    %513 = arith.addf %496, %512 : vector<2x16x16xf32>
    %514 = vector.extract_strided_slice %47 {offsets = [0, 2, 2], sizes = [2, 16, 16], strides = [1, 1, 1]} : vector<2x18x18xf32> to vector<2x16x16xf32>
    %c26 = arith.constant 26 : index
    %515 = memref.load %arg3[%c26] : memref<144xf32, #tpu.memory_space<smem>>
    %516 = vector.broadcast %515 : f32 to vector<2x16x16xf32>
    %517 = arith.mulf %516, %514 : vector<2x16x16xf32>
    %518 = arith.addf %501, %517 : vector<2x16x16xf32>
    %c62 = arith.constant 62 : index
    %519 = memref.load %arg3[%c62] : memref<144xf32, #tpu.memory_space<smem>>
    %520 = vector.broadcast %519 : f32 to vector<2x16x16xf32>
    %521 = arith.mulf %520, %514 : vector<2x16x16xf32>
    %522 = arith.addf %505, %521 : vector<2x16x16xf32>
    %c98 = arith.constant 98 : index
    %523 = memref.load %arg3[%c98] : memref<144xf32, #tpu.memory_space<smem>>
    %524 = vector.broadcast %523 : f32 to vector<2x16x16xf32>
    %525 = arith.mulf %524, %514 : vector<2x16x16xf32>
    %526 = arith.addf %509, %525 : vector<2x16x16xf32>
    %c134 = arith.constant 134 : index
    %527 = memref.load %arg3[%c134] : memref<144xf32, #tpu.memory_space<smem>>
    %528 = vector.broadcast %527 : f32 to vector<2x16x16xf32>
    %529 = arith.mulf %528, %514 : vector<2x16x16xf32>
    %530 = arith.addf %513, %529 : vector<2x16x16xf32>
    %531 = vector.extract_strided_slice %63 {offsets = [0, 0, 0], sizes = [2, 16, 16], strides = [1, 1, 1]} : vector<2x18x18xf32> to vector<2x16x16xf32>
    %c27 = arith.constant 27 : index
    %532 = memref.load %arg3[%c27] : memref<144xf32, #tpu.memory_space<smem>>
    %533 = vector.broadcast %532 : f32 to vector<2x16x16xf32>
    %534 = arith.mulf %533, %531 : vector<2x16x16xf32>
    %535 = arith.addf %518, %534 : vector<2x16x16xf32>
    %c63 = arith.constant 63 : index
    %536 = memref.load %arg3[%c63] : memref<144xf32, #tpu.memory_space<smem>>
    %537 = vector.broadcast %536 : f32 to vector<2x16x16xf32>
    %538 = arith.mulf %537, %531 : vector<2x16x16xf32>
    %539 = arith.addf %522, %538 : vector<2x16x16xf32>
    %c99 = arith.constant 99 : index
    %540 = memref.load %arg3[%c99] : memref<144xf32, #tpu.memory_space<smem>>
    %541 = vector.broadcast %540 : f32 to vector<2x16x16xf32>
    %542 = arith.mulf %541, %531 : vector<2x16x16xf32>
    %543 = arith.addf %526, %542 : vector<2x16x16xf32>
    %c135 = arith.constant 135 : index
    %544 = memref.load %arg3[%c135] : memref<144xf32, #tpu.memory_space<smem>>
    %545 = vector.broadcast %544 : f32 to vector<2x16x16xf32>
    %546 = arith.mulf %545, %531 : vector<2x16x16xf32>
    %547 = arith.addf %530, %546 : vector<2x16x16xf32>
    %548 = vector.extract_strided_slice %63 {offsets = [0, 0, 1], sizes = [2, 16, 16], strides = [1, 1, 1]} : vector<2x18x18xf32> to vector<2x16x16xf32>
    %c28 = arith.constant 28 : index
    %549 = memref.load %arg3[%c28] : memref<144xf32, #tpu.memory_space<smem>>
    %550 = vector.broadcast %549 : f32 to vector<2x16x16xf32>
    %551 = arith.mulf %550, %548 : vector<2x16x16xf32>
    %552 = arith.addf %535, %551 : vector<2x16x16xf32>
    %c64 = arith.constant 64 : index
    %553 = memref.load %arg3[%c64] : memref<144xf32, #tpu.memory_space<smem>>
    %554 = vector.broadcast %553 : f32 to vector<2x16x16xf32>
    %555 = arith.mulf %554, %548 : vector<2x16x16xf32>
    %556 = arith.addf %539, %555 : vector<2x16x16xf32>
    %c100 = arith.constant 100 : index
    %557 = memref.load %arg3[%c100] : memref<144xf32, #tpu.memory_space<smem>>
    %558 = vector.broadcast %557 : f32 to vector<2x16x16xf32>
    %559 = arith.mulf %558, %548 : vector<2x16x16xf32>
    %560 = arith.addf %543, %559 : vector<2x16x16xf32>
    %c136 = arith.constant 136 : index
    %561 = memref.load %arg3[%c136] : memref<144xf32, #tpu.memory_space<smem>>
    %562 = vector.broadcast %561 : f32 to vector<2x16x16xf32>
    %563 = arith.mulf %562, %548 : vector<2x16x16xf32>
    %564 = arith.addf %547, %563 : vector<2x16x16xf32>
    %565 = vector.extract_strided_slice %63 {offsets = [0, 0, 2], sizes = [2, 16, 16], strides = [1, 1, 1]} : vector<2x18x18xf32> to vector<2x16x16xf32>
    %c29 = arith.constant 29 : index
    %566 = memref.load %arg3[%c29] : memref<144xf32, #tpu.memory_space<smem>>
    %567 = vector.broadcast %566 : f32 to vector<2x16x16xf32>
    %568 = arith.mulf %567, %565 : vector<2x16x16xf32>
    %569 = arith.addf %552, %568 : vector<2x16x16xf32>
    %c65 = arith.constant 65 : index
    %570 = memref.load %arg3[%c65] : memref<144xf32, #tpu.memory_space<smem>>
    %571 = vector.broadcast %570 : f32 to vector<2x16x16xf32>
    %572 = arith.mulf %571, %565 : vector<2x16x16xf32>
    %573 = arith.addf %556, %572 : vector<2x16x16xf32>
    %c101 = arith.constant 101 : index
    %574 = memref.load %arg3[%c101] : memref<144xf32, #tpu.memory_space<smem>>
    %575 = vector.broadcast %574 : f32 to vector<2x16x16xf32>
    %576 = arith.mulf %575, %565 : vector<2x16x16xf32>
    %577 = arith.addf %560, %576 : vector<2x16x16xf32>
    %c137 = arith.constant 137 : index
    %578 = memref.load %arg3[%c137] : memref<144xf32, #tpu.memory_space<smem>>
    %579 = vector.broadcast %578 : f32 to vector<2x16x16xf32>
    %580 = arith.mulf %579, %565 : vector<2x16x16xf32>
    %581 = arith.addf %564, %580 : vector<2x16x16xf32>
    %582 = vector.extract_strided_slice %63 {offsets = [0, 1, 0], sizes = [2, 16, 16], strides = [1, 1, 1]} : vector<2x18x18xf32> to vector<2x16x16xf32>
    %c30 = arith.constant 30 : index
    %583 = memref.load %arg3[%c30] : memref<144xf32, #tpu.memory_space<smem>>
    %584 = vector.broadcast %583 : f32 to vector<2x16x16xf32>
    %585 = arith.mulf %584, %582 : vector<2x16x16xf32>
    %586 = arith.addf %569, %585 : vector<2x16x16xf32>
    %c66 = arith.constant 66 : index
    %587 = memref.load %arg3[%c66] : memref<144xf32, #tpu.memory_space<smem>>
    %588 = vector.broadcast %587 : f32 to vector<2x16x16xf32>
    %589 = arith.mulf %588, %582 : vector<2x16x16xf32>
    %590 = arith.addf %573, %589 : vector<2x16x16xf32>
    %c102 = arith.constant 102 : index
    %591 = memref.load %arg3[%c102] : memref<144xf32, #tpu.memory_space<smem>>
    %592 = vector.broadcast %591 : f32 to vector<2x16x16xf32>
    %593 = arith.mulf %592, %582 : vector<2x16x16xf32>
    %594 = arith.addf %577, %593 : vector<2x16x16xf32>
    %c138 = arith.constant 138 : index
    %595 = memref.load %arg3[%c138] : memref<144xf32, #tpu.memory_space<smem>>
    %596 = vector.broadcast %595 : f32 to vector<2x16x16xf32>
    %597 = arith.mulf %596, %582 : vector<2x16x16xf32>
    %598 = arith.addf %581, %597 : vector<2x16x16xf32>
    %599 = vector.extract_strided_slice %63 {offsets = [0, 1, 1], sizes = [2, 16, 16], strides = [1, 1, 1]} : vector<2x18x18xf32> to vector<2x16x16xf32>
    %c31 = arith.constant 31 : index
    %600 = memref.load %arg3[%c31] : memref<144xf32, #tpu.memory_space<smem>>
    %601 = vector.broadcast %600 : f32 to vector<2x16x16xf32>
    %602 = arith.mulf %601, %599 : vector<2x16x16xf32>
    %603 = arith.addf %586, %602 : vector<2x16x16xf32>
    %c67 = arith.constant 67 : index
    %604 = memref.load %arg3[%c67] : memref<144xf32, #tpu.memory_space<smem>>
    %605 = vector.broadcast %604 : f32 to vector<2x16x16xf32>
    %606 = arith.mulf %605, %599 : vector<2x16x16xf32>
    %607 = arith.addf %590, %606 : vector<2x16x16xf32>
    %c103 = arith.constant 103 : index
    %608 = memref.load %arg3[%c103] : memref<144xf32, #tpu.memory_space<smem>>
    %609 = vector.broadcast %608 : f32 to vector<2x16x16xf32>
    %610 = arith.mulf %609, %599 : vector<2x16x16xf32>
    %611 = arith.addf %594, %610 : vector<2x16x16xf32>
    %c139 = arith.constant 139 : index
    %612 = memref.load %arg3[%c139] : memref<144xf32, #tpu.memory_space<smem>>
    %613 = vector.broadcast %612 : f32 to vector<2x16x16xf32>
    %614 = arith.mulf %613, %599 : vector<2x16x16xf32>
    %615 = arith.addf %598, %614 : vector<2x16x16xf32>
    %616 = vector.extract_strided_slice %63 {offsets = [0, 1, 2], sizes = [2, 16, 16], strides = [1, 1, 1]} : vector<2x18x18xf32> to vector<2x16x16xf32>
    %c32 = arith.constant 32 : index
    %617 = memref.load %arg3[%c32] : memref<144xf32, #tpu.memory_space<smem>>
    %618 = vector.broadcast %617 : f32 to vector<2x16x16xf32>
    %619 = arith.mulf %618, %616 : vector<2x16x16xf32>
    %620 = arith.addf %603, %619 : vector<2x16x16xf32>
    %c68 = arith.constant 68 : index
    %621 = memref.load %arg3[%c68] : memref<144xf32, #tpu.memory_space<smem>>
    %622 = vector.broadcast %621 : f32 to vector<2x16x16xf32>
    %623 = arith.mulf %622, %616 : vector<2x16x16xf32>
    %624 = arith.addf %607, %623 : vector<2x16x16xf32>
    %c104 = arith.constant 104 : index
    %625 = memref.load %arg3[%c104] : memref<144xf32, #tpu.memory_space<smem>>
    %626 = vector.broadcast %625 : f32 to vector<2x16x16xf32>
    %627 = arith.mulf %626, %616 : vector<2x16x16xf32>
    %628 = arith.addf %611, %627 : vector<2x16x16xf32>
    %c140 = arith.constant 140 : index
    %629 = memref.load %arg3[%c140] : memref<144xf32, #tpu.memory_space<smem>>
    %630 = vector.broadcast %629 : f32 to vector<2x16x16xf32>
    %631 = arith.mulf %630, %616 : vector<2x16x16xf32>
    %632 = arith.addf %615, %631 : vector<2x16x16xf32>
    %633 = vector.extract_strided_slice %63 {offsets = [0, 2, 0], sizes = [2, 16, 16], strides = [1, 1, 1]} : vector<2x18x18xf32> to vector<2x16x16xf32>
    %c33 = arith.constant 33 : index
    %634 = memref.load %arg3[%c33] : memref<144xf32, #tpu.memory_space<smem>>
    %635 = vector.broadcast %634 : f32 to vector<2x16x16xf32>
    %636 = arith.mulf %635, %633 : vector<2x16x16xf32>
    %637 = arith.addf %620, %636 : vector<2x16x16xf32>
    %c69 = arith.constant 69 : index
    %638 = memref.load %arg3[%c69] : memref<144xf32, #tpu.memory_space<smem>>
    %639 = vector.broadcast %638 : f32 to vector<2x16x16xf32>
    %640 = arith.mulf %639, %633 : vector<2x16x16xf32>
    %641 = arith.addf %624, %640 : vector<2x16x16xf32>
    %c105 = arith.constant 105 : index
    %642 = memref.load %arg3[%c105] : memref<144xf32, #tpu.memory_space<smem>>
    %643 = vector.broadcast %642 : f32 to vector<2x16x16xf32>
    %644 = arith.mulf %643, %633 : vector<2x16x16xf32>
    %645 = arith.addf %628, %644 : vector<2x16x16xf32>
    %c141 = arith.constant 141 : index
    %646 = memref.load %arg3[%c141] : memref<144xf32, #tpu.memory_space<smem>>
    %647 = vector.broadcast %646 : f32 to vector<2x16x16xf32>
    %648 = arith.mulf %647, %633 : vector<2x16x16xf32>
    %649 = arith.addf %632, %648 : vector<2x16x16xf32>
    %650 = vector.extract_strided_slice %63 {offsets = [0, 2, 1], sizes = [2, 16, 16], strides = [1, 1, 1]} : vector<2x18x18xf32> to vector<2x16x16xf32>
    %c34 = arith.constant 34 : index
    %651 = memref.load %arg3[%c34] : memref<144xf32, #tpu.memory_space<smem>>
    %652 = vector.broadcast %651 : f32 to vector<2x16x16xf32>
    %653 = arith.mulf %652, %650 : vector<2x16x16xf32>
    %654 = arith.addf %637, %653 : vector<2x16x16xf32>
    %c70 = arith.constant 70 : index
    %655 = memref.load %arg3[%c70] : memref<144xf32, #tpu.memory_space<smem>>
    %656 = vector.broadcast %655 : f32 to vector<2x16x16xf32>
    %657 = arith.mulf %656, %650 : vector<2x16x16xf32>
    %658 = arith.addf %641, %657 : vector<2x16x16xf32>
    %c106 = arith.constant 106 : index
    %659 = memref.load %arg3[%c106] : memref<144xf32, #tpu.memory_space<smem>>
    %660 = vector.broadcast %659 : f32 to vector<2x16x16xf32>
    %661 = arith.mulf %660, %650 : vector<2x16x16xf32>
    %662 = arith.addf %645, %661 : vector<2x16x16xf32>
    %c142 = arith.constant 142 : index
    %663 = memref.load %arg3[%c142] : memref<144xf32, #tpu.memory_space<smem>>
    %664 = vector.broadcast %663 : f32 to vector<2x16x16xf32>
    %665 = arith.mulf %664, %650 : vector<2x16x16xf32>
    %666 = arith.addf %649, %665 : vector<2x16x16xf32>
    %667 = vector.extract_strided_slice %63 {offsets = [0, 2, 2], sizes = [2, 16, 16], strides = [1, 1, 1]} : vector<2x18x18xf32> to vector<2x16x16xf32>
    %c35 = arith.constant 35 : index
    %668 = memref.load %arg3[%c35] : memref<144xf32, #tpu.memory_space<smem>>
    %669 = vector.broadcast %668 : f32 to vector<2x16x16xf32>
    %670 = arith.mulf %669, %667 : vector<2x16x16xf32>
    %671 = arith.addf %654, %670 : vector<2x16x16xf32>
    %c71 = arith.constant 71 : index
    %672 = memref.load %arg3[%c71] : memref<144xf32, #tpu.memory_space<smem>>
    %673 = vector.broadcast %672 : f32 to vector<2x16x16xf32>
    %674 = arith.mulf %673, %667 : vector<2x16x16xf32>
    %675 = arith.addf %658, %674 : vector<2x16x16xf32>
    %c107 = arith.constant 107 : index
    %676 = memref.load %arg3[%c107] : memref<144xf32, #tpu.memory_space<smem>>
    %677 = vector.broadcast %676 : f32 to vector<2x16x16xf32>
    %678 = arith.mulf %677, %667 : vector<2x16x16xf32>
    %679 = arith.addf %662, %678 : vector<2x16x16xf32>
    %c143 = arith.constant 143 : index
    %680 = memref.load %arg3[%c143] : memref<144xf32, #tpu.memory_space<smem>>
    %681 = vector.broadcast %680 : f32 to vector<2x16x16xf32>
    %682 = arith.mulf %681, %667 : vector<2x16x16xf32>
    %683 = arith.addf %666, %682 : vector<2x16x16xf32>
    %c0_31 = arith.constant 0 : index
    %684 = memref.load %arg5[%c0_31] : memref<4xf32, #tpu.memory_space<smem>>
    %685 = vector.broadcast %684 : f32 to vector<2x16x16xf32>
    %686 = arith.mulf %671, %685 : vector<2x16x16xf32>
    %c0_32 = arith.constant 0 : index
    %687 = memref.load %arg6[%c0_32] : memref<4xf32, #tpu.memory_space<smem>>
    %688 = vector.broadcast %687 : f32 to vector<2x16x16xf32>
    %689 = arith.addf %686, %688 : vector<2x16x16xf32>
    %cst_33 = arith.constant 0.000000e+00 : f32
    %690 = vector.broadcast %cst_33 : f32 to vector<2x16x16xf32>
    %691 = arith.maximumf %689, %690 : vector<2x16x16xf32>
    %692 = vector.extract_strided_slice %691 {offsets = [0, 1, 0], sizes = [2, 1, 16], strides = [1, 1, 1]} : vector<2x16x16xf32> to vector<2x1x16xf32>
    %693 = vector.extract_strided_slice %691 {offsets = [0, 14, 0], sizes = [2, 1, 16], strides = [1, 1, 1]} : vector<2x16x16xf32> to vector<2x1x16xf32>
    %694 = tpu.concatenate %692, %691, %693 in 1 : vector<2x1x16xf32>, vector<2x16x16xf32>, vector<2x1x16xf32> -> vector<2x18x16xf32>
    %695 = vector.extract_strided_slice %694 {offsets = [0, 0, 1], sizes = [2, 18, 1], strides = [1, 1, 1]} : vector<2x18x16xf32> to vector<2x18x1xf32>
    %696 = vector.extract_strided_slice %694 {offsets = [0, 0, 14], sizes = [2, 18, 1], strides = [1, 1, 1]} : vector<2x18x16xf32> to vector<2x18x1xf32>
    %697 = tpu.concatenate %695, %694, %696 in 2 : vector<2x18x1xf32>, vector<2x18x16xf32>, vector<2x18x1xf32> -> vector<2x18x18xf32>
    %c1_34 = arith.constant 1 : index
    %698 = memref.load %arg5[%c1_34] : memref<4xf32, #tpu.memory_space<smem>>
    %699 = vector.broadcast %698 : f32 to vector<2x16x16xf32>
    %700 = arith.mulf %675, %699 : vector<2x16x16xf32>
    %c1_35 = arith.constant 1 : index
    %701 = memref.load %arg6[%c1_35] : memref<4xf32, #tpu.memory_space<smem>>
    %702 = vector.broadcast %701 : f32 to vector<2x16x16xf32>
    %703 = arith.addf %700, %702 : vector<2x16x16xf32>
    %cst_36 = arith.constant 0.000000e+00 : f32
    %704 = vector.broadcast %cst_36 : f32 to vector<2x16x16xf32>
    %705 = arith.maximumf %703, %704 : vector<2x16x16xf32>
    %706 = vector.extract_strided_slice %705 {offsets = [0, 1, 0], sizes = [2, 1, 16], strides = [1, 1, 1]} : vector<2x16x16xf32> to vector<2x1x16xf32>
    %707 = vector.extract_strided_slice %705 {offsets = [0, 14, 0], sizes = [2, 1, 16], strides = [1, 1, 1]} : vector<2x16x16xf32> to vector<2x1x16xf32>
    %708 = tpu.concatenate %706, %705, %707 in 1 : vector<2x1x16xf32>, vector<2x16x16xf32>, vector<2x1x16xf32> -> vector<2x18x16xf32>
    %709 = vector.extract_strided_slice %708 {offsets = [0, 0, 1], sizes = [2, 18, 1], strides = [1, 1, 1]} : vector<2x18x16xf32> to vector<2x18x1xf32>
    %710 = vector.extract_strided_slice %708 {offsets = [0, 0, 14], sizes = [2, 18, 1], strides = [1, 1, 1]} : vector<2x18x16xf32> to vector<2x18x1xf32>
    %711 = tpu.concatenate %709, %708, %710 in 2 : vector<2x18x1xf32>, vector<2x18x16xf32>, vector<2x18x1xf32> -> vector<2x18x18xf32>
    %c2_37 = arith.constant 2 : index
    %712 = memref.load %arg5[%c2_37] : memref<4xf32, #tpu.memory_space<smem>>
    %713 = vector.broadcast %712 : f32 to vector<2x16x16xf32>
    %714 = arith.mulf %679, %713 : vector<2x16x16xf32>
    %c2_38 = arith.constant 2 : index
    %715 = memref.load %arg6[%c2_38] : memref<4xf32, #tpu.memory_space<smem>>
    %716 = vector.broadcast %715 : f32 to vector<2x16x16xf32>
    %717 = arith.addf %714, %716 : vector<2x16x16xf32>
    %cst_39 = arith.constant 0.000000e+00 : f32
    %718 = vector.broadcast %cst_39 : f32 to vector<2x16x16xf32>
    %719 = arith.maximumf %717, %718 : vector<2x16x16xf32>
    %720 = vector.extract_strided_slice %719 {offsets = [0, 1, 0], sizes = [2, 1, 16], strides = [1, 1, 1]} : vector<2x16x16xf32> to vector<2x1x16xf32>
    %721 = vector.extract_strided_slice %719 {offsets = [0, 14, 0], sizes = [2, 1, 16], strides = [1, 1, 1]} : vector<2x16x16xf32> to vector<2x1x16xf32>
    %722 = tpu.concatenate %720, %719, %721 in 1 : vector<2x1x16xf32>, vector<2x16x16xf32>, vector<2x1x16xf32> -> vector<2x18x16xf32>
    %723 = vector.extract_strided_slice %722 {offsets = [0, 0, 1], sizes = [2, 18, 1], strides = [1, 1, 1]} : vector<2x18x16xf32> to vector<2x18x1xf32>
    %724 = vector.extract_strided_slice %722 {offsets = [0, 0, 14], sizes = [2, 18, 1], strides = [1, 1, 1]} : vector<2x18x16xf32> to vector<2x18x1xf32>
    %725 = tpu.concatenate %723, %722, %724 in 2 : vector<2x18x1xf32>, vector<2x18x16xf32>, vector<2x18x1xf32> -> vector<2x18x18xf32>
    %c3_40 = arith.constant 3 : index
    %726 = memref.load %arg5[%c3_40] : memref<4xf32, #tpu.memory_space<smem>>
    %727 = vector.broadcast %726 : f32 to vector<2x16x16xf32>
    %728 = arith.mulf %683, %727 : vector<2x16x16xf32>
    %c3_41 = arith.constant 3 : index
    %729 = memref.load %arg6[%c3_41] : memref<4xf32, #tpu.memory_space<smem>>
    %730 = vector.broadcast %729 : f32 to vector<2x16x16xf32>
    %731 = arith.addf %728, %730 : vector<2x16x16xf32>
    %cst_42 = arith.constant 0.000000e+00 : f32
    %732 = vector.broadcast %cst_42 : f32 to vector<2x16x16xf32>
    %733 = arith.maximumf %731, %732 : vector<2x16x16xf32>
    %734 = vector.extract_strided_slice %733 {offsets = [0, 1, 0], sizes = [2, 1, 16], strides = [1, 1, 1]} : vector<2x16x16xf32> to vector<2x1x16xf32>
    %735 = vector.extract_strided_slice %733 {offsets = [0, 14, 0], sizes = [2, 1, 16], strides = [1, 1, 1]} : vector<2x16x16xf32> to vector<2x1x16xf32>
    %736 = tpu.concatenate %734, %733, %735 in 1 : vector<2x1x16xf32>, vector<2x16x16xf32>, vector<2x1x16xf32> -> vector<2x18x16xf32>
    %737 = vector.extract_strided_slice %736 {offsets = [0, 0, 1], sizes = [2, 18, 1], strides = [1, 1, 1]} : vector<2x18x16xf32> to vector<2x18x1xf32>
    %738 = vector.extract_strided_slice %736 {offsets = [0, 0, 14], sizes = [2, 18, 1], strides = [1, 1, 1]} : vector<2x18x16xf32> to vector<2x18x1xf32>
    %739 = tpu.concatenate %737, %736, %738 in 2 : vector<2x18x1xf32>, vector<2x18x16xf32>, vector<2x18x1xf32> -> vector<2x18x18xf32>
    %c0_43 = arith.constant 0 : index
    %740 = memref.load %arg8[%c0_43] : memref<4xf32, #tpu.memory_space<smem>>
    %741 = vector.broadcast %740 : f32 to vector<2x16x16xf32>
    %c1_44 = arith.constant 1 : index
    %742 = memref.load %arg8[%c1_44] : memref<4xf32, #tpu.memory_space<smem>>
    %743 = vector.broadcast %742 : f32 to vector<2x16x16xf32>
    %c2_45 = arith.constant 2 : index
    %744 = memref.load %arg8[%c2_45] : memref<4xf32, #tpu.memory_space<smem>>
    %745 = vector.broadcast %744 : f32 to vector<2x16x16xf32>
    %c3_46 = arith.constant 3 : index
    %746 = memref.load %arg8[%c3_46] : memref<4xf32, #tpu.memory_space<smem>>
    %747 = vector.broadcast %746 : f32 to vector<2x16x16xf32>
    %748 = vector.extract_strided_slice %697 {offsets = [0, 0, 0], sizes = [2, 16, 16], strides = [1, 1, 1]} : vector<2x18x18xf32> to vector<2x16x16xf32>
    %c0_47 = arith.constant 0 : index
    %749 = memref.load %arg7[%c0_47] : memref<144xf32, #tpu.memory_space<smem>>
    %750 = vector.broadcast %749 : f32 to vector<2x16x16xf32>
    %751 = arith.mulf %750, %748 : vector<2x16x16xf32>
    %752 = arith.addf %741, %751 : vector<2x16x16xf32>
    %c36_48 = arith.constant 36 : index
    %753 = memref.load %arg7[%c36_48] : memref<144xf32, #tpu.memory_space<smem>>
    %754 = vector.broadcast %753 : f32 to vector<2x16x16xf32>
    %755 = arith.mulf %754, %748 : vector<2x16x16xf32>
    %756 = arith.addf %743, %755 : vector<2x16x16xf32>
    %c72_49 = arith.constant 72 : index
    %757 = memref.load %arg7[%c72_49] : memref<144xf32, #tpu.memory_space<smem>>
    %758 = vector.broadcast %757 : f32 to vector<2x16x16xf32>
    %759 = arith.mulf %758, %748 : vector<2x16x16xf32>
    %760 = arith.addf %745, %759 : vector<2x16x16xf32>
    %c108_50 = arith.constant 108 : index
    %761 = memref.load %arg7[%c108_50] : memref<144xf32, #tpu.memory_space<smem>>
    %762 = vector.broadcast %761 : f32 to vector<2x16x16xf32>
    %763 = arith.mulf %762, %748 : vector<2x16x16xf32>
    %764 = arith.addf %747, %763 : vector<2x16x16xf32>
    %765 = vector.extract_strided_slice %697 {offsets = [0, 0, 1], sizes = [2, 16, 16], strides = [1, 1, 1]} : vector<2x18x18xf32> to vector<2x16x16xf32>
    %c1_51 = arith.constant 1 : index
    %766 = memref.load %arg7[%c1_51] : memref<144xf32, #tpu.memory_space<smem>>
    %767 = vector.broadcast %766 : f32 to vector<2x16x16xf32>
    %768 = arith.mulf %767, %765 : vector<2x16x16xf32>
    %769 = arith.addf %752, %768 : vector<2x16x16xf32>
    %c37_52 = arith.constant 37 : index
    %770 = memref.load %arg7[%c37_52] : memref<144xf32, #tpu.memory_space<smem>>
    %771 = vector.broadcast %770 : f32 to vector<2x16x16xf32>
    %772 = arith.mulf %771, %765 : vector<2x16x16xf32>
    %773 = arith.addf %756, %772 : vector<2x16x16xf32>
    %c73_53 = arith.constant 73 : index
    %774 = memref.load %arg7[%c73_53] : memref<144xf32, #tpu.memory_space<smem>>
    %775 = vector.broadcast %774 : f32 to vector<2x16x16xf32>
    %776 = arith.mulf %775, %765 : vector<2x16x16xf32>
    %777 = arith.addf %760, %776 : vector<2x16x16xf32>
    %c109_54 = arith.constant 109 : index
    %778 = memref.load %arg7[%c109_54] : memref<144xf32, #tpu.memory_space<smem>>
    %779 = vector.broadcast %778 : f32 to vector<2x16x16xf32>
    %780 = arith.mulf %779, %765 : vector<2x16x16xf32>
    %781 = arith.addf %764, %780 : vector<2x16x16xf32>
    %782 = vector.extract_strided_slice %697 {offsets = [0, 0, 2], sizes = [2, 16, 16], strides = [1, 1, 1]} : vector<2x18x18xf32> to vector<2x16x16xf32>
    %c2_55 = arith.constant 2 : index
    %783 = memref.load %arg7[%c2_55] : memref<144xf32, #tpu.memory_space<smem>>
    %784 = vector.broadcast %783 : f32 to vector<2x16x16xf32>
    %785 = arith.mulf %784, %782 : vector<2x16x16xf32>
    %786 = arith.addf %769, %785 : vector<2x16x16xf32>
    %c38_56 = arith.constant 38 : index
    %787 = memref.load %arg7[%c38_56] : memref<144xf32, #tpu.memory_space<smem>>
    %788 = vector.broadcast %787 : f32 to vector<2x16x16xf32>
    %789 = arith.mulf %788, %782 : vector<2x16x16xf32>
    %790 = arith.addf %773, %789 : vector<2x16x16xf32>
    %c74_57 = arith.constant 74 : index
    %791 = memref.load %arg7[%c74_57] : memref<144xf32, #tpu.memory_space<smem>>
    %792 = vector.broadcast %791 : f32 to vector<2x16x16xf32>
    %793 = arith.mulf %792, %782 : vector<2x16x16xf32>
    %794 = arith.addf %777, %793 : vector<2x16x16xf32>
    %c110_58 = arith.constant 110 : index
    %795 = memref.load %arg7[%c110_58] : memref<144xf32, #tpu.memory_space<smem>>
    %796 = vector.broadcast %795 : f32 to vector<2x16x16xf32>
    %797 = arith.mulf %796, %782 : vector<2x16x16xf32>
    %798 = arith.addf %781, %797 : vector<2x16x16xf32>
    %799 = vector.extract_strided_slice %697 {offsets = [0, 1, 0], sizes = [2, 16, 16], strides = [1, 1, 1]} : vector<2x18x18xf32> to vector<2x16x16xf32>
    %c3_59 = arith.constant 3 : index
    %800 = memref.load %arg7[%c3_59] : memref<144xf32, #tpu.memory_space<smem>>
    %801 = vector.broadcast %800 : f32 to vector<2x16x16xf32>
    %802 = arith.mulf %801, %799 : vector<2x16x16xf32>
    %803 = arith.addf %786, %802 : vector<2x16x16xf32>
    %c39_60 = arith.constant 39 : index
    %804 = memref.load %arg7[%c39_60] : memref<144xf32, #tpu.memory_space<smem>>
    %805 = vector.broadcast %804 : f32 to vector<2x16x16xf32>
    %806 = arith.mulf %805, %799 : vector<2x16x16xf32>
    %807 = arith.addf %790, %806 : vector<2x16x16xf32>
    %c75_61 = arith.constant 75 : index
    %808 = memref.load %arg7[%c75_61] : memref<144xf32, #tpu.memory_space<smem>>
    %809 = vector.broadcast %808 : f32 to vector<2x16x16xf32>
    %810 = arith.mulf %809, %799 : vector<2x16x16xf32>
    %811 = arith.addf %794, %810 : vector<2x16x16xf32>
    %c111_62 = arith.constant 111 : index
    %812 = memref.load %arg7[%c111_62] : memref<144xf32, #tpu.memory_space<smem>>
    %813 = vector.broadcast %812 : f32 to vector<2x16x16xf32>
    %814 = arith.mulf %813, %799 : vector<2x16x16xf32>
    %815 = arith.addf %798, %814 : vector<2x16x16xf32>
    %816 = vector.extract_strided_slice %697 {offsets = [0, 1, 1], sizes = [2, 16, 16], strides = [1, 1, 1]} : vector<2x18x18xf32> to vector<2x16x16xf32>
    %c4_63 = arith.constant 4 : index
    %817 = memref.load %arg7[%c4_63] : memref<144xf32, #tpu.memory_space<smem>>
    %818 = vector.broadcast %817 : f32 to vector<2x16x16xf32>
    %819 = arith.mulf %818, %816 : vector<2x16x16xf32>
    %820 = arith.addf %803, %819 : vector<2x16x16xf32>
    %c40_64 = arith.constant 40 : index
    %821 = memref.load %arg7[%c40_64] : memref<144xf32, #tpu.memory_space<smem>>
    %822 = vector.broadcast %821 : f32 to vector<2x16x16xf32>
    %823 = arith.mulf %822, %816 : vector<2x16x16xf32>
    %824 = arith.addf %807, %823 : vector<2x16x16xf32>
    %c76_65 = arith.constant 76 : index
    %825 = memref.load %arg7[%c76_65] : memref<144xf32, #tpu.memory_space<smem>>
    %826 = vector.broadcast %825 : f32 to vector<2x16x16xf32>
    %827 = arith.mulf %826, %816 : vector<2x16x16xf32>
    %828 = arith.addf %811, %827 : vector<2x16x16xf32>
    %c112_66 = arith.constant 112 : index
    %829 = memref.load %arg7[%c112_66] : memref<144xf32, #tpu.memory_space<smem>>
    %830 = vector.broadcast %829 : f32 to vector<2x16x16xf32>
    %831 = arith.mulf %830, %816 : vector<2x16x16xf32>
    %832 = arith.addf %815, %831 : vector<2x16x16xf32>
    %833 = vector.extract_strided_slice %697 {offsets = [0, 1, 2], sizes = [2, 16, 16], strides = [1, 1, 1]} : vector<2x18x18xf32> to vector<2x16x16xf32>
    %c5_67 = arith.constant 5 : index
    %834 = memref.load %arg7[%c5_67] : memref<144xf32, #tpu.memory_space<smem>>
    %835 = vector.broadcast %834 : f32 to vector<2x16x16xf32>
    %836 = arith.mulf %835, %833 : vector<2x16x16xf32>
    %837 = arith.addf %820, %836 : vector<2x16x16xf32>
    %c41_68 = arith.constant 41 : index
    %838 = memref.load %arg7[%c41_68] : memref<144xf32, #tpu.memory_space<smem>>
    %839 = vector.broadcast %838 : f32 to vector<2x16x16xf32>
    %840 = arith.mulf %839, %833 : vector<2x16x16xf32>
    %841 = arith.addf %824, %840 : vector<2x16x16xf32>
    %c77_69 = arith.constant 77 : index
    %842 = memref.load %arg7[%c77_69] : memref<144xf32, #tpu.memory_space<smem>>
    %843 = vector.broadcast %842 : f32 to vector<2x16x16xf32>
    %844 = arith.mulf %843, %833 : vector<2x16x16xf32>
    %845 = arith.addf %828, %844 : vector<2x16x16xf32>
    %c113_70 = arith.constant 113 : index
    %846 = memref.load %arg7[%c113_70] : memref<144xf32, #tpu.memory_space<smem>>
    %847 = vector.broadcast %846 : f32 to vector<2x16x16xf32>
    %848 = arith.mulf %847, %833 : vector<2x16x16xf32>
    %849 = arith.addf %832, %848 : vector<2x16x16xf32>
    %850 = vector.extract_strided_slice %697 {offsets = [0, 2, 0], sizes = [2, 16, 16], strides = [1, 1, 1]} : vector<2x18x18xf32> to vector<2x16x16xf32>
    %c6_71 = arith.constant 6 : index
    %851 = memref.load %arg7[%c6_71] : memref<144xf32, #tpu.memory_space<smem>>
    %852 = vector.broadcast %851 : f32 to vector<2x16x16xf32>
    %853 = arith.mulf %852, %850 : vector<2x16x16xf32>
    %854 = arith.addf %837, %853 : vector<2x16x16xf32>
    %c42_72 = arith.constant 42 : index
    %855 = memref.load %arg7[%c42_72] : memref<144xf32, #tpu.memory_space<smem>>
    %856 = vector.broadcast %855 : f32 to vector<2x16x16xf32>
    %857 = arith.mulf %856, %850 : vector<2x16x16xf32>
    %858 = arith.addf %841, %857 : vector<2x16x16xf32>
    %c78_73 = arith.constant 78 : index
    %859 = memref.load %arg7[%c78_73] : memref<144xf32, #tpu.memory_space<smem>>
    %860 = vector.broadcast %859 : f32 to vector<2x16x16xf32>
    %861 = arith.mulf %860, %850 : vector<2x16x16xf32>
    %862 = arith.addf %845, %861 : vector<2x16x16xf32>
    %c114_74 = arith.constant 114 : index
    %863 = memref.load %arg7[%c114_74] : memref<144xf32, #tpu.memory_space<smem>>
    %864 = vector.broadcast %863 : f32 to vector<2x16x16xf32>
    %865 = arith.mulf %864, %850 : vector<2x16x16xf32>
    %866 = arith.addf %849, %865 : vector<2x16x16xf32>
    %867 = vector.extract_strided_slice %697 {offsets = [0, 2, 1], sizes = [2, 16, 16], strides = [1, 1, 1]} : vector<2x18x18xf32> to vector<2x16x16xf32>
    %c7_75 = arith.constant 7 : index
    %868 = memref.load %arg7[%c7_75] : memref<144xf32, #tpu.memory_space<smem>>
    %869 = vector.broadcast %868 : f32 to vector<2x16x16xf32>
    %870 = arith.mulf %869, %867 : vector<2x16x16xf32>
    %871 = arith.addf %854, %870 : vector<2x16x16xf32>
    %c43_76 = arith.constant 43 : index
    %872 = memref.load %arg7[%c43_76] : memref<144xf32, #tpu.memory_space<smem>>
    %873 = vector.broadcast %872 : f32 to vector<2x16x16xf32>
    %874 = arith.mulf %873, %867 : vector<2x16x16xf32>
    %875 = arith.addf %858, %874 : vector<2x16x16xf32>
    %c79_77 = arith.constant 79 : index
    %876 = memref.load %arg7[%c79_77] : memref<144xf32, #tpu.memory_space<smem>>
    %877 = vector.broadcast %876 : f32 to vector<2x16x16xf32>
    %878 = arith.mulf %877, %867 : vector<2x16x16xf32>
    %879 = arith.addf %862, %878 : vector<2x16x16xf32>
    %c115_78 = arith.constant 115 : index
    %880 = memref.load %arg7[%c115_78] : memref<144xf32, #tpu.memory_space<smem>>
    %881 = vector.broadcast %880 : f32 to vector<2x16x16xf32>
    %882 = arith.mulf %881, %867 : vector<2x16x16xf32>
    %883 = arith.addf %866, %882 : vector<2x16x16xf32>
    %884 = vector.extract_strided_slice %697 {offsets = [0, 2, 2], sizes = [2, 16, 16], strides = [1, 1, 1]} : vector<2x18x18xf32> to vector<2x16x16xf32>
    %c8_79 = arith.constant 8 : index
    %885 = memref.load %arg7[%c8_79] : memref<144xf32, #tpu.memory_space<smem>>
    %886 = vector.broadcast %885 : f32 to vector<2x16x16xf32>
    %887 = arith.mulf %886, %884 : vector<2x16x16xf32>
    %888 = arith.addf %871, %887 : vector<2x16x16xf32>
    %c44_80 = arith.constant 44 : index
    %889 = memref.load %arg7[%c44_80] : memref<144xf32, #tpu.memory_space<smem>>
    %890 = vector.broadcast %889 : f32 to vector<2x16x16xf32>
    %891 = arith.mulf %890, %884 : vector<2x16x16xf32>
    %892 = arith.addf %875, %891 : vector<2x16x16xf32>
    %c80_81 = arith.constant 80 : index
    %893 = memref.load %arg7[%c80_81] : memref<144xf32, #tpu.memory_space<smem>>
    %894 = vector.broadcast %893 : f32 to vector<2x16x16xf32>
    %895 = arith.mulf %894, %884 : vector<2x16x16xf32>
    %896 = arith.addf %879, %895 : vector<2x16x16xf32>
    %c116_82 = arith.constant 116 : index
    %897 = memref.load %arg7[%c116_82] : memref<144xf32, #tpu.memory_space<smem>>
    %898 = vector.broadcast %897 : f32 to vector<2x16x16xf32>
    %899 = arith.mulf %898, %884 : vector<2x16x16xf32>
    %900 = arith.addf %883, %899 : vector<2x16x16xf32>
    %901 = vector.extract_strided_slice %711 {offsets = [0, 0, 0], sizes = [2, 16, 16], strides = [1, 1, 1]} : vector<2x18x18xf32> to vector<2x16x16xf32>
    %c9_83 = arith.constant 9 : index
    %902 = memref.load %arg7[%c9_83] : memref<144xf32, #tpu.memory_space<smem>>
    %903 = vector.broadcast %902 : f32 to vector<2x16x16xf32>
    %904 = arith.mulf %903, %901 : vector<2x16x16xf32>
    %905 = arith.addf %888, %904 : vector<2x16x16xf32>
    %c45_84 = arith.constant 45 : index
    %906 = memref.load %arg7[%c45_84] : memref<144xf32, #tpu.memory_space<smem>>
    %907 = vector.broadcast %906 : f32 to vector<2x16x16xf32>
    %908 = arith.mulf %907, %901 : vector<2x16x16xf32>
    %909 = arith.addf %892, %908 : vector<2x16x16xf32>
    %c81_85 = arith.constant 81 : index
    %910 = memref.load %arg7[%c81_85] : memref<144xf32, #tpu.memory_space<smem>>
    %911 = vector.broadcast %910 : f32 to vector<2x16x16xf32>
    %912 = arith.mulf %911, %901 : vector<2x16x16xf32>
    %913 = arith.addf %896, %912 : vector<2x16x16xf32>
    %c117_86 = arith.constant 117 : index
    %914 = memref.load %arg7[%c117_86] : memref<144xf32, #tpu.memory_space<smem>>
    %915 = vector.broadcast %914 : f32 to vector<2x16x16xf32>
    %916 = arith.mulf %915, %901 : vector<2x16x16xf32>
    %917 = arith.addf %900, %916 : vector<2x16x16xf32>
    %918 = vector.extract_strided_slice %711 {offsets = [0, 0, 1], sizes = [2, 16, 16], strides = [1, 1, 1]} : vector<2x18x18xf32> to vector<2x16x16xf32>
    %c10_87 = arith.constant 10 : index
    %919 = memref.load %arg7[%c10_87] : memref<144xf32, #tpu.memory_space<smem>>
    %920 = vector.broadcast %919 : f32 to vector<2x16x16xf32>
    %921 = arith.mulf %920, %918 : vector<2x16x16xf32>
    %922 = arith.addf %905, %921 : vector<2x16x16xf32>
    %c46_88 = arith.constant 46 : index
    %923 = memref.load %arg7[%c46_88] : memref<144xf32, #tpu.memory_space<smem>>
    %924 = vector.broadcast %923 : f32 to vector<2x16x16xf32>
    %925 = arith.mulf %924, %918 : vector<2x16x16xf32>
    %926 = arith.addf %909, %925 : vector<2x16x16xf32>
    %c82_89 = arith.constant 82 : index
    %927 = memref.load %arg7[%c82_89] : memref<144xf32, #tpu.memory_space<smem>>
    %928 = vector.broadcast %927 : f32 to vector<2x16x16xf32>
    %929 = arith.mulf %928, %918 : vector<2x16x16xf32>
    %930 = arith.addf %913, %929 : vector<2x16x16xf32>
    %c118_90 = arith.constant 118 : index
    %931 = memref.load %arg7[%c118_90] : memref<144xf32, #tpu.memory_space<smem>>
    %932 = vector.broadcast %931 : f32 to vector<2x16x16xf32>
    %933 = arith.mulf %932, %918 : vector<2x16x16xf32>
    %934 = arith.addf %917, %933 : vector<2x16x16xf32>
    %935 = vector.extract_strided_slice %711 {offsets = [0, 0, 2], sizes = [2, 16, 16], strides = [1, 1, 1]} : vector<2x18x18xf32> to vector<2x16x16xf32>
    %c11_91 = arith.constant 11 : index
    %936 = memref.load %arg7[%c11_91] : memref<144xf32, #tpu.memory_space<smem>>
    %937 = vector.broadcast %936 : f32 to vector<2x16x16xf32>
    %938 = arith.mulf %937, %935 : vector<2x16x16xf32>
    %939 = arith.addf %922, %938 : vector<2x16x16xf32>
    %c47_92 = arith.constant 47 : index
    %940 = memref.load %arg7[%c47_92] : memref<144xf32, #tpu.memory_space<smem>>
    %941 = vector.broadcast %940 : f32 to vector<2x16x16xf32>
    %942 = arith.mulf %941, %935 : vector<2x16x16xf32>
    %943 = arith.addf %926, %942 : vector<2x16x16xf32>
    %c83_93 = arith.constant 83 : index
    %944 = memref.load %arg7[%c83_93] : memref<144xf32, #tpu.memory_space<smem>>
    %945 = vector.broadcast %944 : f32 to vector<2x16x16xf32>
    %946 = arith.mulf %945, %935 : vector<2x16x16xf32>
    %947 = arith.addf %930, %946 : vector<2x16x16xf32>
    %c119_94 = arith.constant 119 : index
    %948 = memref.load %arg7[%c119_94] : memref<144xf32, #tpu.memory_space<smem>>
    %949 = vector.broadcast %948 : f32 to vector<2x16x16xf32>
    %950 = arith.mulf %949, %935 : vector<2x16x16xf32>
    %951 = arith.addf %934, %950 : vector<2x16x16xf32>
    %952 = vector.extract_strided_slice %711 {offsets = [0, 1, 0], sizes = [2, 16, 16], strides = [1, 1, 1]} : vector<2x18x18xf32> to vector<2x16x16xf32>
    %c12_95 = arith.constant 12 : index
    %953 = memref.load %arg7[%c12_95] : memref<144xf32, #tpu.memory_space<smem>>
    %954 = vector.broadcast %953 : f32 to vector<2x16x16xf32>
    %955 = arith.mulf %954, %952 : vector<2x16x16xf32>
    %956 = arith.addf %939, %955 : vector<2x16x16xf32>
    %c48_96 = arith.constant 48 : index
    %957 = memref.load %arg7[%c48_96] : memref<144xf32, #tpu.memory_space<smem>>
    %958 = vector.broadcast %957 : f32 to vector<2x16x16xf32>
    %959 = arith.mulf %958, %952 : vector<2x16x16xf32>
    %960 = arith.addf %943, %959 : vector<2x16x16xf32>
    %c84_97 = arith.constant 84 : index
    %961 = memref.load %arg7[%c84_97] : memref<144xf32, #tpu.memory_space<smem>>
    %962 = vector.broadcast %961 : f32 to vector<2x16x16xf32>
    %963 = arith.mulf %962, %952 : vector<2x16x16xf32>
    %964 = arith.addf %947, %963 : vector<2x16x16xf32>
    %c120_98 = arith.constant 120 : index
    %965 = memref.load %arg7[%c120_98] : memref<144xf32, #tpu.memory_space<smem>>
    %966 = vector.broadcast %965 : f32 to vector<2x16x16xf32>
    %967 = arith.mulf %966, %952 : vector<2x16x16xf32>
    %968 = arith.addf %951, %967 : vector<2x16x16xf32>
    %969 = vector.extract_strided_slice %711 {offsets = [0, 1, 1], sizes = [2, 16, 16], strides = [1, 1, 1]} : vector<2x18x18xf32> to vector<2x16x16xf32>
    %c13_99 = arith.constant 13 : index
    %970 = memref.load %arg7[%c13_99] : memref<144xf32, #tpu.memory_space<smem>>
    %971 = vector.broadcast %970 : f32 to vector<2x16x16xf32>
    %972 = arith.mulf %971, %969 : vector<2x16x16xf32>
    %973 = arith.addf %956, %972 : vector<2x16x16xf32>
    %c49_100 = arith.constant 49 : index
    %974 = memref.load %arg7[%c49_100] : memref<144xf32, #tpu.memory_space<smem>>
    %975 = vector.broadcast %974 : f32 to vector<2x16x16xf32>
    %976 = arith.mulf %975, %969 : vector<2x16x16xf32>
    %977 = arith.addf %960, %976 : vector<2x16x16xf32>
    %c85_101 = arith.constant 85 : index
    %978 = memref.load %arg7[%c85_101] : memref<144xf32, #tpu.memory_space<smem>>
    %979 = vector.broadcast %978 : f32 to vector<2x16x16xf32>
    %980 = arith.mulf %979, %969 : vector<2x16x16xf32>
    %981 = arith.addf %964, %980 : vector<2x16x16xf32>
    %c121_102 = arith.constant 121 : index
    %982 = memref.load %arg7[%c121_102] : memref<144xf32, #tpu.memory_space<smem>>
    %983 = vector.broadcast %982 : f32 to vector<2x16x16xf32>
    %984 = arith.mulf %983, %969 : vector<2x16x16xf32>
    %985 = arith.addf %968, %984 : vector<2x16x16xf32>
    %986 = vector.extract_strided_slice %711 {offsets = [0, 1, 2], sizes = [2, 16, 16], strides = [1, 1, 1]} : vector<2x18x18xf32> to vector<2x16x16xf32>
    %c14_103 = arith.constant 14 : index
    %987 = memref.load %arg7[%c14_103] : memref<144xf32, #tpu.memory_space<smem>>
    %988 = vector.broadcast %987 : f32 to vector<2x16x16xf32>
    %989 = arith.mulf %988, %986 : vector<2x16x16xf32>
    %990 = arith.addf %973, %989 : vector<2x16x16xf32>
    %c50_104 = arith.constant 50 : index
    %991 = memref.load %arg7[%c50_104] : memref<144xf32, #tpu.memory_space<smem>>
    %992 = vector.broadcast %991 : f32 to vector<2x16x16xf32>
    %993 = arith.mulf %992, %986 : vector<2x16x16xf32>
    %994 = arith.addf %977, %993 : vector<2x16x16xf32>
    %c86_105 = arith.constant 86 : index
    %995 = memref.load %arg7[%c86_105] : memref<144xf32, #tpu.memory_space<smem>>
    %996 = vector.broadcast %995 : f32 to vector<2x16x16xf32>
    %997 = arith.mulf %996, %986 : vector<2x16x16xf32>
    %998 = arith.addf %981, %997 : vector<2x16x16xf32>
    %c122_106 = arith.constant 122 : index
    %999 = memref.load %arg7[%c122_106] : memref<144xf32, #tpu.memory_space<smem>>
    %1000 = vector.broadcast %999 : f32 to vector<2x16x16xf32>
    %1001 = arith.mulf %1000, %986 : vector<2x16x16xf32>
    %1002 = arith.addf %985, %1001 : vector<2x16x16xf32>
    %1003 = vector.extract_strided_slice %711 {offsets = [0, 2, 0], sizes = [2, 16, 16], strides = [1, 1, 1]} : vector<2x18x18xf32> to vector<2x16x16xf32>
    %c15_107 = arith.constant 15 : index
    %1004 = memref.load %arg7[%c15_107] : memref<144xf32, #tpu.memory_space<smem>>
    %1005 = vector.broadcast %1004 : f32 to vector<2x16x16xf32>
    %1006 = arith.mulf %1005, %1003 : vector<2x16x16xf32>
    %1007 = arith.addf %990, %1006 : vector<2x16x16xf32>
    %c51_108 = arith.constant 51 : index
    %1008 = memref.load %arg7[%c51_108] : memref<144xf32, #tpu.memory_space<smem>>
    %1009 = vector.broadcast %1008 : f32 to vector<2x16x16xf32>
    %1010 = arith.mulf %1009, %1003 : vector<2x16x16xf32>
    %1011 = arith.addf %994, %1010 : vector<2x16x16xf32>
    %c87_109 = arith.constant 87 : index
    %1012 = memref.load %arg7[%c87_109] : memref<144xf32, #tpu.memory_space<smem>>
    %1013 = vector.broadcast %1012 : f32 to vector<2x16x16xf32>
    %1014 = arith.mulf %1013, %1003 : vector<2x16x16xf32>
    %1015 = arith.addf %998, %1014 : vector<2x16x16xf32>
    %c123_110 = arith.constant 123 : index
    %1016 = memref.load %arg7[%c123_110] : memref<144xf32, #tpu.memory_space<smem>>
    %1017 = vector.broadcast %1016 : f32 to vector<2x16x16xf32>
    %1018 = arith.mulf %1017, %1003 : vector<2x16x16xf32>
    %1019 = arith.addf %1002, %1018 : vector<2x16x16xf32>
    %1020 = vector.extract_strided_slice %711 {offsets = [0, 2, 1], sizes = [2, 16, 16], strides = [1, 1, 1]} : vector<2x18x18xf32> to vector<2x16x16xf32>
    %c16_111 = arith.constant 16 : index
    %1021 = memref.load %arg7[%c16_111] : memref<144xf32, #tpu.memory_space<smem>>
    %1022 = vector.broadcast %1021 : f32 to vector<2x16x16xf32>
    %1023 = arith.mulf %1022, %1020 : vector<2x16x16xf32>
    %1024 = arith.addf %1007, %1023 : vector<2x16x16xf32>
    %c52_112 = arith.constant 52 : index
    %1025 = memref.load %arg7[%c52_112] : memref<144xf32, #tpu.memory_space<smem>>
    %1026 = vector.broadcast %1025 : f32 to vector<2x16x16xf32>
    %1027 = arith.mulf %1026, %1020 : vector<2x16x16xf32>
    %1028 = arith.addf %1011, %1027 : vector<2x16x16xf32>
    %c88_113 = arith.constant 88 : index
    %1029 = memref.load %arg7[%c88_113] : memref<144xf32, #tpu.memory_space<smem>>
    %1030 = vector.broadcast %1029 : f32 to vector<2x16x16xf32>
    %1031 = arith.mulf %1030, %1020 : vector<2x16x16xf32>
    %1032 = arith.addf %1015, %1031 : vector<2x16x16xf32>
    %c124_114 = arith.constant 124 : index
    %1033 = memref.load %arg7[%c124_114] : memref<144xf32, #tpu.memory_space<smem>>
    %1034 = vector.broadcast %1033 : f32 to vector<2x16x16xf32>
    %1035 = arith.mulf %1034, %1020 : vector<2x16x16xf32>
    %1036 = arith.addf %1019, %1035 : vector<2x16x16xf32>
    %1037 = vector.extract_strided_slice %711 {offsets = [0, 2, 2], sizes = [2, 16, 16], strides = [1, 1, 1]} : vector<2x18x18xf32> to vector<2x16x16xf32>
    %c17_115 = arith.constant 17 : index
    %1038 = memref.load %arg7[%c17_115] : memref<144xf32, #tpu.memory_space<smem>>
    %1039 = vector.broadcast %1038 : f32 to vector<2x16x16xf32>
    %1040 = arith.mulf %1039, %1037 : vector<2x16x16xf32>
    %1041 = arith.addf %1024, %1040 : vector<2x16x16xf32>
    %c53_116 = arith.constant 53 : index
    %1042 = memref.load %arg7[%c53_116] : memref<144xf32, #tpu.memory_space<smem>>
    %1043 = vector.broadcast %1042 : f32 to vector<2x16x16xf32>
    %1044 = arith.mulf %1043, %1037 : vector<2x16x16xf32>
    %1045 = arith.addf %1028, %1044 : vector<2x16x16xf32>
    %c89_117 = arith.constant 89 : index
    %1046 = memref.load %arg7[%c89_117] : memref<144xf32, #tpu.memory_space<smem>>
    %1047 = vector.broadcast %1046 : f32 to vector<2x16x16xf32>
    %1048 = arith.mulf %1047, %1037 : vector<2x16x16xf32>
    %1049 = arith.addf %1032, %1048 : vector<2x16x16xf32>
    %c125_118 = arith.constant 125 : index
    %1050 = memref.load %arg7[%c125_118] : memref<144xf32, #tpu.memory_space<smem>>
    %1051 = vector.broadcast %1050 : f32 to vector<2x16x16xf32>
    %1052 = arith.mulf %1051, %1037 : vector<2x16x16xf32>
    %1053 = arith.addf %1036, %1052 : vector<2x16x16xf32>
    %1054 = vector.extract_strided_slice %725 {offsets = [0, 0, 0], sizes = [2, 16, 16], strides = [1, 1, 1]} : vector<2x18x18xf32> to vector<2x16x16xf32>
    %c18_119 = arith.constant 18 : index
    %1055 = memref.load %arg7[%c18_119] : memref<144xf32, #tpu.memory_space<smem>>
    %1056 = vector.broadcast %1055 : f32 to vector<2x16x16xf32>
    %1057 = arith.mulf %1056, %1054 : vector<2x16x16xf32>
    %1058 = arith.addf %1041, %1057 : vector<2x16x16xf32>
    %c54_120 = arith.constant 54 : index
    %1059 = memref.load %arg7[%c54_120] : memref<144xf32, #tpu.memory_space<smem>>
    %1060 = vector.broadcast %1059 : f32 to vector<2x16x16xf32>
    %1061 = arith.mulf %1060, %1054 : vector<2x16x16xf32>
    %1062 = arith.addf %1045, %1061 : vector<2x16x16xf32>
    %c90_121 = arith.constant 90 : index
    %1063 = memref.load %arg7[%c90_121] : memref<144xf32, #tpu.memory_space<smem>>
    %1064 = vector.broadcast %1063 : f32 to vector<2x16x16xf32>
    %1065 = arith.mulf %1064, %1054 : vector<2x16x16xf32>
    %1066 = arith.addf %1049, %1065 : vector<2x16x16xf32>
    %c126_122 = arith.constant 126 : index
    %1067 = memref.load %arg7[%c126_122] : memref<144xf32, #tpu.memory_space<smem>>
    %1068 = vector.broadcast %1067 : f32 to vector<2x16x16xf32>
    %1069 = arith.mulf %1068, %1054 : vector<2x16x16xf32>
    %1070 = arith.addf %1053, %1069 : vector<2x16x16xf32>
    %1071 = vector.extract_strided_slice %725 {offsets = [0, 0, 1], sizes = [2, 16, 16], strides = [1, 1, 1]} : vector<2x18x18xf32> to vector<2x16x16xf32>
    %c19_123 = arith.constant 19 : index
    %1072 = memref.load %arg7[%c19_123] : memref<144xf32, #tpu.memory_space<smem>>
    %1073 = vector.broadcast %1072 : f32 to vector<2x16x16xf32>
    %1074 = arith.mulf %1073, %1071 : vector<2x16x16xf32>
    %1075 = arith.addf %1058, %1074 : vector<2x16x16xf32>
    %c55_124 = arith.constant 55 : index
    %1076 = memref.load %arg7[%c55_124] : memref<144xf32, #tpu.memory_space<smem>>
    %1077 = vector.broadcast %1076 : f32 to vector<2x16x16xf32>
    %1078 = arith.mulf %1077, %1071 : vector<2x16x16xf32>
    %1079 = arith.addf %1062, %1078 : vector<2x16x16xf32>
    %c91_125 = arith.constant 91 : index
    %1080 = memref.load %arg7[%c91_125] : memref<144xf32, #tpu.memory_space<smem>>
    %1081 = vector.broadcast %1080 : f32 to vector<2x16x16xf32>
    %1082 = arith.mulf %1081, %1071 : vector<2x16x16xf32>
    %1083 = arith.addf %1066, %1082 : vector<2x16x16xf32>
    %c127_126 = arith.constant 127 : index
    %1084 = memref.load %arg7[%c127_126] : memref<144xf32, #tpu.memory_space<smem>>
    %1085 = vector.broadcast %1084 : f32 to vector<2x16x16xf32>
    %1086 = arith.mulf %1085, %1071 : vector<2x16x16xf32>
    %1087 = arith.addf %1070, %1086 : vector<2x16x16xf32>
    %1088 = vector.extract_strided_slice %725 {offsets = [0, 0, 2], sizes = [2, 16, 16], strides = [1, 1, 1]} : vector<2x18x18xf32> to vector<2x16x16xf32>
    %c20_127 = arith.constant 20 : index
    %1089 = memref.load %arg7[%c20_127] : memref<144xf32, #tpu.memory_space<smem>>
    %1090 = vector.broadcast %1089 : f32 to vector<2x16x16xf32>
    %1091 = arith.mulf %1090, %1088 : vector<2x16x16xf32>
    %1092 = arith.addf %1075, %1091 : vector<2x16x16xf32>
    %c56_128 = arith.constant 56 : index
    %1093 = memref.load %arg7[%c56_128] : memref<144xf32, #tpu.memory_space<smem>>
    %1094 = vector.broadcast %1093 : f32 to vector<2x16x16xf32>
    %1095 = arith.mulf %1094, %1088 : vector<2x16x16xf32>
    %1096 = arith.addf %1079, %1095 : vector<2x16x16xf32>
    %c92_129 = arith.constant 92 : index
    %1097 = memref.load %arg7[%c92_129] : memref<144xf32, #tpu.memory_space<smem>>
    %1098 = vector.broadcast %1097 : f32 to vector<2x16x16xf32>
    %1099 = arith.mulf %1098, %1088 : vector<2x16x16xf32>
    %1100 = arith.addf %1083, %1099 : vector<2x16x16xf32>
    %c128_130 = arith.constant 128 : index
    %1101 = memref.load %arg7[%c128_130] : memref<144xf32, #tpu.memory_space<smem>>
    %1102 = vector.broadcast %1101 : f32 to vector<2x16x16xf32>
    %1103 = arith.mulf %1102, %1088 : vector<2x16x16xf32>
    %1104 = arith.addf %1087, %1103 : vector<2x16x16xf32>
    %1105 = vector.extract_strided_slice %725 {offsets = [0, 1, 0], sizes = [2, 16, 16], strides = [1, 1, 1]} : vector<2x18x18xf32> to vector<2x16x16xf32>
    %c21_131 = arith.constant 21 : index
    %1106 = memref.load %arg7[%c21_131] : memref<144xf32, #tpu.memory_space<smem>>
    %1107 = vector.broadcast %1106 : f32 to vector<2x16x16xf32>
    %1108 = arith.mulf %1107, %1105 : vector<2x16x16xf32>
    %1109 = arith.addf %1092, %1108 : vector<2x16x16xf32>
    %c57_132 = arith.constant 57 : index
    %1110 = memref.load %arg7[%c57_132] : memref<144xf32, #tpu.memory_space<smem>>
    %1111 = vector.broadcast %1110 : f32 to vector<2x16x16xf32>
    %1112 = arith.mulf %1111, %1105 : vector<2x16x16xf32>
    %1113 = arith.addf %1096, %1112 : vector<2x16x16xf32>
    %c93_133 = arith.constant 93 : index
    %1114 = memref.load %arg7[%c93_133] : memref<144xf32, #tpu.memory_space<smem>>
    %1115 = vector.broadcast %1114 : f32 to vector<2x16x16xf32>
    %1116 = arith.mulf %1115, %1105 : vector<2x16x16xf32>
    %1117 = arith.addf %1100, %1116 : vector<2x16x16xf32>
    %c129_134 = arith.constant 129 : index
    %1118 = memref.load %arg7[%c129_134] : memref<144xf32, #tpu.memory_space<smem>>
    %1119 = vector.broadcast %1118 : f32 to vector<2x16x16xf32>
    %1120 = arith.mulf %1119, %1105 : vector<2x16x16xf32>
    %1121 = arith.addf %1104, %1120 : vector<2x16x16xf32>
    %1122 = vector.extract_strided_slice %725 {offsets = [0, 1, 1], sizes = [2, 16, 16], strides = [1, 1, 1]} : vector<2x18x18xf32> to vector<2x16x16xf32>
    %c22_135 = arith.constant 22 : index
    %1123 = memref.load %arg7[%c22_135] : memref<144xf32, #tpu.memory_space<smem>>
    %1124 = vector.broadcast %1123 : f32 to vector<2x16x16xf32>
    %1125 = arith.mulf %1124, %1122 : vector<2x16x16xf32>
    %1126 = arith.addf %1109, %1125 : vector<2x16x16xf32>
    %c58_136 = arith.constant 58 : index
    %1127 = memref.load %arg7[%c58_136] : memref<144xf32, #tpu.memory_space<smem>>
    %1128 = vector.broadcast %1127 : f32 to vector<2x16x16xf32>
    %1129 = arith.mulf %1128, %1122 : vector<2x16x16xf32>
    %1130 = arith.addf %1113, %1129 : vector<2x16x16xf32>
    %c94_137 = arith.constant 94 : index
    %1131 = memref.load %arg7[%c94_137] : memref<144xf32, #tpu.memory_space<smem>>
    %1132 = vector.broadcast %1131 : f32 to vector<2x16x16xf32>
    %1133 = arith.mulf %1132, %1122 : vector<2x16x16xf32>
    %1134 = arith.addf %1117, %1133 : vector<2x16x16xf32>
    %c130_138 = arith.constant 130 : index
    %1135 = memref.load %arg7[%c130_138] : memref<144xf32, #tpu.memory_space<smem>>
    %1136 = vector.broadcast %1135 : f32 to vector<2x16x16xf32>
    %1137 = arith.mulf %1136, %1122 : vector<2x16x16xf32>
    %1138 = arith.addf %1121, %1137 : vector<2x16x16xf32>
    %1139 = vector.extract_strided_slice %725 {offsets = [0, 1, 2], sizes = [2, 16, 16], strides = [1, 1, 1]} : vector<2x18x18xf32> to vector<2x16x16xf32>
    %c23_139 = arith.constant 23 : index
    %1140 = memref.load %arg7[%c23_139] : memref<144xf32, #tpu.memory_space<smem>>
    %1141 = vector.broadcast %1140 : f32 to vector<2x16x16xf32>
    %1142 = arith.mulf %1141, %1139 : vector<2x16x16xf32>
    %1143 = arith.addf %1126, %1142 : vector<2x16x16xf32>
    %c59_140 = arith.constant 59 : index
    %1144 = memref.load %arg7[%c59_140] : memref<144xf32, #tpu.memory_space<smem>>
    %1145 = vector.broadcast %1144 : f32 to vector<2x16x16xf32>
    %1146 = arith.mulf %1145, %1139 : vector<2x16x16xf32>
    %1147 = arith.addf %1130, %1146 : vector<2x16x16xf32>
    %c95_141 = arith.constant 95 : index
    %1148 = memref.load %arg7[%c95_141] : memref<144xf32, #tpu.memory_space<smem>>
    %1149 = vector.broadcast %1148 : f32 to vector<2x16x16xf32>
    %1150 = arith.mulf %1149, %1139 : vector<2x16x16xf32>
    %1151 = arith.addf %1134, %1150 : vector<2x16x16xf32>
    %c131_142 = arith.constant 131 : index
    %1152 = memref.load %arg7[%c131_142] : memref<144xf32, #tpu.memory_space<smem>>
    %1153 = vector.broadcast %1152 : f32 to vector<2x16x16xf32>
    %1154 = arith.mulf %1153, %1139 : vector<2x16x16xf32>
    %1155 = arith.addf %1138, %1154 : vector<2x16x16xf32>
    %1156 = vector.extract_strided_slice %725 {offsets = [0, 2, 0], sizes = [2, 16, 16], strides = [1, 1, 1]} : vector<2x18x18xf32> to vector<2x16x16xf32>
    %c24_143 = arith.constant 24 : index
    %1157 = memref.load %arg7[%c24_143] : memref<144xf32, #tpu.memory_space<smem>>
    %1158 = vector.broadcast %1157 : f32 to vector<2x16x16xf32>
    %1159 = arith.mulf %1158, %1156 : vector<2x16x16xf32>
    %1160 = arith.addf %1143, %1159 : vector<2x16x16xf32>
    %c60_144 = arith.constant 60 : index
    %1161 = memref.load %arg7[%c60_144] : memref<144xf32, #tpu.memory_space<smem>>
    %1162 = vector.broadcast %1161 : f32 to vector<2x16x16xf32>
    %1163 = arith.mulf %1162, %1156 : vector<2x16x16xf32>
    %1164 = arith.addf %1147, %1163 : vector<2x16x16xf32>
    %c96_145 = arith.constant 96 : index
    %1165 = memref.load %arg7[%c96_145] : memref<144xf32, #tpu.memory_space<smem>>
    %1166 = vector.broadcast %1165 : f32 to vector<2x16x16xf32>
    %1167 = arith.mulf %1166, %1156 : vector<2x16x16xf32>
    %1168 = arith.addf %1151, %1167 : vector<2x16x16xf32>
    %c132_146 = arith.constant 132 : index
    %1169 = memref.load %arg7[%c132_146] : memref<144xf32, #tpu.memory_space<smem>>
    %1170 = vector.broadcast %1169 : f32 to vector<2x16x16xf32>
    %1171 = arith.mulf %1170, %1156 : vector<2x16x16xf32>
    %1172 = arith.addf %1155, %1171 : vector<2x16x16xf32>
    %1173 = vector.extract_strided_slice %725 {offsets = [0, 2, 1], sizes = [2, 16, 16], strides = [1, 1, 1]} : vector<2x18x18xf32> to vector<2x16x16xf32>
    %c25_147 = arith.constant 25 : index
    %1174 = memref.load %arg7[%c25_147] : memref<144xf32, #tpu.memory_space<smem>>
    %1175 = vector.broadcast %1174 : f32 to vector<2x16x16xf32>
    %1176 = arith.mulf %1175, %1173 : vector<2x16x16xf32>
    %1177 = arith.addf %1160, %1176 : vector<2x16x16xf32>
    %c61_148 = arith.constant 61 : index
    %1178 = memref.load %arg7[%c61_148] : memref<144xf32, #tpu.memory_space<smem>>
    %1179 = vector.broadcast %1178 : f32 to vector<2x16x16xf32>
    %1180 = arith.mulf %1179, %1173 : vector<2x16x16xf32>
    %1181 = arith.addf %1164, %1180 : vector<2x16x16xf32>
    %c97_149 = arith.constant 97 : index
    %1182 = memref.load %arg7[%c97_149] : memref<144xf32, #tpu.memory_space<smem>>
    %1183 = vector.broadcast %1182 : f32 to vector<2x16x16xf32>
    %1184 = arith.mulf %1183, %1173 : vector<2x16x16xf32>
    %1185 = arith.addf %1168, %1184 : vector<2x16x16xf32>
    %c133_150 = arith.constant 133 : index
    %1186 = memref.load %arg7[%c133_150] : memref<144xf32, #tpu.memory_space<smem>>
    %1187 = vector.broadcast %1186 : f32 to vector<2x16x16xf32>
    %1188 = arith.mulf %1187, %1173 : vector<2x16x16xf32>
    %1189 = arith.addf %1172, %1188 : vector<2x16x16xf32>
    %1190 = vector.extract_strided_slice %725 {offsets = [0, 2, 2], sizes = [2, 16, 16], strides = [1, 1, 1]} : vector<2x18x18xf32> to vector<2x16x16xf32>
    %c26_151 = arith.constant 26 : index
    %1191 = memref.load %arg7[%c26_151] : memref<144xf32, #tpu.memory_space<smem>>
    %1192 = vector.broadcast %1191 : f32 to vector<2x16x16xf32>
    %1193 = arith.mulf %1192, %1190 : vector<2x16x16xf32>
    %1194 = arith.addf %1177, %1193 : vector<2x16x16xf32>
    %c62_152 = arith.constant 62 : index
    %1195 = memref.load %arg7[%c62_152] : memref<144xf32, #tpu.memory_space<smem>>
    %1196 = vector.broadcast %1195 : f32 to vector<2x16x16xf32>
    %1197 = arith.mulf %1196, %1190 : vector<2x16x16xf32>
    %1198 = arith.addf %1181, %1197 : vector<2x16x16xf32>
    %c98_153 = arith.constant 98 : index
    %1199 = memref.load %arg7[%c98_153] : memref<144xf32, #tpu.memory_space<smem>>
    %1200 = vector.broadcast %1199 : f32 to vector<2x16x16xf32>
    %1201 = arith.mulf %1200, %1190 : vector<2x16x16xf32>
    %1202 = arith.addf %1185, %1201 : vector<2x16x16xf32>
    %c134_154 = arith.constant 134 : index
    %1203 = memref.load %arg7[%c134_154] : memref<144xf32, #tpu.memory_space<smem>>
    %1204 = vector.broadcast %1203 : f32 to vector<2x16x16xf32>
    %1205 = arith.mulf %1204, %1190 : vector<2x16x16xf32>
    %1206 = arith.addf %1189, %1205 : vector<2x16x16xf32>
    %1207 = vector.extract_strided_slice %739 {offsets = [0, 0, 0], sizes = [2, 16, 16], strides = [1, 1, 1]} : vector<2x18x18xf32> to vector<2x16x16xf32>
    %c27_155 = arith.constant 27 : index
    %1208 = memref.load %arg7[%c27_155] : memref<144xf32, #tpu.memory_space<smem>>
    %1209 = vector.broadcast %1208 : f32 to vector<2x16x16xf32>
    %1210 = arith.mulf %1209, %1207 : vector<2x16x16xf32>
    %1211 = arith.addf %1194, %1210 : vector<2x16x16xf32>
    %c63_156 = arith.constant 63 : index
    %1212 = memref.load %arg7[%c63_156] : memref<144xf32, #tpu.memory_space<smem>>
    %1213 = vector.broadcast %1212 : f32 to vector<2x16x16xf32>
    %1214 = arith.mulf %1213, %1207 : vector<2x16x16xf32>
    %1215 = arith.addf %1198, %1214 : vector<2x16x16xf32>
    %c99_157 = arith.constant 99 : index
    %1216 = memref.load %arg7[%c99_157] : memref<144xf32, #tpu.memory_space<smem>>
    %1217 = vector.broadcast %1216 : f32 to vector<2x16x16xf32>
    %1218 = arith.mulf %1217, %1207 : vector<2x16x16xf32>
    %1219 = arith.addf %1202, %1218 : vector<2x16x16xf32>
    %c135_158 = arith.constant 135 : index
    %1220 = memref.load %arg7[%c135_158] : memref<144xf32, #tpu.memory_space<smem>>
    %1221 = vector.broadcast %1220 : f32 to vector<2x16x16xf32>
    %1222 = arith.mulf %1221, %1207 : vector<2x16x16xf32>
    %1223 = arith.addf %1206, %1222 : vector<2x16x16xf32>
    %1224 = vector.extract_strided_slice %739 {offsets = [0, 0, 1], sizes = [2, 16, 16], strides = [1, 1, 1]} : vector<2x18x18xf32> to vector<2x16x16xf32>
    %c28_159 = arith.constant 28 : index
    %1225 = memref.load %arg7[%c28_159] : memref<144xf32, #tpu.memory_space<smem>>
    %1226 = vector.broadcast %1225 : f32 to vector<2x16x16xf32>
    %1227 = arith.mulf %1226, %1224 : vector<2x16x16xf32>
    %1228 = arith.addf %1211, %1227 : vector<2x16x16xf32>
    %c64_160 = arith.constant 64 : index
    %1229 = memref.load %arg7[%c64_160] : memref<144xf32, #tpu.memory_space<smem>>
    %1230 = vector.broadcast %1229 : f32 to vector<2x16x16xf32>
    %1231 = arith.mulf %1230, %1224 : vector<2x16x16xf32>
    %1232 = arith.addf %1215, %1231 : vector<2x16x16xf32>
    %c100_161 = arith.constant 100 : index
    %1233 = memref.load %arg7[%c100_161] : memref<144xf32, #tpu.memory_space<smem>>
    %1234 = vector.broadcast %1233 : f32 to vector<2x16x16xf32>
    %1235 = arith.mulf %1234, %1224 : vector<2x16x16xf32>
    %1236 = arith.addf %1219, %1235 : vector<2x16x16xf32>
    %c136_162 = arith.constant 136 : index
    %1237 = memref.load %arg7[%c136_162] : memref<144xf32, #tpu.memory_space<smem>>
    %1238 = vector.broadcast %1237 : f32 to vector<2x16x16xf32>
    %1239 = arith.mulf %1238, %1224 : vector<2x16x16xf32>
    %1240 = arith.addf %1223, %1239 : vector<2x16x16xf32>
    %1241 = vector.extract_strided_slice %739 {offsets = [0, 0, 2], sizes = [2, 16, 16], strides = [1, 1, 1]} : vector<2x18x18xf32> to vector<2x16x16xf32>
    %c29_163 = arith.constant 29 : index
    %1242 = memref.load %arg7[%c29_163] : memref<144xf32, #tpu.memory_space<smem>>
    %1243 = vector.broadcast %1242 : f32 to vector<2x16x16xf32>
    %1244 = arith.mulf %1243, %1241 : vector<2x16x16xf32>
    %1245 = arith.addf %1228, %1244 : vector<2x16x16xf32>
    %c65_164 = arith.constant 65 : index
    %1246 = memref.load %arg7[%c65_164] : memref<144xf32, #tpu.memory_space<smem>>
    %1247 = vector.broadcast %1246 : f32 to vector<2x16x16xf32>
    %1248 = arith.mulf %1247, %1241 : vector<2x16x16xf32>
    %1249 = arith.addf %1232, %1248 : vector<2x16x16xf32>
    %c101_165 = arith.constant 101 : index
    %1250 = memref.load %arg7[%c101_165] : memref<144xf32, #tpu.memory_space<smem>>
    %1251 = vector.broadcast %1250 : f32 to vector<2x16x16xf32>
    %1252 = arith.mulf %1251, %1241 : vector<2x16x16xf32>
    %1253 = arith.addf %1236, %1252 : vector<2x16x16xf32>
    %c137_166 = arith.constant 137 : index
    %1254 = memref.load %arg7[%c137_166] : memref<144xf32, #tpu.memory_space<smem>>
    %1255 = vector.broadcast %1254 : f32 to vector<2x16x16xf32>
    %1256 = arith.mulf %1255, %1241 : vector<2x16x16xf32>
    %1257 = arith.addf %1240, %1256 : vector<2x16x16xf32>
    %1258 = vector.extract_strided_slice %739 {offsets = [0, 1, 0], sizes = [2, 16, 16], strides = [1, 1, 1]} : vector<2x18x18xf32> to vector<2x16x16xf32>
    %c30_167 = arith.constant 30 : index
    %1259 = memref.load %arg7[%c30_167] : memref<144xf32, #tpu.memory_space<smem>>
    %1260 = vector.broadcast %1259 : f32 to vector<2x16x16xf32>
    %1261 = arith.mulf %1260, %1258 : vector<2x16x16xf32>
    %1262 = arith.addf %1245, %1261 : vector<2x16x16xf32>
    %c66_168 = arith.constant 66 : index
    %1263 = memref.load %arg7[%c66_168] : memref<144xf32, #tpu.memory_space<smem>>
    %1264 = vector.broadcast %1263 : f32 to vector<2x16x16xf32>
    %1265 = arith.mulf %1264, %1258 : vector<2x16x16xf32>
    %1266 = arith.addf %1249, %1265 : vector<2x16x16xf32>
    %c102_169 = arith.constant 102 : index
    %1267 = memref.load %arg7[%c102_169] : memref<144xf32, #tpu.memory_space<smem>>
    %1268 = vector.broadcast %1267 : f32 to vector<2x16x16xf32>
    %1269 = arith.mulf %1268, %1258 : vector<2x16x16xf32>
    %1270 = arith.addf %1253, %1269 : vector<2x16x16xf32>
    %c138_170 = arith.constant 138 : index
    %1271 = memref.load %arg7[%c138_170] : memref<144xf32, #tpu.memory_space<smem>>
    %1272 = vector.broadcast %1271 : f32 to vector<2x16x16xf32>
    %1273 = arith.mulf %1272, %1258 : vector<2x16x16xf32>
    %1274 = arith.addf %1257, %1273 : vector<2x16x16xf32>
    %1275 = vector.extract_strided_slice %739 {offsets = [0, 1, 1], sizes = [2, 16, 16], strides = [1, 1, 1]} : vector<2x18x18xf32> to vector<2x16x16xf32>
    %c31_171 = arith.constant 31 : index
    %1276 = memref.load %arg7[%c31_171] : memref<144xf32, #tpu.memory_space<smem>>
    %1277 = vector.broadcast %1276 : f32 to vector<2x16x16xf32>
    %1278 = arith.mulf %1277, %1275 : vector<2x16x16xf32>
    %1279 = arith.addf %1262, %1278 : vector<2x16x16xf32>
    %c67_172 = arith.constant 67 : index
    %1280 = memref.load %arg7[%c67_172] : memref<144xf32, #tpu.memory_space<smem>>
    %1281 = vector.broadcast %1280 : f32 to vector<2x16x16xf32>
    %1282 = arith.mulf %1281, %1275 : vector<2x16x16xf32>
    %1283 = arith.addf %1266, %1282 : vector<2x16x16xf32>
    %c103_173 = arith.constant 103 : index
    %1284 = memref.load %arg7[%c103_173] : memref<144xf32, #tpu.memory_space<smem>>
    %1285 = vector.broadcast %1284 : f32 to vector<2x16x16xf32>
    %1286 = arith.mulf %1285, %1275 : vector<2x16x16xf32>
    %1287 = arith.addf %1270, %1286 : vector<2x16x16xf32>
    %c139_174 = arith.constant 139 : index
    %1288 = memref.load %arg7[%c139_174] : memref<144xf32, #tpu.memory_space<smem>>
    %1289 = vector.broadcast %1288 : f32 to vector<2x16x16xf32>
    %1290 = arith.mulf %1289, %1275 : vector<2x16x16xf32>
    %1291 = arith.addf %1274, %1290 : vector<2x16x16xf32>
    %1292 = vector.extract_strided_slice %739 {offsets = [0, 1, 2], sizes = [2, 16, 16], strides = [1, 1, 1]} : vector<2x18x18xf32> to vector<2x16x16xf32>
    %c32_175 = arith.constant 32 : index
    %1293 = memref.load %arg7[%c32_175] : memref<144xf32, #tpu.memory_space<smem>>
    %1294 = vector.broadcast %1293 : f32 to vector<2x16x16xf32>
    %1295 = arith.mulf %1294, %1292 : vector<2x16x16xf32>
    %1296 = arith.addf %1279, %1295 : vector<2x16x16xf32>
    %c68_176 = arith.constant 68 : index
    %1297 = memref.load %arg7[%c68_176] : memref<144xf32, #tpu.memory_space<smem>>
    %1298 = vector.broadcast %1297 : f32 to vector<2x16x16xf32>
    %1299 = arith.mulf %1298, %1292 : vector<2x16x16xf32>
    %1300 = arith.addf %1283, %1299 : vector<2x16x16xf32>
    %c104_177 = arith.constant 104 : index
    %1301 = memref.load %arg7[%c104_177] : memref<144xf32, #tpu.memory_space<smem>>
    %1302 = vector.broadcast %1301 : f32 to vector<2x16x16xf32>
    %1303 = arith.mulf %1302, %1292 : vector<2x16x16xf32>
    %1304 = arith.addf %1287, %1303 : vector<2x16x16xf32>
    %c140_178 = arith.constant 140 : index
    %1305 = memref.load %arg7[%c140_178] : memref<144xf32, #tpu.memory_space<smem>>
    %1306 = vector.broadcast %1305 : f32 to vector<2x16x16xf32>
    %1307 = arith.mulf %1306, %1292 : vector<2x16x16xf32>
    %1308 = arith.addf %1291, %1307 : vector<2x16x16xf32>
    %1309 = vector.extract_strided_slice %739 {offsets = [0, 2, 0], sizes = [2, 16, 16], strides = [1, 1, 1]} : vector<2x18x18xf32> to vector<2x16x16xf32>
    %c33_179 = arith.constant 33 : index
    %1310 = memref.load %arg7[%c33_179] : memref<144xf32, #tpu.memory_space<smem>>
    %1311 = vector.broadcast %1310 : f32 to vector<2x16x16xf32>
    %1312 = arith.mulf %1311, %1309 : vector<2x16x16xf32>
    %1313 = arith.addf %1296, %1312 : vector<2x16x16xf32>
    %c69_180 = arith.constant 69 : index
    %1314 = memref.load %arg7[%c69_180] : memref<144xf32, #tpu.memory_space<smem>>
    %1315 = vector.broadcast %1314 : f32 to vector<2x16x16xf32>
    %1316 = arith.mulf %1315, %1309 : vector<2x16x16xf32>
    %1317 = arith.addf %1300, %1316 : vector<2x16x16xf32>
    %c105_181 = arith.constant 105 : index
    %1318 = memref.load %arg7[%c105_181] : memref<144xf32, #tpu.memory_space<smem>>
    %1319 = vector.broadcast %1318 : f32 to vector<2x16x16xf32>
    %1320 = arith.mulf %1319, %1309 : vector<2x16x16xf32>
    %1321 = arith.addf %1304, %1320 : vector<2x16x16xf32>
    %c141_182 = arith.constant 141 : index
    %1322 = memref.load %arg7[%c141_182] : memref<144xf32, #tpu.memory_space<smem>>
    %1323 = vector.broadcast %1322 : f32 to vector<2x16x16xf32>
    %1324 = arith.mulf %1323, %1309 : vector<2x16x16xf32>
    %1325 = arith.addf %1308, %1324 : vector<2x16x16xf32>
    %1326 = vector.extract_strided_slice %739 {offsets = [0, 2, 1], sizes = [2, 16, 16], strides = [1, 1, 1]} : vector<2x18x18xf32> to vector<2x16x16xf32>
    %c34_183 = arith.constant 34 : index
    %1327 = memref.load %arg7[%c34_183] : memref<144xf32, #tpu.memory_space<smem>>
    %1328 = vector.broadcast %1327 : f32 to vector<2x16x16xf32>
    %1329 = arith.mulf %1328, %1326 : vector<2x16x16xf32>
    %1330 = arith.addf %1313, %1329 : vector<2x16x16xf32>
    %c70_184 = arith.constant 70 : index
    %1331 = memref.load %arg7[%c70_184] : memref<144xf32, #tpu.memory_space<smem>>
    %1332 = vector.broadcast %1331 : f32 to vector<2x16x16xf32>
    %1333 = arith.mulf %1332, %1326 : vector<2x16x16xf32>
    %1334 = arith.addf %1317, %1333 : vector<2x16x16xf32>
    %c106_185 = arith.constant 106 : index
    %1335 = memref.load %arg7[%c106_185] : memref<144xf32, #tpu.memory_space<smem>>
    %1336 = vector.broadcast %1335 : f32 to vector<2x16x16xf32>
    %1337 = arith.mulf %1336, %1326 : vector<2x16x16xf32>
    %1338 = arith.addf %1321, %1337 : vector<2x16x16xf32>
    %c142_186 = arith.constant 142 : index
    %1339 = memref.load %arg7[%c142_186] : memref<144xf32, #tpu.memory_space<smem>>
    %1340 = vector.broadcast %1339 : f32 to vector<2x16x16xf32>
    %1341 = arith.mulf %1340, %1326 : vector<2x16x16xf32>
    %1342 = arith.addf %1325, %1341 : vector<2x16x16xf32>
    %1343 = vector.extract_strided_slice %739 {offsets = [0, 2, 2], sizes = [2, 16, 16], strides = [1, 1, 1]} : vector<2x18x18xf32> to vector<2x16x16xf32>
    %c35_187 = arith.constant 35 : index
    %1344 = memref.load %arg7[%c35_187] : memref<144xf32, #tpu.memory_space<smem>>
    %1345 = vector.broadcast %1344 : f32 to vector<2x16x16xf32>
    %1346 = arith.mulf %1345, %1343 : vector<2x16x16xf32>
    %1347 = arith.addf %1330, %1346 : vector<2x16x16xf32>
    %c71_188 = arith.constant 71 : index
    %1348 = memref.load %arg7[%c71_188] : memref<144xf32, #tpu.memory_space<smem>>
    %1349 = vector.broadcast %1348 : f32 to vector<2x16x16xf32>
    %1350 = arith.mulf %1349, %1343 : vector<2x16x16xf32>
    %1351 = arith.addf %1334, %1350 : vector<2x16x16xf32>
    %c107_189 = arith.constant 107 : index
    %1352 = memref.load %arg7[%c107_189] : memref<144xf32, #tpu.memory_space<smem>>
    %1353 = vector.broadcast %1352 : f32 to vector<2x16x16xf32>
    %1354 = arith.mulf %1353, %1343 : vector<2x16x16xf32>
    %1355 = arith.addf %1338, %1354 : vector<2x16x16xf32>
    %c143_190 = arith.constant 143 : index
    %1356 = memref.load %arg7[%c143_190] : memref<144xf32, #tpu.memory_space<smem>>
    %1357 = vector.broadcast %1356 : f32 to vector<2x16x16xf32>
    %1358 = arith.mulf %1357, %1343 : vector<2x16x16xf32>
    %1359 = arith.addf %1342, %1358 : vector<2x16x16xf32>
    %1360 = vector.shape_cast %1347 : vector<2x16x16xf32> to vector<2x1x16x16xf32>
    %1361 = vector.shape_cast %1351 : vector<2x16x16xf32> to vector<2x1x16x16xf32>
    %1362 = vector.shape_cast %1355 : vector<2x16x16xf32> to vector<2x1x16x16xf32>
    %1363 = vector.shape_cast %1359 : vector<2x16x16xf32> to vector<2x1x16x16xf32>
    %1364 = tpu.concatenate %1360, %1361, %1362, %1363 in 1 : vector<2x1x16x16xf32>, vector<2x1x16x16xf32>, vector<2x1x16x16xf32>, vector<2x1x16x16xf32> -> vector<2x4x16x16xf32>
    %c0_191 = arith.constant 0 : index
    %c0_192 = arith.constant 0 : index
    %c0_193 = arith.constant 0 : index
    %c0_194 = arith.constant 0 : index
    %1365 = vector.load %arg0[%c0_191, %c0_192, %c0_193, %c0_194] : memref<2x4x16x16xf32, #tpu.memory_space<vmem>>, vector<2x4x16x16xf32>
    %1366 = arith.addf %1364, %1365 : vector<2x4x16x16xf32>
    %c0_195 = arith.constant 0 : index
    %c0_196 = arith.constant 0 : index
    %c0_197 = arith.constant 0 : index
    %c0_198 = arith.constant 0 : index
    %1367 = vector.load %arg9[%c0_195, %c0_196, %c0_197, %c0_198] : memref<2x4x16x16xf32, #tpu.memory_space<vmem>>, vector<2x4x16x16xf32>
    tpu.vector_store %arg9[%c0_195, %c0_196, %c0_197, %c0_198], %1366 {strides = array<i32>} : memref<2x4x16x16xf32, #tpu.memory_space<vmem>>, vector<2x4x16x16xf32>,
    return
  }
}

</mosaic_0001>

<llo_original>
// kernel: tpu_custom_call.1
$region0: #{tpu_custom_call.1}
  #allocation0 [shape = 'u32[]', space=smem, size = 0x4, offset = 0x4, fixed_abs, tag = 'smem constant byte address 0x4 - core index']
  #allocation1 [shape = 'u32[144,128]{1,0:T(1,128)}', space=vmem, size = 0x12000, scoped, tag = 'internal scratch']
  %s0 = inlined_call_operand.hbm [shape: f32[2,4,16,16], index: 0, kind: input, shape index: {}]
  %s1 = inlined_call_operand.vmem [shape: f32[4], index: 1, kind: input, shape index: {}]
  %s2 = inlined_call_operand.vmem [shape: f32[4], index: 2, kind: input, shape index: {}]
  %s3 = inlined_call_operand.vmem [shape: f32[144], index: 3, kind: input, shape index: {}]
  %s4 = inlined_call_operand.vmem [shape: f32[4], index: 4, kind: input, shape index: {}]
  %s5 = inlined_call_operand.vmem [shape: f32[4], index: 5, kind: input, shape index: {}]
  %s6 = inlined_call_operand.vmem [shape: f32[4], index: 6, kind: input, shape index: {}]
  %s7 = inlined_call_operand.vmem [shape: f32[144], index: 7, kind: input, shape index: {}]
  %s8 = inlined_call_operand.vmem [shape: f32[4], index: 8, kind: input, shape index: {}]
  %s9 = inlined_call_operand.hbm [shape: f32[2,4,16,16], index: 9, kind: output, shape index: {}]
  %s10 = sld [smem:[#allocation0]]
  $region82: #{tpu_custom_call.1} parent=0
    _
  %s12 = ssub.s32 1, %s10
  %s13 = scalar_select 0, %s12, %s10
  $region1: #{tpu_custom_call.1} parent=0
    #allocation2 [shape = 'u8[65536]{0}', space=vmem, size = 0x10000, scoped, tag = 'input window, operand 0, single buffered']
    #allocation3 [shape = 's32[1]{0}', space=sflag, size = 0x4, scoped, tag = 'scoped memory for tpu_custom_call.1']
    #allocation4 [shape = 's32[1]{0}', space=sflag, size = 0x4, scoped, tag = 'scoped memory for tpu_custom_call.1']
    #allocation5 [shape = 's32[1]{0}', space=sflag, size = 0x4, scoped, tag = 'scoped memory for tpu_custom_call.1']
    #allocation6 [shape = 'u8[512]{0}', space=smem, size = 0x200, scoped, tag = 'input window, operand 1, single buffered']
    #allocation7 [shape = 'u8[512]{0}', space=smem, size = 0x200, scoped, tag = 'input window, operand 2, single buffered']
    #allocation8 [shape = 's32[1]{0}', space=sflag, size = 0x4, scoped, tag = 'scoped memory for tpu_custom_call.1']
    #allocation9 [shape = 'u8[1024]{0}', space=smem, size = 0x400, scoped, tag = 'input window, operand 3, single buffered']
    #allocation10 [shape = 'u8[512]{0}', space=smem, size = 0x200, scoped, tag = 'input window, operand 4, single buffered']
    #allocation11 [shape = 's32[1]{0}', space=sflag, size = 0x4, scoped, tag = 'scoped memory for tpu_custom_call.1']
    #allocation12 [shape = 'u8[512]{0}', space=smem, size = 0x200, scoped, tag = 'input window, operand 5, single buffered']
    #allocation13 [shape = 'u8[512]{0}', space=smem, size = 0x200, scoped, tag = 'input window, operand 6, single buffered']
    #allocation14 [shape = 's32[1]{0}', space=sflag, size = 0x4, scoped, tag = 'scoped memory for tpu_custom_call.1']
    #allocation15 [shape = 'u8[1024]{0}', space=smem, size = 0x400, scoped, tag = 'input window, operand 7, single buffered']
    #allocation16 [shape = 'u8[512]{0}', space=smem, size = 0x200, scoped, tag = 'input window, operand 8, single buffered']
    #allocation17 [shape = 's32[1]{0}', space=sflag, size = 0x4, scoped, tag = 'scoped memory for tpu_custom_call.1']
    #allocation18 [shape = 'u8[65536]{0}', space=vmem, size = 0x10000, scoped, tag = 'output window, operand 0, single buffered']
    %14 = vsyncpa [#allocation3], 0
    %15 = vsyncpa [#allocation5], 0
    %16 = vsyncpa [#allocation8], 0
    %17 = vsyncpa [#allocation11], 0
    %18 = vsyncpa [#allocation14], 0
    %19 = vsyncpa [#allocation17], 0
    %20 = vsyncpa [#allocation4], 0
    // Predicated region
    $region2: #{tpu_custom_call.1} parent=1 // pred_check
      _
    $region3: #{tpu_custom_call.1} parent=1 // pred_check_branch
      %22 = sbr.rel (0) target = $region5
    $region4: #{tpu_custom_call.1} parent=1 // pred_region
      %s24 = ssub.s32 2048, 2048
      %25 = vsyncadd [#allocation3], %s24
      %s26 = sshll.u32 [#allocation2], 4
      %s27 = int_to_ptr.vmem [resolvable:$true] %s26
      %32 = dma.hbm_to_vmem [thread:$0]  %s0, 2048, %s27, [#allocation3], 128, 128, 8
    $region5: #{tpu_custom_call.1} parent=1 // pred_fallthru
      _
    // Predicated region
    $region6: #{tpu_custom_call.1} parent=1 // pred_check
      _
    $region7: #{tpu_custom_call.1} parent=1 // pred_check_branch
      %34 = sbr.rel (0) target = $region9
    $region8: #{tpu_custom_call.1} parent=1 // pred_region
      %s36 = ssub.s32 16, 16
      %37 = vsyncadd [#allocation5], %s36
      %s39 = sshll.u32 %s1, 4
      %s40 = int_to_ptr.vmem [resolvable:$true] %s39
      %42 = dma.vmem_to_smem %s40, 16, [#allocation6], [#allocation5]
    $region9: #{tpu_custom_call.1} parent=1 // pred_fallthru
      _
    // Predicated region
    $region10: #{tpu_custom_call.1} parent=1 // pred_check
      _
    $region11: #{tpu_custom_call.1} parent=1 // pred_check_branch
      %44 = sbr.rel (0) target = $region13
    $region12: #{tpu_custom_call.1} parent=1 // pred_region
      %s46 = ssub.s32 16, 16
      %47 = vsyncadd [#allocation8], %s46
      %s49 = sshll.u32 %s2, 4
      %s50 = int_to_ptr.vmem [resolvable:$true] %s49
      %52 = dma.vmem_to_smem %s50, 16, [#allocation7], [#allocation8]
    $region13: #{tpu_custom_call.1} parent=1 // pred_fallthru
      _
    // Predicated region
    $region14: #{tpu_custom_call.1} parent=1 // pred_check
      _
    $region15: #{tpu_custom_call.1} parent=1 // pred_check_branch
      %54 = sbr.rel (0) target = $region17
    $region16: #{tpu_custom_call.1} parent=1 // pred_region
      %s56 = ssub.s32 32, 32
      %57 = vsyncadd [#allocation8], %s56
      %s59 = sshll.u32 %s3, 4
      %s60 = int_to_ptr.vmem [resolvable:$true] %s59
      %62 = dma.vmem_to_smem %s60, 32, [#allocation9], [#allocation8]
    $region17: #{tpu_custom_call.1} parent=1 // pred_fallthru
      _
    // Predicated region
    $region18: #{tpu_custom_call.1} parent=1 // pred_check
      _
    $region19: #{tpu_custom_call.1} parent=1 // pred_check_branch
      %64 = sbr.rel (0) target = $region21
    $region20: #{tpu_custom_call.1} parent=1 // pred_region
      %s66 = ssub.s32 16, 16
      %67 = vsyncadd [#allocation11], %s66
      %s69 = sshll.u32 %s4, 4
      %s70 = int_to_ptr.vmem [resolvable:$true] %s69
      %72 = dma.vmem_to_smem %s70, 16, [#allocation10], [#allocation11]
    $region21: #{tpu_custom_call.1} parent=1 // pred_fallthru
      _
    // Predicated region
    $region22: #{tpu_custom_call.1} parent=1 // pred_check
      _
    $region23: #{tpu_custom_call.1} parent=1 // pred_check_branch
      %74 = sbr.rel (0) target = $region25
    $region24: #{tpu_custom_call.1} parent=1 // pred_region
      %s76 = ssub.s32 16, 16
      %77 = vsyncadd [#allocation11], %s76
      %s79 = sshll.u32 %s5, 4
      %s80 = int_to_ptr.vmem [resolvable:$true] %s79
      %82 = dma.vmem_to_smem %s80, 16, [#allocation12], [#allocation11]
    $region25: #{tpu_custom_call.1} parent=1 // pred_fallthru
      _
    // Predicated region
    $region26: #{tpu_custom_call.1} parent=1 // pred_check
      _
    $region27: #{tpu_custom_call.1} parent=1 // pred_check_branch
      %84 = sbr.rel (0) target = $region29
    $region28: #{tpu_custom_call.1} parent=1 // pred_region
      %s86 = ssub.s32 16, 16
      %87 = vsyncadd [#allocation14], %s86
      %s89 = sshll.u32 %s6, 4
      %s90 = int_to_ptr.vmem [resolvable:$true] %s89
      %92 = dma.vmem_to_smem %s90, 16, [#allocation13], [#allocation14]
    $region29: #{tpu_custom_call.1} parent=1 // pred_fallthru
      _
    // Predicated region
    $region30: #{tpu_custom_call.1} parent=1 // pred_check
      _
    $region31: #{tpu_custom_call.1} parent=1 // pred_check_branch
      %94 = sbr.rel (0) target = $region33
    $region32: #{tpu_custom_call.1} parent=1 // pred_region
      %s96 = ssub.s32 32, 32
      %97 = vsyncadd [#allocation14], %s96
      %s99 = sshll.u32 %s7, 4
      %s100 = int_to_ptr.vmem [resolvable:$true] %s99
      %102 = dma.vmem_to_smem %s100, 32, [#allocation15], [#allocation14]
    $region33: #{tpu_custom_call.1} parent=1 // pred_fallthru
      _
    // Predicated region
    $region34: #{tpu_custom_call.1} parent=1 // pred_check
      _
    $region35: #{tpu_custom_call.1} parent=1 // pred_check_branch
      %104 = sbr.rel (0) target = $region37
    $region36: #{tpu_custom_call.1} parent=1 // pred_region
      %s106 = ssub.s32 16, 16
      %107 = vsyncadd [#allocation17], %s106
      %s109 = sshll.u32 %s8, 4
      %s110 = int_to_ptr.vmem [resolvable:$true] %s109
      %112 = dma.vmem_to_smem %s110, 16, [#allocation16], [#allocation17]
    $region37: #{tpu_custom_call.1} parent=1 // pred_fallthru
      _
    // Predicated region
    $region38: #{tpu_custom_call.1} parent=1 // pred_check
      _
    $region39: #{tpu_custom_call.1} parent=1 // pred_check_branch
      %114 = sbr.rel (0) target = $region41
    $region40: #{tpu_custom_call.1} parent=1 // pred_region
      %115 = dma.done [#allocation3], 2048
    $region41: #{tpu_custom_call.1} parent=1 // pred_fallthru
      _
    // Predicated region
    $region42: #{tpu_custom_call.1} parent=1 // pred_check
      _
    $region43: #{tpu_custom_call.1} parent=1 // pred_check_branch
      %117 = sbr.rel (0) target = $region45
    $region44: #{tpu_custom_call.1} parent=1 // pred_region
      %118 = dma.done [#allocation5], 16
    $region45: #{tpu_custom_call.1} parent=1 // pred_fallthru
      _
    // Predicated region
    $region46: #{tpu_custom_call.1} parent=1 // pred_check
      _
    $region47: #{tpu_custom_call.1} parent=1 // pred_check_branch
      %120 = sbr.rel (0) target = $region49
    $region48: #{tpu_custom_call.1} parent=1 // pred_region
      %121 = dma.done [#allocation8], 16
    $region49: #{tpu_custom_call.1} parent=1 // pred_fallthru
      _
    // Predicated region
    $region50: #{tpu_custom_call.1} parent=1 // pred_check
      _
    $region51: #{tpu_custom_call.1} parent=1 // pred_check_branch
      %123 = sbr.rel (0) target = $region53
    $region52: #{tpu_custom_call.1} parent=1 // pred_region
      %124 = dma.done [#allocation8], 32
    $region53: #{tpu_custom_call.1} parent=1 // pred_fallthru
      _
    // Predicated region
    $region54: #{tpu_custom_call.1} parent=1 // pred_check
      _
    $region55: #{tpu_custom_call.1} parent=1 // pred_check_branch
      %126 = sbr.rel (0) target = $region57
    $region56: #{tpu_custom_call.1} parent=1 // pred_region
      %127 = dma.done [#allocation11], 16
    $region57: #{tpu_custom_call.1} parent=1 // pred_fallthru
      _
    // Predicated region
    $region58: #{tpu_custom_call.1} parent=1 // pred_check
      _
    $region59: #{tpu_custom_call.1} parent=1 // pred_check_branch
      %129 = sbr.rel (0) target = $region61
    $region60: #{tpu_custom_call.1} parent=1 // pred_region
      %130 = dma.done [#allocation11], 16
    $region61: #{tpu_custom_call.1} parent=1 // pred_fallthru
      _
    // Predicated region
    $region62: #{tpu_custom_call.1} parent=1 // pred_check
      _
    $region63: #{tpu_custom_call.1} parent=1 // pred_check_branch
      %132 = sbr.rel (0) target = $region65
    $region64: #{tpu_custom_call.1} parent=1 // pred_region
      %133 = dma.done [#allocation14], 16
    $region65: #{tpu_custom_call.1} parent=1 // pred_fallthru
      _
    // Predicated region
    $region66: #{tpu_custom_call.1} parent=1 // pred_check
      _
    $region67: #{tpu_custom_call.1} parent=1 // pred_check_branch
      %135 = sbr.rel (0) target = $region69
    $region68: #{tpu_custom_call.1} parent=1 // pred_region
      %136 = dma.done [#allocation14], 32
    $region69: #{tpu_custom_call.1} parent=1 // pred_fallthru
      _
    // Predicated region
    $region70: #{tpu_custom_call.1} parent=1 // pred_check
      _
    $region71: #{tpu_custom_call.1} parent=1 // pred_check_branch
      %138 = sbr.rel (0) target = $region73
    $region72: #{tpu_custom_call.1} parent=1 // pred_region
      %139 = dma.done [#allocation17], 16
    $region73: #{tpu_custom_call.1} parent=1 // pred_fallthru
      _
    %140 = sfence
    %v141 = vld [vmem:[#allocation2] sm:$0xff]
    %v142 = vld [vmem:[#allocation2 + $0x8] sm:$0xff]
    %v143 = vld [vmem:[#allocation2 + $0x40] sm:$0xff]
    %v144 = vld [vmem:[#allocation2 + $0x48] sm:$0xff]
    %s145 = sld [smem:[#allocation6]]
    %v146 = vstv %s145
    %v147 = vmul.f32 %v141, %v146
    %v148 = vmul.f32 %v142, %v146
    %v149 = vmul.f32 %v143, %v146
    %v150 = vmul.f32 %v144, %v146
    %s151 = sld [smem:[#allocation7]]
    %v152 = vstv %s151
    %v153 = vadd.f32 %v147, %v152
    %v154 = vadd.f32 %v148, %v152
    %v155 = vadd.f32 %v149, %v152
    %v156 = vadd.f32 %v150, %v152
    %v157 = vmax.f32 %v153, 0.0
    %v158 = vmax.f32 %v154, 0.0
    %v159 = vmax.f32 %v155, 0.0
    %v160 = vmax.f32 %v156, 0.0
    %v163 = vrot.slane %v157, 1
    %v164 = vrot.slane %v159, 1
    %vm169 = vcmask 1040384
    %v170 = vrot.slane %v157, 7
    %v171 = vrot.slane %v158, 7
    %v172 = vsel %vm169, %v170, %v171
    %v173 = vrot.slane %v159, 7
    %v174 = vrot.slane %v160, 7
    %v175 = vsel %vm169, %v173, %v174
    %v180 = vrot.slane %v158, 5
    %v181 = vrot.slane %v160, 5
    %v184 = vsel %vm169, %v163, %v170
    %v185 = vsel %vm169, %v164, %v173
    %v186 = vsel %vm169, %v171, %v180
    %v187 = vsel %vm169, %v174, %v181
    %192 = vrot.lane.b32.xlu0 %v184, 127
    %v193 = vpop.permute.xlu0 %192
    %194 = vrot.lane.b32.xlu0 %v172, 127
    %v195 = vpop.permute.xlu0 %194
    %196 = vrot.lane.b32.xlu0 %v186, 127
    %v197 = vpop.permute.xlu0 %196
    %198 = vrot.lane.b32.xlu0 %v185, 127
    %v199 = vpop.permute.xlu0 %198
    %200 = vrot.lane.b32.xlu0 %v175, 127
    %v201 = vpop.permute.xlu0 %200
    %202 = vrot.lane.b32.xlu0 %v187, 127
    %v203 = vpop.permute.xlu0 %202
    %210 = vrot.lane.b32.xlu0 %v184, 1
    %v211 = vpop.permute.xlu0 %210
    %212 = vrot.lane.b32.xlu0 %v172, 1
    %v213 = vpop.permute.xlu0 %212
    %214 = vrot.lane.b32.xlu0 %v186, 1
    %v215 = vpop.permute.xlu0 %214
    %216 = vrot.lane.b32.xlu0 %v185, 1
    %v217 = vpop.permute.xlu0 %216
    %218 = vrot.lane.b32.xlu0 %v175, 1
    %v219 = vpop.permute.xlu0 %218
    %220 = vrot.lane.b32.xlu0 %v187, 1
    %v221 = vpop.permute.xlu0 %220
    %228 = vrot.lane.b32.xlu0 %v184, 3
    %v229 = vpop.permute.xlu0 %228
    %230 = vrot.lane.b32.xlu0 %v172, 3
    %v231 = vpop.permute.xlu0 %230
    %232 = vrot.lane.b32.xlu0 %v186, 3
    %v233 = vpop.permute.xlu0 %232
    %234 = vrot.lane.b32.xlu0 %v185, 3
    %v235 = vpop.permute.xlu0 %234
    %236 = vrot.lane.b32.xlu0 %v175, 3
    %v237 = vpop.permute.xlu0 %236
    %238 = vrot.lane.b32.xlu0 %v187, 3
    %v239 = vpop.permute.xlu0 %238
    %vm246 = vcmask 7168
    %v247 = vsel %vm246, %v193, %v211
    %v248 = vsel %vm246, %v195, %v213
    %v249 = vsel %vm246, %v197, %v215
    %v250 = vsel %vm246, %v199, %v217
    %v251 = vsel %vm246, %v201, %v219
    %v252 = vsel %vm246, %v203, %v221
    %vm253 = vcmask 138240
    %v254 = vsel %vm253, %v247, %v229
    %v255 = vsel %vm253, %v248, %v231
    %v256 = vsel %vm253, %v249, %v233
    %v257 = vsel %vm253, %v250, %v235
    %v258 = vsel %vm253, %v251, %v237
    %v259 = vsel %vm253, %v252, %v239
    %s260 = scalar_lea.vmem [#allocation2], 16
    %v261 = vld [vmem:[%s260] sm:$0xff]
    %v262 = vld [vmem:[%s260 + $0x8] sm:$0xff]
    %v263 = vld [vmem:[%s260 + $0x40] sm:$0xff]
    %v264 = vld [vmem:[%s260 + $0x48] sm:$0xff]
    %s265 = sld [smem:[#allocation6 + $0x1]]
    %v266 = vstv %s265
    %v267 = vmul.f32 %v261, %v266
    %v268 = vmul.f32 %v262, %v266
    %v269 = vmul.f32 %v263, %v266
    %v270 = vmul.f32 %v264, %v266
    %s271 = sld [smem:[#allocation7 + $0x1]]
    %v272 = vstv %s271
    %v273 = vadd.f32 %v267, %v272
    %v274 = vadd.f32 %v268, %v272
    %v275 = vadd.f32 %v269, %v272
    %v276 = vadd.f32 %v270, %v272
    %v277 = vmax.f32 %v273, 0.0
    %v278 = vmax.f32 %v274, 0.0
    %v279 = vmax.f32 %v275, 0.0
    %v280 = vmax.f32 %v276, 0.0
    %v283 = vrot.slane %v277, 1
    %v284 = vrot.slane %v279, 1
    %v289 = vrot.slane %v277, 7
    %v290 = vrot.slane %v278, 7
    %v291 = vsel %vm169, %v289, %v290
    %v292 = vrot.slane %v279, 7
    %v293 = vrot.slane %v280, 7
    %v294 = vsel %vm169, %v292, %v293
    %v299 = vrot.slane %v278, 5
    %v300 = vrot.slane %v280, 5
    %v303 = vsel %vm169, %v283, %v289
    %v304 = vsel %vm169, %v284, %v292
    %v305 = vsel %vm169, %v290, %v299
    %v306 = vsel %vm169, %v293, %v300
    %311 = vrot.lane.b32.xlu0 %v303, 127
    %v312 = vpop.permute.xlu0 %311
    %313 = vrot.lane.b32.xlu0 %v291, 127
    %v314 = vpop.permute.xlu0 %313
    %315 = vrot.lane.b32.xlu0 %v305, 127
    %v316 = vpop.permute.xlu0 %315
    %317 = vrot.lane.b32.xlu0 %v304, 127
    %v318 = vpop.permute.xlu0 %317
    %319 = vrot.lane.b32.xlu0 %v294, 127
    %v320 = vpop.permute.xlu0 %319
    %321 = vrot.lane.b32.xlu0 %v306, 127
    %v322 = vpop.permute.xlu0 %321
    %329 = vrot.lane.b32.xlu0 %v303, 1
    %v330 = vpop.permute.xlu0 %329
    %331 = vrot.lane.b32.xlu0 %v291, 1
    %v332 = vpop.permute.xlu0 %331
    %333 = vrot.lane.b32.xlu0 %v305, 1
    %v334 = vpop.permute.xlu0 %333
    %335 = vrot.lane.b32.xlu0 %v304, 1
    %v336 = vpop.permute.xlu0 %335
    %337 = vrot.lane.b32.xlu0 %v294, 1
    %v338 = vpop.permute.xlu0 %337
    %339 = vrot.lane.b32.xlu0 %v306, 1
    %v340 = vpop.permute.xlu0 %339
    %347 = vrot.lane.b32.xlu0 %v303, 3
    %v348 = vpop.permute.xlu0 %347
    %349 = vrot.lane.b32.xlu0 %v291, 3
    %v350 = vpop.permute.xlu0 %349
    %351 = vrot.lane.b32.xlu0 %v305, 3
    %v352 = vpop.permute.xlu0 %351
    %353 = vrot.lane.b32.xlu0 %v304, 3
    %v354 = vpop.permute.xlu0 %353
    %355 = vrot.lane.b32.xlu0 %v294, 3
    %v356 = vpop.permute.xlu0 %355
    %357 = vrot.lane.b32.xlu0 %v306, 3
    %v358 = vpop.permute.xlu0 %357
    %v365 = vsel %vm246, %v312, %v330
    %v366 = vsel %vm246, %v314, %v332
    %v367 = vsel %vm246, %v316, %v334
    %v368 = vsel %vm246, %v318, %v336
    %v369 = vsel %vm246, %v320, %v338
    %v370 = vsel %vm246, %v322, %v340
    %v371 = vsel %vm253, %v365, %v348
    %v372 = vsel %vm253, %v366, %v350
    %v373 = vsel %vm253, %v367, %v352
    %v374 = vsel %vm253, %v368, %v354
    %v375 = vsel %vm253, %v369, %v356
    %v376 = vsel %vm253, %v370, %v358
    %s377 = scalar_lea.vmem [#allocation2], 32
    %v378 = vld [vmem:[%s377] sm:$0xff]
    %v379 = vld [vmem:[%s377 + $0x8] sm:$0xff]
    %v380 = vld [vmem:[%s377 + $0x40] sm:$0xff]
    %v381 = vld [vmem:[%s377 + $0x48] sm:$0xff]
    %s382 = sld [smem:[#allocation6 + $0x2]]
    %v383 = vstv %s382
    %v384 = vmul.f32 %v378, %v383
    %v385 = vmul.f32 %v379, %v383
    %v386 = vmul.f32 %v380, %v383
    %v387 = vmul.f32 %v381, %v383
    %s388 = sld [smem:[#allocation7 + $0x2]]
    %v389 = vstv %s388
    %v390 = vadd.f32 %v384, %v389
    %v391 = vadd.f32 %v385, %v389
    %v392 = vadd.f32 %v386, %v389
    %v393 = vadd.f32 %v387, %v389
    %v394 = vmax.f32 %v390, 0.0
    %v395 = vmax.f32 %v391, 0.0
    %v396 = vmax.f32 %v392, 0.0
    %v397 = vmax.f32 %v393, 0.0
    %v400 = vrot.slane %v394, 1
    %v401 = vrot.slane %v396, 1
    %v406 = vrot.slane %v394, 7
    %v407 = vrot.slane %v395, 7
    %v408 = vsel %vm169, %v406, %v407
    %v409 = vrot.slane %v396, 7
    %v410 = vrot.slane %v397, 7
    %v411 = vsel %vm169, %v409, %v410
    %v416 = vrot.slane %v395, 5
    %v417 = vrot.slane %v397, 5
    %v420 = vsel %vm169, %v400, %v406
    %v421 = vsel %vm169, %v401, %v409
    %v422 = vsel %vm169, %v407, %v416
    %v423 = vsel %vm169, %v410, %v417
    %428 = vrot.lane.b32.xlu0 %v420, 127
    %v429 = vpop.permute.xlu0 %428
    %430 = vrot.lane.b32.xlu0 %v408, 127
    %v431 = vpop.permute.xlu0 %430
    %432 = vrot.lane.b32.xlu0 %v422, 127
    %v433 = vpop.permute.xlu0 %432
    %434 = vrot.lane.b32.xlu0 %v421, 127
    %v435 = vpop.permute.xlu0 %434
    %436 = vrot.lane.b32.xlu0 %v411, 127
    %v437 = vpop.permute.xlu0 %436
    %438 = vrot.lane.b32.xlu0 %v423, 127
    %v439 = vpop.permute.xlu0 %438
    %446 = vrot.lane.b32.xlu0 %v420, 1
    %v447 = vpop.permute.xlu0 %446
    %448 = vrot.lane.b32.xlu0 %v408, 1
    %v449 = vpop.permute.xlu0 %448
    %450 = vrot.lane.b32.xlu0 %v422, 1
    %v451 = vpop.permute.xlu0 %450
    %452 = vrot.lane.b32.xlu0 %v421, 1
    %v453 = vpop.permute.xlu0 %452
    %454 = vrot.lane.b32.xlu0 %v411, 1
    %v455 = vpop.permute.xlu0 %454
    %456 = vrot.lane.b32.xlu0 %v423, 1
    %v457 = vpop.permute.xlu0 %456
    %464 = vrot.lane.b32.xlu0 %v420, 3
    %v465 = vpop.permute.xlu0 %464
    %466 = vrot.lane.b32.xlu0 %v408, 3
    %v467 = vpop.permute.xlu0 %466
    %468 = vrot.lane.b32.xlu0 %v422, 3
    %v469 = vpop.permute.xlu0 %468
    %470 = vrot.lane.b32.xlu0 %v421, 3
    %v471 = vpop.permute.xlu0 %470
    %472 = vrot.lane.b32.xlu0 %v411, 3
    %v473 = vpop.permute.xlu0 %472
    %474 = vrot.lane.b32.xlu0 %v423, 3
    %v475 = vpop.permute.xlu0 %474
    %v482 = vsel %vm246, %v429, %v447
    %v483 = vsel %vm246, %v431, %v449
    %v484 = vsel %vm246, %v433, %v451
    %v485 = vsel %vm246, %v435, %v453
    %v486 = vsel %vm246, %v437, %v455
    %v487 = vsel %vm246, %v439, %v457
    %v488 = vsel %vm253, %v482, %v465
    %v489 = vsel %vm253, %v483, %v467
    %v490 = vsel %vm253, %v484, %v469
    %v491 = vsel %vm253, %v485, %v471
    %v492 = vsel %vm253, %v486, %v473
    %v493 = vsel %vm253, %v487, %v475
    %s494 = scalar_lea.vmem [#allocation2], 48
    %v495 = vld [vmem:[%s494] sm:$0xff]
    %v496 = vld [vmem:[%s494 + $0x8] sm:$0xff]
    %v497 = vld [vmem:[%s494 + $0x40] sm:$0xff]
    %v498 = vld [vmem:[%s494 + $0x48] sm:$0xff]
    %s499 = sld [smem:[#allocation6 + $0x3]]
    %v500 = vstv %s499
    %v501 = vmul.f32 %v495, %v500
    %v502 = vmul.f32 %v496, %v500
    %v503 = vmul.f32 %v497, %v500
    %v504 = vmul.f32 %v498, %v500
    %s505 = sld [smem:[#allocation7 + $0x3]]
    %v506 = vstv %s505
    %v507 = vadd.f32 %v501, %v506
    %v508 = vadd.f32 %v502, %v506
    %v509 = vadd.f32 %v503, %v506
    %v510 = vadd.f32 %v504, %v506
    %v511 = vmax.f32 %v507, 0.0
    %v512 = vmax.f32 %v508, 0.0
    %v513 = vmax.f32 %v509, 0.0
    %v514 = vmax.f32 %v510, 0.0
    %v517 = vrot.slane %v511, 1
    %v518 = vrot.slane %v513, 1
    %v523 = vrot.slane %v511, 7
    %v524 = vrot.slane %v512, 7
    %v525 = vsel %vm169, %v523, %v524
    %v526 = vrot.slane %v513, 7
    %v527 = vrot.slane %v514, 7
    %v528 = vsel %vm169, %v526, %v527
    %v533 = vrot.slane %v512, 5
    %v534 = vrot.slane %v514, 5
    %v537 = vsel %vm169, %v517, %v523
    %v538 = vsel %vm169, %v518, %v526
    %v539 = vsel %vm169, %v524, %v533
    %v540 = vsel %vm169, %v527, %v534
    %545 = vrot.lane.b32.xlu0 %v537, 127
    %v546 = vpop.permute.xlu0 %545
    %547 = vrot.lane.b32.xlu0 %v525, 127
    %v548 = vpop.permute.xlu0 %547
    %549 = vrot.lane.b32.xlu0 %v539, 127
    %v550 = vpop.permute.xlu0 %549
    %551 = vrot.lane.b32.xlu0 %v538, 127
    %v552 = vpop.permute.xlu0 %551
    %553 = vrot.lane.b32.xlu0 %v528, 127
    %v554 = vpop.permute.xlu0 %553
    %555 = vrot.lane.b32.xlu0 %v540, 127
    %v556 = vpop.permute.xlu0 %555
    %563 = vrot.lane.b32.xlu0 %v537, 1
    %v564 = vpop.permute.xlu0 %563
    %565 = vrot.lane.b32.xlu0 %v525, 1
    %v566 = vpop.permute.xlu0 %565
    %567 = vrot.lane.b32.xlu0 %v539, 1
    %v568 = vpop.permute.xlu0 %567
    %569 = vrot.lane.b32.xlu0 %v538, 1
    %v570 = vpop.permute.xlu0 %569
    %571 = vrot.lane.b32.xlu0 %v528, 1
    %v572 = vpop.permute.xlu0 %571
    %573 = vrot.lane.b32.xlu0 %v540, 1
    %v574 = vpop.permute.xlu0 %573
    %581 = vrot.lane.b32.xlu0 %v537, 3
    %v582 = vpop.permute.xlu0 %581
    %583 = vrot.lane.b32.xlu0 %v525, 3
    %v584 = vpop.permute.xlu0 %583
    %585 = vrot.lane.b32.xlu0 %v539, 3
    %v586 = vpop.permute.xlu0 %585
    %587 = vrot.lane.b32.xlu0 %v538, 3
    %v588 = vpop.permute.xlu0 %587
    %589 = vrot.lane.b32.xlu0 %v528, 3
    %v590 = vpop.permute.xlu0 %589
    %591 = vrot.lane.b32.xlu0 %v540, 3
    %v592 = vpop.permute.xlu0 %591
    %v599 = vsel %vm246, %v546, %v564
    %v600 = vsel %vm246, %v548, %v566
    %v601 = vsel %vm246, %v550, %v568
    %v602 = vsel %vm246, %v552, %v570
    %v603 = vsel %vm246, %v554, %v572
    %v604 = vsel %vm246, %v556, %v574
    %v605 = vsel %vm253, %v599, %v582
    %v606 = vsel %vm253, %v600, %v584
    %v607 = vsel %vm253, %v601, %v586
    %v608 = vsel %vm253, %v602, %v588
    %v609 = vsel %vm253, %v603, %v590
    %v610 = vsel %vm253, %v604, %v592
    %s611 = sld [smem:[#allocation10]]
    %v612 = vstv %s611
    %s613 = sld [smem:[#allocation10 + $0x1]]
    %v614 = vstv %s613
    %s615 = sld [smem:[#allocation10 + $0x2]]
    %v616 = vstv %s615
    %s617 = sld [smem:[#allocation10 + $0x3]]
    %v618 = vstv %s617
    %s619 = sld [smem:[#allocation9]]
    %v620 = vstv %s619
    %v621 = vmul.f32 %v620, %v254
    %v622 = vmul.f32 %v620, %v255
    %v623 = vmul.f32 %v620, %v257
    %v624 = vmul.f32 %v620, %v258
    %v625 = vadd.f32 %v612, %v621
    %v626 = vadd.f32 %v612, %v622
    %v627 = vadd.f32 %v612, %v623
    %v628 = vadd.f32 %v612, %v624
    %s629 = sld [smem:[#allocation9 + $0x24]]
    %v630 = vstv %s629
    %v631 = vmul.f32 %v630, %v254
    %v632 = vmul.f32 %v630, %v255
    %v633 = vmul.f32 %v630, %v257
    %v634 = vmul.f32 %v630, %v258
    %v635 = vadd.f32 %v614, %v631
    %v636 = vadd.f32 %v614, %v632
    %v637 = vadd.f32 %v614, %v633
    %v638 = vadd.f32 %v614, %v634
    %s639 = sld [smem:[#allocation9 + $0x48]]
    %v640 = vstv %s639
    %v641 = vmul.f32 %v640, %v254
    %v642 = vmul.f32 %v640, %v255
    %v643 = vmul.f32 %v640, %v257
    %v644 = vmul.f32 %v640, %v258
    %v645 = vadd.f32 %v616, %v641
    %v646 = vadd.f32 %v616, %v642
    %v647 = vadd.f32 %v616, %v643
    %v648 = vadd.f32 %v616, %v644
    %s649 = sld [smem:[#allocation9 + $0x6c]]
    %v650 = vstv %s649
    %v651 = vmul.f32 %v650, %v254
    %v652 = vmul.f32 %v650, %v255
    %v653 = vmul.f32 %v650, %v257
    %v654 = vmul.f32 %v650, %v258
    %v655 = vadd.f32 %v618, %v651
    %v656 = vadd.f32 %v618, %v652
    %v657 = vadd.f32 %v618, %v653
    %v658 = vadd.f32 %v618, %v654
    %s659 = sld [smem:[#allocation9 + $0x1]]
    %v660 = vstv %s659
    %v661 = vmul.f32 %v660, %v254
    %v662 = vmul.f32 %v660, %v255
    %v663 = vmul.f32 %v660, %v257
    %v664 = vmul.f32 %v660, %v258
    %669 = vrot.lane.b32.xlu0 %v661, 127
    %v670 = vpop.permute.xlu0 %669
    %671 = vrot.lane.b32.xlu0 %v662, 127
    %v672 = vpop.permute.xlu0 %671
    %673 = vrot.lane.b32.xlu0 %v663, 127
    %v674 = vpop.permute.xlu0 %673
    %675 = vrot.lane.b32.xlu0 %v664, 127
    %v676 = vpop.permute.xlu0 %675
    %v681 = vadd.f32 %v625, %v670
    %v682 = vadd.f32 %v626, %v672
    %v683 = vadd.f32 %v627, %v674
    %v684 = vadd.f32 %v628, %v676
    %s685 = sld [smem:[#allocation9 + $0x25]]
    %v686 = vstv %s685
    %v687 = vmul.f32 %v686, %v254
    %v688 = vmul.f32 %v686, %v255
    %v689 = vmul.f32 %v686, %v257
    %v690 = vmul.f32 %v686, %v258
    %695 = vrot.lane.b32.xlu0 %v687, 127
    %v696 = vpop.permute.xlu0 %695
    %697 = vrot.lane.b32.xlu0 %v688, 127
    %v698 = vpop.permute.xlu0 %697
    %699 = vrot.lane.b32.xlu0 %v689, 127
    %v700 = vpop.permute.xlu0 %699
    %701 = vrot.lane.b32.xlu0 %v690, 127
    %v702 = vpop.permute.xlu0 %701
    %v707 = vadd.f32 %v635, %v696
    %v708 = vadd.f32 %v636, %v698
    %v709 = vadd.f32 %v637, %v700
    %v710 = vadd.f32 %v638, %v702
    %s711 = sld [smem:[#allocation9 + $0x49]]
    %v712 = vstv %s711
    %v713 = vmul.f32 %v712, %v254
    %v714 = vmul.f32 %v712, %v255
    %v715 = vmul.f32 %v712, %v257
    %v716 = vmul.f32 %v712, %v258
    %721 = vrot.lane.b32.xlu0 %v713, 127
    %v722 = vpop.permute.xlu0 %721
    %723 = vrot.lane.b32.xlu0 %v714, 127
    %v724 = vpop.permute.xlu0 %723
    %725 = vrot.lane.b32.xlu0 %v715, 127
    %v726 = vpop.permute.xlu0 %725
    %727 = vrot.lane.b32.xlu0 %v716, 127
    %v728 = vpop.permute.xlu0 %727
    %v733 = vadd.f32 %v645, %v722
    %v734 = vadd.f32 %v646, %v724
    %v735 = vadd.f32 %v647, %v726
    %v736 = vadd.f32 %v648, %v728
    %s737 = sld [smem:[#allocation9 + $0x6d]]
    %v738 = vstv %s737
    %v739 = vmul.f32 %v738, %v254
    %v740 = vmul.f32 %v738, %v255
    %v741 = vmul.f32 %v738, %v257
    %v742 = vmul.f32 %v738, %v258
    %747 = vrot.lane.b32.xlu0 %v739, 127
    %v748 = vpop.permute.xlu0 %747
    %749 = vrot.lane.b32.xlu0 %v740, 127
    %v750 = vpop.permute.xlu0 %749
    %751 = vrot.lane.b32.xlu0 %v741, 127
    %v752 = vpop.permute.xlu0 %751
    %753 = vrot.lane.b32.xlu0 %v742, 127
    %v754 = vpop.permute.xlu0 %753
    %v759 = vadd.f32 %v655, %v748
    %v760 = vadd.f32 %v656, %v750
    %v761 = vadd.f32 %v657, %v752
    %v762 = vadd.f32 %v658, %v754
    %s763 = sld [smem:[#allocation9 + $0x2]]
    %v764 = vstv %s763
    %v765 = vmul.f32 %v764, %v254
    %v766 = vmul.f32 %v764, %v255
    %v767 = vmul.f32 %v764, %v257
    %v768 = vmul.f32 %v764, %v258
    %773 = vrot.lane.b32.xlu0 %v765, 126
    %v774 = vpop.permute.xlu0 %773
    %775 = vrot.lane.b32.xlu0 %v766, 126
    %v776 = vpop.permute.xlu0 %775
    %777 = vrot.lane.b32.xlu0 %v767, 126
    %v778 = vpop.permute.xlu0 %777
    %779 = vrot.lane.b32.xlu0 %v768, 126
    %v780 = vpop.permute.xlu0 %779
    %v785 = vadd.f32 %v681, %v774
    %v786 = vadd.f32 %v682, %v776
    %v787 = vadd.f32 %v683, %v778
    %v788 = vadd.f32 %v684, %v780
    %s789 = sld [smem:[#allocation9 + $0x26]]
    %v790 = vstv %s789
    %v791 = vmul.f32 %v790, %v254
    %v792 = vmul.f32 %v790, %v255
    %v793 = vmul.f32 %v790, %v257
    %v794 = vmul.f32 %v790, %v258
    %799 = vrot.lane.b32.xlu0 %v791, 126
    %v800 = vpop.permute.xlu0 %799
    %801 = vrot.lane.b32.xlu0 %v792, 126
    %v802 = vpop.permute.xlu0 %801
    %803 = vrot.lane.b32.xlu0 %v793, 126
    %v804 = vpop.permute.xlu0 %803
    %805 = vrot.lane.b32.xlu0 %v794, 126
    %v806 = vpop.permute.xlu0 %805
    %v811 = vadd.f32 %v707, %v800
    %v812 = vadd.f32 %v708, %v802
    %v813 = vadd.f32 %v709, %v804
    %v814 = vadd.f32 %v710, %v806
    %s815 = sld [smem:[#allocation9 + $0x4a]]
    %v816 = vstv %s815
    %v817 = vmul.f32 %v816, %v254
    %v818 = vmul.f32 %v816, %v255
    %v819 = vmul.f32 %v816, %v257
    %v820 = vmul.f32 %v816, %v258
    %825 = vrot.lane.b32.xlu0 %v817, 126
    %v826 = vpop.permute.xlu0 %825
    %827 = vrot.lane.b32.xlu0 %v818, 126
    %v828 = vpop.permute.xlu0 %827
    %829 = vrot.lane.b32.xlu0 %v819, 126
    %v830 = vpop.permute.xlu0 %829
    %831 = vrot.lane.b32.xlu0 %v820, 126
    %v832 = vpop.permute.xlu0 %831
    %v837 = vadd.f32 %v733, %v826
    %v838 = vadd.f32 %v734, %v828
    %v839 = vadd.f32 %v735, %v830
    %v840 = vadd.f32 %v736, %v832
    %s841 = sld [smem:[#allocation9 + $0x6e]]
    %v842 = vstv %s841
    %v843 = vmul.f32 %v842, %v254
    %v844 = vmul.f32 %v842, %v255
    %v845 = vmul.f32 %v842, %v257
    %v846 = vmul.f32 %v842, %v258
    %851 = vrot.lane.b32.xlu0 %v843, 126
    %v852 = vpop.permute.xlu0 %851
    %853 = vrot.lane.b32.xlu0 %v844, 126
    %v854 = vpop.permute.xlu0 %853
    %855 = vrot.lane.b32.xlu0 %v845, 126
    %v856 = vpop.permute.xlu0 %855
    %857 = vrot.lane.b32.xlu0 %v846, 126
    %v858 = vpop.permute.xlu0 %857
    %v863 = vadd.f32 %v759, %v852
    %v864 = vadd.f32 %v760, %v854
    %v865 = vadd.f32 %v761, %v856
    %v866 = vadd.f32 %v762, %v858
    %s867 = sld [smem:[#allocation9 + $0x3]]
    %v868 = vstv %s867
    %v869 = vmul.f32 %v868, %v254
    %v870 = vmul.f32 %v868, %v255
    %v871 = vmul.f32 %v868, %v256
    %v872 = vmul.f32 %v868, %v257
    %v873 = vmul.f32 %v868, %v258
    %v874 = vmul.f32 %v868, %v259
    %vm881 = vcmask 1046528
    %v882 = vrot.slane %v869, 1
    %v883 = vrot.slane %v870, 1
    %v884 = vsel %vm881, %v882, %v883
    %v885 = vrot.slane %v871, 1
    %v886 = vsel %vm881, %v883, %v885
    %v887 = vrot.slane %v872, 1
    %v888 = vrot.slane %v873, 1
    %v889 = vsel %vm881, %v887, %v888
    %v890 = vrot.slane %v874, 1
    %v891 = vsel %vm881, %v888, %v890
    %v896 = vadd.f32 %v785, %v884
    %v897 = vadd.f32 %v786, %v886
    %v898 = vadd.f32 %v787, %v889
    %v899 = vadd.f32 %v788, %v891
    %s900 = sld [smem:[#allocation9 + $0x27]]
    %v901 = vstv %s900
    %v902 = vmul.f32 %v901, %v254
    %v903 = vmul.f32 %v901, %v255
    %v904 = vmul.f32 %v901, %v256
    %v905 = vmul.f32 %v901, %v257
    %v906 = vmul.f32 %v901, %v258
    %v907 = vmul.f32 %v901, %v259
    %v914 = vrot.slane %v902, 1
    %v915 = vrot.slane %v903, 1
    %v916 = vsel %vm881, %v914, %v915
    %v917 = vrot.slane %v904, 1
    %v918 = vsel %vm881, %v915, %v917
    %v919 = vrot.slane %v905, 1
    %v920 = vrot.slane %v906, 1
    %v921 = vsel %vm881, %v919, %v920
    %v922 = vrot.slane %v907, 1
    %v923 = vsel %vm881, %v920, %v922
    %v928 = vadd.f32 %v811, %v916
    %v929 = vadd.f32 %v812, %v918
    %v930 = vadd.f32 %v813, %v921
    %v931 = vadd.f32 %v814, %v923
    %s932 = sld [smem:[#allocation9 + $0x4b]]
    %v933 = vstv %s932
    %v934 = vmul.f32 %v933, %v254
    %v935 = vmul.f32 %v933, %v255
    %v936 = vmul.f32 %v933, %v256
    %v937 = vmul.f32 %v933, %v257
    %v938 = vmul.f32 %v933, %v258
    %v939 = vmul.f32 %v933, %v259
    %v946 = vrot.slane %v934, 1
    %v947 = vrot.slane %v935, 1
    %v948 = vsel %vm881, %v946, %v947
    %v949 = vrot.slane %v936, 1
    %v950 = vsel %vm881, %v947, %v949
    %v951 = vrot.slane %v937, 1
    %v952 = vrot.slane %v938, 1
    %v953 = vsel %vm881, %v951, %v952
    %v954 = vrot.slane %v939, 1
    %v955 = vsel %vm881, %v952, %v954
    %v960 = vadd.f32 %v837, %v948
    %v961 = vadd.f32 %v838, %v950
    %v962 = vadd.f32 %v839, %v953
    %v963 = vadd.f32 %v840, %v955
    %s964 = sld [smem:[#allocation9 + $0x6f]]
    %v965 = vstv %s964
    %v966 = vmul.f32 %v965, %v254
    %v967 = vmul.f32 %v965, %v255
    %v968 = vmul.f32 %v965, %v256
    %v969 = vmul.f32 %v965, %v257
    %v970 = vmul.f32 %v965, %v258
    %v971 = vmul.f32 %v965, %v259
    %v978 = vrot.slane %v966, 1
    %v979 = vrot.slane %v967, 1
    %v980 = vsel %vm881, %v978, %v979
    %v981 = vrot.slane %v968, 1
    %v982 = vsel %vm881, %v979, %v981
    %v983 = vrot.slane %v969, 1
    %v984 = vrot.slane %v970, 1
    %v985 = vsel %vm881, %v983, %v984
    %v986 = vrot.slane %v971, 1
    %v987 = vsel %vm881, %v984, %v986
    %v992 = vadd.f32 %v863, %v980
    %v993 = vadd.f32 %v864, %v982
    %v994 = vadd.f32 %v865, %v985
    %v995 = vadd.f32 %v866, %v987
    %s996 = sld [smem:[#allocation9 + $0x4]]
    %v997 = vstv %s996
    %v998 = vmul.f32 %v997, %v254
    %v999 = vmul.f32 %v997, %v255
    %v1000 = vmul.f32 %v997, %v256
    %v1001 = vmul.f32 %v997, %v257
    %v1002 = vmul.f32 %v997, %v258
    %v1003 = vmul.f32 %v997, %v259
    %v1010 = vrot.slane %v998, 1
    %v1011 = vrot.slane %v999, 1
    %v1012 = vsel %vm881, %v1010, %v1011
    %v1013 = vrot.slane %v1000, 1
    %v1014 = vsel %vm881, %v1011, %v1013
    %v1015 = vrot.slane %v1001, 1
    %v1016 = vrot.slane %v1002, 1
    %v1017 = vsel %vm881, %v1015, %v1016
    %v1018 = vrot.slane %v1003, 1
    %v1019 = vsel %vm881, %v1016, %v1018
    %1020 = vrot.lane.b32.xlu0 %v1012, 127
    %v1021 = vpop.permute.xlu0 %1020
    %1022 = vrot.lane.b32.xlu0 %v1014, 127
    %v1023 = vpop.permute.xlu0 %1022
    %1024 = vrot.lane.b32.xlu0 %v1017, 127
    %v1025 = vpop.permute.xlu0 %1024
    %1026 = vrot.lane.b32.xlu0 %v1019, 127
    %v1027 = vpop.permute.xlu0 %1026
    %v1032 = vadd.f32 %v896, %v1021
    %v1033 = vadd.f32 %v897, %v1023
    %v1034 = vadd.f32 %v898, %v1025
    %v1035 = vadd.f32 %v899, %v1027
    %s1036 = sld [smem:[#allocation9 + $0x28]]
    %v1037 = vstv %s1036
    %v1038 = vmul.f32 %v1037, %v254
    %v1039 = vmul.f32 %v1037, %v255
    %v1040 = vmul.f32 %v1037, %v256
    %v1041 = vmul.f32 %v1037, %v257
    %v1042 = vmul.f32 %v1037, %v258
    %v1043 = vmul.f32 %v1037, %v259
    %v1050 = vrot.slane %v1038, 1
    %v1051 = vrot.slane %v1039, 1
    %v1052 = vsel %vm881, %v1050, %v1051
    %v1053 = vrot.slane %v1040, 1
    %v1054 = vsel %vm881, %v1051, %v1053
    %v1055 = vrot.slane %v1041, 1
    %v1056 = vrot.slane %v1042, 1
    %v1057 = vsel %vm881, %v1055, %v1056
    %v1058 = vrot.slane %v1043, 1
    %v1059 = vsel %vm881, %v1056, %v1058
    %1060 = vrot.lane.b32.xlu0 %v1052, 127
    %v1061 = vpop.permute.xlu0 %1060
    %1062 = vrot.lane.b32.xlu0 %v1054, 127
    %v1063 = vpop.permute.xlu0 %1062
    %1064 = vrot.lane.b32.xlu0 %v1057, 127
    %v1065 = vpop.permute.xlu0 %1064
    %1066 = vrot.lane.b32.xlu0 %v1059, 127
    %v1067 = vpop.permute.xlu0 %1066
    %v1072 = vadd.f32 %v928, %v1061
    %v1073 = vadd.f32 %v929, %v1063
    %v1074 = vadd.f32 %v930, %v1065
    %v1075 = vadd.f32 %v931, %v1067
    %s1076 = sld [smem:[#allocation9 + $0x4c]]
    %v1077 = vstv %s1076
    %v1078 = vmul.f32 %v1077, %v254
    %v1079 = vmul.f32 %v1077, %v255
    %v1080 = vmul.f32 %v1077, %v256
    %v1081 = vmul.f32 %v1077, %v257
    %v1082 = vmul.f32 %v1077, %v258
    %v1083 = vmul.f32 %v1077, %v259
    %v1090 = vrot.slane %v1078, 1
    %v1091 = vrot.slane %v1079, 1
    %v1092 = vsel %vm881, %v1090, %v1091
    %v1093 = vrot.slane %v1080, 1
    %v1094 = vsel %vm881, %v1091, %v1093
    %v1095 = vrot.slane %v1081, 1
    %v1096 = vrot.slane %v1082, 1
    %v1097 = vsel %vm881, %v1095, %v1096
    %v1098 = vrot.slane %v1083, 1
    %v1099 = vsel %vm881, %v1096, %v1098
    %1100 = vrot.lane.b32.xlu0 %v1092, 127
    %v1101 = vpop.permute.xlu0 %1100
    %1102 = vrot.lane.b32.xlu0 %v1094, 127
    %v1103 = vpop.permute.xlu0 %1102
    %1104 = vrot.lane.b32.xlu0 %v1097, 127
    %v1105 = vpop.permute.xlu0 %1104
    %1106 = vrot.lane.b32.xlu0 %v1099, 127
    %v1107 = vpop.permute.xlu0 %1106
    %v1112 = vadd.f32 %v960, %v1101
    %v1113 = vadd.f32 %v961, %v1103
    %v1114 = vadd.f32 %v962, %v1105
    %v1115 = vadd.f32 %v963, %v1107
    %s1116 = sld [smem:[#allocation9 + $0x70]]
    %v1117 = vstv %s1116
    %v1118 = vmul.f32 %v1117, %v254
    %v1119 = vmul.f32 %v1117, %v255
    %v1120 = vmul.f32 %v1117, %v256
    %v1121 = vmul.f32 %v1117, %v257
    %v1122 = vmul.f32 %v1117, %v258
    %v1123 = vmul.f32 %v1117, %v259
    %v1130 = vrot.slane %v1118, 1
    %v1131 = vrot.slane %v1119, 1
    %v1132 = vsel %vm881, %v1130, %v1131
    %v1133 = vrot.slane %v1120, 1
    %v1134 = vsel %vm881, %v1131, %v1133
    %v1135 = vrot.slane %v1121, 1
    %v1136 = vrot.slane %v1122, 1
    %v1137 = vsel %vm881, %v1135, %v1136
    %v1138 = vrot.slane %v1123, 1
    %v1139 = vsel %vm881, %v1136, %v1138
    %1140 = vrot.lane.b32.xlu0 %v1132, 127
    %v1141 = vpop.permute.xlu0 %1140
    %1142 = vrot.lane.b32.xlu0 %v1134, 127
    %v1143 = vpop.permute.xlu0 %1142
    %1144 = vrot.lane.b32.xlu0 %v1137, 127
    %v1145 = vpop.permute.xlu0 %1144
    %1146 = vrot.lane.b32.xlu0 %v1139, 127
    %v1147 = vpop.permute.xlu0 %1146
    %v1152 = vadd.f32 %v992, %v1141
    %v1153 = vadd.f32 %v993, %v1143
    %v1154 = vadd.f32 %v994, %v1145
    %v1155 = vadd.f32 %v995, %v1147
    %s1156 = sld [smem:[#allocation9 + $0x5]]
    %v1157 = vstv %s1156
    %v1158 = vmul.f32 %v1157, %v254
    %v1159 = vmul.f32 %v1157, %v255
    %v1160 = vmul.f32 %v1157, %v256
    %v1161 = vmul.f32 %v1157, %v257
    %v1162 = vmul.f32 %v1157, %v258
    %v1163 = vmul.f32 %v1157, %v259
    %v1170 = vrot.slane %v1158, 1
    %v1171 = vrot.slane %v1159, 1
    %v1172 = vsel %vm881, %v1170, %v1171
    %v1173 = vrot.slane %v1160, 1
    %v1174 = vsel %vm881, %v1171, %v1173
    %v1175 = vrot.slane %v1161, 1
    %v1176 = vrot.slane %v1162, 1
    %v1177 = vsel %vm881, %v1175, %v1176
    %v1178 = vrot.slane %v1163, 1
    %v1179 = vsel %vm881, %v1176, %v1178
    %1180 = vrot.lane.b32.xlu0 %v1172, 126
    %v1181 = vpop.permute.xlu0 %1180
    %1182 = vrot.lane.b32.xlu0 %v1174, 126
    %v1183 = vpop.permute.xlu0 %1182
    %1184 = vrot.lane.b32.xlu0 %v1177, 126
    %v1185 = vpop.permute.xlu0 %1184
    %1186 = vrot.lane.b32.xlu0 %v1179, 126
    %v1187 = vpop.permute.xlu0 %1186
    %v1192 = vadd.f32 %v1032, %v1181
    %v1193 = vadd.f32 %v1033, %v1183
    %v1194 = vadd.f32 %v1034, %v1185
    %v1195 = vadd.f32 %v1035, %v1187
    %s1196 = sld [smem:[#allocation9 + $0x29]]
    %v1197 = vstv %s1196
    %v1198 = vmul.f32 %v1197, %v254
    %v1199 = vmul.f32 %v1197, %v255
    %v1200 = vmul.f32 %v1197, %v256
    %v1201 = vmul.f32 %v1197, %v257
    %v1202 = vmul.f32 %v1197, %v258
    %v1203 = vmul.f32 %v1197, %v259
    %v1210 = vrot.slane %v1198, 1
    %v1211 = vrot.slane %v1199, 1
    %v1212 = vsel %vm881, %v1210, %v1211
    %v1213 = vrot.slane %v1200, 1
    %v1214 = vsel %vm881, %v1211, %v1213
    %v1215 = vrot.slane %v1201, 1
    %v1216 = vrot.slane %v1202, 1
    %v1217 = vsel %vm881, %v1215, %v1216
    %v1218 = vrot.slane %v1203, 1
    %v1219 = vsel %vm881, %v1216, %v1218
    %1220 = vrot.lane.b32.xlu0 %v1212, 126
    %v1221 = vpop.permute.xlu0 %1220
    %1222 = vrot.lane.b32.xlu0 %v1214, 126
    %v1223 = vpop.permute.xlu0 %1222
    %1224 = vrot.lane.b32.xlu0 %v1217, 126
    %v1225 = vpop.permute.xlu0 %1224
    %1226 = vrot.lane.b32.xlu0 %v1219, 126
    %v1227 = vpop.permute.xlu0 %1226
    %v1232 = vadd.f32 %v1072, %v1221
    %v1233 = vadd.f32 %v1073, %v1223
    %v1234 = vadd.f32 %v1074, %v1225
    %v1235 = vadd.f32 %v1075, %v1227
    %s1236 = sld [smem:[#allocation9 + $0x4d]]
    %v1237 = vstv %s1236
    %v1238 = vmul.f32 %v1237, %v254
    %v1239 = vmul.f32 %v1237, %v255
    %v1240 = vmul.f32 %v1237, %v256
    %v1241 = vmul.f32 %v1237, %v257
    %v1242 = vmul.f32 %v1237, %v258
    %v1243 = vmul.f32 %v1237, %v259
    %v1250 = vrot.slane %v1238, 1
    %v1251 = vrot.slane %v1239, 1
    %v1252 = vsel %vm881, %v1250, %v1251
    %v1253 = vrot.slane %v1240, 1
    %v1254 = vsel %vm881, %v1251, %v1253
    %v1255 = vrot.slane %v1241, 1
    %v1256 = vrot.slane %v1242, 1
    %v1257 = vsel %vm881, %v1255, %v1256
    %v1258 = vrot.slane %v1243, 1
    %v1259 = vsel %vm881, %v1256, %v1258
    %1260 = vrot.lane.b32.xlu0 %v1252, 126
    %v1261 = vpop.permute.xlu0 %1260
    %1262 = vrot.lane.b32.xlu0 %v1254, 126
    %v1263 = vpop.permute.xlu0 %1262
    %1264 = vrot.lane.b32.xlu0 %v1257, 126
    %v1265 = vpop.permute.xlu0 %1264
    %1266 = vrot.lane.b32.xlu0 %v1259, 126
    %v1267 = vpop.permute.xlu0 %1266
    %v1272 = vadd.f32 %v1112, %v1261
    %v1273 = vadd.f32 %v1113, %v1263
    %v1274 = vadd.f32 %v1114, %v1265
    %v1275 = vadd.f32 %v1115, %v1267
    %s1276 = sld [smem:[#allocation9 + $0x71]]
    %v1277 = vstv %s1276
    %v1278 = vmul.f32 %v1277, %v254
    %v1279 = vmul.f32 %v1277, %v255
    %v1280 = vmul.f32 %v1277, %v256
    %v1281 = vmul.f32 %v1277, %v257
    %v1282 = vmul.f32 %v1277, %v258
    %v1283 = vmul.f32 %v1277, %v259
    %v1290 = vrot.slane %v1278, 1
    %v1291 = vrot.slane %v1279, 1
    %v1292 = vsel %vm881, %v1290, %v1291
    %v1293 = vrot.slane %v1280, 1
    %v1294 = vsel %vm881, %v1291, %v1293
    %v1295 = vrot.slane %v1281, 1
    %v1296 = vrot.slane %v1282, 1
    %v1297 = vsel %vm881, %v1295, %v1296
    %v1298 = vrot.slane %v1283, 1
    %v1299 = vsel %vm881, %v1296, %v1298
    %1300 = vrot.lane.b32.xlu0 %v1292, 126
    %v1301 = vpop.permute.xlu0 %1300
    %1302 = vrot.lane.b32.xlu0 %v1294, 126
    %v1303 = vpop.permute.xlu0 %1302
    %1304 = vrot.lane.b32.xlu0 %v1297, 126
    %v1305 = vpop.permute.xlu0 %1304
    %1306 = vrot.lane.b32.xlu0 %v1299, 126
    %v1307 = vpop.permute.xlu0 %1306
    %v1312 = vadd.f32 %v1152, %v1301
    %v1313 = vadd.f32 %v1153, %v1303
    %v1314 = vadd.f32 %v1154, %v1305
    %v1315 = vadd.f32 %v1155, %v1307
    %s1316 = sld [smem:[#allocation9 + $0x6]]
    %v1317 = vstv %s1316
    %v1318 = vmul.f32 %v1317, %v254
    %v1319 = vmul.f32 %v1317, %v255
    %v1320 = vmul.f32 %v1317, %v256
    %v1321 = vmul.f32 %v1317, %v257
    %v1322 = vmul.f32 %v1317, %v258
    %v1323 = vmul.f32 %v1317, %v259
    %vm1330 = vcmask 1045504
    %v1331 = vrot.slane %v1318, 2
    %v1332 = vrot.slane %v1319, 2
    %v1333 = vsel %vm1330, %v1331, %v1332
    %v1334 = vrot.slane %v1320, 2
    %v1335 = vsel %vm1330, %v1332, %v1334
    %v1336 = vrot.slane %v1321, 2
    %v1337 = vrot.slane %v1322, 2
    %v1338 = vsel %vm1330, %v1336, %v1337
    %v1339 = vrot.slane %v1323, 2
    %v1340 = vsel %vm1330, %v1337, %v1339
    %v1345 = vadd.f32 %v1192, %v1333
    %v1346 = vadd.f32 %v1193, %v1335
    %v1347 = vadd.f32 %v1194, %v1338
    %v1348 = vadd.f32 %v1195, %v1340
    %s1349 = sld [smem:[#allocation9 + $0x2a]]
    %v1350 = vstv %s1349
    %v1351 = vmul.f32 %v1350, %v254
    %v1352 = vmul.f32 %v1350, %v255
    %v1353 = vmul.f32 %v1350, %v256
    %v1354 = vmul.f32 %v1350, %v257
    %v1355 = vmul.f32 %v1350, %v258
    %v1356 = vmul.f32 %v1350, %v259
    %v1363 = vrot.slane %v1351, 2
    %v1364 = vrot.slane %v1352, 2
    %v1365 = vsel %vm1330, %v1363, %v1364
    %v1366 = vrot.slane %v1353, 2
    %v1367 = vsel %vm1330, %v1364, %v1366
    %v1368 = vrot.slane %v1354, 2
    %v1369 = vrot.slane %v1355, 2
    %v1370 = vsel %vm1330, %v1368, %v1369
    %v1371 = vrot.slane %v1356, 2
    %v1372 = vsel %vm1330, %v1369, %v1371
    %v1377 = vadd.f32 %v1232, %v1365
    %v1378 = vadd.f32 %v1233, %v1367
    %v1379 = vadd.f32 %v1234, %v1370
    %v1380 = vadd.f32 %v1235, %v1372
    %s1381 = sld [smem:[#allocation9 + $0x4e]]
    %v1382 = vstv %s1381
    %v1383 = vmul.f32 %v1382, %v254
    %v1384 = vmul.f32 %v1382, %v255
    %v1385 = vmul.f32 %v1382, %v256
    %v1386 = vmul.f32 %v1382, %v257
    %v1387 = vmul.f32 %v1382, %v258
    %v1388 = vmul.f32 %v1382, %v259
    %v1395 = vrot.slane %v1383, 2
    %v1396 = vrot.slane %v1384, 2
    %v1397 = vsel %vm1330, %v1395, %v1396
    %v1398 = vrot.slane %v1385, 2
    %v1399 = vsel %vm1330, %v1396, %v1398
    %v1400 = vrot.slane %v1386, 2
    %v1401 = vrot.slane %v1387, 2
    %v1402 = vsel %vm1330, %v1400, %v1401
    %v1403 = vrot.slane %v1388, 2
    %v1404 = vsel %vm1330, %v1401, %v1403
    %v1409 = vadd.f32 %v1272, %v1397
    %v1410 = vadd.f32 %v1273, %v1399
    %v1411 = vadd.f32 %v1274, %v1402
    %v1412 = vadd.f32 %v1275, %v1404
    %s1413 = sld [smem:[#allocation9 + $0x72]]
    %v1414 = vstv %s1413
    %v1415 = vmul.f32 %v1414, %v254
    %v1416 = vmul.f32 %v1414, %v255
    %v1417 = vmul.f32 %v1414, %v256
    %v1418 = vmul.f32 %v1414, %v257
    %v1419 = vmul.f32 %v1414, %v258
    %v1420 = vmul.f32 %v1414, %v259
    %v1427 = vrot.slane %v1415, 2
    %v1428 = vrot.slane %v1416, 2
    %v1429 = vsel %vm1330, %v1427, %v1428
    %v1430 = vrot.slane %v1417, 2
    %v1431 = vsel %vm1330, %v1428, %v1430
    %v1432 = vrot.slane %v1418, 2
    %v1433 = vrot.slane %v1419, 2
    %v1434 = vsel %vm1330, %v1432, %v1433
    %v1435 = vrot.slane %v1420, 2
    %v1436 = vsel %vm1330, %v1433, %v1435
    %v1441 = vadd.f32 %v1312, %v1429
    %v1442 = vadd.f32 %v1313, %v1431
    %v1443 = vadd.f32 %v1314, %v1434
    %v1444 = vadd.f32 %v1315, %v1436
    %s1445 = sld [smem:[#allocation9 + $0x7]]
    %v1446 = vstv %s1445
    %v1447 = vmul.f32 %v1446, %v254
    %v1448 = vmul.f32 %v1446, %v255
    %v1449 = vmul.f32 %v1446, %v256
    %v1450 = vmul.f32 %v1446, %v257
    %v1451 = vmul.f32 %v1446, %v258
    %v1452 = vmul.f32 %v1446, %v259
    %v1459 = vrot.slane %v1447, 2
    %v1460 = vrot.slane %v1448, 2
    %v1461 = vsel %vm1330, %v1459, %v1460
    %v1462 = vrot.slane %v1449, 2
    %v1463 = vsel %vm1330, %v1460, %v1462
    %v1464 = vrot.slane %v1450, 2
    %v1465 = vrot.slane %v1451, 2
    %v1466 = vsel %vm1330, %v1464, %v1465
    %v1467 = vrot.slane %v1452, 2
    %v1468 = vsel %vm1330, %v1465, %v1467
    %1469 = vrot.lane.b32.xlu0 %v1461, 127
    %v1470 = vpop.permute.xlu0 %1469
    %1471 = vrot.lane.b32.xlu0 %v1463, 127
    %v1472 = vpop.permute.xlu0 %1471
    %1473 = vrot.lane.b32.xlu0 %v1466, 127
    %v1474 = vpop.permute.xlu0 %1473
    %1475 = vrot.lane.b32.xlu0 %v1468, 127
    %v1476 = vpop.permute.xlu0 %1475
    %v1481 = vadd.f32 %v1345, %v1470
    %v1482 = vadd.f32 %v1346, %v1472
    %v1483 = vadd.f32 %v1347, %v1474
    %v1484 = vadd.f32 %v1348, %v1476
    %s1485 = sld [smem:[#allocation9 + $0x2b]]
    %v1486 = vstv %s1485
    %v1487 = vmul.f32 %v1486, %v254
    %v1488 = vmul.f32 %v1486, %v255
    %v1489 = vmul.f32 %v1486, %v256
    %v1490 = vmul.f32 %v1486, %v257
    %v1491 = vmul.f32 %v1486, %v258
    %v1492 = vmul.f32 %v1486, %v259
    %v1499 = vrot.slane %v1487, 2
    %v1500 = vrot.slane %v1488, 2
    %v1501 = vsel %vm1330, %v1499, %v1500
    %v1502 = vrot.slane %v1489, 2
    %v1503 = vsel %vm1330, %v1500, %v1502
    %v1504 = vrot.slane %v1490, 2
    %v1505 = vrot.slane %v1491, 2
    %v1506 = vsel %vm1330, %v1504, %v1505
    %v1507 = vrot.slane %v1492, 2
    %v1508 = vsel %vm1330, %v1505, %v1507
    %1509 = vrot.lane.b32.xlu0 %v1501, 127
    %v1510 = vpop.permute.xlu0 %1509
    %1511 = vrot.lane.b32.xlu0 %v1503, 127
    %v1512 = vpop.permute.xlu0 %1511
    %1513 = vrot.lane.b32.xlu0 %v1506, 127
    %v1514 = vpop.permute.xlu0 %1513
    %1515 = vrot.lane.b32.xlu0 %v1508, 127
    %v1516 = vpop.permute.xlu0 %1515
    %v1521 = vadd.f32 %v1377, %v1510
    %v1522 = vadd.f32 %v1378, %v1512
    %v1523 = vadd.f32 %v1379, %v1514
    %v1524 = vadd.f32 %v1380, %v1516
    %s1525 = sld [smem:[#allocation9 + $0x4f]]
    %v1526 = vstv %s1525
    %v1527 = vmul.f32 %v1526, %v254
    %v1528 = vmul.f32 %v1526, %v255
    %v1529 = vmul.f32 %v1526, %v256
    %v1530 = vmul.f32 %v1526, %v257
    %v1531 = vmul.f32 %v1526, %v258
    %v1532 = vmul.f32 %v1526, %v259
    %v1539 = vrot.slane %v1527, 2
    %v1540 = vrot.slane %v1528, 2
    %v1541 = vsel %vm1330, %v1539, %v1540
    %v1542 = vrot.slane %v1529, 2
    %v1543 = vsel %vm1330, %v1540, %v1542
    %v1544 = vrot.slane %v1530, 2
    %v1545 = vrot.slane %v1531, 2
    %v1546 = vsel %vm1330, %v1544, %v1545
    %v1547 = vrot.slane %v1532, 2
    %v1548 = vsel %vm1330, %v1545, %v1547
    %1549 = vrot.lane.b32.xlu0 %v1541, 127
    %v1550 = vpop.permute.xlu0 %1549
    %1551 = vrot.lane.b32.xlu0 %v1543, 127
    %v1552 = vpop.permute.xlu0 %1551
    %1553 = vrot.lane.b32.xlu0 %v1546, 127
    %v1554 = vpop.permute.xlu0 %1553
    %1555 = vrot.lane.b32.xlu0 %v1548, 127
    %v1556 = vpop.permute.xlu0 %1555
    %v1561 = vadd.f32 %v1409, %v1550
    %v1562 = vadd.f32 %v1410, %v1552
    %v1563 = vadd.f32 %v1411, %v1554
    %v1564 = vadd.f32 %v1412, %v1556
    %s1565 = sld [smem:[#allocation9 + $0x73]]
    %v1566 = vstv %s1565
    %v1567 = vmul.f32 %v1566, %v254
    %v1568 = vmul.f32 %v1566, %v255
    %v1569 = vmul.f32 %v1566, %v256
    %v1570 = vmul.f32 %v1566, %v257
    %v1571 = vmul.f32 %v1566, %v258
    %v1572 = vmul.f32 %v1566, %v259
    %v1579 = vrot.slane %v1567, 2
    %v1580 = vrot.slane %v1568, 2
    %v1581 = vsel %vm1330, %v1579, %v1580
    %v1582 = vrot.slane %v1569, 2
    %v1583 = vsel %vm1330, %v1580, %v1582
    %v1584 = vrot.slane %v1570, 2
    %v1585 = vrot.slane %v1571, 2
    %v1586 = vsel %vm1330, %v1584, %v1585
    %v1587 = vrot.slane %v1572, 2
    %v1588 = vsel %vm1330, %v1585, %v1587
    %1589 = vrot.lane.b32.xlu0 %v1581, 127
    %v1590 = vpop.permute.xlu0 %1589
    %1591 = vrot.lane.b32.xlu0 %v1583, 127
    %v1592 = vpop.permute.xlu0 %1591
    %1593 = vrot.lane.b32.xlu0 %v1586, 127
    %v1594 = vpop.permute.xlu0 %1593
    %1595 = vrot.lane.b32.xlu0 %v1588, 127
    %v1596 = vpop.permute.xlu0 %1595
    %v1601 = vadd.f32 %v1441, %v1590
    %v1602 = vadd.f32 %v1442, %v1592
    %v1603 = vadd.f32 %v1443, %v1594
    %v1604 = vadd.f32 %v1444, %v1596
    %s1605 = sld [smem:[#allocation9 + $0x8]]
    %v1606 = vstv %s1605
    %v1607 = vmul.f32 %v1606, %v254
    %v1608 = vmul.f32 %v1606, %v255
    %v1609 = vmul.f32 %v1606, %v256
    %v1610 = vmul.f32 %v1606, %v257
    %v1611 = vmul.f32 %v1606, %v258
    %v1612 = vmul.f32 %v1606, %v259
    %v1619 = vrot.slane %v1607, 2
    %v1620 = vrot.slane %v1608, 2
    %v1621 = vsel %vm1330, %v1619, %v1620
    %v1622 = vrot.slane %v1609, 2
    %v1623 = vsel %vm1330, %v1620, %v1622
    %v1624 = vrot.slane %v1610, 2
    %v1625 = vrot.slane %v1611, 2
    %v1626 = vsel %vm1330, %v1624, %v1625
    %v1627 = vrot.slane %v1612, 2
    %v1628 = vsel %vm1330, %v1625, %v1627
    %1629 = vrot.lane.b32.xlu0 %v1621, 126
    %v1630 = vpop.permute.xlu0 %1629
    %1631 = vrot.lane.b32.xlu0 %v1623, 126
    %v1632 = vpop.permute.xlu0 %1631
    %1633 = vrot.lane.b32.xlu0 %v1626, 126
    %v1634 = vpop.permute.xlu0 %1633
    %1635 = vrot.lane.b32.xlu0 %v1628, 126
    %v1636 = vpop.permute.xlu0 %1635
    %v1641 = vadd.f32 %v1481, %v1630
    %v1642 = vadd.f32 %v1482, %v1632
    %v1643 = vadd.f32 %v1483, %v1634
    %v1644 = vadd.f32 %v1484, %v1636
    %s1645 = sld [smem:[#allocation9 + $0x2c]]
    %v1646 = vstv %s1645
    %v1647 = vmul.f32 %v1646, %v254
    %v1648 = vmul.f32 %v1646, %v255
    %v1649 = vmul.f32 %v1646, %v256
    %v1650 = vmul.f32 %v1646, %v257
    %v1651 = vmul.f32 %v1646, %v258
    %v1652 = vmul.f32 %v1646, %v259
    %v1659 = vrot.slane %v1647, 2
    %v1660 = vrot.slane %v1648, 2
    %v1661 = vsel %vm1330, %v1659, %v1660
    %v1662 = vrot.slane %v1649, 2
    %v1663 = vsel %vm1330, %v1660, %v1662
    %v1664 = vrot.slane %v1650, 2
    %v1665 = vrot.slane %v1651, 2
    %v1666 = vsel %vm1330, %v1664, %v1665
    %v1667 = vrot.slane %v1652, 2
    %v1668 = vsel %vm1330, %v1665, %v1667
    %1669 = vrot.lane.b32.xlu0 %v1661, 126
    %v1670 = vpop.permute.xlu0 %1669
    %1671 = vrot.lane.b32.xlu0 %v1663, 126
    %v1672 = vpop.permute.xlu0 %1671
    %1673 = vrot.lane.b32.xlu0 %v1666, 126
    %v1674 = vpop.permute.xlu0 %1673
    %1675 = vrot.lane.b32.xlu0 %v1668, 126
    %v1676 = vpop.permute.xlu0 %1675
    %v1681 = vadd.f32 %v1521, %v1670
    %v1682 = vadd.f32 %v1522, %v1672
    %v1683 = vadd.f32 %v1523, %v1674
    %v1684 = vadd.f32 %v1524, %v1676
    %s1685 = sld [smem:[#allocation9 + $0x50]]
    %v1686 = vstv %s1685
    %v1687 = vmul.f32 %v1686, %v254
    %v1688 = vmul.f32 %v1686, %v255
    %v1689 = vmul.f32 %v1686, %v256
    %v1690 = vmul.f32 %v1686, %v257
    %v1691 = vmul.f32 %v1686, %v258
    %v1692 = vmul.f32 %v1686, %v259
    %v1699 = vrot.slane %v1687, 2
    %v1700 = vrot.slane %v1688, 2
    %v1701 = vsel %vm1330, %v1699, %v1700
    %v1702 = vrot.slane %v1689, 2
    %v1703 = vsel %vm1330, %v1700, %v1702
    %v1704 = vrot.slane %v1690, 2
    %v1705 = vrot.slane %v1691, 2
    %v1706 = vsel %vm1330, %v1704, %v1705
    %v1707 = vrot.slane %v1692, 2
    %v1708 = vsel %vm1330, %v1705, %v1707
    %1709 = vrot.lane.b32.xlu0 %v1701, 126
    %v1710 = vpop.permute.xlu0 %1709
    %1711 = vrot.lane.b32.xlu0 %v1703, 126
    %v1712 = vpop.permute.xlu0 %1711
    %1713 = vrot.lane.b32.xlu0 %v1706, 126
    %v1714 = vpop.permute.xlu0 %1713
    %1715 = vrot.lane.b32.xlu0 %v1708, 126
    %v1716 = vpop.permute.xlu0 %1715
    %v1721 = vadd.f32 %v1561, %v1710
    %v1722 = vadd.f32 %v1562, %v1712
    %v1723 = vadd.f32 %v1563, %v1714
    %v1724 = vadd.f32 %v1564, %v1716
    %s1725 = sld [smem:[#allocation9 + $0x74]]
    %v1726 = vstv %s1725
    %v1727 = vmul.f32 %v1726, %v254
    %v1728 = vmul.f32 %v1726, %v255
    %v1729 = vmul.f32 %v1726, %v256
    %v1730 = vmul.f32 %v1726, %v257
    %v1731 = vmul.f32 %v1726, %v258
    %v1732 = vmul.f32 %v1726, %v259
    %v1739 = vrot.slane %v1727, 2
    %v1740 = vrot.slane %v1728, 2
    %v1741 = vsel %vm1330, %v1739, %v1740
    %v1742 = vrot.slane %v1729, 2
    %v1743 = vsel %vm1330, %v1740, %v1742
    %v1744 = vrot.slane %v1730, 2
    %v1745 = vrot.slane %v1731, 2
    %v1746 = vsel %vm1330, %v1744, %v1745
    %v1747 = vrot.slane %v1732, 2
    %v1748 = vsel %vm1330, %v1745, %v1747
    %1749 = vrot.lane.b32.xlu0 %v1741, 126
    %v1750 = vpop.permute.xlu0 %1749
    %1751 = vrot.lane.b32.xlu0 %v1743, 126
    %v1752 = vpop.permute.xlu0 %1751
    %1753 = vrot.lane.b32.xlu0 %v1746, 126
    %v1754 = vpop.permute.xlu0 %1753
    %1755 = vrot.lane.b32.xlu0 %v1748, 126
    %v1756 = vpop.permute.xlu0 %1755
    %v1761 = vadd.f32 %v1601, %v1750
    %v1762 = vadd.f32 %v1602, %v1752
    %v1763 = vadd.f32 %v1603, %v1754
    %v1764 = vadd.f32 %v1604, %v1756
    %s1765 = sld [smem:[#allocation9 + $0x9]]
    %v1766 = vstv %s1765
    %v1767 = vmul.f32 %v1766, %v371
    %v1768 = vmul.f32 %v1766, %v372
    %v1769 = vmul.f32 %v1766, %v374
    %v1770 = vmul.f32 %v1766, %v375
    %v1771 = vadd.f32 %v1641, %v1767
    %v1772 = vadd.f32 %v1642, %v1768
    %v1773 = vadd.f32 %v1643, %v1769
    %v1774 = vadd.f32 %v1644, %v1770
    %s1775 = sld [smem:[#allocation9 + $0x2d]]
    %v1776 = vstv %s1775
    %v1777 = vmul.f32 %v1776, %v371
    %v1778 = vmul.f32 %v1776, %v372
    %v1779 = vmul.f32 %v1776, %v374
    %v1780 = vmul.f32 %v1776, %v375
    %v1781 = vadd.f32 %v1681, %v1777
    %v1782 = vadd.f32 %v1682, %v1778
    %v1783 = vadd.f32 %v1683, %v1779
    %v1784 = vadd.f32 %v1684, %v1780
    %s1785 = sld [smem:[#allocation9 + $0x51]]
    %v1786 = vstv %s1785
    %v1787 = vmul.f32 %v1786, %v371
    %v1788 = vmul.f32 %v1786, %v372
    %v1789 = vmul.f32 %v1786, %v374
    %v1790 = vmul.f32 %v1786, %v375
    %v1791 = vadd.f32 %v1721, %v1787
    %v1792 = vadd.f32 %v1722, %v1788
    %v1793 = vadd.f32 %v1723, %v1789
    %v1794 = vadd.f32 %v1724, %v1790
    %s1795 = sld [smem:[#allocation9 + $0x75]]
    %v1796 = vstv %s1795
    %v1797 = vmul.f32 %v1796, %v371
    %v1798 = vmul.f32 %v1796, %v372
    %v1799 = vmul.f32 %v1796, %v374
    %v1800 = vmul.f32 %v1796, %v375
    %v1801 = vadd.f32 %v1761, %v1797
    %v1802 = vadd.f32 %v1762, %v1798
    %v1803 = vadd.f32 %v1763, %v1799
    %v1804 = vadd.f32 %v1764, %v1800
    %s1805 = sld [smem:[#allocation9 + $0xa]]
    %v1806 = vstv %s1805
    %v1807 = vmul.f32 %v1806, %v371
    %v1808 = vmul.f32 %v1806, %v372
    %v1809 = vmul.f32 %v1806, %v374
    %v1810 = vmul.f32 %v1806, %v375
    %1815 = vrot.lane.b32.xlu0 %v1807, 127
    %v1816 = vpop.permute.xlu0 %1815
    %1817 = vrot.lane.b32.xlu0 %v1808, 127
    %v1818 = vpop.permute.xlu0 %1817
    %1819 = vrot.lane.b32.xlu0 %v1809, 127
    %v1820 = vpop.permute.xlu0 %1819
    %1821 = vrot.lane.b32.xlu0 %v1810, 127
    %v1822 = vpop.permute.xlu0 %1821
    %v1827 = vadd.f32 %v1771, %v1816
    %v1828 = vadd.f32 %v1772, %v1818
    %v1829 = vadd.f32 %v1773, %v1820
    %v1830 = vadd.f32 %v1774, %v1822
    %s1831 = sld [smem:[#allocation9 + $0x2e]]
    %v1832 = vstv %s1831
    %v1833 = vmul.f32 %v1832, %v371
    %v1834 = vmul.f32 %v1832, %v372
    %v1835 = vmul.f32 %v1832, %v374
    %v1836 = vmul.f32 %v1832, %v375
    %1841 = vrot.lane.b32.xlu0 %v1833, 127
    %v1842 = vpop.permute.xlu0 %1841
    %1843 = vrot.lane.b32.xlu0 %v1834, 127
    %v1844 = vpop.permute.xlu0 %1843
    %1845 = vrot.lane.b32.xlu0 %v1835, 127
    %v1846 = vpop.permute.xlu0 %1845
    %1847 = vrot.lane.b32.xlu0 %v1836, 127
    %v1848 = vpop.permute.xlu0 %1847
    %v1853 = vadd.f32 %v1781, %v1842
    %v1854 = vadd.f32 %v1782, %v1844
    %v1855 = vadd.f32 %v1783, %v1846
    %v1856 = vadd.f32 %v1784, %v1848
    %s1857 = sld [smem:[#allocation9 + $0x52]]
    %v1858 = vstv %s1857
    %v1859 = vmul.f32 %v1858, %v371
    %v1860 = vmul.f32 %v1858, %v372
    %v1861 = vmul.f32 %v1858, %v374
    %v1862 = vmul.f32 %v1858, %v375
    %1867 = vrot.lane.b32.xlu0 %v1859, 127
    %v1868 = vpop.permute.xlu0 %1867
    %1869 = vrot.lane.b32.xlu0 %v1860, 127
    %v1870 = vpop.permute.xlu0 %1869
    %1871 = vrot.lane.b32.xlu0 %v1861, 127
    %v1872 = vpop.permute.xlu0 %1871
    %1873 = vrot.lane.b32.xlu0 %v1862, 127
    %v1874 = vpop.permute.xlu0 %1873
    %v1879 = vadd.f32 %v1791, %v1868
    %v1880 = vadd.f32 %v1792, %v1870
    %v1881 = vadd.f32 %v1793, %v1872
    %v1882 = vadd.f32 %v1794, %v1874
    %s1883 = sld [smem:[#allocation9 + $0x76]]
    %v1884 = vstv %s1883
    %v1885 = vmul.f32 %v1884, %v371
    %v1886 = vmul.f32 %v1884, %v372
    %v1887 = vmul.f32 %v1884, %v374
    %v1888 = vmul.f32 %v1884, %v375
    %1893 = vrot.lane.b32.xlu0 %v1885, 127
    %v1894 = vpop.permute.xlu0 %1893
    %1895 = vrot.lane.b32.xlu0 %v1886, 127
    %v1896 = vpop.permute.xlu0 %1895
    %1897 = vrot.lane.b32.xlu0 %v1887, 127
    %v1898 = vpop.permute.xlu0 %1897
    %1899 = vrot.lane.b32.xlu0 %v1888, 127
    %v1900 = vpop.permute.xlu0 %1899
    %v1905 = vadd.f32 %v1801, %v1894
    %v1906 = vadd.f32 %v1802, %v1896
    %v1907 = vadd.f32 %v1803, %v1898
    %v1908 = vadd.f32 %v1804, %v1900
    %s1909 = sld [smem:[#allocation9 + $0xb]]
    %v1910 = vstv %s1909
    %v1911 = vmul.f32 %v1910, %v371
    %v1912 = vmul.f32 %v1910, %v372
    %v1913 = vmul.f32 %v1910, %v374
    %v1914 = vmul.f32 %v1910, %v375
    %1919 = vrot.lane.b32.xlu0 %v1911, 126
    %v1920 = vpop.permute.xlu0 %1919
    %1921 = vrot.lane.b32.xlu0 %v1912, 126
    %v1922 = vpop.permute.xlu0 %1921
    %1923 = vrot.lane.b32.xlu0 %v1913, 126
    %v1924 = vpop.permute.xlu0 %1923
    %1925 = vrot.lane.b32.xlu0 %v1914, 126
    %v1926 = vpop.permute.xlu0 %1925
    %v1931 = vadd.f32 %v1827, %v1920
    %v1932 = vadd.f32 %v1828, %v1922
    %v1933 = vadd.f32 %v1829, %v1924
    %v1934 = vadd.f32 %v1830, %v1926
    %s1935 = sld [smem:[#allocation9 + $0x2f]]
    %v1936 = vstv %s1935
    %v1937 = vmul.f32 %v1936, %v371
    %v1938 = vmul.f32 %v1936, %v372
    %v1939 = vmul.f32 %v1936, %v374
    %v1940 = vmul.f32 %v1936, %v375
    %1945 = vrot.lane.b32.xlu0 %v1937, 126
    %v1946 = vpop.permute.xlu0 %1945
    %1947 = vrot.lane.b32.xlu0 %v1938, 126
    %v1948 = vpop.permute.xlu0 %1947
    %1949 = vrot.lane.b32.xlu0 %v1939, 126
    %v1950 = vpop.permute.xlu0 %1949
    %1951 = vrot.lane.b32.xlu0 %v1940, 126
    %v1952 = vpop.permute.xlu0 %1951
    %v1957 = vadd.f32 %v1853, %v1946
    %v1958 = vadd.f32 %v1854, %v1948
    %v1959 = vadd.f32 %v1855, %v1950
    %v1960 = vadd.f32 %v1856, %v1952
    %s1961 = sld [smem:[#allocation9 + $0x53]]
    %v1962 = vstv %s1961
    %v1963 = vmul.f32 %v1962, %v371
    %v1964 = vmul.f32 %v1962, %v372
    %v1965 = vmul.f32 %v1962, %v374
    %v1966 = vmul.f32 %v1962, %v375
    %1971 = vrot.lane.b32.xlu0 %v1963, 126
    %v1972 = vpop.permute.xlu0 %1971
    %1973 = vrot.lane.b32.xlu0 %v1964, 126
    %v1974 = vpop.permute.xlu0 %1973
    %1975 = vrot.lane.b32.xlu0 %v1965, 126
    %v1976 = vpop.permute.xlu0 %1975
    %1977 = vrot.lane.b32.xlu0 %v1966, 126
    %v1978 = vpop.permute.xlu0 %1977
    %v1983 = vadd.f32 %v1879, %v1972
    %v1984 = vadd.f32 %v1880, %v1974
    %v1985 = vadd.f32 %v1881, %v1976
    %v1986 = vadd.f32 %v1882, %v1978
    %s1987 = sld [smem:[#allocation9 + $0x77]]
    %v1988 = vstv %s1987
    %v1989 = vmul.f32 %v1988, %v371
    %v1990 = vmul.f32 %v1988, %v372
    %v1991 = vmul.f32 %v1988, %v374
    %v1992 = vmul.f32 %v1988, %v375
    %1997 = vrot.lane.b32.xlu0 %v1989, 126
    %v1998 = vpop.permute.xlu0 %1997
    %1999 = vrot.lane.b32.xlu0 %v1990, 126
    %v2000 = vpop.permute.xlu0 %1999
    %2001 = vrot.lane.b32.xlu0 %v1991, 126
    %v2002 = vpop.permute.xlu0 %2001
    %2003 = vrot.lane.b32.xlu0 %v1992, 126
    %v2004 = vpop.permute.xlu0 %2003
    %v2009 = vadd.f32 %v1905, %v1998
    %v2010 = vadd.f32 %v1906, %v2000
    %v2011 = vadd.f32 %v1907, %v2002
    %v2012 = vadd.f32 %v1908, %v2004
    %s2013 = sld [smem:[#allocation9 + $0xc]]
    %v2014 = vstv %s2013
    %v2015 = vmul.f32 %v2014, %v371
    %v2016 = vmul.f32 %v2014, %v372
    %v2017 = vmul.f32 %v2014, %v373
    %v2018 = vmul.f32 %v2014, %v374
    %v2019 = vmul.f32 %v2014, %v375
    %v2020 = vmul.f32 %v2014, %v376
    %v2027 = vrot.slane %v2015, 1
    %v2028 = vrot.slane %v2016, 1
    %v2029 = vsel %vm881, %v2027, %v2028
    %v2030 = vrot.slane %v2017, 1
    %v2031 = vsel %vm881, %v2028, %v2030
    %v2032 = vrot.slane %v2018, 1
    %v2033 = vrot.slane %v2019, 1
    %v2034 = vsel %vm881, %v2032, %v2033
    %v2035 = vrot.slane %v2020, 1
    %v2036 = vsel %vm881, %v2033, %v2035
    %v2041 = vadd.f32 %v1931, %v2029
    %v2042 = vadd.f32 %v1932, %v2031
    %v2043 = vadd.f32 %v1933, %v2034
    %v2044 = vadd.f32 %v1934, %v2036
    %s2045 = sld [smem:[#allocation9 + $0x30]]
    %v2046 = vstv %s2045
    %v2047 = vmul.f32 %v2046, %v371
    %v2048 = vmul.f32 %v2046, %v372
    %v2049 = vmul.f32 %v2046, %v373
    %v2050 = vmul.f32 %v2046, %v374
    %v2051 = vmul.f32 %v2046, %v375
    %v2052 = vmul.f32 %v2046, %v376
    %v2059 = vrot.slane %v2047, 1
    %v2060 = vrot.slane %v2048, 1
    %v2061 = vsel %vm881, %v2059, %v2060
    %v2062 = vrot.slane %v2049, 1
    %v2063 = vsel %vm881, %v2060, %v2062
    %v2064 = vrot.slane %v2050, 1
    %v2065 = vrot.slane %v2051, 1
    %v2066 = vsel %vm881, %v2064, %v2065
    %v2067 = vrot.slane %v2052, 1
    %v2068 = vsel %vm881, %v2065, %v2067
    %v2073 = vadd.f32 %v1957, %v2061
    %v2074 = vadd.f32 %v1958, %v2063
    %v2075 = vadd.f32 %v1959, %v2066
    %v2076 = vadd.f32 %v1960, %v2068
    %s2077 = sld [smem:[#allocation9 + $0x54]]
    %v2078 = vstv %s2077
    %v2079 = vmul.f32 %v2078, %v371
    %v2080 = vmul.f32 %v2078, %v372
    %v2081 = vmul.f32 %v2078, %v373
    %v2082 = vmul.f32 %v2078, %v374
    %v2083 = vmul.f32 %v2078, %v375
    %v2084 = vmul.f32 %v2078, %v376
    %v2091 = vrot.slane %v2079, 1
    %v2092 = vrot.slane %v2080, 1
    %v2093 = vsel %vm881, %v2091, %v2092
    %v2094 = vrot.slane %v2081, 1
    %v2095 = vsel %vm881, %v2092, %v2094
    %v2096 = vrot.slane %v2082, 1
    %v2097 = vrot.slane %v2083, 1
    %v2098 = vsel %vm881, %v2096, %v2097
    %v2099 = vrot.slane %v2084, 1
    %v2100 = vsel %vm881, %v2097, %v2099
    %v2105 = vadd.f32 %v1983, %v2093
    %v2106 = vadd.f32 %v1984, %v2095
    %v2107 = vadd.f32 %v1985, %v2098
    %v2108 = vadd.f32 %v1986, %v2100
    %s2109 = sld [smem:[#allocation9 + $0x78]]
    %v2110 = vstv %s2109
    %v2111 = vmul.f32 %v2110, %v371
    %v2112 = vmul.f32 %v2110, %v372
    %v2113 = vmul.f32 %v2110, %v373
    %v2114 = vmul.f32 %v2110, %v374
    %v2115 = vmul.f32 %v2110, %v375
    %v2116 = vmul.f32 %v2110, %v376
    %v2123 = vrot.slane %v2111, 1
    %v2124 = vrot.slane %v2112, 1
    %v2125 = vsel %vm881, %v2123, %v2124
    %v2126 = vrot.slane %v2113, 1
    %v2127 = vsel %vm881, %v2124, %v2126
    %v2128 = vrot.slane %v2114, 1
    %v2129 = vrot.slane %v2115, 1
    %v2130 = vsel %vm881, %v2128, %v2129
    %v2131 = vrot.slane %v2116, 1
    %v2132 = vsel %vm881, %v2129, %v2131
    %v2137 = vadd.f32 %v2009, %v2125
    %v2138 = vadd.f32 %v2010, %v2127
    %v2139 = vadd.f32 %v2011, %v2130
    %v2140 = vadd.f32 %v2012, %v2132
    %s2141 = sld [smem:[#allocation9 + $0xd]]
    %v2142 = vstv %s2141
    %v2143 = vmul.f32 %v2142, %v371
    %v2144 = vmul.f32 %v2142, %v372
    %v2145 = vmul.f32 %v2142, %v373
    %v2146 = vmul.f32 %v2142, %v374
    %v2147 = vmul.f32 %v2142, %v375
    %v2148 = vmul.f32 %v2142, %v376
    %v2155 = vrot.slane %v2143, 1
    %v2156 = vrot.slane %v2144, 1
    %v2157 = vsel %vm881, %v2155, %v2156
    %v2158 = vrot.slane %v2145, 1
    %v2159 = vsel %vm881, %v2156, %v2158
    %v2160 = vrot.slane %v2146, 1
    %v2161 = vrot.slane %v2147, 1
    %v2162 = vsel %vm881, %v2160, %v2161
    %v2163 = vrot.slane %v2148, 1
    %v2164 = vsel %vm881, %v2161, %v2163
    %2165 = vrot.lane.b32.xlu0 %v2157, 127
    %v2166 = vpop.permute.xlu0 %2165
    %2167 = vrot.lane.b32.xlu0 %v2159, 127
    %v2168 = vpop.permute.xlu0 %2167
    %2169 = vrot.lane.b32.xlu0 %v2162, 127
    %v2170 = vpop.permute.xlu0 %2169
    %2171 = vrot.lane.b32.xlu0 %v2164, 127
    %v2172 = vpop.permute.xlu0 %2171
    %v2177 = vadd.f32 %v2041, %v2166
    %v2178 = vadd.f32 %v2042, %v2168
    %v2179 = vadd.f32 %v2043, %v2170
    %v2180 = vadd.f32 %v2044, %v2172
    %s2181 = sld [smem:[#allocation9 + $0x31]]
    %v2182 = vstv %s2181
    %v2183 = vmul.f32 %v2182, %v371
    %v2184 = vmul.f32 %v2182, %v372
    %v2185 = vmul.f32 %v2182, %v373
    %v2186 = vmul.f32 %v2182, %v374
    %v2187 = vmul.f32 %v2182, %v375
    %v2188 = vmul.f32 %v2182, %v376
    %v2195 = vrot.slane %v2183, 1
    %v2196 = vrot.slane %v2184, 1
    %v2197 = vsel %vm881, %v2195, %v2196
    %v2198 = vrot.slane %v2185, 1
    %v2199 = vsel %vm881, %v2196, %v2198
    %v2200 = vrot.slane %v2186, 1
    %v2201 = vrot.slane %v2187, 1
    %v2202 = vsel %vm881, %v2200, %v2201
    %v2203 = vrot.slane %v2188, 1
    %v2204 = vsel %vm881, %v2201, %v2203
    %2205 = vrot.lane.b32.xlu0 %v2197, 127
    %v2206 = vpop.permute.xlu0 %2205
    %2207 = vrot.lane.b32.xlu0 %v2199, 127
    %v2208 = vpop.permute.xlu0 %2207
    %2209 = vrot.lane.b32.xlu0 %v2202, 127
    %v2210 = vpop.permute.xlu0 %2209
    %2211 = vrot.lane.b32.xlu0 %v2204, 127
    %v2212 = vpop.permute.xlu0 %2211
    %v2217 = vadd.f32 %v2073, %v2206
    %v2218 = vadd.f32 %v2074, %v2208
    %v2219 = vadd.f32 %v2075, %v2210
    %v2220 = vadd.f32 %v2076, %v2212
    %s2221 = sld [smem:[#allocation9 + $0x55]]
    %v2222 = vstv %s2221
    %v2223 = vmul.f32 %v2222, %v371
    %v2224 = vmul.f32 %v2222, %v372
    %v2225 = vmul.f32 %v2222, %v373
    %v2226 = vmul.f32 %v2222, %v374
    %v2227 = vmul.f32 %v2222, %v375
    %v2228 = vmul.f32 %v2222, %v376
    %v2235 = vrot.slane %v2223, 1
    %v2236 = vrot.slane %v2224, 1
    %v2237 = vsel %vm881, %v2235, %v2236
    %v2238 = vrot.slane %v2225, 1
    %v2239 = vsel %vm881, %v2236, %v2238
    %v2240 = vrot.slane %v2226, 1
    %v2241 = vrot.slane %v2227, 1
    %v2242 = vsel %vm881, %v2240, %v2241
    %v2243 = vrot.slane %v2228, 1
    %v2244 = vsel %vm881, %v2241, %v2243
    %2245 = vrot.lane.b32.xlu0 %v2237, 127
    %v2246 = vpop.permute.xlu0 %2245
    %2247 = vrot.lane.b32.xlu0 %v2239, 127
    %v2248 = vpop.permute.xlu0 %2247
    %2249 = vrot.lane.b32.xlu0 %v2242, 127
    %v2250 = vpop.permute.xlu0 %2249
    %2251 = vrot.lane.b32.xlu0 %v2244, 127
    %v2252 = vpop.permute.xlu0 %2251
    %v2257 = vadd.f32 %v2105, %v2246
    %v2258 = vadd.f32 %v2106, %v2248
    %v2259 = vadd.f32 %v2107, %v2250
    %v2260 = vadd.f32 %v2108, %v2252
    %s2261 = sld [smem:[#allocation9 + $0x79]]
    %v2262 = vstv %s2261
    %v2263 = vmul.f32 %v2262, %v371
    %v2264 = vmul.f32 %v2262, %v372
    %v2265 = vmul.f32 %v2262, %v373
    %v2266 = vmul.f32 %v2262, %v374
    %v2267 = vmul.f32 %v2262, %v375
    %v2268 = vmul.f32 %v2262, %v376
    %v2275 = vrot.slane %v2263, 1
    %v2276 = vrot.slane %v2264, 1
    %v2277 = vsel %vm881, %v2275, %v2276
    %v2278 = vrot.slane %v2265, 1
    %v2279 = vsel %vm881, %v2276, %v2278
    %v2280 = vrot.slane %v2266, 1
    %v2281 = vrot.slane %v2267, 1
    %v2282 = vsel %vm881, %v2280, %v2281
    %v2283 = vrot.slane %v2268, 1
    %v2284 = vsel %vm881, %v2281, %v2283
    %2285 = vrot.lane.b32.xlu0 %v2277, 127
    %v2286 = vpop.permute.xlu0 %2285
    %2287 = vrot.lane.b32.xlu0 %v2279, 127
    %v2288 = vpop.permute.xlu0 %2287
    %2289 = vrot.lane.b32.xlu0 %v2282, 127
    %v2290 = vpop.permute.xlu0 %2289
    %2291 = vrot.lane.b32.xlu0 %v2284, 127
    %v2292 = vpop.permute.xlu0 %2291
    %v2297 = vadd.f32 %v2137, %v2286
    %v2298 = vadd.f32 %v2138, %v2288
    %v2299 = vadd.f32 %v2139, %v2290
    %v2300 = vadd.f32 %v2140, %v2292
    %s2301 = sld [smem:[#allocation9 + $0xe]]
    %v2302 = vstv %s2301
    %v2303 = vmul.f32 %v2302, %v371
    %v2304 = vmul.f32 %v2302, %v372
    %v2305 = vmul.f32 %v2302, %v373
    %v2306 = vmul.f32 %v2302, %v374
    %v2307 = vmul.f32 %v2302, %v375
    %v2308 = vmul.f32 %v2302, %v376
    %v2315 = vrot.slane %v2303, 1
    %v2316 = vrot.slane %v2304, 1
    %v2317 = vsel %vm881, %v2315, %v2316
    %v2318 = vrot.slane %v2305, 1
    %v2319 = vsel %vm881, %v2316, %v2318
    %v2320 = vrot.slane %v2306, 1
    %v2321 = vrot.slane %v2307, 1
    %v2322 = vsel %vm881, %v2320, %v2321
    %v2323 = vrot.slane %v2308, 1
    %v2324 = vsel %vm881, %v2321, %v2323
    %2325 = vrot.lane.b32.xlu0 %v2317, 126
    %v2326 = vpop.permute.xlu0 %2325
    %2327 = vrot.lane.b32.xlu0 %v2319, 126
    %v2328 = vpop.permute.xlu0 %2327
    %2329 = vrot.lane.b32.xlu0 %v2322, 126
    %v2330 = vpop.permute.xlu0 %2329
    %2331 = vrot.lane.b32.xlu0 %v2324, 126
    %v2332 = vpop.permute.xlu0 %2331
    %v2337 = vadd.f32 %v2177, %v2326
    %v2338 = vadd.f32 %v2178, %v2328
    %v2339 = vadd.f32 %v2179, %v2330
    %v2340 = vadd.f32 %v2180, %v2332
    %s2341 = sld [smem:[#allocation9 + $0x32]]
    %v2342 = vstv %s2341
    %v2343 = vmul.f32 %v2342, %v371
    %v2344 = vmul.f32 %v2342, %v372
    %v2345 = vmul.f32 %v2342, %v373
    %v2346 = vmul.f32 %v2342, %v374
    %v2347 = vmul.f32 %v2342, %v375
    %v2348 = vmul.f32 %v2342, %v376
    %v2355 = vrot.slane %v2343, 1
    %v2356 = vrot.slane %v2344, 1
    %v2357 = vsel %vm881, %v2355, %v2356
    %v2358 = vrot.slane %v2345, 1
    %v2359 = vsel %vm881, %v2356, %v2358
    %v2360 = vrot.slane %v2346, 1
    %v2361 = vrot.slane %v2347, 1
    %v2362 = vsel %vm881, %v2360, %v2361
    %v2363 = vrot.slane %v2348, 1
    %v2364 = vsel %vm881, %v2361, %v2363
    %2365 = vrot.lane.b32.xlu0 %v2357, 126
    %v2366 = vpop.permute.xlu0 %2365
    %2367 = vrot.lane.b32.xlu0 %v2359, 126
    %v2368 = vpop.permute.xlu0 %2367
    %2369 = vrot.lane.b32.xlu0 %v2362, 126
    %v2370 = vpop.permute.xlu0 %2369
    %2371 = vrot.lane.b32.xlu0 %v2364, 126
    %v2372 = vpop.permute.xlu0 %2371
    %v2377 = vadd.f32 %v2217, %v2366
    %v2378 = vadd.f32 %v2218, %v2368
    %v2379 = vadd.f32 %v2219, %v2370
    %v2380 = vadd.f32 %v2220, %v2372
    %s2381 = sld [smem:[#allocation9 + $0x56]]
    %v2382 = vstv %s2381
    %v2383 = vmul.f32 %v2382, %v371
    %v2384 = vmul.f32 %v2382, %v372
    %v2385 = vmul.f32 %v2382, %v373
    %v2386 = vmul.f32 %v2382, %v374
    %v2387 = vmul.f32 %v2382, %v375
    %v2388 = vmul.f32 %v2382, %v376
    %v2395 = vrot.slane %v2383, 1
    %v2396 = vrot.slane %v2384, 1
    %v2397 = vsel %vm881, %v2395, %v2396
    %v2398 = vrot.slane %v2385, 1
    %v2399 = vsel %vm881, %v2396, %v2398
    %v2400 = vrot.slane %v2386, 1
    %v2401 = vrot.slane %v2387, 1
    %v2402 = vsel %vm881, %v2400, %v2401
    %v2403 = vrot.slane %v2388, 1
    %v2404 = vsel %vm881, %v2401, %v2403
    %2405 = vrot.lane.b32.xlu0 %v2397, 126
    %v2406 = vpop.permute.xlu0 %2405
    %2407 = vrot.lane.b32.xlu0 %v2399, 126
    %v2408 = vpop.permute.xlu0 %2407
    %2409 = vrot.lane.b32.xlu0 %v2402, 126
    %v2410 = vpop.permute.xlu0 %2409
    %2411 = vrot.lane.b32.xlu0 %v2404, 126
    %v2412 = vpop.permute.xlu0 %2411
    %v2417 = vadd.f32 %v2257, %v2406
    %v2418 = vadd.f32 %v2258, %v2408
    %v2419 = vadd.f32 %v2259, %v2410
    %v2420 = vadd.f32 %v2260, %v2412
    %s2421 = sld [smem:[#allocation9 + $0x7a]]
    %v2422 = vstv %s2421
    %v2423 = vmul.f32 %v2422, %v371
    %v2424 = vmul.f32 %v2422, %v372
    %v2425 = vmul.f32 %v2422, %v373
    %v2426 = vmul.f32 %v2422, %v374
    %v2427 = vmul.f32 %v2422, %v375
    %v2428 = vmul.f32 %v2422, %v376
    %v2435 = vrot.slane %v2423, 1
    %v2436 = vrot.slane %v2424, 1
    %v2437 = vsel %vm881, %v2435, %v2436
    %v2438 = vrot.slane %v2425, 1
    %v2439 = vsel %vm881, %v2436, %v2438
    %v2440 = vrot.slane %v2426, 1
    %v2441 = vrot.slane %v2427, 1
    %v2442 = vsel %vm881, %v2440, %v2441
    %v2443 = vrot.slane %v2428, 1
    %v2444 = vsel %vm881, %v2441, %v2443
    %2445 = vrot.lane.b32.xlu0 %v2437, 126
    %v2446 = vpop.permute.xlu0 %2445
    %2447 = vrot.lane.b32.xlu0 %v2439, 126
    %v2448 = vpop.permute.xlu0 %2447
    %2449 = vrot.lane.b32.xlu0 %v2442, 126
    %v2450 = vpop.permute.xlu0 %2449
    %2451 = vrot.lane.b32.xlu0 %v2444, 126
    %v2452 = vpop.permute.xlu0 %2451
    %v2457 = vadd.f32 %v2297, %v2446
    %v2458 = vadd.f32 %v2298, %v2448
    %v2459 = vadd.f32 %v2299, %v2450
    %v2460 = vadd.f32 %v2300, %v2452
    %s2461 = sld [smem:[#allocation9 + $0xf]]
    %v2462 = vstv %s2461
    %v2463 = vmul.f32 %v2462, %v371
    %v2464 = vmul.f32 %v2462, %v372
    %v2465 = vmul.f32 %v2462, %v373
    %v2466 = vmul.f32 %v2462, %v374
    %v2467 = vmul.f32 %v2462, %v375
    %v2468 = vmul.f32 %v2462, %v376
    %v2475 = vrot.slane %v2463, 2
    %v2476 = vrot.slane %v2464, 2
    %v2477 = vsel %vm1330, %v2475, %v2476
    %v2478 = vrot.slane %v2465, 2
    %v2479 = vsel %vm1330, %v2476, %v2478
    %v2480 = vrot.slane %v2466, 2
    %v2481 = vrot.slane %v2467, 2
    %v2482 = vsel %vm1330, %v2480, %v2481
    %v2483 = vrot.slane %v2468, 2
    %v2484 = vsel %vm1330, %v2481, %v2483
    %v2489 = vadd.f32 %v2337, %v2477
    %v2490 = vadd.f32 %v2338, %v2479
    %v2491 = vadd.f32 %v2339, %v2482
    %v2492 = vadd.f32 %v2340, %v2484
    %s2493 = sld [smem:[#allocation9 + $0x33]]
    %v2494 = vstv %s2493
    %v2495 = vmul.f32 %v2494, %v371
    %v2496 = vmul.f32 %v2494, %v372
    %v2497 = vmul.f32 %v2494, %v373
    %v2498 = vmul.f32 %v2494, %v374
    %v2499 = vmul.f32 %v2494, %v375
    %v2500 = vmul.f32 %v2494, %v376
    %v2507 = vrot.slane %v2495, 2
    %v2508 = vrot.slane %v2496, 2
    %v2509 = vsel %vm1330, %v2507, %v2508
    %v2510 = vrot.slane %v2497, 2
    %v2511 = vsel %vm1330, %v2508, %v2510
    %v2512 = vrot.slane %v2498, 2
    %v2513 = vrot.slane %v2499, 2
    %v2514 = vsel %vm1330, %v2512, %v2513
    %v2515 = vrot.slane %v2500, 2
    %v2516 = vsel %vm1330, %v2513, %v2515
    %v2521 = vadd.f32 %v2377, %v2509
    %v2522 = vadd.f32 %v2378, %v2511
    %v2523 = vadd.f32 %v2379, %v2514
    %v2524 = vadd.f32 %v2380, %v2516
    %s2525 = sld [smem:[#allocation9 + $0x57]]
    %v2526 = vstv %s2525
    %v2527 = vmul.f32 %v2526, %v371
    %v2528 = vmul.f32 %v2526, %v372
    %v2529 = vmul.f32 %v2526, %v373
    %v2530 = vmul.f32 %v2526, %v374
    %v2531 = vmul.f32 %v2526, %v375
    %v2532 = vmul.f32 %v2526, %v376
    %v2539 = vrot.slane %v2527, 2
    %v2540 = vrot.slane %v2528, 2
    %v2541 = vsel %vm1330, %v2539, %v2540
    %v2542 = vrot.slane %v2529, 2
    %v2543 = vsel %vm1330, %v2540, %v2542
    %v2544 = vrot.slane %v2530, 2
    %v2545 = vrot.slane %v2531, 2
    %v2546 = vsel %vm1330, %v2544, %v2545
    %v2547 = vrot.slane %v2532, 2
    %v2548 = vsel %vm1330, %v2545, %v2547
    %v2553 = vadd.f32 %v2417, %v2541
    %v2554 = vadd.f32 %v2418, %v2543
    %v2555 = vadd.f32 %v2419, %v2546
    %v2556 = vadd.f32 %v2420, %v2548
    %s2557 = sld [smem:[#allocation9 + $0x7b]]
    %v2558 = vstv %s2557
    %v2559 = vmul.f32 %v2558, %v371
    %v2560 = vmul.f32 %v2558, %v372
    %v2561 = vmul.f32 %v2558, %v373
    %v2562 = vmul.f32 %v2558, %v374
    %v2563 = vmul.f32 %v2558, %v375
    %v2564 = vmul.f32 %v2558, %v376
    %v2571 = vrot.slane %v2559, 2
    %v2572 = vrot.slane %v2560, 2
    %v2573 = vsel %vm1330, %v2571, %v2572
    %v2574 = vrot.slane %v2561, 2
    %v2575 = vsel %vm1330, %v2572, %v2574
    %v2576 = vrot.slane %v2562, 2
    %v2577 = vrot.slane %v2563, 2
    %v2578 = vsel %vm1330, %v2576, %v2577
    %v2579 = vrot.slane %v2564, 2
    %v2580 = vsel %vm1330, %v2577, %v2579
    %v2585 = vadd.f32 %v2457, %v2573
    %v2586 = vadd.f32 %v2458, %v2575
    %v2587 = vadd.f32 %v2459, %v2578
    %v2588 = vadd.f32 %v2460, %v2580
    %s2589 = sld [smem:[#allocation9 + $0x10]]
    %v2590 = vstv %s2589
    %v2591 = vmul.f32 %v2590, %v371
    %v2592 = vmul.f32 %v2590, %v372
    %v2593 = vmul.f32 %v2590, %v373
    %v2594 = vmul.f32 %v2590, %v374
    %v2595 = vmul.f32 %v2590, %v375
    %v2596 = vmul.f32 %v2590, %v376
    %v2603 = vrot.slane %v2591, 2
    %v2604 = vrot.slane %v2592, 2
    %v2605 = vsel %vm1330, %v2603, %v2604
    %v2606 = vrot.slane %v2593, 2
    %v2607 = vsel %vm1330, %v2604, %v2606
    %v2608 = vrot.slane %v2594, 2
    %v2609 = vrot.slane %v2595, 2
    %v2610 = vsel %vm1330, %v2608, %v2609
    %v2611 = vrot.slane %v2596, 2
    %v2612 = vsel %vm1330, %v2609, %v2611
    %2613 = vrot.lane.b32.xlu0 %v2605, 127
    %v2614 = vpop.permute.xlu0 %2613
    %2615 = vrot.lane.b32.xlu0 %v2607, 127
    %v2616 = vpop.permute.xlu0 %2615
    %2617 = vrot.lane.b32.xlu0 %v2610, 127
    %v2618 = vpop.permute.xlu0 %2617
    %2619 = vrot.lane.b32.xlu0 %v2612, 127
    %v2620 = vpop.permute.xlu0 %2619
    %v2625 = vadd.f32 %v2489, %v2614
    %v2626 = vadd.f32 %v2490, %v2616
    %v2627 = vadd.f32 %v2491, %v2618
    %v2628 = vadd.f32 %v2492, %v2620
    %s2629 = sld [smem:[#allocation9 + $0x34]]
    %v2630 = vstv %s2629
    %v2631 = vmul.f32 %v2630, %v371
    %v2632 = vmul.f32 %v2630, %v372
    %v2633 = vmul.f32 %v2630, %v373
    %v2634 = vmul.f32 %v2630, %v374
    %v2635 = vmul.f32 %v2630, %v375
    %v2636 = vmul.f32 %v2630, %v376
    %v2643 = vrot.slane %v2631, 2
    %v2644 = vrot.slane %v2632, 2
    %v2645 = vsel %vm1330, %v2643, %v2644
    %v2646 = vrot.slane %v2633, 2
    %v2647 = vsel %vm1330, %v2644, %v2646
    %v2648 = vrot.slane %v2634, 2
    %v2649 = vrot.slane %v2635, 2
    %v2650 = vsel %vm1330, %v2648, %v2649
    %v2651 = vrot.slane %v2636, 2
    %v2652 = vsel %vm1330, %v2649, %v2651
    %2653 = vrot.lane.b32.xlu0 %v2645, 127
    %v2654 = vpop.permute.xlu0 %2653
    %2655 = vrot.lane.b32.xlu0 %v2647, 127
    %v2656 = vpop.permute.xlu0 %2655
    %2657 = vrot.lane.b32.xlu0 %v2650, 127
    %v2658 = vpop.permute.xlu0 %2657
    %2659 = vrot.lane.b32.xlu0 %v2652, 127
    %v2660 = vpop.permute.xlu0 %2659
    %v2665 = vadd.f32 %v2521, %v2654
    %v2666 = vadd.f32 %v2522, %v2656
    %v2667 = vadd.f32 %v2523, %v2658
    %v2668 = vadd.f32 %v2524, %v2660
    %s2669 = sld [smem:[#allocation9 + $0x58]]
    %v2670 = vstv %s2669
    %v2671 = vmul.f32 %v2670, %v371
    %v2672 = vmul.f32 %v2670, %v372
    %v2673 = vmul.f32 %v2670, %v373
    %v2674 = vmul.f32 %v2670, %v374
    %v2675 = vmul.f32 %v2670, %v375
    %v2676 = vmul.f32 %v2670, %v376
    %v2683 = vrot.slane %v2671, 2
    %v2684 = vrot.slane %v2672, 2
    %v2685 = vsel %vm1330, %v2683, %v2684
    %v2686 = vrot.slane %v2673, 2
    %v2687 = vsel %vm1330, %v2684, %v2686
    %v2688 = vrot.slane %v2674, 2
    %v2689 = vrot.slane %v2675, 2
    %v2690 = vsel %vm1330, %v2688, %v2689
    %v2691 = vrot.slane %v2676, 2
    %v2692 = vsel %vm1330, %v2689, %v2691
    %2693 = vrot.lane.b32.xlu0 %v2685, 127
    %v2694 = vpop.permute.xlu0 %2693
    %2695 = vrot.lane.b32.xlu0 %v2687, 127
    %v2696 = vpop.permute.xlu0 %2695
    %2697 = vrot.lane.b32.xlu0 %v2690, 127
    %v2698 = vpop.permute.xlu0 %2697
    %2699 = vrot.lane.b32.xlu0 %v2692, 127
    %v2700 = vpop.permute.xlu0 %2699
    %v2705 = vadd.f32 %v2553, %v2694
    %v2706 = vadd.f32 %v2554, %v2696
    %v2707 = vadd.f32 %v2555, %v2698
    %v2708 = vadd.f32 %v2556, %v2700
    %s2709 = sld [smem:[#allocation9 + $0x7c]]
    %v2710 = vstv %s2709
    %v2711 = vmul.f32 %v2710, %v371
    %v2712 = vmul.f32 %v2710, %v372
    %v2713 = vmul.f32 %v2710, %v373
    %v2714 = vmul.f32 %v2710, %v374
    %v2715 = vmul.f32 %v2710, %v375
    %v2716 = vmul.f32 %v2710, %v376
    %v2723 = vrot.slane %v2711, 2
    %v2724 = vrot.slane %v2712, 2
    %v2725 = vsel %vm1330, %v2723, %v2724
    %v2726 = vrot.slane %v2713, 2
    %v2727 = vsel %vm1330, %v2724, %v2726
    %v2728 = vrot.slane %v2714, 2
    %v2729 = vrot.slane %v2715, 2
    %v2730 = vsel %vm1330, %v2728, %v2729
    %v2731 = vrot.slane %v2716, 2
    %v2732 = vsel %vm1330, %v2729, %v2731
    %2733 = vrot.lane.b32.xlu0 %v2725, 127
    %v2734 = vpop.permute.xlu0 %2733
    %2735 = vrot.lane.b32.xlu0 %v2727, 127
    %v2736 = vpop.permute.xlu0 %2735
    %2737 = vrot.lane.b32.xlu0 %v2730, 127
    %v2738 = vpop.permute.xlu0 %2737
    %2739 = vrot.lane.b32.xlu0 %v2732, 127
    %v2740 = vpop.permute.xlu0 %2739
    %v2745 = vadd.f32 %v2585, %v2734
    %v2746 = vadd.f32 %v2586, %v2736
    %v2747 = vadd.f32 %v2587, %v2738
    %v2748 = vadd.f32 %v2588, %v2740
    %s2749 = sld [smem:[#allocation9 + $0x11]]
    %v2750 = vstv %s2749
    %v2751 = vmul.f32 %v2750, %v371
    %v2752 = vmul.f32 %v2750, %v372
    %v2753 = vmul.f32 %v2750, %v373
    %v2754 = vmul.f32 %v2750, %v374
    %v2755 = vmul.f32 %v2750, %v375
    %v2756 = vmul.f32 %v2750, %v376
    %v2763 = vrot.slane %v2751, 2
    %v2764 = vrot.slane %v2752, 2
    %v2765 = vsel %vm1330, %v2763, %v2764
    %v2766 = vrot.slane %v2753, 2
    %v2767 = vsel %vm1330, %v2764, %v2766
    %v2768 = vrot.slane %v2754, 2
    %v2769 = vrot.slane %v2755, 2
    %v2770 = vsel %vm1330, %v2768, %v2769
    %v2771 = vrot.slane %v2756, 2
    %v2772 = vsel %vm1330, %v2769, %v2771
    %2773 = vrot.lane.b32.xlu0 %v2765, 126
    %v2774 = vpop.permute.xlu0 %2773
    %2775 = vrot.lane.b32.xlu0 %v2767, 126
    %v2776 = vpop.permute.xlu0 %2775
    %2777 = vrot.lane.b32.xlu0 %v2770, 126
    %v2778 = vpop.permute.xlu0 %2777
    %2779 = vrot.lane.b32.xlu0 %v2772, 126
    %v2780 = vpop.permute.xlu0 %2779
    %v2785 = vadd.f32 %v2625, %v2774
    %v2786 = vadd.f32 %v2626, %v2776
    %v2787 = vadd.f32 %v2627, %v2778
    %v2788 = vadd.f32 %v2628, %v2780
    %s2789 = sld [smem:[#allocation9 + $0x35]]
    %v2790 = vstv %s2789
    %v2791 = vmul.f32 %v2790, %v371
    %v2792 = vmul.f32 %v2790, %v372
    %v2793 = vmul.f32 %v2790, %v373
    %v2794 = vmul.f32 %v2790, %v374
    %v2795 = vmul.f32 %v2790, %v375
    %v2796 = vmul.f32 %v2790, %v376
    %v2803 = vrot.slane %v2791, 2
    %v2804 = vrot.slane %v2792, 2
    %v2805 = vsel %vm1330, %v2803, %v2804
    %v2806 = vrot.slane %v2793, 2
    %v2807 = vsel %vm1330, %v2804, %v2806
    %v2808 = vrot.slane %v2794, 2
    %v2809 = vrot.slane %v2795, 2
    %v2810 = vsel %vm1330, %v2808, %v2809
    %v2811 = vrot.slane %v2796, 2
    %v2812 = vsel %vm1330, %v2809, %v2811
    %2813 = vrot.lane.b32.xlu0 %v2805, 126
    %v2814 = vpop.permute.xlu0 %2813
    %2815 = vrot.lane.b32.xlu0 %v2807, 126
    %v2816 = vpop.permute.xlu0 %2815
    %2817 = vrot.lane.b32.xlu0 %v2810, 126
    %v2818 = vpop.permute.xlu0 %2817
    %2819 = vrot.lane.b32.xlu0 %v2812, 126
    %v2820 = vpop.permute.xlu0 %2819
    %v2825 = vadd.f32 %v2665, %v2814
    %v2826 = vadd.f32 %v2666, %v2816
    %v2827 = vadd.f32 %v2667, %v2818
    %v2828 = vadd.f32 %v2668, %v2820
    %s2829 = sld [smem:[#allocation9 + $0x59]]
    %v2830 = vstv %s2829
    %v2831 = vmul.f32 %v2830, %v371
    %v2832 = vmul.f32 %v2830, %v372
    %v2833 = vmul.f32 %v2830, %v373
    %v2834 = vmul.f32 %v2830, %v374
    %v2835 = vmul.f32 %v2830, %v375
    %v2836 = vmul.f32 %v2830, %v376
    %v2843 = vrot.slane %v2831, 2
    %v2844 = vrot.slane %v2832, 2
    %v2845 = vsel %vm1330, %v2843, %v2844
    %v2846 = vrot.slane %v2833, 2
    %v2847 = vsel %vm1330, %v2844, %v2846
    %v2848 = vrot.slane %v2834, 2
    %v2849 = vrot.slane %v2835, 2
    %v2850 = vsel %vm1330, %v2848, %v2849
    %v2851 = vrot.slane %v2836, 2
    %v2852 = vsel %vm1330, %v2849, %v2851
    %2853 = vrot.lane.b32.xlu0 %v2845, 126
    %v2854 = vpop.permute.xlu0 %2853
    %2855 = vrot.lane.b32.xlu0 %v2847, 126
    %v2856 = vpop.permute.xlu0 %2855
    %2857 = vrot.lane.b32.xlu0 %v2850, 126
    %v2858 = vpop.permute.xlu0 %2857
    %2859 = vrot.lane.b32.xlu0 %v2852, 126
    %v2860 = vpop.permute.xlu0 %2859
    %v2865 = vadd.f32 %v2705, %v2854
    %v2866 = vadd.f32 %v2706, %v2856
    %v2867 = vadd.f32 %v2707, %v2858
    %v2868 = vadd.f32 %v2708, %v2860
    %s2869 = sld [smem:[#allocation9 + $0x7d]]
    %v2870 = vstv %s2869
    %v2871 = vmul.f32 %v2870, %v371
    %v2872 = vmul.f32 %v2870, %v372
    %v2873 = vmul.f32 %v2870, %v373
    %v2874 = vmul.f32 %v2870, %v374
    %v2875 = vmul.f32 %v2870, %v375
    %v2876 = vmul.f32 %v2870, %v376
    %v2883 = vrot.slane %v2871, 2
    %v2884 = vrot.slane %v2872, 2
    %v2885 = vsel %vm1330, %v2883, %v2884
    %v2886 = vrot.slane %v2873, 2
    %v2887 = vsel %vm1330, %v2884, %v2886
    %v2888 = vrot.slane %v2874, 2
    %v2889 = vrot.slane %v2875, 2
    %v2890 = vsel %vm1330, %v2888, %v2889
    %v2891 = vrot.slane %v2876, 2
    %v2892 = vsel %vm1330, %v2889, %v2891
    %2893 = vrot.lane.b32.xlu0 %v2885, 126
    %v2894 = vpop.permute.xlu0 %2893
    %2895 = vrot.lane.b32.xlu0 %v2887, 126
    %v2896 = vpop.permute.xlu0 %2895
    %2897 = vrot.lane.b32.xlu0 %v2890, 126
    %v2898 = vpop.permute.xlu0 %2897
    %2899 = vrot.lane.b32.xlu0 %v2892, 126
    %v2900 = vpop.permute.xlu0 %2899
    %v2905 = vadd.f32 %v2745, %v2894
    %v2906 = vadd.f32 %v2746, %v2896
    %v2907 = vadd.f32 %v2747, %v2898
    %v2908 = vadd.f32 %v2748, %v2900
    %s2909 = sld [smem:[#allocation9 + $0x12]]
    %v2910 = vstv %s2909
    %v2911 = vmul.f32 %v2910, %v488
    %v2912 = vmul.f32 %v2910, %v489
    %v2913 = vmul.f32 %v2910, %v491
    %v2914 = vmul.f32 %v2910, %v492
    %v2915 = vadd.f32 %v2785, %v2911
    %v2916 = vadd.f32 %v2786, %v2912
    %v2917 = vadd.f32 %v2787, %v2913
    %v2918 = vadd.f32 %v2788, %v2914
    %s2919 = sld [smem:[#allocation9 + $0x36]]
    %v2920 = vstv %s2919
    %v2921 = vmul.f32 %v2920, %v488
    %v2922 = vmul.f32 %v2920, %v489
    %v2923 = vmul.f32 %v2920, %v491
    %v2924 = vmul.f32 %v2920, %v492
    %v2925 = vadd.f32 %v2825, %v2921
    %v2926 = vadd.f32 %v2826, %v2922
    %v2927 = vadd.f32 %v2827, %v2923
    %v2928 = vadd.f32 %v2828, %v2924
    %s2929 = sld [smem:[#allocation9 + $0x5a]]
    %v2930 = vstv %s2929
    %v2931 = vmul.f32 %v2930, %v488
    %v2932 = vmul.f32 %v2930, %v489
    %v2933 = vmul.f32 %v2930, %v491
    %v2934 = vmul.f32 %v2930, %v492
    %v2935 = vadd.f32 %v2865, %v2931
    %v2936 = vadd.f32 %v2866, %v2932
    %v2937 = vadd.f32 %v2867, %v2933
    %v2938 = vadd.f32 %v2868, %v2934
    %s2939 = sld [smem:[#allocation9 + $0x7e]]
    %v2940 = vstv %s2939
    %v2941 = vmul.f32 %v2940, %v488
    %v2942 = vmul.f32 %v2940, %v489
    %v2943 = vmul.f32 %v2940, %v491
    %v2944 = vmul.f32 %v2940, %v492
    %v2945 = vadd.f32 %v2905, %v2941
    %v2946 = vadd.f32 %v2906, %v2942
    %v2947 = vadd.f32 %v2907, %v2943
    %v2948 = vadd.f32 %v2908, %v2944
    %s2949 = sld [smem:[#allocation9 + $0x13]]
    %v2950 = vstv %s2949
    %v2951 = vmul.f32 %v2950, %v488
    %v2952 = vmul.f32 %v2950, %v489
    %v2953 = vmul.f32 %v2950, %v491
    %v2954 = vmul.f32 %v2950, %v492
    %2959 = vrot.lane.b32.xlu0 %v2951, 127
    %v2960 = vpop.permute.xlu0 %2959
    %2961 = vrot.lane.b32.xlu0 %v2952, 127
    %v2962 = vpop.permute.xlu0 %2961
    %2963 = vrot.lane.b32.xlu0 %v2953, 127
    %v2964 = vpop.permute.xlu0 %2963
    %2965 = vrot.lane.b32.xlu0 %v2954, 127
    %v2966 = vpop.permute.xlu0 %2965
    %v2971 = vadd.f32 %v2915, %v2960
    %v2972 = vadd.f32 %v2916, %v2962
    %v2973 = vadd.f32 %v2917, %v2964
    %v2974 = vadd.f32 %v2918, %v2966
    %s2975 = sld [smem:[#allocation9 + $0x37]]
    %v2976 = vstv %s2975
    %v2977 = vmul.f32 %v2976, %v488
    %v2978 = vmul.f32 %v2976, %v489
    %v2979 = vmul.f32 %v2976, %v491
    %v2980 = vmul.f32 %v2976, %v492
    %2985 = vrot.lane.b32.xlu0 %v2977, 127
    %v2986 = vpop.permute.xlu0 %2985
    %2987 = vrot.lane.b32.xlu0 %v2978, 127
    %v2988 = vpop.permute.xlu0 %2987
    %2989 = vrot.lane.b32.xlu0 %v2979, 127
    %v2990 = vpop.permute.xlu0 %2989
    %2991 = vrot.lane.b32.xlu0 %v2980, 127
    %v2992 = vpop.permute.xlu0 %2991
    %v2997 = vadd.f32 %v2925, %v2986
    %v2998 = vadd.f32 %v2926, %v2988
    %v2999 = vadd.f32 %v2927, %v2990
    %v3000 = vadd.f32 %v2928, %v2992
    %s3001 = sld [smem:[#allocation9 + $0x5b]]
    %v3002 = vstv %s3001
    %v3003 = vmul.f32 %v3002, %v488
    %v3004 = vmul.f32 %v3002, %v489
    %v3005 = vmul.f32 %v3002, %v491
    %v3006 = vmul.f32 %v3002, %v492
    %3011 = vrot.lane.b32.xlu0 %v3003, 127
    %v3012 = vpop.permute.xlu0 %3011
    %3013 = vrot.lane.b32.xlu0 %v3004, 127
    %v3014 = vpop.permute.xlu0 %3013
    %3015 = vrot.lane.b32.xlu0 %v3005, 127
    %v3016 = vpop.permute.xlu0 %3015
    %3017 = vrot.lane.b32.xlu0 %v3006, 127
    %v3018 = vpop.permute.xlu0 %3017
    %v3023 = vadd.f32 %v2935, %v3012
    %v3024 = vadd.f32 %v2936, %v3014
    %v3025 = vadd.f32 %v2937, %v3016
    %v3026 = vadd.f32 %v2938, %v3018
    %s3027 = sld [smem:[#allocation9 + $0x7f]]
    %v3028 = vstv %s3027
    %v3029 = vmul.f32 %v3028, %v488
    %v3030 = vmul.f32 %v3028, %v489
    %v3031 = vmul.f32 %v3028, %v491
    %v3032 = vmul.f32 %v3028, %v492
    %3037 = vrot.lane.b32.xlu0 %v3029, 127
    %v3038 = vpop.permute.xlu0 %3037
    %3039 = vrot.lane.b32.xlu0 %v3030, 127
    %v3040 = vpop.permute.xlu0 %3039
    %3041 = vrot.lane.b32.xlu0 %v3031, 127
    %v3042 = vpop.permute.xlu0 %3041
    %3043 = vrot.lane.b32.xlu0 %v3032, 127
    %v3044 = vpop.permute.xlu0 %3043
    %v3049 = vadd.f32 %v2945, %v3038
    %v3050 = vadd.f32 %v2946, %v3040
    %v3051 = vadd.f32 %v2947, %v3042
    %v3052 = vadd.f32 %v2948, %v3044
    %s3053 = sld [smem:[#allocation9 + $0x14]]
    %v3054 = vstv %s3053
    %v3055 = vmul.f32 %v3054, %v488
    %v3056 = vmul.f32 %v3054, %v489
    %v3057 = vmul.f32 %v3054, %v491
    %v3058 = vmul.f32 %v3054, %v492
    %3063 = vrot.lane.b32.xlu0 %v3055, 126
    %v3064 = vpop.permute.xlu0 %3063
    %3065 = vrot.lane.b32.xlu0 %v3056, 126
    %v3066 = vpop.permute.xlu0 %3065
    %3067 = vrot.lane.b32.xlu0 %v3057, 126
    %v3068 = vpop.permute.xlu0 %3067
    %3069 = vrot.lane.b32.xlu0 %v3058, 126
    %v3070 = vpop.permute.xlu0 %3069
    %v3075 = vadd.f32 %v2971, %v3064
    %v3076 = vadd.f32 %v2972, %v3066
    %v3077 = vadd.f32 %v2973, %v3068
    %v3078 = vadd.f32 %v2974, %v3070
    %s3079 = sld [smem:[#allocation9 + $0x38]]
    %v3080 = vstv %s3079
    %v3081 = vmul.f32 %v3080, %v488
    %v3082 = vmul.f32 %v3080, %v489
    %v3083 = vmul.f32 %v3080, %v491
    %v3084 = vmul.f32 %v3080, %v492
    %3089 = vrot.lane.b32.xlu0 %v3081, 126
    %v3090 = vpop.permute.xlu0 %3089
    %3091 = vrot.lane.b32.xlu0 %v3082, 126
    %v3092 = vpop.permute.xlu0 %3091
    %3093 = vrot.lane.b32.xlu0 %v3083, 126
    %v3094 = vpop.permute.xlu0 %3093
    %3095 = vrot.lane.b32.xlu0 %v3084, 126
    %v3096 = vpop.permute.xlu0 %3095
    %v3101 = vadd.f32 %v2997, %v3090
    %v3102 = vadd.f32 %v2998, %v3092
    %v3103 = vadd.f32 %v2999, %v3094
    %v3104 = vadd.f32 %v3000, %v3096
    %s3105 = sld [smem:[#allocation9 + $0x5c]]
    %v3106 = vstv %s3105
    %v3107 = vmul.f32 %v3106, %v488
    %v3108 = vmul.f32 %v3106, %v489
    %v3109 = vmul.f32 %v3106, %v491
    %v3110 = vmul.f32 %v3106, %v492
    %3115 = vrot.lane.b32.xlu0 %v3107, 126
    %v3116 = vpop.permute.xlu0 %3115
    %3117 = vrot.lane.b32.xlu0 %v3108, 126
    %v3118 = vpop.permute.xlu0 %3117
    %3119 = vrot.lane.b32.xlu0 %v3109, 126
    %v3120 = vpop.permute.xlu0 %3119
    %3121 = vrot.lane.b32.xlu0 %v3110, 126
    %v3122 = vpop.permute.xlu0 %3121
    %v3127 = vadd.f32 %v3023, %v3116
    %v3128 = vadd.f32 %v3024, %v3118
    %v3129 = vadd.f32 %v3025, %v3120
    %v3130 = vadd.f32 %v3026, %v3122
    %s3131 = sld [smem:[#allocation9 + $0x80]]
    %v3132 = vstv %s3131
    %v3133 = vmul.f32 %v3132, %v488
    %v3134 = vmul.f32 %v3132, %v489
    %v3135 = vmul.f32 %v3132, %v491
    %v3136 = vmul.f32 %v3132, %v492
    %3141 = vrot.lane.b32.xlu0 %v3133, 126
    %v3142 = vpop.permute.xlu0 %3141
    %3143 = vrot.lane.b32.xlu0 %v3134, 126
    %v3144 = vpop.permute.xlu0 %3143
    %3145 = vrot.lane.b32.xlu0 %v3135, 126
    %v3146 = vpop.permute.xlu0 %3145
    %3147 = vrot.lane.b32.xlu0 %v3136, 126
    %v3148 = vpop.permute.xlu0 %3147
    %v3153 = vadd.f32 %v3049, %v3142
    %v3154 = vadd.f32 %v3050, %v3144
    %v3155 = vadd.f32 %v3051, %v3146
    %v3156 = vadd.f32 %v3052, %v3148
    %s3157 = sld [smem:[#allocation9 + $0x15]]
    %v3158 = vstv %s3157
    %v3159 = vmul.f32 %v3158, %v488
    %v3160 = vmul.f32 %v3158, %v489
    %v3161 = vmul.f32 %v3158, %v490
    %v3162 = vmul.f32 %v3158, %v491
    %v3163 = vmul.f32 %v3158, %v492
    %v3164 = vmul.f32 %v3158, %v493
    %v3171 = vrot.slane %v3159, 1
    %v3172 = vrot.slane %v3160, 1
    %v3173 = vsel %vm881, %v3171, %v3172
    %v3174 = vrot.slane %v3161, 1
    %v3175 = vsel %vm881, %v3172, %v3174
    %v3176 = vrot.slane %v3162, 1
    %v3177 = vrot.slane %v3163, 1
    %v3178 = vsel %vm881, %v3176, %v3177
    %v3179 = vrot.slane %v3164, 1
    %v3180 = vsel %vm881, %v3177, %v3179
    %v3185 = vadd.f32 %v3075, %v3173
    %v3186 = vadd.f32 %v3076, %v3175
    %v3187 = vadd.f32 %v3077, %v3178
    %v3188 = vadd.f32 %v3078, %v3180
    %s3189 = sld [smem:[#allocation9 + $0x39]]
    %v3190 = vstv %s3189
    %v3191 = vmul.f32 %v3190, %v488
    %v3192 = vmul.f32 %v3190, %v489
    %v3193 = vmul.f32 %v3190, %v490
    %v3194 = vmul.f32 %v3190, %v491
    %v3195 = vmul.f32 %v3190, %v492
    %v3196 = vmul.f32 %v3190, %v493
    %v3203 = vrot.slane %v3191, 1
    %v3204 = vrot.slane %v3192, 1
    %v3205 = vsel %vm881, %v3203, %v3204
    %v3206 = vrot.slane %v3193, 1
    %v3207 = vsel %vm881, %v3204, %v3206
    %v3208 = vrot.slane %v3194, 1
    %v3209 = vrot.slane %v3195, 1
    %v3210 = vsel %vm881, %v3208, %v3209
    %v3211 = vrot.slane %v3196, 1
    %v3212 = vsel %vm881, %v3209, %v3211
    %v3217 = vadd.f32 %v3101, %v3205
    %v3218 = vadd.f32 %v3102, %v3207
    %v3219 = vadd.f32 %v3103, %v3210
    %v3220 = vadd.f32 %v3104, %v3212
    %s3221 = sld [smem:[#allocation9 + $0x5d]]
    %v3222 = vstv %s3221
    %v3223 = vmul.f32 %v3222, %v488
    %v3224 = vmul.f32 %v3222, %v489
    %v3225 = vmul.f32 %v3222, %v490
    %v3226 = vmul.f32 %v3222, %v491
    %v3227 = vmul.f32 %v3222, %v492
    %v3228 = vmul.f32 %v3222, %v493
    %v3235 = vrot.slane %v3223, 1
    %v3236 = vrot.slane %v3224, 1
    %v3237 = vsel %vm881, %v3235, %v3236
    %v3238 = vrot.slane %v3225, 1
    %v3239 = vsel %vm881, %v3236, %v3238
    %v3240 = vrot.slane %v3226, 1
    %v3241 = vrot.slane %v3227, 1
    %v3242 = vsel %vm881, %v3240, %v3241
    %v3243 = vrot.slane %v3228, 1
    %v3244 = vsel %vm881, %v3241, %v3243
    %v3249 = vadd.f32 %v3127, %v3237
    %v3250 = vadd.f32 %v3128, %v3239
    %v3251 = vadd.f32 %v3129, %v3242
    %v3252 = vadd.f32 %v3130, %v3244
    %s3253 = sld [smem:[#allocation9 + $0x81]]
    %v3254 = vstv %s3253
    %v3255 = vmul.f32 %v3254, %v488
    %v3256 = vmul.f32 %v3254, %v489
    %v3257 = vmul.f32 %v3254, %v490
    %v3258 = vmul.f32 %v3254, %v491
    %v3259 = vmul.f32 %v3254, %v492
    %v3260 = vmul.f32 %v3254, %v493
    %v3267 = vrot.slane %v3255, 1
    %v3268 = vrot.slane %v3256, 1
    %v3269 = vsel %vm881, %v3267, %v3268
    %v3270 = vrot.slane %v3257, 1
    %v3271 = vsel %vm881, %v3268, %v3270
    %v3272 = vrot.slane %v3258, 1
    %v3273 = vrot.slane %v3259, 1
    %v3274 = vsel %vm881, %v3272, %v3273
    %v3275 = vrot.slane %v3260, 1
    %v3276 = vsel %vm881, %v3273, %v3275
    %v3281 = vadd.f32 %v3153, %v3269
    %v3282 = vadd.f32 %v3154, %v3271
    %v3283 = vadd.f32 %v3155, %v3274
    %v3284 = vadd.f32 %v3156, %v3276
    %s3285 = sld [smem:[#allocation9 + $0x16]]
    %v3286 = vstv %s3285
    %v3287 = vmul.f32 %v3286, %v488
    %v3288 = vmul.f32 %v3286, %v489
    %v3289 = vmul.f32 %v3286, %v490
    %v3290 = vmul.f32 %v3286, %v491
    %v3291 = vmul.f32 %v3286, %v492
    %v3292 = vmul.f32 %v3286, %v493
    %v3299 = vrot.slane %v3287, 1
    %v3300 = vrot.slane %v3288, 1
    %v3301 = vsel %vm881, %v3299, %v3300
    %v3302 = vrot.slane %v3289, 1
    %v3303 = vsel %vm881, %v3300, %v3302
    %v3304 = vrot.slane %v3290, 1
    %v3305 = vrot.slane %v3291, 1
    %v3306 = vsel %vm881, %v3304, %v3305
    %v3307 = vrot.slane %v3292, 1
    %v3308 = vsel %vm881, %v3305, %v3307
    %3309 = vrot.lane.b32.xlu0 %v3301, 127
    %v3310 = vpop.permute.xlu0 %3309
    %3311 = vrot.lane.b32.xlu0 %v3303, 127
    %v3312 = vpop.permute.xlu0 %3311
    %3313 = vrot.lane.b32.xlu0 %v3306, 127
    %v3314 = vpop.permute.xlu0 %3313
    %3315 = vrot.lane.b32.xlu0 %v3308, 127
    %v3316 = vpop.permute.xlu0 %3315
    %v3321 = vadd.f32 %v3185, %v3310
    %v3322 = vadd.f32 %v3186, %v3312
    %v3323 = vadd.f32 %v3187, %v3314
    %v3324 = vadd.f32 %v3188, %v3316
    %s3325 = sld [smem:[#allocation9 + $0x3a]]
    %v3326 = vstv %s3325
    %v3327 = vmul.f32 %v3326, %v488
    %v3328 = vmul.f32 %v3326, %v489
    %v3329 = vmul.f32 %v3326, %v490
    %v3330 = vmul.f32 %v3326, %v491
    %v3331 = vmul.f32 %v3326, %v492
    %v3332 = vmul.f32 %v3326, %v493
    %v3339 = vrot.slane %v3327, 1
    %v3340 = vrot.slane %v3328, 1
    %v3341 = vsel %vm881, %v3339, %v3340
    %v3342 = vrot.slane %v3329, 1
    %v3343 = vsel %vm881, %v3340, %v3342
    %v3344 = vrot.slane %v3330, 1
    %v3345 = vrot.slane %v3331, 1
    %v3346 = vsel %vm881, %v3344, %v3345
    %v3347 = vrot.slane %v3332, 1
    %v3348 = vsel %vm881, %v3345, %v3347
    %3349 = vrot.lane.b32.xlu0 %v3341, 127
    %v3350 = vpop.permute.xlu0 %3349
    %3351 = vrot.lane.b32.xlu0 %v3343, 127
    %v3352 = vpop.permute.xlu0 %3351
    %3353 = vrot.lane.b32.xlu0 %v3346, 127
    %v3354 = vpop.permute.xlu0 %3353
    %3355 = vrot.lane.b32.xlu0 %v3348, 127
    %v3356 = vpop.permute.xlu0 %3355
    %v3361 = vadd.f32 %v3217, %v3350
    %v3362 = vadd.f32 %v3218, %v3352
    %v3363 = vadd.f32 %v3219, %v3354
    %v3364 = vadd.f32 %v3220, %v3356
    %s3365 = sld [smem:[#allocation9 + $0x5e]]
    %v3366 = vstv %s3365
    %v3367 = vmul.f32 %v3366, %v488
    %v3368 = vmul.f32 %v3366, %v489
    %v3369 = vmul.f32 %v3366, %v490
    %v3370 = vmul.f32 %v3366, %v491
    %v3371 = vmul.f32 %v3366, %v492
    %v3372 = vmul.f32 %v3366, %v493
    %v3379 = vrot.slane %v3367, 1
    %v3380 = vrot.slane %v3368, 1
    %v3381 = vsel %vm881, %v3379, %v3380
    %v3382 = vrot.slane %v3369, 1
    %v3383 = vsel %vm881, %v3380, %v3382
    %v3384 = vrot.slane %v3370, 1
    %v3385 = vrot.slane %v3371, 1
    %v3386 = vsel %vm881, %v3384, %v3385
    %v3387 = vrot.slane %v3372, 1
    %v3388 = vsel %vm881, %v3385, %v3387
    %3389 = vrot.lane.b32.xlu0 %v3381, 127
    %v3390 = vpop.permute.xlu0 %3389
    %3391 = vrot.lane.b32.xlu0 %v3383, 127
    %v3392 = vpop.permute.xlu0 %3391
    %3393 = vrot.lane.b32.xlu0 %v3386, 127
    %v3394 = vpop.permute.xlu0 %3393
    %3395 = vrot.lane.b32.xlu0 %v3388, 127
    %v3396 = vpop.permute.xlu0 %3395
    %v3401 = vadd.f32 %v3249, %v3390
    %v3402 = vadd.f32 %v3250, %v3392
    %v3403 = vadd.f32 %v3251, %v3394
    %v3404 = vadd.f32 %v3252, %v3396
    %s3405 = sld [smem:[#allocation9 + $0x82]]
    %v3406 = vstv %s3405
    %v3407 = vmul.f32 %v3406, %v488
    %v3408 = vmul.f32 %v3406, %v489
    %v3409 = vmul.f32 %v3406, %v490
    %v3410 = vmul.f32 %v3406, %v491
    %v3411 = vmul.f32 %v3406, %v492
    %v3412 = vmul.f32 %v3406, %v493
    %v3419 = vrot.slane %v3407, 1
    %v3420 = vrot.slane %v3408, 1
    %v3421 = vsel %vm881, %v3419, %v3420
    %v3422 = vrot.slane %v3409, 1
    %v3423 = vsel %vm881, %v3420, %v3422
    %v3424 = vrot.slane %v3410, 1
    %v3425 = vrot.slane %v3411, 1
    %v3426 = vsel %vm881, %v3424, %v3425
    %v3427 = vrot.slane %v3412, 1
    %v3428 = vsel %vm881, %v3425, %v3427
    %3429 = vrot.lane.b32.xlu0 %v3421, 127
    %v3430 = vpop.permute.xlu0 %3429
    %3431 = vrot.lane.b32.xlu0 %v3423, 127
    %v3432 = vpop.permute.xlu0 %3431
    %3433 = vrot.lane.b32.xlu0 %v3426, 127
    %v3434 = vpop.permute.xlu0 %3433
    %3435 = vrot.lane.b32.xlu0 %v3428, 127
    %v3436 = vpop.permute.xlu0 %3435
    %v3441 = vadd.f32 %v3281, %v3430
    %v3442 = vadd.f32 %v3282, %v3432
    %v3443 = vadd.f32 %v3283, %v3434
    %v3444 = vadd.f32 %v3284, %v3436
    %s3445 = sld [smem:[#allocation9 + $0x17]]
    %v3446 = vstv %s3445
    %v3447 = vmul.f32 %v3446, %v488
    %v3448 = vmul.f32 %v3446, %v489
    %v3449 = vmul.f32 %v3446, %v490
    %v3450 = vmul.f32 %v3446, %v491
    %v3451 = vmul.f32 %v3446, %v492
    %v3452 = vmul.f32 %v3446, %v493
    %v3459 = vrot.slane %v3447, 1
    %v3460 = vrot.slane %v3448, 1
    %v3461 = vsel %vm881, %v3459, %v3460
    %v3462 = vrot.slane %v3449, 1
    %v3463 = vsel %vm881, %v3460, %v3462
    %v3464 = vrot.slane %v3450, 1
    %v3465 = vrot.slane %v3451, 1
    %v3466 = vsel %vm881, %v3464, %v3465
    %v3467 = vrot.slane %v3452, 1
    %v3468 = vsel %vm881, %v3465, %v3467
    %3469 = vrot.lane.b32.xlu0 %v3461, 126
    %v3470 = vpop.permute.xlu0 %3469
    %3471 = vrot.lane.b32.xlu0 %v3463, 126
    %v3472 = vpop.permute.xlu0 %3471
    %3473 = vrot.lane.b32.xlu0 %v3466, 126
    %v3474 = vpop.permute.xlu0 %3473
    %3475 = vrot.lane.b32.xlu0 %v3468, 126
    %v3476 = vpop.permute.xlu0 %3475
    %v3481 = vadd.f32 %v3321, %v3470
    %v3482 = vadd.f32 %v3322, %v3472
    %v3483 = vadd.f32 %v3323, %v3474
    %v3484 = vadd.f32 %v3324, %v3476
    %s3485 = sld [smem:[#allocation9 + $0x3b]]
    %v3486 = vstv %s3485
    %v3487 = vmul.f32 %v3486, %v488
    %v3488 = vmul.f32 %v3486, %v489
    %v3489 = vmul.f32 %v3486, %v490
    %v3490 = vmul.f32 %v3486, %v491
    %v3491 = vmul.f32 %v3486, %v492
    %v3492 = vmul.f32 %v3486, %v493
    %v3499 = vrot.slane %v3487, 1
    %v3500 = vrot.slane %v3488, 1
    %v3501 = vsel %vm881, %v3499, %v3500
    %v3502 = vrot.slane %v3489, 1
    %v3503 = vsel %vm881, %v3500, %v3502
    %v3504 = vrot.slane %v3490, 1
    %v3505 = vrot.slane %v3491, 1
    %v3506 = vsel %vm881, %v3504, %v3505
    %v3507 = vrot.slane %v3492, 1
    %v3508 = vsel %vm881, %v3505, %v3507
    %3509 = vrot.lane.b32.xlu0 %v3501, 126
    %v3510 = vpop.permute.xlu0 %3509
    %3511 = vrot.lane.b32.xlu0 %v3503, 126
    %v3512 = vpop.permute.xlu0 %3511
    %3513 = vrot.lane.b32.xlu0 %v3506, 126
    %v3514 = vpop.permute.xlu0 %3513
    %3515 = vrot.lane.b32.xlu0 %v3508, 126
    %v3516 = vpop.permute.xlu0 %3515
    %v3521 = vadd.f32 %v3361, %v3510
    %v3522 = vadd.f32 %v3362, %v3512
    %v3523 = vadd.f32 %v3363, %v3514
    %v3524 = vadd.f32 %v3364, %v3516
    %s3525 = sld [smem:[#allocation9 + $0x5f]]
    %v3526 = vstv %s3525
    %v3527 = vmul.f32 %v3526, %v488
    %v3528 = vmul.f32 %v3526, %v489
    %v3529 = vmul.f32 %v3526, %v490
    %v3530 = vmul.f32 %v3526, %v491
    %v3531 = vmul.f32 %v3526, %v492
    %v3532 = vmul.f32 %v3526, %v493
    %v3539 = vrot.slane %v3527, 1
    %v3540 = vrot.slane %v3528, 1
    %v3541 = vsel %vm881, %v3539, %v3540
    %v3542 = vrot.slane %v3529, 1
    %v3543 = vsel %vm881, %v3540, %v3542
    %v3544 = vrot.slane %v3530, 1
    %v3545 = vrot.slane %v3531, 1
    %v3546 = vsel %vm881, %v3544, %v3545
    %v3547 = vrot.slane %v3532, 1
    %v3548 = vsel %vm881, %v3545, %v3547
    %3549 = vrot.lane.b32.xlu0 %v3541, 126
    %v3550 = vpop.permute.xlu0 %3549
    %3551 = vrot.lane.b32.xlu0 %v3543, 126
    %v3552 = vpop.permute.xlu0 %3551
    %3553 = vrot.lane.b32.xlu0 %v3546, 126
    %v3554 = vpop.permute.xlu0 %3553
    %3555 = vrot.lane.b32.xlu0 %v3548, 126
    %v3556 = vpop.permute.xlu0 %3555
    %v3561 = vadd.f32 %v3401, %v3550
    %v3562 = vadd.f32 %v3402, %v3552
    %v3563 = vadd.f32 %v3403, %v3554
    %v3564 = vadd.f32 %v3404, %v3556
    %s3565 = sld [smem:[#allocation9 + $0x83]]
    %v3566 = vstv %s3565
    %v3567 = vmul.f32 %v3566, %v488
    %v3568 = vmul.f32 %v3566, %v489
    %v3569 = vmul.f32 %v3566, %v490
    %v3570 = vmul.f32 %v3566, %v491
    %v3571 = vmul.f32 %v3566, %v492
    %v3572 = vmul.f32 %v3566, %v493
    %v3579 = vrot.slane %v3567, 1
    %v3580 = vrot.slane %v3568, 1
    %v3581 = vsel %vm881, %v3579, %v3580
    %v3582 = vrot.slane %v3569, 1
    %v3583 = vsel %vm881, %v3580, %v3582
    %v3584 = vrot.slane %v3570, 1
    %v3585 = vrot.slane %v3571, 1
    %v3586 = vsel %vm881, %v3584, %v3585
    %v3587 = vrot.slane %v3572, 1
    %v3588 = vsel %vm881, %v3585, %v3587
    %3589 = vrot.lane.b32.xlu0 %v3581, 126
    %v3590 = vpop.permute.xlu0 %3589
    %3591 = vrot.lane.b32.xlu0 %v3583, 126
    %v3592 = vpop.permute.xlu0 %3591
    %3593 = vrot.lane.b32.xlu0 %v3586, 126
    %v3594 = vpop.permute.xlu0 %3593
    %3595 = vrot.lane.b32.xlu0 %v3588, 126
    %v3596 = vpop.permute.xlu0 %3595
    %v3601 = vadd.f32 %v3441, %v3590
    %v3602 = vadd.f32 %v3442, %v3592
    %v3603 = vadd.f32 %v3443, %v3594
    %v3604 = vadd.f32 %v3444, %v3596
    %s3605 = sld [smem:[#allocation9 + $0x18]]
    %v3606 = vstv %s3605
    %v3607 = vmul.f32 %v3606, %v488
    %v3608 = vmul.f32 %v3606, %v489
    %v3609 = vmul.f32 %v3606, %v490
    %v3610 = vmul.f32 %v3606, %v491
    %v3611 = vmul.f32 %v3606, %v492
    %v3612 = vmul.f32 %v3606, %v493
    %v3619 = vrot.slane %v3607, 2
    %v3620 = vrot.slane %v3608, 2
    %v3621 = vsel %vm1330, %v3619, %v3620
    %v3622 = vrot.slane %v3609, 2
    %v3623 = vsel %vm1330, %v3620, %v3622
    %v3624 = vrot.slane %v3610, 2
    %v3625 = vrot.slane %v3611, 2
    %v3626 = vsel %vm1330, %v3624, %v3625
    %v3627 = vrot.slane %v3612, 2
    %v3628 = vsel %vm1330, %v3625, %v3627
    %v3633 = vadd.f32 %v3481, %v3621
    %v3634 = vadd.f32 %v3482, %v3623
    %v3635 = vadd.f32 %v3483, %v3626
    %v3636 = vadd.f32 %v3484, %v3628
    %s3637 = sld [smem:[#allocation9 + $0x3c]]
    %v3638 = vstv %s3637
    %v3639 = vmul.f32 %v3638, %v488
    %v3640 = vmul.f32 %v3638, %v489
    %v3641 = vmul.f32 %v3638, %v490
    %v3642 = vmul.f32 %v3638, %v491
    %v3643 = vmul.f32 %v3638, %v492
    %v3644 = vmul.f32 %v3638, %v493
    %v3651 = vrot.slane %v3639, 2
    %v3652 = vrot.slane %v3640, 2
    %v3653 = vsel %vm1330, %v3651, %v3652
    %v3654 = vrot.slane %v3641, 2
    %v3655 = vsel %vm1330, %v3652, %v3654
    %v3656 = vrot.slane %v3642, 2
    %v3657 = vrot.slane %v3643, 2
    %v3658 = vsel %vm1330, %v3656, %v3657
    %v3659 = vrot.slane %v3644, 2
    %v3660 = vsel %vm1330, %v3657, %v3659
    %v3665 = vadd.f32 %v3521, %v3653
    %v3666 = vadd.f32 %v3522, %v3655
    %v3667 = vadd.f32 %v3523, %v3658
    %v3668 = vadd.f32 %v3524, %v3660
    %s3669 = sld [smem:[#allocation9 + $0x60]]
    %v3670 = vstv %s3669
    %v3671 = vmul.f32 %v3670, %v488
    %v3672 = vmul.f32 %v3670, %v489
    %v3673 = vmul.f32 %v3670, %v490
    %v3674 = vmul.f32 %v3670, %v491
    %v3675 = vmul.f32 %v3670, %v492
    %v3676 = vmul.f32 %v3670, %v493
    %v3683 = vrot.slane %v3671, 2
    %v3684 = vrot.slane %v3672, 2
    %v3685 = vsel %vm1330, %v3683, %v3684
    %v3686 = vrot.slane %v3673, 2
    %v3687 = vsel %vm1330, %v3684, %v3686
    %v3688 = vrot.slane %v3674, 2
    %v3689 = vrot.slane %v3675, 2
    %v3690 = vsel %vm1330, %v3688, %v3689
    %v3691 = vrot.slane %v3676, 2
    %v3692 = vsel %vm1330, %v3689, %v3691
    %v3697 = vadd.f32 %v3561, %v3685
    %v3698 = vadd.f32 %v3562, %v3687
    %v3699 = vadd.f32 %v3563, %v3690
    %v3700 = vadd.f32 %v3564, %v3692
    %s3701 = sld [smem:[#allocation9 + $0x84]]
    %v3702 = vstv %s3701
    %v3703 = vmul.f32 %v3702, %v488
    %v3704 = vmul.f32 %v3702, %v489
    %v3705 = vmul.f32 %v3702, %v490
    %v3706 = vmul.f32 %v3702, %v491
    %v3707 = vmul.f32 %v3702, %v492
    %v3708 = vmul.f32 %v3702, %v493
    %v3715 = vrot.slane %v3703, 2
    %v3716 = vrot.slane %v3704, 2
    %v3717 = vsel %vm1330, %v3715, %v3716
    %v3718 = vrot.slane %v3705, 2
    %v3719 = vsel %vm1330, %v3716, %v3718
    %v3720 = vrot.slane %v3706, 2
    %v3721 = vrot.slane %v3707, 2
    %v3722 = vsel %vm1330, %v3720, %v3721
    %v3723 = vrot.slane %v3708, 2
    %v3724 = vsel %vm1330, %v3721, %v3723
    %v3729 = vadd.f32 %v3601, %v3717
    %v3730 = vadd.f32 %v3602, %v3719
    %v3731 = vadd.f32 %v3603, %v3722
    %v3732 = vadd.f32 %v3604, %v3724
    %s3733 = sld [smem:[#allocation9 + $0x19]]
    %v3734 = vstv %s3733
    %v3735 = vmul.f32 %v3734, %v488
    %v3736 = vmul.f32 %v3734, %v489
    %v3737 = vmul.f32 %v3734, %v490
    %v3738 = vmul.f32 %v3734, %v491
    %v3739 = vmul.f32 %v3734, %v492
    %v3740 = vmul.f32 %v3734, %v493
    %v3747 = vrot.slane %v3735, 2
    %v3748 = vrot.slane %v3736, 2
    %v3749 = vsel %vm1330, %v3747, %v3748
    %v3750 = vrot.slane %v3737, 2
    %v3751 = vsel %vm1330, %v3748, %v3750
    %v3752 = vrot.slane %v3738, 2
    %v3753 = vrot.slane %v3739, 2
    %v3754 = vsel %vm1330, %v3752, %v3753
    %v3755 = vrot.slane %v3740, 2
    %v3756 = vsel %vm1330, %v3753, %v3755
    %3757 = vrot.lane.b32.xlu0 %v3749, 127
    %v3758 = vpop.permute.xlu0 %3757
    %3759 = vrot.lane.b32.xlu0 %v3751, 127
    %v3760 = vpop.permute.xlu0 %3759
    %3761 = vrot.lane.b32.xlu0 %v3754, 127
    %v3762 = vpop.permute.xlu0 %3761
    %3763 = vrot.lane.b32.xlu0 %v3756, 127
    %v3764 = vpop.permute.xlu0 %3763
    %v3769 = vadd.f32 %v3633, %v3758
    %v3770 = vadd.f32 %v3634, %v3760
    %v3771 = vadd.f32 %v3635, %v3762
    %v3772 = vadd.f32 %v3636, %v3764
    %s3773 = sld [smem:[#allocation9 + $0x3d]]
    %v3774 = vstv %s3773
    %v3775 = vmul.f32 %v3774, %v488
    %v3776 = vmul.f32 %v3774, %v489
    %v3777 = vmul.f32 %v3774, %v490
    %v3778 = vmul.f32 %v3774, %v491
    %v3779 = vmul.f32 %v3774, %v492
    %v3780 = vmul.f32 %v3774, %v493
    %v3787 = vrot.slane %v3775, 2
    %v3788 = vrot.slane %v3776, 2
    %v3789 = vsel %vm1330, %v3787, %v3788
    %v3790 = vrot.slane %v3777, 2
    %v3791 = vsel %vm1330, %v3788, %v3790
    %v3792 = vrot.slane %v3778, 2
    %v3793 = vrot.slane %v3779, 2
    %v3794 = vsel %vm1330, %v3792, %v3793
    %v3795 = vrot.slane %v3780, 2
    %v3796 = vsel %vm1330, %v3793, %v3795
    %3797 = vrot.lane.b32.xlu0 %v3789, 127
    %v3798 = vpop.permute.xlu0 %3797
    %3799 = vrot.lane.b32.xlu0 %v3791, 127
    %v3800 = vpop.permute.xlu0 %3799
    %3801 = vrot.lane.b32.xlu0 %v3794, 127
    %v3802 = vpop.permute.xlu0 %3801
    %3803 = vrot.lane.b32.xlu0 %v3796, 127
    %v3804 = vpop.permute.xlu0 %3803
    %v3809 = vadd.f32 %v3665, %v3798
    %v3810 = vadd.f32 %v3666, %v3800
    %v3811 = vadd.f32 %v3667, %v3802
    %v3812 = vadd.f32 %v3668, %v3804
    %s3813 = sld [smem:[#allocation9 + $0x61]]
    %v3814 = vstv %s3813
    %v3815 = vmul.f32 %v3814, %v488
    %v3816 = vmul.f32 %v3814, %v489
    %v3817 = vmul.f32 %v3814, %v490
    %v3818 = vmul.f32 %v3814, %v491
    %v3819 = vmul.f32 %v3814, %v492
    %v3820 = vmul.f32 %v3814, %v493
    %v3827 = vrot.slane %v3815, 2
    %v3828 = vrot.slane %v3816, 2
    %v3829 = vsel %vm1330, %v3827, %v3828
    %v3830 = vrot.slane %v3817, 2
    %v3831 = vsel %vm1330, %v3828, %v3830
    %v3832 = vrot.slane %v3818, 2
    %v3833 = vrot.slane %v3819, 2
    %v3834 = vsel %vm1330, %v3832, %v3833
    %v3835 = vrot.slane %v3820, 2
    %v3836 = vsel %vm1330, %v3833, %v3835
    %3837 = vrot.lane.b32.xlu0 %v3829, 127
    %v3838 = vpop.permute.xlu0 %3837
    %3839 = vrot.lane.b32.xlu0 %v3831, 127
    %v3840 = vpop.permute.xlu0 %3839
    %3841 = vrot.lane.b32.xlu0 %v3834, 127
    %v3842 = vpop.permute.xlu0 %3841
    %3843 = vrot.lane.b32.xlu0 %v3836, 127
    %v3844 = vpop.permute.xlu0 %3843
    %v3849 = vadd.f32 %v3697, %v3838
    %v3850 = vadd.f32 %v3698, %v3840
    %v3851 = vadd.f32 %v3699, %v3842
    %v3852 = vadd.f32 %v3700, %v3844
    %s3853 = sld [smem:[#allocation9 + $0x85]]
    %v3854 = vstv %s3853
    %v3855 = vmul.f32 %v3854, %v488
    %v3856 = vmul.f32 %v3854, %v489
    %v3857 = vmul.f32 %v3854, %v490
    %v3858 = vmul.f32 %v3854, %v491
    %v3859 = vmul.f32 %v3854, %v492
    %v3860 = vmul.f32 %v3854, %v493
    %v3867 = vrot.slane %v3855, 2
    %v3868 = vrot.slane %v3856, 2
    %v3869 = vsel %vm1330, %v3867, %v3868
    %v3870 = vrot.slane %v3857, 2
    %v3871 = vsel %vm1330, %v3868, %v3870
    %v3872 = vrot.slane %v3858, 2
    %v3873 = vrot.slane %v3859, 2
    %v3874 = vsel %vm1330, %v3872, %v3873
    %v3875 = vrot.slane %v3860, 2
    %v3876 = vsel %vm1330, %v3873, %v3875
    %3877 = vrot.lane.b32.xlu0 %v3869, 127
    %v3878 = vpop.permute.xlu0 %3877
    %3879 = vrot.lane.b32.xlu0 %v3871, 127
    %v3880 = vpop.permute.xlu0 %3879
    %3881 = vrot.lane.b32.xlu0 %v3874, 127
    %v3882 = vpop.permute.xlu0 %3881
    %3883 = vrot.lane.b32.xlu0 %v3876, 127
    %v3884 = vpop.permute.xlu0 %3883
    %v3889 = vadd.f32 %v3729, %v3878
    %v3890 = vadd.f32 %v3730, %v3880
    %v3891 = vadd.f32 %v3731, %v3882
    %v3892 = vadd.f32 %v3732, %v3884
    %s3893 = sld [smem:[#allocation9 + $0x1a]]
    %v3894 = vstv %s3893
    %v3895 = vmul.f32 %v3894, %v488
    %v3896 = vmul.f32 %v3894, %v489
    %v3897 = vmul.f32 %v3894, %v490
    %v3898 = vmul.f32 %v3894, %v491
    %v3899 = vmul.f32 %v3894, %v492
    %v3900 = vmul.f32 %v3894, %v493
    %v3907 = vrot.slane %v3895, 2
    %v3908 = vrot.slane %v3896, 2
    %v3909 = vsel %vm1330, %v3907, %v3908
    %v3910 = vrot.slane %v3897, 2
    %v3911 = vsel %vm1330, %v3908, %v3910
    %v3912 = vrot.slane %v3898, 2
    %v3913 = vrot.slane %v3899, 2
    %v3914 = vsel %vm1330, %v3912, %v3913
    %v3915 = vrot.slane %v3900, 2
    %v3916 = vsel %vm1330, %v3913, %v3915
    %3917 = vrot.lane.b32.xlu0 %v3909, 126
    %v3918 = vpop.permute.xlu0 %3917
    %3919 = vrot.lane.b32.xlu0 %v3911, 126
    %v3920 = vpop.permute.xlu0 %3919
    %3921 = vrot.lane.b32.xlu0 %v3914, 126
    %v3922 = vpop.permute.xlu0 %3921
    %3923 = vrot.lane.b32.xlu0 %v3916, 126
    %v3924 = vpop.permute.xlu0 %3923
    %v3929 = vadd.f32 %v3769, %v3918
    %v3930 = vadd.f32 %v3770, %v3920
    %v3931 = vadd.f32 %v3771, %v3922
    %v3932 = vadd.f32 %v3772, %v3924
    %s3933 = sld [smem:[#allocation9 + $0x3e]]
    %v3934 = vstv %s3933
    %v3935 = vmul.f32 %v3934, %v488
    %v3936 = vmul.f32 %v3934, %v489
    %v3937 = vmul.f32 %v3934, %v490
    %v3938 = vmul.f32 %v3934, %v491
    %v3939 = vmul.f32 %v3934, %v492
    %v3940 = vmul.f32 %v3934, %v493
    %v3947 = vrot.slane %v3935, 2
    %v3948 = vrot.slane %v3936, 2
    %v3949 = vsel %vm1330, %v3947, %v3948
    %v3950 = vrot.slane %v3937, 2
    %v3951 = vsel %vm1330, %v3948, %v3950
    %v3952 = vrot.slane %v3938, 2
    %v3953 = vrot.slane %v3939, 2
    %v3954 = vsel %vm1330, %v3952, %v3953
    %v3955 = vrot.slane %v3940, 2
    %v3956 = vsel %vm1330, %v3953, %v3955
    %3957 = vrot.lane.b32.xlu0 %v3949, 126
    %v3958 = vpop.permute.xlu0 %3957
    %3959 = vrot.lane.b32.xlu0 %v3951, 126
    %v3960 = vpop.permute.xlu0 %3959
    %3961 = vrot.lane.b32.xlu0 %v3954, 126
    %v3962 = vpop.permute.xlu0 %3961
    %3963 = vrot.lane.b32.xlu0 %v3956, 126
    %v3964 = vpop.permute.xlu0 %3963
    %v3969 = vadd.f32 %v3809, %v3958
    %v3970 = vadd.f32 %v3810, %v3960
    %v3971 = vadd.f32 %v3811, %v3962
    %v3972 = vadd.f32 %v3812, %v3964
    %s3973 = sld [smem:[#allocation9 + $0x62]]
    %v3974 = vstv %s3973
    %v3975 = vmul.f32 %v3974, %v488
    %v3976 = vmul.f32 %v3974, %v489
    %v3977 = vmul.f32 %v3974, %v490
    %v3978 = vmul.f32 %v3974, %v491
    %v3979 = vmul.f32 %v3974, %v492
    %v3980 = vmul.f32 %v3974, %v493
    %v3987 = vrot.slane %v3975, 2
    %v3988 = vrot.slane %v3976, 2
    %v3989 = vsel %vm1330, %v3987, %v3988
    %v3990 = vrot.slane %v3977, 2
    %v3991 = vsel %vm1330, %v3988, %v3990
    %v3992 = vrot.slane %v3978, 2
    %v3993 = vrot.slane %v3979, 2
    %v3994 = vsel %vm1330, %v3992, %v3993
    %v3995 = vrot.slane %v3980, 2
    %v3996 = vsel %vm1330, %v3993, %v3995
    %3997 = vrot.lane.b32.xlu0 %v3989, 126
    %v3998 = vpop.permute.xlu0 %3997
    %3999 = vrot.lane.b32.xlu0 %v3991, 126
    %v4000 = vpop.permute.xlu0 %3999
    %4001 = vrot.lane.b32.xlu0 %v3994, 126
    %v4002 = vpop.permute.xlu0 %4001
    %4003 = vrot.lane.b32.xlu0 %v3996, 126
    %v4004 = vpop.permute.xlu0 %4003
    %v4009 = vadd.f32 %v3849, %v3998
    %v4010 = vadd.f32 %v3850, %v4000
    %v4011 = vadd.f32 %v3851, %v4002
    %v4012 = vadd.f32 %v3852, %v4004
    %s4013 = sld [smem:[#allocation9 + $0x86]]
    %v4014 = vstv %s4013
    %v4015 = vmul.f32 %v4014, %v488
    %v4016 = vmul.f32 %v4014, %v489
    %v4017 = vmul.f32 %v4014, %v490
    %v4018 = vmul.f32 %v4014, %v491
    %v4019 = vmul.f32 %v4014, %v492
    %v4020 = vmul.f32 %v4014, %v493
    %v4027 = vrot.slane %v4015, 2
    %v4028 = vrot.slane %v4016, 2
    %v4029 = vsel %vm1330, %v4027, %v4028
    %v4030 = vrot.slane %v4017, 2
    %v4031 = vsel %vm1330, %v4028, %v4030
    %v4032 = vrot.slane %v4018, 2
    %v4033 = vrot.slane %v4019, 2
    %v4034 = vsel %vm1330, %v4032, %v4033
    %v4035 = vrot.slane %v4020, 2
    %v4036 = vsel %vm1330, %v4033, %v4035
    %4037 = vrot.lane.b32.xlu0 %v4029, 126
    %v4038 = vpop.permute.xlu0 %4037
    %4039 = vrot.lane.b32.xlu0 %v4031, 126
    %v4040 = vpop.permute.xlu0 %4039
    %4041 = vrot.lane.b32.xlu0 %v4034, 126
    %v4042 = vpop.permute.xlu0 %4041
    %4043 = vrot.lane.b32.xlu0 %v4036, 126
    %v4044 = vpop.permute.xlu0 %4043
    %v4049 = vadd.f32 %v3889, %v4038
    %v4050 = vadd.f32 %v3890, %v4040
    %v4051 = vadd.f32 %v3891, %v4042
    %v4052 = vadd.f32 %v3892, %v4044
    %s4053 = sld [smem:[#allocation9 + $0x1b]]
    %v4054 = vstv %s4053
    %v4055 = vmul.f32 %v4054, %v605
    %v4056 = vmul.f32 %v4054, %v606
    %v4057 = vmul.f32 %v4054, %v608
    %v4058 = vmul.f32 %v4054, %v609
    %v4059 = vadd.f32 %v3929, %v4055
    %v4060 = vadd.f32 %v3930, %v4056
    %v4061 = vadd.f32 %v3931, %v4057
    %v4062 = vadd.f32 %v3932, %v4058
    %s4063 = sld [smem:[#allocation9 + $0x3f]]
    %v4064 = vstv %s4063
    %v4065 = vmul.f32 %v4064, %v605
    %v4066 = vmul.f32 %v4064, %v606
    %v4067 = vmul.f32 %v4064, %v608
    %v4068 = vmul.f32 %v4064, %v609
    %v4069 = vadd.f32 %v3969, %v4065
    %v4070 = vadd.f32 %v3970, %v4066
    %v4071 = vadd.f32 %v3971, %v4067
    %v4072 = vadd.f32 %v3972, %v4068
    %s4073 = sld [smem:[#allocation9 + $0x63]]
    %v4074 = vstv %s4073
    %v4075 = vmul.f32 %v4074, %v605
    %v4076 = vmul.f32 %v4074, %v606
    %v4077 = vmul.f32 %v4074, %v608
    %v4078 = vmul.f32 %v4074, %v609
    %v4079 = vadd.f32 %v4009, %v4075
    %v4080 = vadd.f32 %v4010, %v4076
    %v4081 = vadd.f32 %v4011, %v4077
    %v4082 = vadd.f32 %v4012, %v4078
    %s4083 = sld [smem:[#allocation9 + $0x87]]
    %v4084 = vstv %s4083
    %v4085 = vmul.f32 %v4084, %v605
    %v4086 = vmul.f32 %v4084, %v606
    %v4087 = vmul.f32 %v4084, %v608
    %v4088 = vmul.f32 %v4084, %v609
    %v4089 = vadd.f32 %v4049, %v4085
    %v4090 = vadd.f32 %v4050, %v4086
    %v4091 = vadd.f32 %v4051, %v4087
    %v4092 = vadd.f32 %v4052, %v4088
    %s4093 = sld [smem:[#allocation9 + $0x1c]]
    %v4094 = vstv %s4093
    %v4095 = vmul.f32 %v4094, %v605
    %v4096 = vmul.f32 %v4094, %v606
    %v4097 = vmul.f32 %v4094, %v608
    %v4098 = vmul.f32 %v4094, %v609
    %4103 = vrot.lane.b32.xlu0 %v4095, 127
    %v4104 = vpop.permute.xlu0 %4103
    %4105 = vrot.lane.b32.xlu0 %v4096, 127
    %v4106 = vpop.permute.xlu0 %4105
    %4107 = vrot.lane.b32.xlu0 %v4097, 127
    %v4108 = vpop.permute.xlu0 %4107
    %4109 = vrot.lane.b32.xlu0 %v4098, 127
    %v4110 = vpop.permute.xlu0 %4109
    %v4115 = vadd.f32 %v4059, %v4104
    %v4116 = vadd.f32 %v4060, %v4106
    %v4117 = vadd.f32 %v4061, %v4108
    %v4118 = vadd.f32 %v4062, %v4110
    %s4119 = sld [smem:[#allocation9 + $0x40]]
    %v4120 = vstv %s4119
    %v4121 = vmul.f32 %v4120, %v605
    %v4122 = vmul.f32 %v4120, %v606
    %v4123 = vmul.f32 %v4120, %v608
    %v4124 = vmul.f32 %v4120, %v609
    %4129 = vrot.lane.b32.xlu0 %v4121, 127
    %v4130 = vpop.permute.xlu0 %4129
    %4131 = vrot.lane.b32.xlu0 %v4122, 127
    %v4132 = vpop.permute.xlu0 %4131
    %4133 = vrot.lane.b32.xlu0 %v4123, 127
    %v4134 = vpop.permute.xlu0 %4133
    %4135 = vrot.lane.b32.xlu0 %v4124, 127
    %v4136 = vpop.permute.xlu0 %4135
    %v4141 = vadd.f32 %v4069, %v4130
    %v4142 = vadd.f32 %v4070, %v4132
    %v4143 = vadd.f32 %v4071, %v4134
    %v4144 = vadd.f32 %v4072, %v4136
    %s4145 = sld [smem:[#allocation9 + $0x64]]
    %v4146 = vstv %s4145
    %v4147 = vmul.f32 %v4146, %v605
    %v4148 = vmul.f32 %v4146, %v606
    %v4149 = vmul.f32 %v4146, %v608
    %v4150 = vmul.f32 %v4146, %v609
    %4155 = vrot.lane.b32.xlu0 %v4147, 127
    %v4156 = vpop.permute.xlu0 %4155
    %4157 = vrot.lane.b32.xlu0 %v4148, 127
    %v4158 = vpop.permute.xlu0 %4157
    %4159 = vrot.lane.b32.xlu0 %v4149, 127
    %v4160 = vpop.permute.xlu0 %4159
    %4161 = vrot.lane.b32.xlu0 %v4150, 127
    %v4162 = vpop.permute.xlu0 %4161
    %v4167 = vadd.f32 %v4079, %v4156
    %v4168 = vadd.f32 %v4080, %v4158
    %v4169 = vadd.f32 %v4081, %v4160
    %v4170 = vadd.f32 %v4082, %v4162
    %s4171 = sld [smem:[#allocation9 + $0x88]]
    %v4172 = vstv %s4171
    %v4173 = vmul.f32 %v4172, %v605
    %v4174 = vmul.f32 %v4172, %v606
    %v4175 = vmul.f32 %v4172, %v608
    %v4176 = vmul.f32 %v4172, %v609
    %4181 = vrot.lane.b32.xlu0 %v4173, 127
    %v4182 = vpop.permute.xlu0 %4181
    %4183 = vrot.lane.b32.xlu0 %v4174, 127
    %v4184 = vpop.permute.xlu0 %4183
    %4185 = vrot.lane.b32.xlu0 %v4175, 127
    %v4186 = vpop.permute.xlu0 %4185
    %4187 = vrot.lane.b32.xlu0 %v4176, 127
    %v4188 = vpop.permute.xlu0 %4187
    %v4193 = vadd.f32 %v4089, %v4182
    %v4194 = vadd.f32 %v4090, %v4184
    %v4195 = vadd.f32 %v4091, %v4186
    %v4196 = vadd.f32 %v4092, %v4188
    %s4197 = sld [smem:[#allocation9 + $0x1d]]
    %v4198 = vstv %s4197
    %v4199 = vmul.f32 %v4198, %v605
    %v4200 = vmul.f32 %v4198, %v606
    %v4201 = vmul.f32 %v4198, %v608
    %v4202 = vmul.f32 %v4198, %v609
    %4207 = vrot.lane.b32.xlu0 %v4199, 126
    %v4208 = vpop.permute.xlu0 %4207
    %4209 = vrot.lane.b32.xlu0 %v4200, 126
    %v4210 = vpop.permute.xlu0 %4209
    %4211 = vrot.lane.b32.xlu0 %v4201, 126
    %v4212 = vpop.permute.xlu0 %4211
    %4213 = vrot.lane.b32.xlu0 %v4202, 126
    %v4214 = vpop.permute.xlu0 %4213
    %v4219 = vadd.f32 %v4115, %v4208
    %v4220 = vadd.f32 %v4116, %v4210
    %v4221 = vadd.f32 %v4117, %v4212
    %v4222 = vadd.f32 %v4118, %v4214
    %s4223 = sld [smem:[#allocation9 + $0x41]]
    %v4224 = vstv %s4223
    %v4225 = vmul.f32 %v4224, %v605
    %v4226 = vmul.f32 %v4224, %v606
    %v4227 = vmul.f32 %v4224, %v608
    %v4228 = vmul.f32 %v4224, %v609
    %4233 = vrot.lane.b32.xlu0 %v4225, 126
    %v4234 = vpop.permute.xlu0 %4233
    %4235 = vrot.lane.b32.xlu0 %v4226, 126
    %v4236 = vpop.permute.xlu0 %4235
    %4237 = vrot.lane.b32.xlu0 %v4227, 126
    %v4238 = vpop.permute.xlu0 %4237
    %4239 = vrot.lane.b32.xlu0 %v4228, 126
    %v4240 = vpop.permute.xlu0 %4239
    %v4245 = vadd.f32 %v4141, %v4234
    %v4246 = vadd.f32 %v4142, %v4236
    %v4247 = vadd.f32 %v4143, %v4238
    %v4248 = vadd.f32 %v4144, %v4240
    %s4249 = sld [smem:[#allocation9 + $0x65]]
    %v4250 = vstv %s4249
    %v4251 = vmul.f32 %v4250, %v605
    %v4252 = vmul.f32 %v4250, %v606
    %v4253 = vmul.f32 %v4250, %v608
    %v4254 = vmul.f32 %v4250, %v609
    %4259 = vrot.lane.b32.xlu0 %v4251, 126
    %v4260 = vpop.permute.xlu0 %4259
    %4261 = vrot.lane.b32.xlu0 %v4252, 126
    %v4262 = vpop.permute.xlu0 %4261
    %4263 = vrot.lane.b32.xlu0 %v4253, 126
    %v4264 = vpop.permute.xlu0 %4263
    %4265 = vrot.lane.b32.xlu0 %v4254, 126
    %v4266 = vpop.permute.xlu0 %4265
    %v4271 = vadd.f32 %v4167, %v4260
    %v4272 = vadd.f32 %v4168, %v4262
    %v4273 = vadd.f32 %v4169, %v4264
    %v4274 = vadd.f32 %v4170, %v4266
    %s4275 = sld [smem:[#allocation9 + $0x89]]
    %v4276 = vstv %s4275
    %v4277 = vmul.f32 %v4276, %v605
    %v4278 = vmul.f32 %v4276, %v606
    %v4279 = vmul.f32 %v4276, %v608
    %v4280 = vmul.f32 %v4276, %v609
    %4285 = vrot.lane.b32.xlu0 %v4277, 126
    %v4286 = vpop.permute.xlu0 %4285
    %4287 = vrot.lane.b32.xlu0 %v4278, 126
    %v4288 = vpop.permute.xlu0 %4287
    %4289 = vrot.lane.b32.xlu0 %v4279, 126
    %v4290 = vpop.permute.xlu0 %4289
    %4291 = vrot.lane.b32.xlu0 %v4280, 126
    %v4292 = vpop.permute.xlu0 %4291
    %v4297 = vadd.f32 %v4193, %v4286
    %v4298 = vadd.f32 %v4194, %v4288
    %v4299 = vadd.f32 %v4195, %v4290
    %v4300 = vadd.f32 %v4196, %v4292
    %s4301 = sld [smem:[#allocation9 + $0x1e]]
    %v4302 = vstv %s4301
    %v4303 = vmul.f32 %v4302, %v605
    %v4304 = vmul.f32 %v4302, %v606
    %v4305 = vmul.f32 %v4302, %v607
    %v4306 = vmul.f32 %v4302, %v608
    %v4307 = vmul.f32 %v4302, %v609
    %v4308 = vmul.f32 %v4302, %v610
    %v4315 = vrot.slane %v4303, 1
    %v4316 = vrot.slane %v4304, 1
    %v4317 = vsel %vm881, %v4315, %v4316
    %v4318 = vrot.slane %v4305, 1
    %v4319 = vsel %vm881, %v4316, %v4318
    %v4320 = vrot.slane %v4306, 1
    %v4321 = vrot.slane %v4307, 1
    %v4322 = vsel %vm881, %v4320, %v4321
    %v4323 = vrot.slane %v4308, 1
    %v4324 = vsel %vm881, %v4321, %v4323
    %v4329 = vadd.f32 %v4219, %v4317
    %v4330 = vadd.f32 %v4220, %v4319
    %v4331 = vadd.f32 %v4221, %v4322
    %v4332 = vadd.f32 %v4222, %v4324
    %s4333 = sld [smem:[#allocation9 + $0x42]]
    %v4334 = vstv %s4333
    %v4335 = vmul.f32 %v4334, %v605
    %v4336 = vmul.f32 %v4334, %v606
    %v4337 = vmul.f32 %v4334, %v607
    %v4338 = vmul.f32 %v4334, %v608
    %v4339 = vmul.f32 %v4334, %v609
    %v4340 = vmul.f32 %v4334, %v610
    %v4347 = vrot.slane %v4335, 1
    %v4348 = vrot.slane %v4336, 1
    %v4349 = vsel %vm881, %v4347, %v4348
    %v4350 = vrot.slane %v4337, 1
    %v4351 = vsel %vm881, %v4348, %v4350
    %v4352 = vrot.slane %v4338, 1
    %v4353 = vrot.slane %v4339, 1
    %v4354 = vsel %vm881, %v4352, %v4353
    %v4355 = vrot.slane %v4340, 1
    %v4356 = vsel %vm881, %v4353, %v4355
    %v4361 = vadd.f32 %v4245, %v4349
    %v4362 = vadd.f32 %v4246, %v4351
    %v4363 = vadd.f32 %v4247, %v4354
    %v4364 = vadd.f32 %v4248, %v4356
    %s4365 = sld [smem:[#allocation9 + $0x66]]
    %v4366 = vstv %s4365
    %v4367 = vmul.f32 %v4366, %v605
    %v4368 = vmul.f32 %v4366, %v606
    %v4369 = vmul.f32 %v4366, %v607
    %v4370 = vmul.f32 %v4366, %v608
    %v4371 = vmul.f32 %v4366, %v609
    %v4372 = vmul.f32 %v4366, %v610
    %v4379 = vrot.slane %v4367, 1
    %v4380 = vrot.slane %v4368, 1
    %v4381 = vsel %vm881, %v4379, %v4380
    %v4382 = vrot.slane %v4369, 1
    %v4383 = vsel %vm881, %v4380, %v4382
    %v4384 = vrot.slane %v4370, 1
    %v4385 = vrot.slane %v4371, 1
    %v4386 = vsel %vm881, %v4384, %v4385
    %v4387 = vrot.slane %v4372, 1
    %v4388 = vsel %vm881, %v4385, %v4387
    %v4393 = vadd.f32 %v4271, %v4381
    %v4394 = vadd.f32 %v4272, %v4383
    %v4395 = vadd.f32 %v4273, %v4386
    %v4396 = vadd.f32 %v4274, %v4388
    %s4397 = sld [smem:[#allocation9 + $0x8a]]
    %v4398 = vstv %s4397
    %v4399 = vmul.f32 %v4398, %v605
    %v4400 = vmul.f32 %v4398, %v606
    %v4401 = vmul.f32 %v4398, %v607
    %v4402 = vmul.f32 %v4398, %v608
    %v4403 = vmul.f32 %v4398, %v609
    %v4404 = vmul.f32 %v4398, %v610
    %v4411 = vrot.slane %v4399, 1
    %v4412 = vrot.slane %v4400, 1
    %v4413 = vsel %vm881, %v4411, %v4412
    %v4414 = vrot.slane %v4401, 1
    %v4415 = vsel %vm881, %v4412, %v4414
    %v4416 = vrot.slane %v4402, 1
    %v4417 = vrot.slane %v4403, 1
    %v4418 = vsel %vm881, %v4416, %v4417
    %v4419 = vrot.slane %v4404, 1
    %v4420 = vsel %vm881, %v4417, %v4419
    %v4425 = vadd.f32 %v4297, %v4413
    %v4426 = vadd.f32 %v4298, %v4415
    %v4427 = vadd.f32 %v4299, %v4418
    %v4428 = vadd.f32 %v4300, %v4420
    %s4429 = sld [smem:[#allocation9 + $0x1f]]
    %v4430 = vstv %s4429
    %v4431 = vmul.f32 %v4430, %v605
    %v4432 = vmul.f32 %v4430, %v606
    %v4433 = vmul.f32 %v4430, %v607
    %v4434 = vmul.f32 %v4430, %v608
    %v4435 = vmul.f32 %v4430, %v609
    %v4436 = vmul.f32 %v4430, %v610
    %v4443 = vrot.slane %v4431, 1
    %v4444 = vrot.slane %v4432, 1
    %v4445 = vsel %vm881, %v4443, %v4444
    %v4446 = vrot.slane %v4433, 1
    %v4447 = vsel %vm881, %v4444, %v4446
    %v4448 = vrot.slane %v4434, 1
    %v4449 = vrot.slane %v4435, 1
    %v4450 = vsel %vm881, %v4448, %v4449
    %v4451 = vrot.slane %v4436, 1
    %v4452 = vsel %vm881, %v4449, %v4451
    %4453 = vrot.lane.b32.xlu0 %v4445, 127
    %v4454 = vpop.permute.xlu0 %4453
    %4455 = vrot.lane.b32.xlu0 %v4447, 127
    %v4456 = vpop.permute.xlu0 %4455
    %4457 = vrot.lane.b32.xlu0 %v4450, 127
    %v4458 = vpop.permute.xlu0 %4457
    %4459 = vrot.lane.b32.xlu0 %v4452, 127
    %v4460 = vpop.permute.xlu0 %4459
    %v4465 = vadd.f32 %v4329, %v4454
    %v4466 = vadd.f32 %v4330, %v4456
    %v4467 = vadd.f32 %v4331, %v4458
    %v4468 = vadd.f32 %v4332, %v4460
    %s4469 = sld [smem:[#allocation9 + $0x43]]
    %v4470 = vstv %s4469
    %v4471 = vmul.f32 %v4470, %v605
    %v4472 = vmul.f32 %v4470, %v606
    %v4473 = vmul.f32 %v4470, %v607
    %v4474 = vmul.f32 %v4470, %v608
    %v4475 = vmul.f32 %v4470, %v609
    %v4476 = vmul.f32 %v4470, %v610
    %v4483 = vrot.slane %v4471, 1
    %v4484 = vrot.slane %v4472, 1
    %v4485 = vsel %vm881, %v4483, %v4484
    %v4486 = vrot.slane %v4473, 1
    %v4487 = vsel %vm881, %v4484, %v4486
    %v4488 = vrot.slane %v4474, 1
    %v4489 = vrot.slane %v4475, 1
    %v4490 = vsel %vm881, %v4488, %v4489
    %v4491 = vrot.slane %v4476, 1
    %v4492 = vsel %vm881, %v4489, %v4491
    %4493 = vrot.lane.b32.xlu0 %v4485, 127
    %v4494 = vpop.permute.xlu0 %4493
    %4495 = vrot.lane.b32.xlu0 %v4487, 127
    %v4496 = vpop.permute.xlu0 %4495
    %4497 = vrot.lane.b32.xlu0 %v4490, 127
    %v4498 = vpop.permute.xlu0 %4497
    %4499 = vrot.lane.b32.xlu0 %v4492, 127
    %v4500 = vpop.permute.xlu0 %4499
    %v4505 = vadd.f32 %v4361, %v4494
    %v4506 = vadd.f32 %v4362, %v4496
    %v4507 = vadd.f32 %v4363, %v4498
    %v4508 = vadd.f32 %v4364, %v4500
    %s4509 = sld [smem:[#allocation9 + $0x67]]
    %v4510 = vstv %s4509
    %v4511 = vmul.f32 %v4510, %v605
    %v4512 = vmul.f32 %v4510, %v606
    %v4513 = vmul.f32 %v4510, %v607
    %v4514 = vmul.f32 %v4510, %v608
    %v4515 = vmul.f32 %v4510, %v609
    %v4516 = vmul.f32 %v4510, %v610
    %v4523 = vrot.slane %v4511, 1
    %v4524 = vrot.slane %v4512, 1
    %v4525 = vsel %vm881, %v4523, %v4524
    %v4526 = vrot.slane %v4513, 1
    %v4527 = vsel %vm881, %v4524, %v4526
    %v4528 = vrot.slane %v4514, 1
    %v4529 = vrot.slane %v4515, 1
    %v4530 = vsel %vm881, %v4528, %v4529
    %v4531 = vrot.slane %v4516, 1
    %v4532 = vsel %vm881, %v4529, %v4531
    %4533 = vrot.lane.b32.xlu0 %v4525, 127
    %v4534 = vpop.permute.xlu0 %4533
    %4535 = vrot.lane.b32.xlu0 %v4527, 127
    %v4536 = vpop.permute.xlu0 %4535
    %4537 = vrot.lane.b32.xlu0 %v4530, 127
    %v4538 = vpop.permute.xlu0 %4537
    %4539 = vrot.lane.b32.xlu0 %v4532, 127
    %v4540 = vpop.permute.xlu0 %4539
    %v4545 = vadd.f32 %v4393, %v4534
    %v4546 = vadd.f32 %v4394, %v4536
    %v4547 = vadd.f32 %v4395, %v4538
    %v4548 = vadd.f32 %v4396, %v4540
    %s4549 = sld [smem:[#allocation9 + $0x8b]]
    %v4550 = vstv %s4549
    %v4551 = vmul.f32 %v4550, %v605
    %v4552 = vmul.f32 %v4550, %v606
    %v4553 = vmul.f32 %v4550, %v607
    %v4554 = vmul.f32 %v4550, %v608
    %v4555 = vmul.f32 %v4550, %v609
    %v4556 = vmul.f32 %v4550, %v610
    %v4563 = vrot.slane %v4551, 1
    %v4564 = vrot.slane %v4552, 1
    %v4565 = vsel %vm881, %v4563, %v4564
    %v4566 = vrot.slane %v4553, 1
    %v4567 = vsel %vm881, %v4564, %v4566
    %v4568 = vrot.slane %v4554, 1
    %v4569 = vrot.slane %v4555, 1
    %v4570 = vsel %vm881, %v4568, %v4569
    %v4571 = vrot.slane %v4556, 1
    %v4572 = vsel %vm881, %v4569, %v4571
    %4573 = vrot.lane.b32.xlu0 %v4565, 127
    %v4574 = vpop.permute.xlu0 %4573
    %4575 = vrot.lane.b32.xlu0 %v4567, 127
    %v4576 = vpop.permute.xlu0 %4575
    %4577 = vrot.lane.b32.xlu0 %v4570, 127
    %v4578 = vpop.permute.xlu0 %4577
    %4579 = vrot.lane.b32.xlu0 %v4572, 127
    %v4580 = vpop.permute.xlu0 %4579
    %v4585 = vadd.f32 %v4425, %v4574
    %v4586 = vadd.f32 %v4426, %v4576
    %v4587 = vadd.f32 %v4427, %v4578
    %v4588 = vadd.f32 %v4428, %v4580
    %s4589 = sld [smem:[#allocation9 + $0x20]]
    %v4590 = vstv %s4589
    %v4591 = vmul.f32 %v4590, %v605
    %v4592 = vmul.f32 %v4590, %v606
    %v4593 = vmul.f32 %v4590, %v607
    %v4594 = vmul.f32 %v4590, %v608
    %v4595 = vmul.f32 %v4590, %v609
    %v4596 = vmul.f32 %v4590, %v610
    %v4603 = vrot.slane %v4591, 1
    %v4604 = vrot.slane %v4592, 1
    %v4605 = vsel %vm881, %v4603, %v4604
    %v4606 = vrot.slane %v4593, 1
    %v4607 = vsel %vm881, %v4604, %v4606
    %v4608 = vrot.slane %v4594, 1
    %v4609 = vrot.slane %v4595, 1
    %v4610 = vsel %vm881, %v4608, %v4609
    %v4611 = vrot.slane %v4596, 1
    %v4612 = vsel %vm881, %v4609, %v4611
    %4613 = vrot.lane.b32.xlu0 %v4605, 126
    %v4614 = vpop.permute.xlu0 %4613
    %4615 = vrot.lane.b32.xlu0 %v4607, 126
    %v4616 = vpop.permute.xlu0 %4615
    %4617 = vrot.lane.b32.xlu0 %v4610, 126
    %v4618 = vpop.permute.xlu0 %4617
    %4619 = vrot.lane.b32.xlu0 %v4612, 126
    %v4620 = vpop.permute.xlu0 %4619
    %v4625 = vadd.f32 %v4465, %v4614
    %v4626 = vadd.f32 %v4466, %v4616
    %v4627 = vadd.f32 %v4467, %v4618
    %v4628 = vadd.f32 %v4468, %v4620
    %s4629 = sld [smem:[#allocation9 + $0x44]]
    %v4630 = vstv %s4629
    %v4631 = vmul.f32 %v4630, %v605
    %v4632 = vmul.f32 %v4630, %v606
    %v4633 = vmul.f32 %v4630, %v607
    %v4634 = vmul.f32 %v4630, %v608
    %v4635 = vmul.f32 %v4630, %v609
    %v4636 = vmul.f32 %v4630, %v610
    %v4643 = vrot.slane %v4631, 1
    %v4644 = vrot.slane %v4632, 1
    %v4645 = vsel %vm881, %v4643, %v4644
    %v4646 = vrot.slane %v4633, 1
    %v4647 = vsel %vm881, %v4644, %v4646
    %v4648 = vrot.slane %v4634, 1
    %v4649 = vrot.slane %v4635, 1
    %v4650 = vsel %vm881, %v4648, %v4649
    %v4651 = vrot.slane %v4636, 1
    %v4652 = vsel %vm881, %v4649, %v4651
    %4653 = vrot.lane.b32.xlu0 %v4645, 126
    %v4654 = vpop.permute.xlu0 %4653
    %4655 = vrot.lane.b32.xlu0 %v4647, 126
    %v4656 = vpop.permute.xlu0 %4655
    %4657 = vrot.lane.b32.xlu0 %v4650, 126
    %v4658 = vpop.permute.xlu0 %4657
    %4659 = vrot.lane.b32.xlu0 %v4652, 126
    %v4660 = vpop.permute.xlu0 %4659
    %v4665 = vadd.f32 %v4505, %v4654
    %v4666 = vadd.f32 %v4506, %v4656
    %v4667 = vadd.f32 %v4507, %v4658
    %v4668 = vadd.f32 %v4508, %v4660
    %s4669 = sld [smem:[#allocation9 + $0x68]]
    %v4670 = vstv %s4669
    %v4671 = vmul.f32 %v4670, %v605
    %v4672 = vmul.f32 %v4670, %v606
    %v4673 = vmul.f32 %v4670, %v607
    %v4674 = vmul.f32 %v4670, %v608
    %v4675 = vmul.f32 %v4670, %v609
    %v4676 = vmul.f32 %v4670, %v610
    %v4683 = vrot.slane %v4671, 1
    %v4684 = vrot.slane %v4672, 1
    %v4685 = vsel %vm881, %v4683, %v4684
    %v4686 = vrot.slane %v4673, 1
    %v4687 = vsel %vm881, %v4684, %v4686
    %v4688 = vrot.slane %v4674, 1
    %v4689 = vrot.slane %v4675, 1
    %v4690 = vsel %vm881, %v4688, %v4689
    %v4691 = vrot.slane %v4676, 1
    %v4692 = vsel %vm881, %v4689, %v4691
    %4693 = vrot.lane.b32.xlu0 %v4685, 126
    %v4694 = vpop.permute.xlu0 %4693
    %4695 = vrot.lane.b32.xlu0 %v4687, 126
    %v4696 = vpop.permute.xlu0 %4695
    %4697 = vrot.lane.b32.xlu0 %v4690, 126
    %v4698 = vpop.permute.xlu0 %4697
    %4699 = vrot.lane.b32.xlu0 %v4692, 126
    %v4700 = vpop.permute.xlu0 %4699
    %v4705 = vadd.f32 %v4545, %v4694
    %v4706 = vadd.f32 %v4546, %v4696
    %v4707 = vadd.f32 %v4547, %v4698
    %v4708 = vadd.f32 %v4548, %v4700
    %s4709 = sld [smem:[#allocation9 + $0x8c]]
    %v4710 = vstv %s4709
    %v4711 = vmul.f32 %v4710, %v605
    %v4712 = vmul.f32 %v4710, %v606
    %v4713 = vmul.f32 %v4710, %v607
    %v4714 = vmul.f32 %v4710, %v608
    %v4715 = vmul.f32 %v4710, %v609
    %v4716 = vmul.f32 %v4710, %v610
    %v4723 = vrot.slane %v4711, 1
    %v4724 = vrot.slane %v4712, 1
    %v4725 = vsel %vm881, %v4723, %v4724
    %v4726 = vrot.slane %v4713, 1
    %v4727 = vsel %vm881, %v4724, %v4726
    %v4728 = vrot.slane %v4714, 1
    %v4729 = vrot.slane %v4715, 1
    %v4730 = vsel %vm881, %v4728, %v4729
    %v4731 = vrot.slane %v4716, 1
    %v4732 = vsel %vm881, %v4729, %v4731
    %4733 = vrot.lane.b32.xlu0 %v4725, 126
    %v4734 = vpop.permute.xlu0 %4733
    %4735 = vrot.lane.b32.xlu0 %v4727, 126
    %v4736 = vpop.permute.xlu0 %4735
    %4737 = vrot.lane.b32.xlu0 %v4730, 126
    %v4738 = vpop.permute.xlu0 %4737
    %4739 = vrot.lane.b32.xlu0 %v4732, 126
    %v4740 = vpop.permute.xlu0 %4739
    %v4745 = vadd.f32 %v4585, %v4734
    %v4746 = vadd.f32 %v4586, %v4736
    %v4747 = vadd.f32 %v4587, %v4738
    %v4748 = vadd.f32 %v4588, %v4740
    %s4749 = sld [smem:[#allocation9 + $0x21]]
    %v4750 = vstv %s4749
    %v4751 = vmul.f32 %v4750, %v605
    %v4752 = vmul.f32 %v4750, %v606
    %v4753 = vmul.f32 %v4750, %v607
    %v4754 = vmul.f32 %v4750, %v608
    %v4755 = vmul.f32 %v4750, %v609
    %v4756 = vmul.f32 %v4750, %v610
    %v4763 = vrot.slane %v4751, 2
    %v4764 = vrot.slane %v4752, 2
    %v4765 = vsel %vm1330, %v4763, %v4764
    %v4766 = vrot.slane %v4753, 2
    %v4767 = vsel %vm1330, %v4764, %v4766
    %v4768 = vrot.slane %v4754, 2
    %v4769 = vrot.slane %v4755, 2
    %v4770 = vsel %vm1330, %v4768, %v4769
    %v4771 = vrot.slane %v4756, 2
    %v4772 = vsel %vm1330, %v4769, %v4771
    %v4777 = vadd.f32 %v4625, %v4765
    %v4778 = vadd.f32 %v4626, %v4767
    %v4779 = vadd.f32 %v4627, %v4770
    %v4780 = vadd.f32 %v4628, %v4772
    %s4781 = sld [smem:[#allocation9 + $0x45]]
    %v4782 = vstv %s4781
    %v4783 = vmul.f32 %v4782, %v605
    %v4784 = vmul.f32 %v4782, %v606
    %v4785 = vmul.f32 %v4782, %v607
    %v4786 = vmul.f32 %v4782, %v608
    %v4787 = vmul.f32 %v4782, %v609
    %v4788 = vmul.f32 %v4782, %v610
    %v4795 = vrot.slane %v4783, 2
    %v4796 = vrot.slane %v4784, 2
    %v4797 = vsel %vm1330, %v4795, %v4796
    %v4798 = vrot.slane %v4785, 2
    %v4799 = vsel %vm1330, %v4796, %v4798
    %v4800 = vrot.slane %v4786, 2
    %v4801 = vrot.slane %v4787, 2
    %v4802 = vsel %vm1330, %v4800, %v4801
    %v4803 = vrot.slane %v4788, 2
    %v4804 = vsel %vm1330, %v4801, %v4803
    %v4809 = vadd.f32 %v4665, %v4797
    %v4810 = vadd.f32 %v4666, %v4799
    %v4811 = vadd.f32 %v4667, %v4802
    %v4812 = vadd.f32 %v4668, %v4804
    %s4813 = sld [smem:[#allocation9 + $0x69]]
    %v4814 = vstv %s4813
    %v4815 = vmul.f32 %v4814, %v605
    %v4816 = vmul.f32 %v4814, %v606
    %v4817 = vmul.f32 %v4814, %v607
    %v4818 = vmul.f32 %v4814, %v608
    %v4819 = vmul.f32 %v4814, %v609
    %v4820 = vmul.f32 %v4814, %v610
    %v4827 = vrot.slane %v4815, 2
    %v4828 = vrot.slane %v4816, 2
    %v4829 = vsel %vm1330, %v4827, %v4828
    %v4830 = vrot.slane %v4817, 2
    %v4831 = vsel %vm1330, %v4828, %v4830
    %v4832 = vrot.slane %v4818, 2
    %v4833 = vrot.slane %v4819, 2
    %v4834 = vsel %vm1330, %v4832, %v4833
    %v4835 = vrot.slane %v4820, 2
    %v4836 = vsel %vm1330, %v4833, %v4835
    %v4841 = vadd.f32 %v4705, %v4829
    %v4842 = vadd.f32 %v4706, %v4831
    %v4843 = vadd.f32 %v4707, %v4834
    %v4844 = vadd.f32 %v4708, %v4836
    %s4845 = sld [smem:[#allocation9 + $0x8d]]
    %v4846 = vstv %s4845
    %v4847 = vmul.f32 %v4846, %v605
    %v4848 = vmul.f32 %v4846, %v606
    %v4849 = vmul.f32 %v4846, %v607
    %v4850 = vmul.f32 %v4846, %v608
    %v4851 = vmul.f32 %v4846, %v609
    %v4852 = vmul.f32 %v4846, %v610
    %v4859 = vrot.slane %v4847, 2
    %v4860 = vrot.slane %v4848, 2
    %v4861 = vsel %vm1330, %v4859, %v4860
    %v4862 = vrot.slane %v4849, 2
    %v4863 = vsel %vm1330, %v4860, %v4862
    %v4864 = vrot.slane %v4850, 2
    %v4865 = vrot.slane %v4851, 2
    %v4866 = vsel %vm1330, %v4864, %v4865
    %v4867 = vrot.slane %v4852, 2
    %v4868 = vsel %vm1330, %v4865, %v4867
    %v4873 = vadd.f32 %v4745, %v4861
    %v4874 = vadd.f32 %v4746, %v4863
    %v4875 = vadd.f32 %v4747, %v4866
    %v4876 = vadd.f32 %v4748, %v4868
    %s4877 = sld [smem:[#allocation9 + $0x22]]
    %v4878 = vstv %s4877
    %v4879 = vmul.f32 %v4878, %v605
    %v4880 = vmul.f32 %v4878, %v606
    %v4881 = vmul.f32 %v4878, %v607
    %v4882 = vmul.f32 %v4878, %v608
    %v4883 = vmul.f32 %v4878, %v609
    %v4884 = vmul.f32 %v4878, %v610
    %v4891 = vrot.slane %v4879, 2
    %v4892 = vrot.slane %v4880, 2
    %v4893 = vsel %vm1330, %v4891, %v4892
    %v4894 = vrot.slane %v4881, 2
    %v4895 = vsel %vm1330, %v4892, %v4894
    %v4896 = vrot.slane %v4882, 2
    %v4897 = vrot.slane %v4883, 2
    %v4898 = vsel %vm1330, %v4896, %v4897
    %v4899 = vrot.slane %v4884, 2
    %v4900 = vsel %vm1330, %v4897, %v4899
    %4901 = vrot.lane.b32.xlu0 %v4893, 127
    %v4902 = vpop.permute.xlu0 %4901
    %4903 = vrot.lane.b32.xlu0 %v4895, 127
    %v4904 = vpop.permute.xlu0 %4903
    %4905 = vrot.lane.b32.xlu0 %v4898, 127
    %v4906 = vpop.permute.xlu0 %4905
    %4907 = vrot.lane.b32.xlu0 %v4900, 127
    %v4908 = vpop.permute.xlu0 %4907
    %v4913 = vadd.f32 %v4777, %v4902
    %v4914 = vadd.f32 %v4778, %v4904
    %v4915 = vadd.f32 %v4779, %v4906
    %v4916 = vadd.f32 %v4780, %v4908
    %s4917 = sld [smem:[#allocation9 + $0x46]]
    %v4918 = vstv %s4917
    %v4919 = vmul.f32 %v4918, %v605
    %v4920 = vmul.f32 %v4918, %v606
    %v4921 = vmul.f32 %v4918, %v607
    %v4922 = vmul.f32 %v4918, %v608
    %v4923 = vmul.f32 %v4918, %v609
    %v4924 = vmul.f32 %v4918, %v610
    %v4931 = vrot.slane %v4919, 2
    %v4932 = vrot.slane %v4920, 2
    %v4933 = vsel %vm1330, %v4931, %v4932
    %v4934 = vrot.slane %v4921, 2
    %v4935 = vsel %vm1330, %v4932, %v4934
    %v4936 = vrot.slane %v4922, 2
    %v4937 = vrot.slane %v4923, 2
    %v4938 = vsel %vm1330, %v4936, %v4937
    %v4939 = vrot.slane %v4924, 2
    %v4940 = vsel %vm1330, %v4937, %v4939
    %4941 = vrot.lane.b32.xlu0 %v4933, 127
    %v4942 = vpop.permute.xlu0 %4941
    %4943 = vrot.lane.b32.xlu0 %v4935, 127
    %v4944 = vpop.permute.xlu0 %4943
    %4945 = vrot.lane.b32.xlu0 %v4938, 127
    %v4946 = vpop.permute.xlu0 %4945
    %4947 = vrot.lane.b32.xlu0 %v4940, 127
    %v4948 = vpop.permute.xlu0 %4947
    %v4953 = vadd.f32 %v4809, %v4942
    %v4954 = vadd.f32 %v4810, %v4944
    %v4955 = vadd.f32 %v4811, %v4946
    %v4956 = vadd.f32 %v4812, %v4948
    %s4957 = sld [smem:[#allocation9 + $0x6a]]
    %v4958 = vstv %s4957
    %v4959 = vmul.f32 %v4958, %v605
    %v4960 = vmul.f32 %v4958, %v606
    %v4961 = vmul.f32 %v4958, %v607
    %v4962 = vmul.f32 %v4958, %v608
    %v4963 = vmul.f32 %v4958, %v609
    %v4964 = vmul.f32 %v4958, %v610
    %v4971 = vrot.slane %v4959, 2
    %v4972 = vrot.slane %v4960, 2
    %v4973 = vsel %vm1330, %v4971, %v4972
    %v4974 = vrot.slane %v4961, 2
    %v4975 = vsel %vm1330, %v4972, %v4974
    %v4976 = vrot.slane %v4962, 2
    %v4977 = vrot.slane %v4963, 2
    %v4978 = vsel %vm1330, %v4976, %v4977
    %v4979 = vrot.slane %v4964, 2
    %v4980 = vsel %vm1330, %v4977, %v4979
    %4981 = vrot.lane.b32.xlu0 %v4973, 127
    %v4982 = vpop.permute.xlu0 %4981
    %4983 = vrot.lane.b32.xlu0 %v4975, 127
    %v4984 = vpop.permute.xlu0 %4983
    %4985 = vrot.lane.b32.xlu0 %v4978, 127
    %v4986 = vpop.permute.xlu0 %4985
    %4987 = vrot.lane.b32.xlu0 %v4980, 127
    %v4988 = vpop.permute.xlu0 %4987
    %v4993 = vadd.f32 %v4841, %v4982
    %v4994 = vadd.f32 %v4842, %v4984
    %v4995 = vadd.f32 %v4843, %v4986
    %v4996 = vadd.f32 %v4844, %v4988
    %s4997 = sld [smem:[#allocation9 + $0x8e]]
    %v4998 = vstv %s4997
    %v4999 = vmul.f32 %v4998, %v605
    %v5000 = vmul.f32 %v4998, %v606
    %v5001 = vmul.f32 %v4998, %v607
    %v5002 = vmul.f32 %v4998, %v608
    %v5003 = vmul.f32 %v4998, %v609
    %v5004 = vmul.f32 %v4998, %v610
    %v5011 = vrot.slane %v4999, 2
    %v5012 = vrot.slane %v5000, 2
    %v5013 = vsel %vm1330, %v5011, %v5012
    %v5014 = vrot.slane %v5001, 2
    %v5015 = vsel %vm1330, %v5012, %v5014
    %v5016 = vrot.slane %v5002, 2
    %v5017 = vrot.slane %v5003, 2
    %v5018 = vsel %vm1330, %v5016, %v5017
    %v5019 = vrot.slane %v5004, 2
    %v5020 = vsel %vm1330, %v5017, %v5019
    %5021 = vrot.lane.b32.xlu0 %v5013, 127
    %v5022 = vpop.permute.xlu0 %5021
    %5023 = vrot.lane.b32.xlu0 %v5015, 127
    %v5024 = vpop.permute.xlu0 %5023
    %5025 = vrot.lane.b32.xlu0 %v5018, 127
    %v5026 = vpop.permute.xlu0 %5025
    %5027 = vrot.lane.b32.xlu0 %v5020, 127
    %v5028 = vpop.permute.xlu0 %5027
    %v5033 = vadd.f32 %v4873, %v5022
    %v5034 = vadd.f32 %v4874, %v5024
    %v5035 = vadd.f32 %v4875, %v5026
    %v5036 = vadd.f32 %v4876, %v5028
    %s5037 = sld [smem:[#allocation9 + $0x23]]
    %v5038 = vstv %s5037
    %v5039 = vmul.f32 %v5038, %v605
    %v5040 = vmul.f32 %v5038, %v606
    %v5041 = vmul.f32 %v5038, %v607
    %v5042 = vmul.f32 %v5038, %v608
    %v5043 = vmul.f32 %v5038, %v609
    %v5044 = vmul.f32 %v5038, %v610
    %v5051 = vrot.slane %v5039, 2
    %v5052 = vrot.slane %v5040, 2
    %v5053 = vsel %vm1330, %v5051, %v5052
    %v5054 = vrot.slane %v5041, 2
    %v5055 = vsel %vm1330, %v5052, %v5054
    %v5056 = vrot.slane %v5042, 2
    %v5057 = vrot.slane %v5043, 2
    %v5058 = vsel %vm1330, %v5056, %v5057
    %v5059 = vrot.slane %v5044, 2
    %v5060 = vsel %vm1330, %v5057, %v5059
    %5061 = vrot.lane.b32.xlu0 %v5053, 126
    %v5062 = vpop.permute.xlu0 %5061
    %5063 = vrot.lane.b32.xlu0 %v5055, 126
    %v5064 = vpop.permute.xlu0 %5063
    %5065 = vrot.lane.b32.xlu0 %v5058, 126
    %v5066 = vpop.permute.xlu0 %5065
    %5067 = vrot.lane.b32.xlu0 %v5060, 126
    %v5068 = vpop.permute.xlu0 %5067
    %v5073 = vadd.f32 %v4913, %v5062
    %v5074 = vadd.f32 %v4914, %v5064
    %v5075 = vadd.f32 %v4915, %v5066
    %v5076 = vadd.f32 %v4916, %v5068
    %s5077 = sld [smem:[#allocation9 + $0x47]]
    %v5078 = vstv %s5077
    %v5079 = vmul.f32 %v5078, %v605
    %v5080 = vmul.f32 %v5078, %v606
    %v5081 = vmul.f32 %v5078, %v607
    %v5082 = vmul.f32 %v5078, %v608
    %v5083 = vmul.f32 %v5078, %v609
    %v5084 = vmul.f32 %v5078, %v610
    %v5091 = vrot.slane %v5079, 2
    %v5092 = vrot.slane %v5080, 2
    %v5093 = vsel %vm1330, %v5091, %v5092
    %v5094 = vrot.slane %v5081, 2
    %v5095 = vsel %vm1330, %v5092, %v5094
    %v5096 = vrot.slane %v5082, 2
    %v5097 = vrot.slane %v5083, 2
    %v5098 = vsel %vm1330, %v5096, %v5097
    %v5099 = vrot.slane %v5084, 2
    %v5100 = vsel %vm1330, %v5097, %v5099
    %5101 = vrot.lane.b32.xlu0 %v5093, 126
    %v5102 = vpop.permute.xlu0 %5101
    %5103 = vrot.lane.b32.xlu0 %v5095, 126
    %v5104 = vpop.permute.xlu0 %5103
    %5105 = vrot.lane.b32.xlu0 %v5098, 126
    %v5106 = vpop.permute.xlu0 %5105
    %5107 = vrot.lane.b32.xlu0 %v5100, 126
    %v5108 = vpop.permute.xlu0 %5107
    %v5113 = vadd.f32 %v4953, %v5102
    %v5114 = vadd.f32 %v4954, %v5104
    %v5115 = vadd.f32 %v4955, %v5106
    %v5116 = vadd.f32 %v4956, %v5108
    %s5117 = sld [smem:[#allocation9 + $0x6b]]
    %v5118 = vstv %s5117
    %v5119 = vmul.f32 %v5118, %v605
    %v5120 = vmul.f32 %v5118, %v606
    %v5121 = vmul.f32 %v5118, %v607
    %v5122 = vmul.f32 %v5118, %v608
    %v5123 = vmul.f32 %v5118, %v609
    %v5124 = vmul.f32 %v5118, %v610
    %v5131 = vrot.slane %v5119, 2
    %v5132 = vrot.slane %v5120, 2
    %v5133 = vsel %vm1330, %v5131, %v5132
    %v5134 = vrot.slane %v5121, 2
    %v5135 = vsel %vm1330, %v5132, %v5134
    %v5136 = vrot.slane %v5122, 2
    %v5137 = vrot.slane %v5123, 2
    %v5138 = vsel %vm1330, %v5136, %v5137
    %v5139 = vrot.slane %v5124, 2
    %v5140 = vsel %vm1330, %v5137, %v5139
    %5141 = vrot.lane.b32.xlu0 %v5133, 126
    %v5142 = vpop.permute.xlu0 %5141
    %5143 = vrot.lane.b32.xlu0 %v5135, 126
    %v5144 = vpop.permute.xlu0 %5143
    %5145 = vrot.lane.b32.xlu0 %v5138, 126
    %v5146 = vpop.permute.xlu0 %5145
    %5147 = vrot.lane.b32.xlu0 %v5140, 126
    %v5148 = vpop.permute.xlu0 %5147
    %v5153 = vadd.f32 %v4993, %v5142
    %v5154 = vadd.f32 %v4994, %v5144
    %v5155 = vadd.f32 %v4995, %v5146
    %v5156 = vadd.f32 %v4996, %v5148
    %s5157 = sld [smem:[#allocation9 + $0x8f]]
    %v5158 = vstv %s5157
    %v5159 = vmul.f32 %v5158, %v605
    %v5160 = vmul.f32 %v5158, %v606
    %v5161 = vmul.f32 %v5158, %v607
    %v5162 = vmul.f32 %v5158, %v608
    %v5163 = vmul.f32 %v5158, %v609
    %v5164 = vmul.f32 %v5158, %v610
    %v5171 = vrot.slane %v5159, 2
    %v5172 = vrot.slane %v5160, 2
    %v5173 = vsel %vm1330, %v5171, %v5172
    %v5174 = vrot.slane %v5161, 2
    %v5175 = vsel %vm1330, %v5172, %v5174
    %v5176 = vrot.slane %v5162, 2
    %v5177 = vrot.slane %v5163, 2
    %v5178 = vsel %vm1330, %v5176, %v5177
    %v5179 = vrot.slane %v5164, 2
    %v5180 = vsel %vm1330, %v5177, %v5179
    %5181 = vrot.lane.b32.xlu0 %v5173, 126
    %v5182 = vpop.permute.xlu0 %5181
    %5183 = vrot.lane.b32.xlu0 %v5175, 126
    %v5184 = vpop.permute.xlu0 %5183
    %5185 = vrot.lane.b32.xlu0 %v5178, 126
    %v5186 = vpop.permute.xlu0 %5185
    %5187 = vrot.lane.b32.xlu0 %v5180, 126
    %v5188 = vpop.permute.xlu0 %5187
    %v5193 = vadd.f32 %v5033, %v5182
    %v5194 = vadd.f32 %v5034, %v5184
    %v5195 = vadd.f32 %v5035, %v5186
    %v5196 = vadd.f32 %v5036, %v5188
    %s5197 = sld [smem:[#allocation12]]
    %v5198 = vstv %s5197
    %v5199 = vmul.f32 %v5073, %v5198
    %v5200 = vmul.f32 %v5074, %v5198
    %v5201 = vmul.f32 %v5075, %v5198
    %v5202 = vmul.f32 %v5076, %v5198
    %s5203 = sld [smem:[#allocation13]]
    %v5204 = vstv %s5203
    %v5205 = vadd.f32 %v5199, %v5204
    %v5206 = vadd.f32 %v5200, %v5204
    %v5207 = vadd.f32 %v5201, %v5204
    %v5208 = vadd.f32 %v5202, %v5204
    %v5209 = vmax.f32 %v5205, 0.0
    %v5210 = vmax.f32 %v5206, 0.0
    %v5211 = vmax.f32 %v5207, 0.0
    %v5212 = vmax.f32 %v5208, 0.0
    %v5215 = vrot.slane %v5209, 1
    %v5216 = vrot.slane %v5211, 1
    %v5221 = vrot.slane %v5209, 7
    %v5222 = vrot.slane %v5210, 7
    %v5223 = vsel %vm169, %v5221, %v5222
    %v5224 = vrot.slane %v5211, 7
    %v5225 = vrot.slane %v5212, 7
    %v5226 = vsel %vm169, %v5224, %v5225
    %v5231 = vrot.slane %v5210, 5
    %v5232 = vrot.slane %v5212, 5
    %v5235 = vsel %vm169, %v5215, %v5221
    %v5236 = vsel %vm169, %v5216, %v5224
    %v5237 = vsel %vm169, %v5222, %v5231
    %v5238 = vsel %vm169, %v5225, %v5232
    %5243 = vrot.lane.b32.xlu0 %v5235, 127
    %v5244 = vpop.permute.xlu0 %5243
    %5245 = vrot.lane.b32.xlu0 %v5223, 127
    %v5246 = vpop.permute.xlu0 %5245
    %5247 = vrot.lane.b32.xlu0 %v5237, 127
    %v5248 = vpop.permute.xlu0 %5247
    %5249 = vrot.lane.b32.xlu0 %v5236, 127
    %v5250 = vpop.permute.xlu0 %5249
    %5251 = vrot.lane.b32.xlu0 %v5226, 127
    %v5252 = vpop.permute.xlu0 %5251
    %5253 = vrot.lane.b32.xlu0 %v5238, 127
    %v5254 = vpop.permute.xlu0 %5253
    %5261 = vrot.lane.b32.xlu0 %v5235, 1
    %v5262 = vpop.permute.xlu0 %5261
    %5263 = vrot.lane.b32.xlu0 %v5223, 1
    %v5264 = vpop.permute.xlu0 %5263
    %5265 = vrot.lane.b32.xlu0 %v5237, 1
    %v5266 = vpop.permute.xlu0 %5265
    %5267 = vrot.lane.b32.xlu0 %v5236, 1
    %v5268 = vpop.permute.xlu0 %5267
    %5269 = vrot.lane.b32.xlu0 %v5226, 1
    %v5270 = vpop.permute.xlu0 %5269
    %5271 = vrot.lane.b32.xlu0 %v5238, 1
    %v5272 = vpop.permute.xlu0 %5271
    %5279 = vrot.lane.b32.xlu0 %v5235, 3
    %v5280 = vpop.permute.xlu0 %5279
    %5281 = vrot.lane.b32.xlu0 %v5223, 3
    %v5282 = vpop.permute.xlu0 %5281
    %5283 = vrot.lane.b32.xlu0 %v5237, 3
    %v5284 = vpop.permute.xlu0 %5283
    %5285 = vrot.lane.b32.xlu0 %v5236, 3
    %v5286 = vpop.permute.xlu0 %5285
    %5287 = vrot.lane.b32.xlu0 %v5226, 3
    %v5288 = vpop.permute.xlu0 %5287
    %5289 = vrot.lane.b32.xlu0 %v5238, 3
    %v5290 = vpop.permute.xlu0 %5289
    %v5297 = vsel %vm246, %v5244, %v5262
    %v5298 = vsel %vm246, %v5246, %v5264
    %v5299 = vsel %vm246, %v5248, %v5266
    %v5300 = vsel %vm246, %v5250, %v5268
    %v5301 = vsel %vm246, %v5252, %v5270
    %v5302 = vsel %vm246, %v5254, %v5272
    %v5303 = vsel %vm253, %v5297, %v5280
    %v5304 = vsel %vm253, %v5298, %v5282
    %v5305 = vsel %vm253, %v5299, %v5284
    %v5306 = vsel %vm253, %v5300, %v5286
    %v5307 = vsel %vm253, %v5301, %v5288
    %v5308 = vsel %vm253, %v5302, %v5290
    %s5309 = sld [smem:[#allocation12 + $0x1]]
    %v5310 = vstv %s5309
    %v5311 = vmul.f32 %v5113, %v5310
    %v5312 = vmul.f32 %v5114, %v5310
    %v5313 = vmul.f32 %v5115, %v5310
    %v5314 = vmul.f32 %v5116, %v5310
    %s5315 = sld [smem:[#allocation13 + $0x1]]
    %v5316 = vstv %s5315
    %v5317 = vadd.f32 %v5311, %v5316
    %v5318 = vadd.f32 %v5312, %v5316
    %v5319 = vadd.f32 %v5313, %v5316
    %v5320 = vadd.f32 %v5314, %v5316
    %v5321 = vmax.f32 %v5317, 0.0
    %v5322 = vmax.f32 %v5318, 0.0
    %v5323 = vmax.f32 %v5319, 0.0
    %v5324 = vmax.f32 %v5320, 0.0
    %v5327 = vrot.slane %v5321, 1
    %v5328 = vrot.slane %v5323, 1
    %v5333 = vrot.slane %v5321, 7
    %v5334 = vrot.slane %v5322, 7
    %v5335 = vsel %vm169, %v5333, %v5334
    %v5336 = vrot.slane %v5323, 7
    %v5337 = vrot.slane %v5324, 7
    %v5338 = vsel %vm169, %v5336, %v5337
    %v5343 = vrot.slane %v5322, 5
    %v5344 = vrot.slane %v5324, 5
    %v5347 = vsel %vm169, %v5327, %v5333
    %v5348 = vsel %vm169, %v5328, %v5336
    %v5349 = vsel %vm169, %v5334, %v5343
    %v5350 = vsel %vm169, %v5337, %v5344
    %5355 = vrot.lane.b32.xlu0 %v5347, 127
    %v5356 = vpop.permute.xlu0 %5355
    %5357 = vrot.lane.b32.xlu0 %v5335, 127
    %v5358 = vpop.permute.xlu0 %5357
    %5359 = vrot.lane.b32.xlu0 %v5349, 127
    %v5360 = vpop.permute.xlu0 %5359
    %5361 = vrot.lane.b32.xlu0 %v5348, 127
    %v5362 = vpop.permute.xlu0 %5361
    %5363 = vrot.lane.b32.xlu0 %v5338, 127
    %v5364 = vpop.permute.xlu0 %5363
    %5365 = vrot.lane.b32.xlu0 %v5350, 127
    %v5366 = vpop.permute.xlu0 %5365
    %5373 = vrot.lane.b32.xlu0 %v5347, 1
    %v5374 = vpop.permute.xlu0 %5373
    %5375 = vrot.lane.b32.xlu0 %v5335, 1
    %v5376 = vpop.permute.xlu0 %5375
    %5377 = vrot.lane.b32.xlu0 %v5349, 1
    %v5378 = vpop.permute.xlu0 %5377
    %5379 = vrot.lane.b32.xlu0 %v5348, 1
    %v5380 = vpop.permute.xlu0 %5379
    %5381 = vrot.lane.b32.xlu0 %v5338, 1
    %v5382 = vpop.permute.xlu0 %5381
    %5383 = vrot.lane.b32.xlu0 %v5350, 1
    %v5384 = vpop.permute.xlu0 %5383
    %5391 = vrot.lane.b32.xlu0 %v5347, 3
    %v5392 = vpop.permute.xlu0 %5391
    %5393 = vrot.lane.b32.xlu0 %v5335, 3
    %v5394 = vpop.permute.xlu0 %5393
    %5395 = vrot.lane.b32.xlu0 %v5349, 3
    %v5396 = vpop.permute.xlu0 %5395
    %5397 = vrot.lane.b32.xlu0 %v5348, 3
    %v5398 = vpop.permute.xlu0 %5397
    %5399 = vrot.lane.b32.xlu0 %v5338, 3
    %v5400 = vpop.permute.xlu0 %5399
    %5401 = vrot.lane.b32.xlu0 %v5350, 3
    %v5402 = vpop.permute.xlu0 %5401
    %v5409 = vsel %vm246, %v5356, %v5374
    %v5410 = vsel %vm246, %v5358, %v5376
    %v5411 = vsel %vm246, %v5360, %v5378
    %v5412 = vsel %vm246, %v5362, %v5380
    %v5413 = vsel %vm246, %v5364, %v5382
    %v5414 = vsel %vm246, %v5366, %v5384
    %v5415 = vsel %vm253, %v5409, %v5392
    %v5416 = vsel %vm253, %v5410, %v5394
    %v5417 = vsel %vm253, %v5411, %v5396
    %v5418 = vsel %vm253, %v5412, %v5398
    %v5419 = vsel %vm253, %v5413, %v5400
    %v5420 = vsel %vm253, %v5414, %v5402
    %s5421 = sld [smem:[#allocation12 + $0x2]]
    %v5422 = vstv %s5421
    %v5423 = vmul.f32 %v5153, %v5422
    %v5424 = vmul.f32 %v5154, %v5422
    %v5425 = vmul.f32 %v5155, %v5422
    %v5426 = vmul.f32 %v5156, %v5422
    %s5427 = sld [smem:[#allocation13 + $0x2]]
    %v5428 = vstv %s5427
    %v5429 = vadd.f32 %v5423, %v5428
    %v5430 = vadd.f32 %v5424, %v5428
    %v5431 = vadd.f32 %v5425, %v5428
    %v5432 = vadd.f32 %v5426, %v5428
    %v5433 = vmax.f32 %v5429, 0.0
    %v5434 = vmax.f32 %v5430, 0.0
    %v5435 = vmax.f32 %v5431, 0.0
    %v5436 = vmax.f32 %v5432, 0.0
    %v5439 = vrot.slane %v5433, 1
    %v5440 = vrot.slane %v5435, 1
    %v5445 = vrot.slane %v5433, 7
    %v5446 = vrot.slane %v5434, 7
    %v5447 = vsel %vm169, %v5445, %v5446
    %v5448 = vrot.slane %v5435, 7
    %v5449 = vrot.slane %v5436, 7
    %v5450 = vsel %vm169, %v5448, %v5449
    %v5455 = vrot.slane %v5434, 5
    %v5456 = vrot.slane %v5436, 5
    %v5459 = vsel %vm169, %v5439, %v5445
    %v5460 = vsel %vm169, %v5440, %v5448
    %v5461 = vsel %vm169, %v5446, %v5455
    %v5462 = vsel %vm169, %v5449, %v5456
    %5467 = vrot.lane.b32.xlu0 %v5459, 127
    %v5468 = vpop.permute.xlu0 %5467
    %5469 = vrot.lane.b32.xlu0 %v5447, 127
    %v5470 = vpop.permute.xlu0 %5469
    %5471 = vrot.lane.b32.xlu0 %v5461, 127
    %v5472 = vpop.permute.xlu0 %5471
    %5473 = vrot.lane.b32.xlu0 %v5460, 127
    %v5474 = vpop.permute.xlu0 %5473
    %5475 = vrot.lane.b32.xlu0 %v5450, 127
    %v5476 = vpop.permute.xlu0 %5475
    %5477 = vrot.lane.b32.xlu0 %v5462, 127
    %v5478 = vpop.permute.xlu0 %5477
    %5485 = vrot.lane.b32.xlu0 %v5459, 1
    %v5486 = vpop.permute.xlu0 %5485
    %5487 = vrot.lane.b32.xlu0 %v5447, 1
    %v5488 = vpop.permute.xlu0 %5487
    %5489 = vrot.lane.b32.xlu0 %v5461, 1
    %v5490 = vpop.permute.xlu0 %5489
    %5491 = vrot.lane.b32.xlu0 %v5460, 1
    %v5492 = vpop.permute.xlu0 %5491
    %5493 = vrot.lane.b32.xlu0 %v5450, 1
    %v5494 = vpop.permute.xlu0 %5493
    %5495 = vrot.lane.b32.xlu0 %v5462, 1
    %v5496 = vpop.permute.xlu0 %5495
    %5503 = vrot.lane.b32.xlu0 %v5459, 3
    %v5504 = vpop.permute.xlu0 %5503
    %5505 = vrot.lane.b32.xlu0 %v5447, 3
    %v5506 = vpop.permute.xlu0 %5505
    %5507 = vrot.lane.b32.xlu0 %v5461, 3
    %v5508 = vpop.permute.xlu0 %5507
    %5509 = vrot.lane.b32.xlu0 %v5460, 3
    %v5510 = vpop.permute.xlu0 %5509
    %5511 = vrot.lane.b32.xlu0 %v5450, 3
    %v5512 = vpop.permute.xlu0 %5511
    %5513 = vrot.lane.b32.xlu0 %v5462, 3
    %v5514 = vpop.permute.xlu0 %5513
    %v5521 = vsel %vm246, %v5468, %v5486
    %v5522 = vsel %vm246, %v5470, %v5488
    %v5523 = vsel %vm246, %v5472, %v5490
    %v5524 = vsel %vm246, %v5474, %v5492
    %v5525 = vsel %vm246, %v5476, %v5494
    %v5526 = vsel %vm246, %v5478, %v5496
    %v5527 = vsel %vm253, %v5521, %v5504
    %v5528 = vsel %vm253, %v5522, %v5506
    %v5529 = vsel %vm253, %v5523, %v5508
    %v5530 = vsel %vm253, %v5524, %v5510
    %v5531 = vsel %vm253, %v5525, %v5512
    %v5532 = vsel %vm253, %v5526, %v5514
    %s5533 = sld [smem:[#allocation12 + $0x3]]
    %v5534 = vstv %s5533
    %v5535 = vmul.f32 %v5193, %v5534
    %v5536 = vmul.f32 %v5194, %v5534
    %v5537 = vmul.f32 %v5195, %v5534
    %v5538 = vmul.f32 %v5196, %v5534
    %s5539 = sld [smem:[#allocation13 + $0x3]]
    %v5540 = vstv %s5539
    %v5541 = vadd.f32 %v5535, %v5540
    %v5542 = vadd.f32 %v5536, %v5540
    %v5543 = vadd.f32 %v5537, %v5540
    %v5544 = vadd.f32 %v5538, %v5540
    %v5545 = vmax.f32 %v5541, 0.0
    %v5546 = vmax.f32 %v5542, 0.0
    %v5547 = vmax.f32 %v5543, 0.0
    %v5548 = vmax.f32 %v5544, 0.0
    %v5551 = vrot.slane %v5545, 1
    %v5552 = vrot.slane %v5547, 1
    %v5557 = vrot.slane %v5545, 7
    %v5558 = vrot.slane %v5546, 7
    %v5559 = vsel %vm169, %v5557, %v5558
    %v5560 = vrot.slane %v5547, 7
    %v5561 = vrot.slane %v5548, 7
    %v5562 = vsel %vm169, %v5560, %v5561
    %v5567 = vrot.slane %v5546, 5
    %v5568 = vrot.slane %v5548, 5
    %v5571 = vsel %vm169, %v5551, %v5557
    %v5572 = vsel %vm169, %v5552, %v5560
    %v5573 = vsel %vm169, %v5558, %v5567
    %v5574 = vsel %vm169, %v5561, %v5568
    %5579 = vrot.lane.b32.xlu0 %v5571, 127
    %v5580 = vpop.permute.xlu0 %5579
    %5581 = vrot.lane.b32.xlu0 %v5559, 127
    %v5582 = vpop.permute.xlu0 %5581
    %5583 = vrot.lane.b32.xlu0 %v5573, 127
    %v5584 = vpop.permute.xlu0 %5583
    %5585 = vrot.lane.b32.xlu0 %v5572, 127
    %v5586 = vpop.permute.xlu0 %5585
    %5587 = vrot.lane.b32.xlu0 %v5562, 127
    %v5588 = vpop.permute.xlu0 %5587
    %5589 = vrot.lane.b32.xlu0 %v5574, 127
    %v5590 = vpop.permute.xlu0 %5589
    %5597 = vrot.lane.b32.xlu0 %v5571, 1
    %v5598 = vpop.permute.xlu0 %5597
    %5599 = vrot.lane.b32.xlu0 %v5559, 1
    %v5600 = vpop.permute.xlu0 %5599
    %5601 = vrot.lane.b32.xlu0 %v5573, 1
    %v5602 = vpop.permute.xlu0 %5601
    %5603 = vrot.lane.b32.xlu0 %v5572, 1
    %v5604 = vpop.permute.xlu0 %5603
    %5605 = vrot.lane.b32.xlu0 %v5562, 1
    %v5606 = vpop.permute.xlu0 %5605
    %5607 = vrot.lane.b32.xlu0 %v5574, 1
    %v5608 = vpop.permute.xlu0 %5607
    %5615 = vrot.lane.b32.xlu0 %v5571, 3
    %v5616 = vpop.permute.xlu0 %5615
    %5617 = vrot.lane.b32.xlu0 %v5559, 3
    %v5618 = vpop.permute.xlu0 %5617
    %5619 = vrot.lane.b32.xlu0 %v5573, 3
    %v5620 = vpop.permute.xlu0 %5619
    %5621 = vrot.lane.b32.xlu0 %v5572, 3
    %v5622 = vpop.permute.xlu0 %5621
    %5623 = vrot.lane.b32.xlu0 %v5562, 3
    %v5624 = vpop.permute.xlu0 %5623
    %5625 = vrot.lane.b32.xlu0 %v5574, 3
    %v5626 = vpop.permute.xlu0 %5625
    %v5633 = vsel %vm246, %v5580, %v5598
    %v5634 = vsel %vm246, %v5582, %v5600
    %v5635 = vsel %vm246, %v5584, %v5602
    %v5636 = vsel %vm246, %v5586, %v5604
    %v5637 = vsel %vm246, %v5588, %v5606
    %v5638 = vsel %vm246, %v5590, %v5608
    %v5639 = vsel %vm253, %v5633, %v5616
    %v5640 = vsel %vm253, %v5634, %v5618
    %v5641 = vsel %vm253, %v5635, %v5620
    %v5642 = vsel %vm253, %v5636, %v5622
    %v5643 = vsel %vm253, %v5637, %v5624
    %v5644 = vsel %vm253, %v5638, %v5626
    %s5645 = sld [smem:[#allocation16]]
    %v5646 = vstv %s5645
    %s5647 = sld [smem:[#allocation16 + $0x1]]
    %v5648 = vstv %s5647
    %s5649 = sld [smem:[#allocation16 + $0x2]]
    %v5650 = vstv %s5649
    %s5651 = sld [smem:[#allocation16 + $0x3]]
    %v5652 = vstv %s5651
    %s5653 = sld [smem:[#allocation15]]
    %v5654 = vstv %s5653
    %v5655 = vmul.f32 %v5654, %v5303
    %v5656 = vmul.f32 %v5654, %v5304
    %v5657 = vmul.f32 %v5654, %v5306
    %v5658 = vmul.f32 %v5654, %v5307
    %v5659 = vadd.f32 %v5646, %v5655
    %v5660 = vadd.f32 %v5646, %v5656
    %v5661 = vadd.f32 %v5646, %v5657
    %v5662 = vadd.f32 %v5646, %v5658
    %s5663 = sld [smem:[#allocation15 + $0x24]]
    %v5664 = vstv %s5663
    %v5665 = vmul.f32 %v5664, %v5303
    %v5666 = vmul.f32 %v5664, %v5304
    %v5667 = vmul.f32 %v5664, %v5306
    %v5668 = vmul.f32 %v5664, %v5307
    %v5669 = vadd.f32 %v5648, %v5665
    %v5670 = vadd.f32 %v5648, %v5666
    %v5671 = vadd.f32 %v5648, %v5667
    %v5672 = vadd.f32 %v5648, %v5668
    %s5673 = sld [smem:[#allocation15 + $0x48]]
    %v5674 = vstv %s5673
    %v5675 = vmul.f32 %v5674, %v5303
    %v5676 = vmul.f32 %v5674, %v5304
    %v5677 = vmul.f32 %v5674, %v5306
    %v5678 = vmul.f32 %v5674, %v5307
    %v5679 = vadd.f32 %v5650, %v5675
    %v5680 = vadd.f32 %v5650, %v5676
    %v5681 = vadd.f32 %v5650, %v5677
    %v5682 = vadd.f32 %v5650, %v5678
    %s5683 = sld [smem:[#allocation15 + $0x6c]]
    %v5684 = vstv %s5683
    %v5685 = vmul.f32 %v5684, %v5303
    %v5686 = vmul.f32 %v5684, %v5304
    %v5687 = vmul.f32 %v5684, %v5306
    %v5688 = vmul.f32 %v5684, %v5307
    %v5689 = vadd.f32 %v5652, %v5685
    %v5690 = vadd.f32 %v5652, %v5686
    %v5691 = vadd.f32 %v5652, %v5687
    %v5692 = vadd.f32 %v5652, %v5688
    %s5693 = sld [smem:[#allocation15 + $0x1]]
    %v5694 = vstv %s5693
    %v5695 = vmul.f32 %v5694, %v5303
    %v5696 = vmul.f32 %v5694, %v5304
    %v5697 = vmul.f32 %v5694, %v5306
    %v5698 = vmul.f32 %v5694, %v5307
    %5703 = vrot.lane.b32.xlu0 %v5695, 127
    %v5704 = vpop.permute.xlu0 %5703
    %5705 = vrot.lane.b32.xlu0 %v5696, 127
    %v5706 = vpop.permute.xlu0 %5705
    %5707 = vrot.lane.b32.xlu0 %v5697, 127
    %v5708 = vpop.permute.xlu0 %5707
    %5709 = vrot.lane.b32.xlu0 %v5698, 127
    %v5710 = vpop.permute.xlu0 %5709
    %v5715 = vadd.f32 %v5659, %v5704
    %v5716 = vadd.f32 %v5660, %v5706
    %v5717 = vadd.f32 %v5661, %v5708
    %v5718 = vadd.f32 %v5662, %v5710
    %s5719 = sld [smem:[#allocation15 + $0x25]]
    %v5720 = vstv %s5719
    %v5721 = vmul.f32 %v5720, %v5303
    %v5722 = vmul.f32 %v5720, %v5304
    %v5723 = vmul.f32 %v5720, %v5306
    %v5724 = vmul.f32 %v5720, %v5307
    %5729 = vrot.lane.b32.xlu0 %v5721, 127
    %v5730 = vpop.permute.xlu0 %5729
    %5731 = vrot.lane.b32.xlu0 %v5722, 127
    %v5732 = vpop.permute.xlu0 %5731
    %5733 = vrot.lane.b32.xlu0 %v5723, 127
    %v5734 = vpop.permute.xlu0 %5733
    %5735 = vrot.lane.b32.xlu0 %v5724, 127
    %v5736 = vpop.permute.xlu0 %5735
    %v5741 = vadd.f32 %v5669, %v5730
    %v5742 = vadd.f32 %v5670, %v5732
    %v5743 = vadd.f32 %v5671, %v5734
    %v5744 = vadd.f32 %v5672, %v5736
    %s5745 = sld [smem:[#allocation15 + $0x49]]
    %v5746 = vstv %s5745
    %v5747 = vmul.f32 %v5746, %v5303
    %v5748 = vmul.f32 %v5746, %v5304
    %v5749 = vmul.f32 %v5746, %v5306
    %v5750 = vmul.f32 %v5746, %v5307
    %5755 = vrot.lane.b32.xlu0 %v5747, 127
    %v5756 = vpop.permute.xlu0 %5755
    %5757 = vrot.lane.b32.xlu0 %v5748, 127
    %v5758 = vpop.permute.xlu0 %5757
    %5759 = vrot.lane.b32.xlu0 %v5749, 127
    %v5760 = vpop.permute.xlu0 %5759
    %5761 = vrot.lane.b32.xlu0 %v5750, 127
    %v5762 = vpop.permute.xlu0 %5761
    %v5767 = vadd.f32 %v5679, %v5756
    %v5768 = vadd.f32 %v5680, %v5758
    %v5769 = vadd.f32 %v5681, %v5760
    %v5770 = vadd.f32 %v5682, %v5762
    %s5771 = sld [smem:[#allocation15 + $0x6d]]
    %v5772 = vstv %s5771
    %v5773 = vmul.f32 %v5772, %v5303
    %v5774 = vmul.f32 %v5772, %v5304
    %v5775 = vmul.f32 %v5772, %v5306
    %v5776 = vmul.f32 %v5772, %v5307
    %5781 = vrot.lane.b32.xlu0 %v5773, 127
    %v5782 = vpop.permute.xlu0 %5781
    %5783 = vrot.lane.b32.xlu0 %v5774, 127
    %v5784 = vpop.permute.xlu0 %5783
    %5785 = vrot.lane.b32.xlu0 %v5775, 127
    %v5786 = vpop.permute.xlu0 %5785
    %5787 = vrot.lane.b32.xlu0 %v5776, 127
    %v5788 = vpop.permute.xlu0 %5787
    %v5793 = vadd.f32 %v5689, %v5782
    %v5794 = vadd.f32 %v5690, %v5784
    %v5795 = vadd.f32 %v5691, %v5786
    %v5796 = vadd.f32 %v5692, %v5788
    %s5797 = sld [smem:[#allocation15 + $0x2]]
    %v5798 = vstv %s5797
    %v5799 = vmul.f32 %v5798, %v5303
    %v5800 = vmul.f32 %v5798, %v5304
    %v5801 = vmul.f32 %v5798, %v5306
    %v5802 = vmul.f32 %v5798, %v5307
    %5807 = vrot.lane.b32.xlu0 %v5799, 126
    %v5808 = vpop.permute.xlu0 %5807
    %5809 = vrot.lane.b32.xlu0 %v5800, 126
    %v5810 = vpop.permute.xlu0 %5809
    %5811 = vrot.lane.b32.xlu0 %v5801, 126
    %v5812 = vpop.permute.xlu0 %5811
    %5813 = vrot.lane.b32.xlu0 %v5802, 126
    %v5814 = vpop.permute.xlu0 %5813
    %v5819 = vadd.f32 %v5715, %v5808
    %v5820 = vadd.f32 %v5716, %v5810
    %v5821 = vadd.f32 %v5717, %v5812
    %v5822 = vadd.f32 %v5718, %v5814
    %s5823 = sld [smem:[#allocation15 + $0x26]]
    %v5824 = vstv %s5823
    %v5825 = vmul.f32 %v5824, %v5303
    %v5826 = vmul.f32 %v5824, %v5304
    %v5827 = vmul.f32 %v5824, %v5306
    %v5828 = vmul.f32 %v5824, %v5307
    %5833 = vrot.lane.b32.xlu0 %v5825, 126
    %v5834 = vpop.permute.xlu0 %5833
    %5835 = vrot.lane.b32.xlu0 %v5826, 126
    %v5836 = vpop.permute.xlu0 %5835
    %5837 = vrot.lane.b32.xlu0 %v5827, 126
    %v5838 = vpop.permute.xlu0 %5837
    %5839 = vrot.lane.b32.xlu0 %v5828, 126
    %v5840 = vpop.permute.xlu0 %5839
    %v5845 = vadd.f32 %v5741, %v5834
    %v5846 = vadd.f32 %v5742, %v5836
    %v5847 = vadd.f32 %v5743, %v5838
    %v5848 = vadd.f32 %v5744, %v5840
    %s5849 = sld [smem:[#allocation15 + $0x4a]]
    %v5850 = vstv %s5849
    %v5851 = vmul.f32 %v5850, %v5303
    %v5852 = vmul.f32 %v5850, %v5304
    %v5853 = vmul.f32 %v5850, %v5306
    %v5854 = vmul.f32 %v5850, %v5307
    %5859 = vrot.lane.b32.xlu0 %v5851, 126
    %v5860 = vpop.permute.xlu0 %5859
    %5861 = vrot.lane.b32.xlu0 %v5852, 126
    %v5862 = vpop.permute.xlu0 %5861
    %5863 = vrot.lane.b32.xlu0 %v5853, 126
    %v5864 = vpop.permute.xlu0 %5863
    %5865 = vrot.lane.b32.xlu0 %v5854, 126
    %v5866 = vpop.permute.xlu0 %5865
    %v5871 = vadd.f32 %v5767, %v5860
    %v5872 = vadd.f32 %v5768, %v5862
    %v5873 = vadd.f32 %v5769, %v5864
    %v5874 = vadd.f32 %v5770, %v5866
    %s5875 = sld [smem:[#allocation15 + $0x6e]]
    %v5876 = vstv %s5875
    %v5877 = vmul.f32 %v5876, %v5303
    %v5878 = vmul.f32 %v5876, %v5304
    %v5879 = vmul.f32 %v5876, %v5306
    %v5880 = vmul.f32 %v5876, %v5307
    %5885 = vrot.lane.b32.xlu0 %v5877, 126
    %v5886 = vpop.permute.xlu0 %5885
    %5887 = vrot.lane.b32.xlu0 %v5878, 126
    %v5888 = vpop.permute.xlu0 %5887
    %5889 = vrot.lane.b32.xlu0 %v5879, 126
    %v5890 = vpop.permute.xlu0 %5889
    %5891 = vrot.lane.b32.xlu0 %v5880, 126
    %v5892 = vpop.permute.xlu0 %5891
    %v5897 = vadd.f32 %v5793, %v5886
    %v5898 = vadd.f32 %v5794, %v5888
    %v5899 = vadd.f32 %v5795, %v5890
    %v5900 = vadd.f32 %v5796, %v5892
    %s5901 = sld [smem:[#allocation15 + $0x3]]
    %v5902 = vstv %s5901
    %v5903 = vmul.f32 %v5902, %v5303
    %v5904 = vmul.f32 %v5902, %v5304
    %v5905 = vmul.f32 %v5902, %v5305
    %v5906 = vmul.f32 %v5902, %v5306
    %v5907 = vmul.f32 %v5902, %v5307
    %v5908 = vmul.f32 %v5902, %v5308
    %v5915 = vrot.slane %v5903, 1
    %v5916 = vrot.slane %v5904, 1
    %v5917 = vsel %vm881, %v5915, %v5916
    %v5918 = vrot.slane %v5905, 1
    %v5919 = vsel %vm881, %v5916, %v5918
    %v5920 = vrot.slane %v5906, 1
    %v5921 = vrot.slane %v5907, 1
    %v5922 = vsel %vm881, %v5920, %v5921
    %v5923 = vrot.slane %v5908, 1
    %v5924 = vsel %vm881, %v5921, %v5923
    %v5929 = vadd.f32 %v5819, %v5917
    %v5930 = vadd.f32 %v5820, %v5919
    %v5931 = vadd.f32 %v5821, %v5922
    %v5932 = vadd.f32 %v5822, %v5924
    %s5933 = sld [smem:[#allocation15 + $0x27]]
    %v5934 = vstv %s5933
    %v5935 = vmul.f32 %v5934, %v5303
    %v5936 = vmul.f32 %v5934, %v5304
    %v5937 = vmul.f32 %v5934, %v5305
    %v5938 = vmul.f32 %v5934, %v5306
    %v5939 = vmul.f32 %v5934, %v5307
    %v5940 = vmul.f32 %v5934, %v5308
    %v5947 = vrot.slane %v5935, 1
    %v5948 = vrot.slane %v5936, 1
    %v5949 = vsel %vm881, %v5947, %v5948
    %v5950 = vrot.slane %v5937, 1
    %v5951 = vsel %vm881, %v5948, %v5950
    %v5952 = vrot.slane %v5938, 1
    %v5953 = vrot.slane %v5939, 1
    %v5954 = vsel %vm881, %v5952, %v5953
    %v5955 = vrot.slane %v5940, 1
    %v5956 = vsel %vm881, %v5953, %v5955
    %v5961 = vadd.f32 %v5845, %v5949
    %v5962 = vadd.f32 %v5846, %v5951
    %v5963 = vadd.f32 %v5847, %v5954
    %v5964 = vadd.f32 %v5848, %v5956
    %s5965 = sld [smem:[#allocation15 + $0x4b]]
    %v5966 = vstv %s5965
    %v5967 = vmul.f32 %v5966, %v5303
    %v5968 = vmul.f32 %v5966, %v5304
    %v5969 = vmul.f32 %v5966, %v5305
    %v5970 = vmul.f32 %v5966, %v5306
    %v5971 = vmul.f32 %v5966, %v5307
    %v5972 = vmul.f32 %v5966, %v5308
    %v5979 = vrot.slane %v5967, 1
    %v5980 = vrot.slane %v5968, 1
    %v5981 = vsel %vm881, %v5979, %v5980
    %v5982 = vrot.slane %v5969, 1
    %v5983 = vsel %vm881, %v5980, %v5982
    %v5984 = vrot.slane %v5970, 1
    %v5985 = vrot.slane %v5971, 1
    %v5986 = vsel %vm881, %v5984, %v5985
    %v5987 = vrot.slane %v5972, 1
    %v5988 = vsel %vm881, %v5985, %v5987
    %v5993 = vadd.f32 %v5871, %v5981
    %v5994 = vadd.f32 %v5872, %v5983
    %v5995 = vadd.f32 %v5873, %v5986
    %v5996 = vadd.f32 %v5874, %v5988
    %s5997 = sld [smem:[#allocation15 + $0x6f]]
    %v5998 = vstv %s5997
    %v5999 = vmul.f32 %v5998, %v5303
    %v6000 = vmul.f32 %v5998, %v5304
    %v6001 = vmul.f32 %v5998, %v5305
    %v6002 = vmul.f32 %v5998, %v5306
    %v6003 = vmul.f32 %v5998, %v5307
    %v6004 = vmul.f32 %v5998, %v5308
    %v6011 = vrot.slane %v5999, 1
    %v6012 = vrot.slane %v6000, 1
    %v6013 = vsel %vm881, %v6011, %v6012
    %v6014 = vrot.slane %v6001, 1
    %v6015 = vsel %vm881, %v6012, %v6014
    %v6016 = vrot.slane %v6002, 1
    %v6017 = vrot.slane %v6003, 1
    %v6018 = vsel %vm881, %v6016, %v6017
    %v6019 = vrot.slane %v6004, 1
    %v6020 = vsel %vm881, %v6017, %v6019
    %v6025 = vadd.f32 %v5897, %v6013
    %v6026 = vadd.f32 %v5898, %v6015
    %v6027 = vadd.f32 %v5899, %v6018
    %v6028 = vadd.f32 %v5900, %v6020
    %s6029 = sld [smem:[#allocation15 + $0x4]]
    %v6030 = vstv %s6029
    %v6031 = vmul.f32 %v6030, %v5303
    %v6032 = vmul.f32 %v6030, %v5304
    %v6033 = vmul.f32 %v6030, %v5305
    %v6034 = vmul.f32 %v6030, %v5306
    %v6035 = vmul.f32 %v6030, %v5307
    %v6036 = vmul.f32 %v6030, %v5308
    %v6043 = vrot.slane %v6031, 1
    %v6044 = vrot.slane %v6032, 1
    %v6045 = vsel %vm881, %v6043, %v6044
    %v6046 = vrot.slane %v6033, 1
    %v6047 = vsel %vm881, %v6044, %v6046
    %v6048 = vrot.slane %v6034, 1
    %v6049 = vrot.slane %v6035, 1
    %v6050 = vsel %vm881, %v6048, %v6049
    %v6051 = vrot.slane %v6036, 1
    %v6052 = vsel %vm881, %v6049, %v6051
    %6053 = vrot.lane.b32.xlu0 %v6045, 127
    %v6054 = vpop.permute.xlu0 %6053
    %6055 = vrot.lane.b32.xlu0 %v6047, 127
    %v6056 = vpop.permute.xlu0 %6055
    %6057 = vrot.lane.b32.xlu0 %v6050, 127
    %v6058 = vpop.permute.xlu0 %6057
    %6059 = vrot.lane.b32.xlu0 %v6052, 127
    %v6060 = vpop.permute.xlu0 %6059
    %v6065 = vadd.f32 %v5929, %v6054
    %v6066 = vadd.f32 %v5930, %v6056
    %v6067 = vadd.f32 %v5931, %v6058
    %v6068 = vadd.f32 %v5932, %v6060
    %s6069 = sld [smem:[#allocation15 + $0x28]]
    %v6070 = vstv %s6069
    %v6071 = vmul.f32 %v6070, %v5303
    %v6072 = vmul.f32 %v6070, %v5304
    %v6073 = vmul.f32 %v6070, %v5305
    %v6074 = vmul.f32 %v6070, %v5306
    %v6075 = vmul.f32 %v6070, %v5307
    %v6076 = vmul.f32 %v6070, %v5308
    %v6083 = vrot.slane %v6071, 1
    %v6084 = vrot.slane %v6072, 1
    %v6085 = vsel %vm881, %v6083, %v6084
    %v6086 = vrot.slane %v6073, 1
    %v6087 = vsel %vm881, %v6084, %v6086
    %v6088 = vrot.slane %v6074, 1
    %v6089 = vrot.slane %v6075, 1
    %v6090 = vsel %vm881, %v6088, %v6089
    %v6091 = vrot.slane %v6076, 1
    %v6092 = vsel %vm881, %v6089, %v6091
    %6093 = vrot.lane.b32.xlu0 %v6085, 127
    %v6094 = vpop.permute.xlu0 %6093
    %6095 = vrot.lane.b32.xlu0 %v6087, 127
    %v6096 = vpop.permute.xlu0 %6095
    %6097 = vrot.lane.b32.xlu0 %v6090, 127
    %v6098 = vpop.permute.xlu0 %6097
    %6099 = vrot.lane.b32.xlu0 %v6092, 127
    %v6100 = vpop.permute.xlu0 %6099
    %v6105 = vadd.f32 %v5961, %v6094
    %v6106 = vadd.f32 %v5962, %v6096
    %v6107 = vadd.f32 %v5963, %v6098
    %v6108 = vadd.f32 %v5964, %v6100
    %s6109 = sld [smem:[#allocation15 + $0x4c]]
    %v6110 = vstv %s6109
    %v6111 = vmul.f32 %v6110, %v5303
    %v6112 = vmul.f32 %v6110, %v5304
    %v6113 = vmul.f32 %v6110, %v5305
    %v6114 = vmul.f32 %v6110, %v5306
    %v6115 = vmul.f32 %v6110, %v5307
    %v6116 = vmul.f32 %v6110, %v5308
    %v6123 = vrot.slane %v6111, 1
    %v6124 = vrot.slane %v6112, 1
    %v6125 = vsel %vm881, %v6123, %v6124
    %v6126 = vrot.slane %v6113, 1
    %v6127 = vsel %vm881, %v6124, %v6126
    %v6128 = vrot.slane %v6114, 1
    %v6129 = vrot.slane %v6115, 1
    %v6130 = vsel %vm881, %v6128, %v6129
    %v6131 = vrot.slane %v6116, 1
    %v6132 = vsel %vm881, %v6129, %v6131
    %6133 = vrot.lane.b32.xlu0 %v6125, 127
    %v6134 = vpop.permute.xlu0 %6133
    %6135 = vrot.lane.b32.xlu0 %v6127, 127
    %v6136 = vpop.permute.xlu0 %6135
    %6137 = vrot.lane.b32.xlu0 %v6130, 127
    %v6138 = vpop.permute.xlu0 %6137
    %6139 = vrot.lane.b32.xlu0 %v6132, 127
    %v6140 = vpop.permute.xlu0 %6139
    %v6145 = vadd.f32 %v5993, %v6134
    %v6146 = vadd.f32 %v5994, %v6136
    %v6147 = vadd.f32 %v5995, %v6138
    %v6148 = vadd.f32 %v5996, %v6140
    %s6149 = sld [smem:[#allocation15 + $0x70]]
    %v6150 = vstv %s6149
    %v6151 = vmul.f32 %v6150, %v5303
    %v6152 = vmul.f32 %v6150, %v5304
    %v6153 = vmul.f32 %v6150, %v5305
    %v6154 = vmul.f32 %v6150, %v5306
    %v6155 = vmul.f32 %v6150, %v5307
    %v6156 = vmul.f32 %v6150, %v5308
    %v6163 = vrot.slane %v6151, 1
    %v6164 = vrot.slane %v6152, 1
    %v6165 = vsel %vm881, %v6163, %v6164
    %v6166 = vrot.slane %v6153, 1
    %v6167 = vsel %vm881, %v6164, %v6166
    %v6168 = vrot.slane %v6154, 1
    %v6169 = vrot.slane %v6155, 1
    %v6170 = vsel %vm881, %v6168, %v6169
    %v6171 = vrot.slane %v6156, 1
    %v6172 = vsel %vm881, %v6169, %v6171
    %6173 = vrot.lane.b32.xlu0 %v6165, 127
    %v6174 = vpop.permute.xlu0 %6173
    %6175 = vrot.lane.b32.xlu0 %v6167, 127
    %v6176 = vpop.permute.xlu0 %6175
    %6177 = vrot.lane.b32.xlu0 %v6170, 127
    %v6178 = vpop.permute.xlu0 %6177
    %6179 = vrot.lane.b32.xlu0 %v6172, 127
    %v6180 = vpop.permute.xlu0 %6179
    %v6185 = vadd.f32 %v6025, %v6174
    %v6186 = vadd.f32 %v6026, %v6176
    %v6187 = vadd.f32 %v6027, %v6178
    %v6188 = vadd.f32 %v6028, %v6180
    %s6189 = sld [smem:[#allocation15 + $0x5]]
    %v6190 = vstv %s6189
    %v6191 = vmul.f32 %v6190, %v5303
    %v6192 = vmul.f32 %v6190, %v5304
    %v6193 = vmul.f32 %v6190, %v5305
    %v6194 = vmul.f32 %v6190, %v5306
    %v6195 = vmul.f32 %v6190, %v5307
    %v6196 = vmul.f32 %v6190, %v5308
    %v6203 = vrot.slane %v6191, 1
    %v6204 = vrot.slane %v6192, 1
    %v6205 = vsel %vm881, %v6203, %v6204
    %v6206 = vrot.slane %v6193, 1
    %v6207 = vsel %vm881, %v6204, %v6206
    %v6208 = vrot.slane %v6194, 1
    %v6209 = vrot.slane %v6195, 1
    %v6210 = vsel %vm881, %v6208, %v6209
    %v6211 = vrot.slane %v6196, 1
    %v6212 = vsel %vm881, %v6209, %v6211
    %6213 = vrot.lane.b32.xlu0 %v6205, 126
    %v6214 = vpop.permute.xlu0 %6213
    %6215 = vrot.lane.b32.xlu0 %v6207, 126
    %v6216 = vpop.permute.xlu0 %6215
    %6217 = vrot.lane.b32.xlu0 %v6210, 126
    %v6218 = vpop.permute.xlu0 %6217
    %6219 = vrot.lane.b32.xlu0 %v6212, 126
    %v6220 = vpop.permute.xlu0 %6219
    %v6225 = vadd.f32 %v6065, %v6214
    %v6226 = vadd.f32 %v6066, %v6216
    %v6227 = vadd.f32 %v6067, %v6218
    %v6228 = vadd.f32 %v6068, %v6220
    %s6229 = sld [smem:[#allocation15 + $0x29]]
    %v6230 = vstv %s6229
    %v6231 = vmul.f32 %v6230, %v5303
    %v6232 = vmul.f32 %v6230, %v5304
    %v6233 = vmul.f32 %v6230, %v5305
    %v6234 = vmul.f32 %v6230, %v5306
    %v6235 = vmul.f32 %v6230, %v5307
    %v6236 = vmul.f32 %v6230, %v5308
    %v6243 = vrot.slane %v6231, 1
    %v6244 = vrot.slane %v6232, 1
    %v6245 = vsel %vm881, %v6243, %v6244
    %v6246 = vrot.slane %v6233, 1
    %v6247 = vsel %vm881, %v6244, %v6246
    %v6248 = vrot.slane %v6234, 1
    %v6249 = vrot.slane %v6235, 1
    %v6250 = vsel %vm881, %v6248, %v6249
    %v6251 = vrot.slane %v6236, 1
    %v6252 = vsel %vm881, %v6249, %v6251
    %6253 = vrot.lane.b32.xlu0 %v6245, 126
    %v6254 = vpop.permute.xlu0 %6253
    %6255 = vrot.lane.b32.xlu0 %v6247, 126
    %v6256 = vpop.permute.xlu0 %6255
    %6257 = vrot.lane.b32.xlu0 %v6250, 126
    %v6258 = vpop.permute.xlu0 %6257
    %6259 = vrot.lane.b32.xlu0 %v6252, 126
    %v6260 = vpop.permute.xlu0 %6259
    %v6265 = vadd.f32 %v6105, %v6254
    %v6266 = vadd.f32 %v6106, %v6256
    %v6267 = vadd.f32 %v6107, %v6258
    %v6268 = vadd.f32 %v6108, %v6260
    %s6269 = sld [smem:[#allocation15 + $0x4d]]
    %v6270 = vstv %s6269
    %v6271 = vmul.f32 %v6270, %v5303
    %v6272 = vmul.f32 %v6270, %v5304
    %v6273 = vmul.f32 %v6270, %v5305
    %v6274 = vmul.f32 %v6270, %v5306
    %v6275 = vmul.f32 %v6270, %v5307
    %v6276 = vmul.f32 %v6270, %v5308
    %v6283 = vrot.slane %v6271, 1
    %v6284 = vrot.slane %v6272, 1
    %v6285 = vsel %vm881, %v6283, %v6284
    %v6286 = vrot.slane %v6273, 1
    %v6287 = vsel %vm881, %v6284, %v6286
    %v6288 = vrot.slane %v6274, 1
    %v6289 = vrot.slane %v6275, 1
    %v6290 = vsel %vm881, %v6288, %v6289
    %v6291 = vrot.slane %v6276, 1
    %v6292 = vsel %vm881, %v6289, %v6291
    %6293 = vrot.lane.b32.xlu0 %v6285, 126
    %v6294 = vpop.permute.xlu0 %6293
    %6295 = vrot.lane.b32.xlu0 %v6287, 126
    %v6296 = vpop.permute.xlu0 %6295
    %6297 = vrot.lane.b32.xlu0 %v6290, 126
    %v6298 = vpop.permute.xlu0 %6297
    %6299 = vrot.lane.b32.xlu0 %v6292, 126
    %v6300 = vpop.permute.xlu0 %6299
    %v6305 = vadd.f32 %v6145, %v6294
    %v6306 = vadd.f32 %v6146, %v6296
    %v6307 = vadd.f32 %v6147, %v6298
    %v6308 = vadd.f32 %v6148, %v6300
    %s6309 = sld [smem:[#allocation15 + $0x71]]
    %v6310 = vstv %s6309
    %v6311 = vmul.f32 %v6310, %v5303
    %v6312 = vmul.f32 %v6310, %v5304
    %v6313 = vmul.f32 %v6310, %v5305
    %v6314 = vmul.f32 %v6310, %v5306
    %v6315 = vmul.f32 %v6310, %v5307
    %v6316 = vmul.f32 %v6310, %v5308
    %v6323 = vrot.slane %v6311, 1
    %v6324 = vrot.slane %v6312, 1
    %v6325 = vsel %vm881, %v6323, %v6324
    %v6326 = vrot.slane %v6313, 1
    %v6327 = vsel %vm881, %v6324, %v6326
    %v6328 = vrot.slane %v6314, 1
    %v6329 = vrot.slane %v6315, 1
    %v6330 = vsel %vm881, %v6328, %v6329
    %v6331 = vrot.slane %v6316, 1
    %v6332 = vsel %vm881, %v6329, %v6331
    %6333 = vrot.lane.b32.xlu0 %v6325, 126
    %v6334 = vpop.permute.xlu0 %6333
    %6335 = vrot.lane.b32.xlu0 %v6327, 126
    %v6336 = vpop.permute.xlu0 %6335
    %6337 = vrot.lane.b32.xlu0 %v6330, 126
    %v6338 = vpop.permute.xlu0 %6337
    %6339 = vrot.lane.b32.xlu0 %v6332, 126
    %v6340 = vpop.permute.xlu0 %6339
    %v6345 = vadd.f32 %v6185, %v6334
    %v6346 = vadd.f32 %v6186, %v6336
    %v6347 = vadd.f32 %v6187, %v6338
    %v6348 = vadd.f32 %v6188, %v6340
    %s6349 = sld [smem:[#allocation15 + $0x6]]
    %v6350 = vstv %s6349
    %v6351 = vmul.f32 %v6350, %v5303
    %v6352 = vmul.f32 %v6350, %v5304
    %v6353 = vmul.f32 %v6350, %v5305
    %v6354 = vmul.f32 %v6350, %v5306
    %v6355 = vmul.f32 %v6350, %v5307
    %v6356 = vmul.f32 %v6350, %v5308
    %v6363 = vrot.slane %v6351, 2
    %v6364 = vrot.slane %v6352, 2
    %v6365 = vsel %vm1330, %v6363, %v6364
    %v6366 = vrot.slane %v6353, 2
    %v6367 = vsel %vm1330, %v6364, %v6366
    %v6368 = vrot.slane %v6354, 2
    %v6369 = vrot.slane %v6355, 2
    %v6370 = vsel %vm1330, %v6368, %v6369
    %v6371 = vrot.slane %v6356, 2
    %v6372 = vsel %vm1330, %v6369, %v6371
    %v6377 = vadd.f32 %v6225, %v6365
    %v6378 = vadd.f32 %v6226, %v6367
    %v6379 = vadd.f32 %v6227, %v6370
    %v6380 = vadd.f32 %v6228, %v6372
    %s6381 = sld [smem:[#allocation15 + $0x2a]]
    %v6382 = vstv %s6381
    %v6383 = vmul.f32 %v6382, %v5303
    %v6384 = vmul.f32 %v6382, %v5304
    %v6385 = vmul.f32 %v6382, %v5305
    %v6386 = vmul.f32 %v6382, %v5306
    %v6387 = vmul.f32 %v6382, %v5307
    %v6388 = vmul.f32 %v6382, %v5308
    %v6395 = vrot.slane %v6383, 2
    %v6396 = vrot.slane %v6384, 2
    %v6397 = vsel %vm1330, %v6395, %v6396
    %v6398 = vrot.slane %v6385, 2
    %v6399 = vsel %vm1330, %v6396, %v6398
    %v6400 = vrot.slane %v6386, 2
    %v6401 = vrot.slane %v6387, 2
    %v6402 = vsel %vm1330, %v6400, %v6401
    %v6403 = vrot.slane %v6388, 2
    %v6404 = vsel %vm1330, %v6401, %v6403
    %v6409 = vadd.f32 %v6265, %v6397
    %v6410 = vadd.f32 %v6266, %v6399
    %v6411 = vadd.f32 %v6267, %v6402
    %v6412 = vadd.f32 %v6268, %v6404
    %s6413 = sld [smem:[#allocation15 + $0x4e]]
    %v6414 = vstv %s6413
    %v6415 = vmul.f32 %v6414, %v5303
    %v6416 = vmul.f32 %v6414, %v5304
    %v6417 = vmul.f32 %v6414, %v5305
    %v6418 = vmul.f32 %v6414, %v5306
    %v6419 = vmul.f32 %v6414, %v5307
    %v6420 = vmul.f32 %v6414, %v5308
    %v6427 = vrot.slane %v6415, 2
    %v6428 = vrot.slane %v6416, 2
    %v6429 = vsel %vm1330, %v6427, %v6428
    %v6430 = vrot.slane %v6417, 2
    %v6431 = vsel %vm1330, %v6428, %v6430
    %v6432 = vrot.slane %v6418, 2
    %v6433 = vrot.slane %v6419, 2
    %v6434 = vsel %vm1330, %v6432, %v6433
    %v6435 = vrot.slane %v6420, 2
    %v6436 = vsel %vm1330, %v6433, %v6435
    %v6441 = vadd.f32 %v6305, %v6429
    %v6442 = vadd.f32 %v6306, %v6431
    %v6443 = vadd.f32 %v6307, %v6434
    %v6444 = vadd.f32 %v6308, %v6436
    %s6445 = sld [smem:[#allocation15 + $0x72]]
    %v6446 = vstv %s6445
    %v6447 = vmul.f32 %v6446, %v5303
    %v6448 = vmul.f32 %v6446, %v5304
    %v6449 = vmul.f32 %v6446, %v5305
    %v6450 = vmul.f32 %v6446, %v5306
    %v6451 = vmul.f32 %v6446, %v5307
    %v6452 = vmul.f32 %v6446, %v5308
    %v6459 = vrot.slane %v6447, 2
    %v6460 = vrot.slane %v6448, 2
    %v6461 = vsel %vm1330, %v6459, %v6460
    %v6462 = vrot.slane %v6449, 2
    %v6463 = vsel %vm1330, %v6460, %v6462
    %v6464 = vrot.slane %v6450, 2
    %v6465 = vrot.slane %v6451, 2
    %v6466 = vsel %vm1330, %v6464, %v6465
    %v6467 = vrot.slane %v6452, 2
    %v6468 = vsel %vm1330, %v6465, %v6467
    %v6473 = vadd.f32 %v6345, %v6461
    %v6474 = vadd.f32 %v6346, %v6463
    %v6475 = vadd.f32 %v6347, %v6466
    %v6476 = vadd.f32 %v6348, %v6468
    %s6477 = sld [smem:[#allocation15 + $0x7]]
    %v6478 = vstv %s6477
    %v6479 = vmul.f32 %v6478, %v5303
    %v6480 = vmul.f32 %v6478, %v5304
    %v6481 = vmul.f32 %v6478, %v5305
    %v6482 = vmul.f32 %v6478, %v5306
    %v6483 = vmul.f32 %v6478, %v5307
    %v6484 = vmul.f32 %v6478, %v5308
    %v6491 = vrot.slane %v6479, 2
    %v6492 = vrot.slane %v6480, 2
    %v6493 = vsel %vm1330, %v6491, %v6492
    %v6494 = vrot.slane %v6481, 2
    %v6495 = vsel %vm1330, %v6492, %v6494
    %v6496 = vrot.slane %v6482, 2
    %v6497 = vrot.slane %v6483, 2
    %v6498 = vsel %vm1330, %v6496, %v6497
    %v6499 = vrot.slane %v6484, 2
    %v6500 = vsel %vm1330, %v6497, %v6499
    %6501 = vrot.lane.b32.xlu0 %v6493, 127
    %v6502 = vpop.permute.xlu0 %6501
    %6503 = vrot.lane.b32.xlu0 %v6495, 127
    %v6504 = vpop.permute.xlu0 %6503
    %6505 = vrot.lane.b32.xlu0 %v6498, 127
    %v6506 = vpop.permute.xlu0 %6505
    %6507 = vrot.lane.b32.xlu0 %v6500, 127
    %v6508 = vpop.permute.xlu0 %6507
    %v6513 = vadd.f32 %v6377, %v6502
    %v6514 = vadd.f32 %v6378, %v6504
    %v6515 = vadd.f32 %v6379, %v6506
    %v6516 = vadd.f32 %v6380, %v6508
    %s6517 = sld [smem:[#allocation15 + $0x2b]]
    %v6518 = vstv %s6517
    %v6519 = vmul.f32 %v6518, %v5303
    %v6520 = vmul.f32 %v6518, %v5304
    %v6521 = vmul.f32 %v6518, %v5305
    %v6522 = vmul.f32 %v6518, %v5306
    %v6523 = vmul.f32 %v6518, %v5307
    %v6524 = vmul.f32 %v6518, %v5308
    %v6531 = vrot.slane %v6519, 2
    %v6532 = vrot.slane %v6520, 2
    %v6533 = vsel %vm1330, %v6531, %v6532
    %v6534 = vrot.slane %v6521, 2
    %v6535 = vsel %vm1330, %v6532, %v6534
    %v6536 = vrot.slane %v6522, 2
    %v6537 = vrot.slane %v6523, 2
    %v6538 = vsel %vm1330, %v6536, %v6537
    %v6539 = vrot.slane %v6524, 2
    %v6540 = vsel %vm1330, %v6537, %v6539
    %6541 = vrot.lane.b32.xlu0 %v6533, 127
    %v6542 = vpop.permute.xlu0 %6541
    %6543 = vrot.lane.b32.xlu0 %v6535, 127
    %v6544 = vpop.permute.xlu0 %6543
    %6545 = vrot.lane.b32.xlu0 %v6538, 127
    %v6546 = vpop.permute.xlu0 %6545
    %6547 = vrot.lane.b32.xlu0 %v6540, 127
    %v6548 = vpop.permute.xlu0 %6547
    %v6553 = vadd.f32 %v6409, %v6542
    %v6554 = vadd.f32 %v6410, %v6544
    %v6555 = vadd.f32 %v6411, %v6546
    %v6556 = vadd.f32 %v6412, %v6548
    %s6557 = sld [smem:[#allocation15 + $0x4f]]
    %v6558 = vstv %s6557
    %v6559 = vmul.f32 %v6558, %v5303
    %v6560 = vmul.f32 %v6558, %v5304
    %v6561 = vmul.f32 %v6558, %v5305
    %v6562 = vmul.f32 %v6558, %v5306
    %v6563 = vmul.f32 %v6558, %v5307
    %v6564 = vmul.f32 %v6558, %v5308
    %v6571 = vrot.slane %v6559, 2
    %v6572 = vrot.slane %v6560, 2
    %v6573 = vsel %vm1330, %v6571, %v6572
    %v6574 = vrot.slane %v6561, 2
    %v6575 = vsel %vm1330, %v6572, %v6574
    %v6576 = vrot.slane %v6562, 2
    %v6577 = vrot.slane %v6563, 2
    %v6578 = vsel %vm1330, %v6576, %v6577
    %v6579 = vrot.slane %v6564, 2
    %v6580 = vsel %vm1330, %v6577, %v6579
    %6581 = vrot.lane.b32.xlu0 %v6573, 127
    %v6582 = vpop.permute.xlu0 %6581
    %6583 = vrot.lane.b32.xlu0 %v6575, 127
    %v6584 = vpop.permute.xlu0 %6583
    %6585 = vrot.lane.b32.xlu0 %v6578, 127
    %v6586 = vpop.permute.xlu0 %6585
    %6587 = vrot.lane.b32.xlu0 %v6580, 127
    %v6588 = vpop.permute.xlu0 %6587
    %v6593 = vadd.f32 %v6441, %v6582
    %v6594 = vadd.f32 %v6442, %v6584
    %v6595 = vadd.f32 %v6443, %v6586
    %v6596 = vadd.f32 %v6444, %v6588
    %s6597 = sld [smem:[#allocation15 + $0x73]]
    %v6598 = vstv %s6597
    %v6599 = vmul.f32 %v6598, %v5303
    %v6600 = vmul.f32 %v6598, %v5304
    %v6601 = vmul.f32 %v6598, %v5305
    %v6602 = vmul.f32 %v6598, %v5306
    %v6603 = vmul.f32 %v6598, %v5307
    %v6604 = vmul.f32 %v6598, %v5308
    %v6611 = vrot.slane %v6599, 2
    %v6612 = vrot.slane %v6600, 2
    %v6613 = vsel %vm1330, %v6611, %v6612
    %v6614 = vrot.slane %v6601, 2
    %v6615 = vsel %vm1330, %v6612, %v6614
    %v6616 = vrot.slane %v6602, 2
    %v6617 = vrot.slane %v6603, 2
    %v6618 = vsel %vm1330, %v6616, %v6617
    %v6619 = vrot.slane %v6604, 2
    %v6620 = vsel %vm1330, %v6617, %v6619
    %6621 = vrot.lane.b32.xlu0 %v6613, 127
    %v6622 = vpop.permute.xlu0 %6621
    %6623 = vrot.lane.b32.xlu0 %v6615, 127
    %v6624 = vpop.permute.xlu0 %6623
    %6625 = vrot.lane.b32.xlu0 %v6618, 127
    %v6626 = vpop.permute.xlu0 %6625
    %6627 = vrot.lane.b32.xlu0 %v6620, 127
    %v6628 = vpop.permute.xlu0 %6627
    %v6633 = vadd.f32 %v6473, %v6622
    %v6634 = vadd.f32 %v6474, %v6624
    %v6635 = vadd.f32 %v6475, %v6626
    %v6636 = vadd.f32 %v6476, %v6628
    %s6637 = sld [smem:[#allocation15 + $0x8]]
    %v6638 = vstv %s6637
    %v6639 = vmul.f32 %v6638, %v5303
    %v6640 = vmul.f32 %v6638, %v5304
    %v6641 = vmul.f32 %v6638, %v5305
    %v6642 = vmul.f32 %v6638, %v5306
    %v6643 = vmul.f32 %v6638, %v5307
    %v6644 = vmul.f32 %v6638, %v5308
    %v6651 = vrot.slane %v6639, 2
    %v6652 = vrot.slane %v6640, 2
    %v6653 = vsel %vm1330, %v6651, %v6652
    %v6654 = vrot.slane %v6641, 2
    %v6655 = vsel %vm1330, %v6652, %v6654
    %v6656 = vrot.slane %v6642, 2
    %v6657 = vrot.slane %v6643, 2
    %v6658 = vsel %vm1330, %v6656, %v6657
    %v6659 = vrot.slane %v6644, 2
    %v6660 = vsel %vm1330, %v6657, %v6659
    %6661 = vrot.lane.b32.xlu0 %v6653, 126
    %v6662 = vpop.permute.xlu0 %6661
    %6663 = vrot.lane.b32.xlu0 %v6655, 126
    %v6664 = vpop.permute.xlu0 %6663
    %6665 = vrot.lane.b32.xlu0 %v6658, 126
    %v6666 = vpop.permute.xlu0 %6665
    %6667 = vrot.lane.b32.xlu0 %v6660, 126
    %v6668 = vpop.permute.xlu0 %6667
    %v6673 = vadd.f32 %v6513, %v6662
    %v6674 = vadd.f32 %v6514, %v6664
    %v6675 = vadd.f32 %v6515, %v6666
    %v6676 = vadd.f32 %v6516, %v6668
    %s6677 = sld [smem:[#allocation15 + $0x2c]]
    %v6678 = vstv %s6677
    %v6679 = vmul.f32 %v6678, %v5303
    %v6680 = vmul.f32 %v6678, %v5304
    %v6681 = vmul.f32 %v6678, %v5305
    %v6682 = vmul.f32 %v6678, %v5306
    %v6683 = vmul.f32 %v6678, %v5307
    %v6684 = vmul.f32 %v6678, %v5308
    %v6691 = vrot.slane %v6679, 2
    %v6692 = vrot.slane %v6680, 2
    %v6693 = vsel %vm1330, %v6691, %v6692
    %v6694 = vrot.slane %v6681, 2
    %v6695 = vsel %vm1330, %v6692, %v6694
    %v6696 = vrot.slane %v6682, 2
    %v6697 = vrot.slane %v6683, 2
    %v6698 = vsel %vm1330, %v6696, %v6697
    %v6699 = vrot.slane %v6684, 2
    %v6700 = vsel %vm1330, %v6697, %v6699
    %6701 = vrot.lane.b32.xlu0 %v6693, 126
    %v6702 = vpop.permute.xlu0 %6701
    %6703 = vrot.lane.b32.xlu0 %v6695, 126
    %v6704 = vpop.permute.xlu0 %6703
    %6705 = vrot.lane.b32.xlu0 %v6698, 126
    %v6706 = vpop.permute.xlu0 %6705
    %6707 = vrot.lane.b32.xlu0 %v6700, 126
    %v6708 = vpop.permute.xlu0 %6707
    %v6713 = vadd.f32 %v6553, %v6702
    %v6714 = vadd.f32 %v6554, %v6704
    %v6715 = vadd.f32 %v6555, %v6706
    %v6716 = vadd.f32 %v6556, %v6708
    %s6717 = sld [smem:[#allocation15 + $0x50]]
    %v6718 = vstv %s6717
    %v6719 = vmul.f32 %v6718, %v5303
    %v6720 = vmul.f32 %v6718, %v5304
    %v6721 = vmul.f32 %v6718, %v5305
    %v6722 = vmul.f32 %v6718, %v5306
    %v6723 = vmul.f32 %v6718, %v5307
    %v6724 = vmul.f32 %v6718, %v5308
    %v6731 = vrot.slane %v6719, 2
    %v6732 = vrot.slane %v6720, 2
    %v6733 = vsel %vm1330, %v6731, %v6732
    %v6734 = vrot.slane %v6721, 2
    %v6735 = vsel %vm1330, %v6732, %v6734
    %v6736 = vrot.slane %v6722, 2
    %v6737 = vrot.slane %v6723, 2
    %v6738 = vsel %vm1330, %v6736, %v6737
    %v6739 = vrot.slane %v6724, 2
    %v6740 = vsel %vm1330, %v6737, %v6739
    %6741 = vrot.lane.b32.xlu0 %v6733, 126
    %v6742 = vpop.permute.xlu0 %6741
    %6743 = vrot.lane.b32.xlu0 %v6735, 126
    %v6744 = vpop.permute.xlu0 %6743
    %6745 = vrot.lane.b32.xlu0 %v6738, 126
    %v6746 = vpop.permute.xlu0 %6745
    %6747 = vrot.lane.b32.xlu0 %v6740, 126
    %v6748 = vpop.permute.xlu0 %6747
    %v6753 = vadd.f32 %v6593, %v6742
    %v6754 = vadd.f32 %v6594, %v6744
    %v6755 = vadd.f32 %v6595, %v6746
    %v6756 = vadd.f32 %v6596, %v6748
    %s6757 = sld [smem:[#allocation15 + $0x74]]
    %v6758 = vstv %s6757
    %v6759 = vmul.f32 %v6758, %v5303
    %v6760 = vmul.f32 %v6758, %v5304
    %v6761 = vmul.f32 %v6758, %v5305
    %v6762 = vmul.f32 %v6758, %v5306
    %v6763 = vmul.f32 %v6758, %v5307
    %v6764 = vmul.f32 %v6758, %v5308
    %v6771 = vrot.slane %v6759, 2
    %v6772 = vrot.slane %v6760, 2
    %v6773 = vsel %vm1330, %v6771, %v6772
    %v6774 = vrot.slane %v6761, 2
    %v6775 = vsel %vm1330, %v6772, %v6774
    %v6776 = vrot.slane %v6762, 2
    %v6777 = vrot.slane %v6763, 2
    %v6778 = vsel %vm1330, %v6776, %v6777
    %v6779 = vrot.slane %v6764, 2
    %v6780 = vsel %vm1330, %v6777, %v6779
    %6781 = vrot.lane.b32.xlu0 %v6773, 126
    %v6782 = vpop.permute.xlu0 %6781
    %6783 = vrot.lane.b32.xlu0 %v6775, 126
    %v6784 = vpop.permute.xlu0 %6783
    %6785 = vrot.lane.b32.xlu0 %v6778, 126
    %v6786 = vpop.permute.xlu0 %6785
    %6787 = vrot.lane.b32.xlu0 %v6780, 126
    %v6788 = vpop.permute.xlu0 %6787
    %v6793 = vadd.f32 %v6633, %v6782
    %v6794 = vadd.f32 %v6634, %v6784
    %v6795 = vadd.f32 %v6635, %v6786
    %v6796 = vadd.f32 %v6636, %v6788
    %s6797 = sld [smem:[#allocation15 + $0x9]]
    %v6798 = vstv %s6797
    %v6799 = vmul.f32 %v6798, %v5415
    %v6800 = vmul.f32 %v6798, %v5416
    %v6801 = vmul.f32 %v6798, %v5418
    %v6802 = vmul.f32 %v6798, %v5419
    %v6803 = vadd.f32 %v6673, %v6799
    %v6804 = vadd.f32 %v6674, %v6800
    %v6805 = vadd.f32 %v6675, %v6801
    %v6806 = vadd.f32 %v6676, %v6802
    %s6807 = sld [smem:[#allocation15 + $0x2d]]
    %v6808 = vstv %s6807
    %v6809 = vmul.f32 %v6808, %v5415
    %v6810 = vmul.f32 %v6808, %v5416
    %v6811 = vmul.f32 %v6808, %v5418
    %v6812 = vmul.f32 %v6808, %v5419
    %v6813 = vadd.f32 %v6713, %v6809
    %v6814 = vadd.f32 %v6714, %v6810
    %v6815 = vadd.f32 %v6715, %v6811
    %v6816 = vadd.f32 %v6716, %v6812
    %s6817 = sld [smem:[#allocation15 + $0x51]]
    %v6818 = vstv %s6817
    %v6819 = vmul.f32 %v6818, %v5415
    %v6820 = vmul.f32 %v6818, %v5416
    %v6821 = vmul.f32 %v6818, %v5418
    %v6822 = vmul.f32 %v6818, %v5419
    %v6823 = vadd.f32 %v6753, %v6819
    %v6824 = vadd.f32 %v6754, %v6820
    %v6825 = vadd.f32 %v6755, %v6821
    %v6826 = vadd.f32 %v6756, %v6822
    %s6827 = sld [smem:[#allocation15 + $0x75]]
    %v6828 = vstv %s6827
    %v6829 = vmul.f32 %v6828, %v5415
    %v6830 = vmul.f32 %v6828, %v5416
    %v6831 = vmul.f32 %v6828, %v5418
    %v6832 = vmul.f32 %v6828, %v5419
    %v6833 = vadd.f32 %v6793, %v6829
    %v6834 = vadd.f32 %v6794, %v6830
    %v6835 = vadd.f32 %v6795, %v6831
    %v6836 = vadd.f32 %v6796, %v6832
    %s6837 = sld [smem:[#allocation15 + $0xa]]
    %v6838 = vstv %s6837
    %v6839 = vmul.f32 %v6838, %v5415
    %v6840 = vmul.f32 %v6838, %v5416
    %v6841 = vmul.f32 %v6838, %v5418
    %v6842 = vmul.f32 %v6838, %v5419
    %6847 = vrot.lane.b32.xlu0 %v6839, 127
    %v6848 = vpop.permute.xlu0 %6847
    %6849 = vrot.lane.b32.xlu0 %v6840, 127
    %v6850 = vpop.permute.xlu0 %6849
    %6851 = vrot.lane.b32.xlu0 %v6841, 127
    %v6852 = vpop.permute.xlu0 %6851
    %6853 = vrot.lane.b32.xlu0 %v6842, 127
    %v6854 = vpop.permute.xlu0 %6853
    %v6859 = vadd.f32 %v6803, %v6848
    %v6860 = vadd.f32 %v6804, %v6850
    %v6861 = vadd.f32 %v6805, %v6852
    %v6862 = vadd.f32 %v6806, %v6854
    %s6863 = sld [smem:[#allocation15 + $0x2e]]
    %v6864 = vstv %s6863
    %v6865 = vmul.f32 %v6864, %v5415
    %v6866 = vmul.f32 %v6864, %v5416
    %v6867 = vmul.f32 %v6864, %v5418
    %v6868 = vmul.f32 %v6864, %v5419
    %6873 = vrot.lane.b32.xlu0 %v6865, 127
    %v6874 = vpop.permute.xlu0 %6873
    %6875 = vrot.lane.b32.xlu0 %v6866, 127
    %v6876 = vpop.permute.xlu0 %6875
    %6877 = vrot.lane.b32.xlu0 %v6867, 127
    %v6878 = vpop.permute.xlu0 %6877
    %6879 = vrot.lane.b32.xlu0 %v6868, 127
    %v6880 = vpop.permute.xlu0 %6879
    %v6885 = vadd.f32 %v6813, %v6874
    %v6886 = vadd.f32 %v6814, %v6876
    %v6887 = vadd.f32 %v6815, %v6878
    %v6888 = vadd.f32 %v6816, %v6880
    %s6889 = sld [smem:[#allocation15 + $0x52]]
    %v6890 = vstv %s6889
    %v6891 = vmul.f32 %v6890, %v5415
    %v6892 = vmul.f32 %v6890, %v5416
    %v6893 = vmul.f32 %v6890, %v5418
    %v6894 = vmul.f32 %v6890, %v5419
    %6899 = vrot.lane.b32.xlu0 %v6891, 127
    %v6900 = vpop.permute.xlu0 %6899
    %6901 = vrot.lane.b32.xlu0 %v6892, 127
    %v6902 = vpop.permute.xlu0 %6901
    %6903 = vrot.lane.b32.xlu0 %v6893, 127
    %v6904 = vpop.permute.xlu0 %6903
    %6905 = vrot.lane.b32.xlu0 %v6894, 127
    %v6906 = vpop.permute.xlu0 %6905
    %v6911 = vadd.f32 %v6823, %v6900
    %v6912 = vadd.f32 %v6824, %v6902
    %v6913 = vadd.f32 %v6825, %v6904
    %v6914 = vadd.f32 %v6826, %v6906
    %s6915 = sld [smem:[#allocation15 + $0x76]]
    %v6916 = vstv %s6915
    %v6917 = vmul.f32 %v6916, %v5415
    %v6918 = vmul.f32 %v6916, %v5416
    %v6919 = vmul.f32 %v6916, %v5418
    %v6920 = vmul.f32 %v6916, %v5419
    %6925 = vrot.lane.b32.xlu0 %v6917, 127
    %v6926 = vpop.permute.xlu0 %6925
    %6927 = vrot.lane.b32.xlu0 %v6918, 127
    %v6928 = vpop.permute.xlu0 %6927
    %6929 = vrot.lane.b32.xlu0 %v6919, 127
    %v6930 = vpop.permute.xlu0 %6929
    %6931 = vrot.lane.b32.xlu0 %v6920, 127
    %v6932 = vpop.permute.xlu0 %6931
    %v6937 = vadd.f32 %v6833, %v6926
    %v6938 = vadd.f32 %v6834, %v6928
    %v6939 = vadd.f32 %v6835, %v6930
    %v6940 = vadd.f32 %v6836, %v6932
    %s6941 = sld [smem:[#allocation15 + $0xb]]
    %v6942 = vstv %s6941
    %v6943 = vmul.f32 %v6942, %v5415
    %v6944 = vmul.f32 %v6942, %v5416
    %v6945 = vmul.f32 %v6942, %v5418
    %v6946 = vmul.f32 %v6942, %v5419
    %6951 = vrot.lane.b32.xlu0 %v6943, 126
    %v6952 = vpop.permute.xlu0 %6951
    %6953 = vrot.lane.b32.xlu0 %v6944, 126
    %v6954 = vpop.permute.xlu0 %6953
    %6955 = vrot.lane.b32.xlu0 %v6945, 126
    %v6956 = vpop.permute.xlu0 %6955
    %6957 = vrot.lane.b32.xlu0 %v6946, 126
    %v6958 = vpop.permute.xlu0 %6957
    %v6963 = vadd.f32 %v6859, %v6952
    %v6964 = vadd.f32 %v6860, %v6954
    %v6965 = vadd.f32 %v6861, %v6956
    %v6966 = vadd.f32 %v6862, %v6958
    %s6967 = sld [smem:[#allocation15 + $0x2f]]
    %v6968 = vstv %s6967
    %v6969 = vmul.f32 %v6968, %v5415
    %v6970 = vmul.f32 %v6968, %v5416
    %v6971 = vmul.f32 %v6968, %v5418
    %v6972 = vmul.f32 %v6968, %v5419
    %6977 = vrot.lane.b32.xlu0 %v6969, 126
    %v6978 = vpop.permute.xlu0 %6977
    %6979 = vrot.lane.b32.xlu0 %v6970, 126
    %v6980 = vpop.permute.xlu0 %6979
    %6981 = vrot.lane.b32.xlu0 %v6971, 126
    %v6982 = vpop.permute.xlu0 %6981
    %6983 = vrot.lane.b32.xlu0 %v6972, 126
    %v6984 = vpop.permute.xlu0 %6983
    %v6989 = vadd.f32 %v6885, %v6978
    %v6990 = vadd.f32 %v6886, %v6980
    %v6991 = vadd.f32 %v6887, %v6982
    %v6992 = vadd.f32 %v6888, %v6984
    %s6993 = sld [smem:[#allocation15 + $0x53]]
    %v6994 = vstv %s6993
    %v6995 = vmul.f32 %v6994, %v5415
    %v6996 = vmul.f32 %v6994, %v5416
    %v6997 = vmul.f32 %v6994, %v5418
    %v6998 = vmul.f32 %v6994, %v5419
    %7003 = vrot.lane.b32.xlu0 %v6995, 126
    %v7004 = vpop.permute.xlu0 %7003
    %7005 = vrot.lane.b32.xlu0 %v6996, 126
    %v7006 = vpop.permute.xlu0 %7005
    %7007 = vrot.lane.b32.xlu0 %v6997, 126
    %v7008 = vpop.permute.xlu0 %7007
    %7009 = vrot.lane.b32.xlu0 %v6998, 126
    %v7010 = vpop.permute.xlu0 %7009
    %v7015 = vadd.f32 %v6911, %v7004
    %v7016 = vadd.f32 %v6912, %v7006
    %v7017 = vadd.f32 %v6913, %v7008
    %v7018 = vadd.f32 %v6914, %v7010
    %s7019 = sld [smem:[#allocation15 + $0x77]]
    %v7020 = vstv %s7019
    %v7021 = vmul.f32 %v7020, %v5415
    %v7022 = vmul.f32 %v7020, %v5416
    %v7023 = vmul.f32 %v7020, %v5418
    %v7024 = vmul.f32 %v7020, %v5419
    %7029 = vrot.lane.b32.xlu0 %v7021, 126
    %v7030 = vpop.permute.xlu0 %7029
    %7031 = vrot.lane.b32.xlu0 %v7022, 126
    %v7032 = vpop.permute.xlu0 %7031
    %7033 = vrot.lane.b32.xlu0 %v7023, 126
    %v7034 = vpop.permute.xlu0 %7033
    %7035 = vrot.lane.b32.xlu0 %v7024, 126
    %v7036 = vpop.permute.xlu0 %7035
    %v7041 = vadd.f32 %v6937, %v7030
    %v7042 = vadd.f32 %v6938, %v7032
    %v7043 = vadd.f32 %v6939, %v7034
    %v7044 = vadd.f32 %v6940, %v7036
    %s7045 = sld [smem:[#allocation15 + $0xc]]
    %v7046 = vstv %s7045
    %v7047 = vmul.f32 %v7046, %v5415
    %v7048 = vmul.f32 %v7046, %v5416
    %v7049 = vmul.f32 %v7046, %v5417
    %v7050 = vmul.f32 %v7046, %v5418
    %v7051 = vmul.f32 %v7046, %v5419
    %v7052 = vmul.f32 %v7046, %v5420
    %v7059 = vrot.slane %v7047, 1
    %v7060 = vrot.slane %v7048, 1
    %v7061 = vsel %vm881, %v7059, %v7060
    %v7062 = vrot.slane %v7049, 1
    %v7063 = vsel %vm881, %v7060, %v7062
    %v7064 = vrot.slane %v7050, 1
    %v7065 = vrot.slane %v7051, 1
    %v7066 = vsel %vm881, %v7064, %v7065
    %v7067 = vrot.slane %v7052, 1
    %v7068 = vsel %vm881, %v7065, %v7067
    %v7073 = vadd.f32 %v6963, %v7061
    %v7074 = vadd.f32 %v6964, %v7063
    %v7075 = vadd.f32 %v6965, %v7066
    %v7076 = vadd.f32 %v6966, %v7068
    %s7077 = sld [smem:[#allocation15 + $0x30]]
    %v7078 = vstv %s7077
    %v7079 = vmul.f32 %v7078, %v5415
    %v7080 = vmul.f32 %v7078, %v5416
    %v7081 = vmul.f32 %v7078, %v5417
    %v7082 = vmul.f32 %v7078, %v5418
    %v7083 = vmul.f32 %v7078, %v5419
    %v7084 = vmul.f32 %v7078, %v5420
    %v7091 = vrot.slane %v7079, 1
    %v7092 = vrot.slane %v7080, 1
    %v7093 = vsel %vm881, %v7091, %v7092
    %v7094 = vrot.slane %v7081, 1
    %v7095 = vsel %vm881, %v7092, %v7094
    %v7096 = vrot.slane %v7082, 1
    %v7097 = vrot.slane %v7083, 1
    %v7098 = vsel %vm881, %v7096, %v7097
    %v7099 = vrot.slane %v7084, 1
    %v7100 = vsel %vm881, %v7097, %v7099
    %v7105 = vadd.f32 %v6989, %v7093
    %v7106 = vadd.f32 %v6990, %v7095
    %v7107 = vadd.f32 %v6991, %v7098
    %v7108 = vadd.f32 %v6992, %v7100
    %s7109 = sld [smem:[#allocation15 + $0x54]]
    %v7110 = vstv %s7109
    %v7111 = vmul.f32 %v7110, %v5415
    %v7112 = vmul.f32 %v7110, %v5416
    %v7113 = vmul.f32 %v7110, %v5417
    %v7114 = vmul.f32 %v7110, %v5418
    %v7115 = vmul.f32 %v7110, %v5419
    %v7116 = vmul.f32 %v7110, %v5420
    %v7123 = vrot.slane %v7111, 1
    %v7124 = vrot.slane %v7112, 1
    %v7125 = vsel %vm881, %v7123, %v7124
    %v7126 = vrot.slane %v7113, 1
    %v7127 = vsel %vm881, %v7124, %v7126
    %v7128 = vrot.slane %v7114, 1
    %v7129 = vrot.slane %v7115, 1
    %v7130 = vsel %vm881, %v7128, %v7129
    %v7131 = vrot.slane %v7116, 1
    %v7132 = vsel %vm881, %v7129, %v7131
    %v7137 = vadd.f32 %v7015, %v7125
    %v7138 = vadd.f32 %v7016, %v7127
    %v7139 = vadd.f32 %v7017, %v7130
    %v7140 = vadd.f32 %v7018, %v7132
    %s7141 = sld [smem:[#allocation15 + $0x78]]
    %v7142 = vstv %s7141
    %v7143 = vmul.f32 %v7142, %v5415
    %v7144 = vmul.f32 %v7142, %v5416
    %v7145 = vmul.f32 %v7142, %v5417
    %v7146 = vmul.f32 %v7142, %v5418
    %v7147 = vmul.f32 %v7142, %v5419
    %v7148 = vmul.f32 %v7142, %v5420
    %v7155 = vrot.slane %v7143, 1
    %v7156 = vrot.slane %v7144, 1
    %v7157 = vsel %vm881, %v7155, %v7156
    %v7158 = vrot.slane %v7145, 1
    %v7159 = vsel %vm881, %v7156, %v7158
    %v7160 = vrot.slane %v7146, 1
    %v7161 = vrot.slane %v7147, 1
    %v7162 = vsel %vm881, %v7160, %v7161
    %v7163 = vrot.slane %v7148, 1
    %v7164 = vsel %vm881, %v7161, %v7163
    %v7169 = vadd.f32 %v7041, %v7157
    %v7170 = vadd.f32 %v7042, %v7159
    %v7171 = vadd.f32 %v7043, %v7162
    %v7172 = vadd.f32 %v7044, %v7164
    %s7173 = sld [smem:[#allocation15 + $0xd]]
    %v7174 = vstv %s7173
    %v7175 = vmul.f32 %v7174, %v5415
    %v7176 = vmul.f32 %v7174, %v5416
    %v7177 = vmul.f32 %v7174, %v5417
    %v7178 = vmul.f32 %v7174, %v5418
    %v7179 = vmul.f32 %v7174, %v5419
    %v7180 = vmul.f32 %v7174, %v5420
    %v7187 = vrot.slane %v7175, 1
    %v7188 = vrot.slane %v7176, 1
    %v7189 = vsel %vm881, %v7187, %v7188
    %v7190 = vrot.slane %v7177, 1
    %v7191 = vsel %vm881, %v7188, %v7190
    %v7192 = vrot.slane %v7178, 1
    %v7193 = vrot.slane %v7179, 1
    %v7194 = vsel %vm881, %v7192, %v7193
    %v7195 = vrot.slane %v7180, 1
    %v7196 = vsel %vm881, %v7193, %v7195
    %7197 = vrot.lane.b32.xlu0 %v7189, 127
    %v7198 = vpop.permute.xlu0 %7197
    %7199 = vrot.lane.b32.xlu0 %v7191, 127
    %v7200 = vpop.permute.xlu0 %7199
    %7201 = vrot.lane.b32.xlu0 %v7194, 127
    %v7202 = vpop.permute.xlu0 %7201
    %7203 = vrot.lane.b32.xlu0 %v7196, 127
    %v7204 = vpop.permute.xlu0 %7203
    %v7209 = vadd.f32 %v7073, %v7198
    %v7210 = vadd.f32 %v7074, %v7200
    %v7211 = vadd.f32 %v7075, %v7202
    %v7212 = vadd.f32 %v7076, %v7204
    %s7213 = sld [smem:[#allocation15 + $0x31]]
    %v7214 = vstv %s7213
    %v7215 = vmul.f32 %v7214, %v5415
    %v7216 = vmul.f32 %v7214, %v5416
    %v7217 = vmul.f32 %v7214, %v5417
    %v7218 = vmul.f32 %v7214, %v5418
    %v7219 = vmul.f32 %v7214, %v5419
    %v7220 = vmul.f32 %v7214, %v5420
    %v7227 = vrot.slane %v7215, 1
    %v7228 = vrot.slane %v7216, 1
    %v7229 = vsel %vm881, %v7227, %v7228
    %v7230 = vrot.slane %v7217, 1
    %v7231 = vsel %vm881, %v7228, %v7230
    %v7232 = vrot.slane %v7218, 1
    %v7233 = vrot.slane %v7219, 1
    %v7234 = vsel %vm881, %v7232, %v7233
    %v7235 = vrot.slane %v7220, 1
    %v7236 = vsel %vm881, %v7233, %v7235
    %7237 = vrot.lane.b32.xlu0 %v7229, 127
    %v7238 = vpop.permute.xlu0 %7237
    %7239 = vrot.lane.b32.xlu0 %v7231, 127
    %v7240 = vpop.permute.xlu0 %7239
    %7241 = vrot.lane.b32.xlu0 %v7234, 127
    %v7242 = vpop.permute.xlu0 %7241
    %7243 = vrot.lane.b32.xlu0 %v7236, 127
    %v7244 = vpop.permute.xlu0 %7243
    %v7249 = vadd.f32 %v7105, %v7238
    %v7250 = vadd.f32 %v7106, %v7240
    %v7251 = vadd.f32 %v7107, %v7242
    %v7252 = vadd.f32 %v7108, %v7244
    %s7253 = sld [smem:[#allocation15 + $0x55]]
    %v7254 = vstv %s7253
    %v7255 = vmul.f32 %v7254, %v5415
    %v7256 = vmul.f32 %v7254, %v5416
    %v7257 = vmul.f32 %v7254, %v5417
    %v7258 = vmul.f32 %v7254, %v5418
    %v7259 = vmul.f32 %v7254, %v5419
    %v7260 = vmul.f32 %v7254, %v5420
    %v7267 = vrot.slane %v7255, 1
    %v7268 = vrot.slane %v7256, 1
    %v7269 = vsel %vm881, %v7267, %v7268
    %v7270 = vrot.slane %v7257, 1
    %v7271 = vsel %vm881, %v7268, %v7270
    %v7272 = vrot.slane %v7258, 1
    %v7273 = vrot.slane %v7259, 1
    %v7274 = vsel %vm881, %v7272, %v7273
    %v7275 = vrot.slane %v7260, 1
    %v7276 = vsel %vm881, %v7273, %v7275
    %7277 = vrot.lane.b32.xlu0 %v7269, 127
    %v7278 = vpop.permute.xlu0 %7277
    %7279 = vrot.lane.b32.xlu0 %v7271, 127
    %v7280 = vpop.permute.xlu0 %7279
    %7281 = vrot.lane.b32.xlu0 %v7274, 127
    %v7282 = vpop.permute.xlu0 %7281
    %7283 = vrot.lane.b32.xlu0 %v7276, 127
    %v7284 = vpop.permute.xlu0 %7283
    %v7289 = vadd.f32 %v7137, %v7278
    %v7290 = vadd.f32 %v7138, %v7280
    %v7291 = vadd.f32 %v7139, %v7282
    %v7292 = vadd.f32 %v7140, %v7284
    %s7293 = sld [smem:[#allocation15 + $0x79]]
    %v7294 = vstv %s7293
    %v7295 = vmul.f32 %v7294, %v5415
    %v7296 = vmul.f32 %v7294, %v5416
    %v7297 = vmul.f32 %v7294, %v5417
    %v7298 = vmul.f32 %v7294, %v5418
    %v7299 = vmul.f32 %v7294, %v5419
    %v7300 = vmul.f32 %v7294, %v5420
    %v7307 = vrot.slane %v7295, 1
    %v7308 = vrot.slane %v7296, 1
    %v7309 = vsel %vm881, %v7307, %v7308
    %v7310 = vrot.slane %v7297, 1
    %v7311 = vsel %vm881, %v7308, %v7310
    %v7312 = vrot.slane %v7298, 1
    %v7313 = vrot.slane %v7299, 1
    %v7314 = vsel %vm881, %v7312, %v7313
    %v7315 = vrot.slane %v7300, 1
    %v7316 = vsel %vm881, %v7313, %v7315
    %7317 = vrot.lane.b32.xlu0 %v7309, 127
    %v7318 = vpop.permute.xlu0 %7317
    %7319 = vrot.lane.b32.xlu0 %v7311, 127
    %v7320 = vpop.permute.xlu0 %7319
    %7321 = vrot.lane.b32.xlu0 %v7314, 127
    %v7322 = vpop.permute.xlu0 %7321
    %7323 = vrot.lane.b32.xlu0 %v7316, 127
    %v7324 = vpop.permute.xlu0 %7323
    %v7329 = vadd.f32 %v7169, %v7318
    %v7330 = vadd.f32 %v7170, %v7320
    %v7331 = vadd.f32 %v7171, %v7322
    %v7332 = vadd.f32 %v7172, %v7324
    %s7333 = sld [smem:[#allocation15 + $0xe]]
    %v7334 = vstv %s7333
    %v7335 = vmul.f32 %v7334, %v5415
    %v7336 = vmul.f32 %v7334, %v5416
    %v7337 = vmul.f32 %v7334, %v5417
    %v7338 = vmul.f32 %v7334, %v5418
    %v7339 = vmul.f32 %v7334, %v5419
    %v7340 = vmul.f32 %v7334, %v5420
    %v7347 = vrot.slane %v7335, 1
    %v7348 = vrot.slane %v7336, 1
    %v7349 = vsel %vm881, %v7347, %v7348
    %v7350 = vrot.slane %v7337, 1
    %v7351 = vsel %vm881, %v7348, %v7350
    %v7352 = vrot.slane %v7338, 1
    %v7353 = vrot.slane %v7339, 1
    %v7354 = vsel %vm881, %v7352, %v7353
    %v7355 = vrot.slane %v7340, 1
    %v7356 = vsel %vm881, %v7353, %v7355
    %7357 = vrot.lane.b32.xlu0 %v7349, 126
    %v7358 = vpop.permute.xlu0 %7357
    %7359 = vrot.lane.b32.xlu0 %v7351, 126
    %v7360 = vpop.permute.xlu0 %7359
    %7361 = vrot.lane.b32.xlu0 %v7354, 126
    %v7362 = vpop.permute.xlu0 %7361
    %7363 = vrot.lane.b32.xlu0 %v7356, 126
    %v7364 = vpop.permute.xlu0 %7363
    %v7369 = vadd.f32 %v7209, %v7358
    %v7370 = vadd.f32 %v7210, %v7360
    %v7371 = vadd.f32 %v7211, %v7362
    %v7372 = vadd.f32 %v7212, %v7364
    %s7373 = sld [smem:[#allocation15 + $0x32]]
    %v7374 = vstv %s7373
    %v7375 = vmul.f32 %v7374, %v5415
    %v7376 = vmul.f32 %v7374, %v5416
    %v7377 = vmul.f32 %v7374, %v5417
    %v7378 = vmul.f32 %v7374, %v5418
    %v7379 = vmul.f32 %v7374, %v5419
    %v7380 = vmul.f32 %v7374, %v5420
    %v7387 = vrot.slane %v7375, 1
    %v7388 = vrot.slane %v7376, 1
    %v7389 = vsel %vm881, %v7387, %v7388
    %v7390 = vrot.slane %v7377, 1
    %v7391 = vsel %vm881, %v7388, %v7390
    %v7392 = vrot.slane %v7378, 1
    %v7393 = vrot.slane %v7379, 1
    %v7394 = vsel %vm881, %v7392, %v7393
    %v7395 = vrot.slane %v7380, 1
    %v7396 = vsel %vm881, %v7393, %v7395
    %7397 = vrot.lane.b32.xlu0 %v7389, 126
    %v7398 = vpop.permute.xlu0 %7397
    %7399 = vrot.lane.b32.xlu0 %v7391, 126
    %v7400 = vpop.permute.xlu0 %7399
    %7401 = vrot.lane.b32.xlu0 %v7394, 126
    %v7402 = vpop.permute.xlu0 %7401
    %7403 = vrot.lane.b32.xlu0 %v7396, 126
    %v7404 = vpop.permute.xlu0 %7403
    %v7409 = vadd.f32 %v7249, %v7398
    %v7410 = vadd.f32 %v7250, %v7400
    %v7411 = vadd.f32 %v7251, %v7402
    %v7412 = vadd.f32 %v7252, %v7404
    %s7413 = sld [smem:[#allocation15 + $0x56]]
    %v7414 = vstv %s7413
    %v7415 = vmul.f32 %v7414, %v5415
    %v7416 = vmul.f32 %v7414, %v5416
    %v7417 = vmul.f32 %v7414, %v5417
    %v7418 = vmul.f32 %v7414, %v5418
    %v7419 = vmul.f32 %v7414, %v5419
    %v7420 = vmul.f32 %v7414, %v5420
    %v7427 = vrot.slane %v7415, 1
    %v7428 = vrot.slane %v7416, 1
    %v7429 = vsel %vm881, %v7427, %v7428
    %v7430 = vrot.slane %v7417, 1
    %v7431 = vsel %vm881, %v7428, %v7430
    %v7432 = vrot.slane %v7418, 1
    %v7433 = vrot.slane %v7419, 1
    %v7434 = vsel %vm881, %v7432, %v7433
    %v7435 = vrot.slane %v7420, 1
    %v7436 = vsel %vm881, %v7433, %v7435
    %7437 = vrot.lane.b32.xlu0 %v7429, 126
    %v7438 = vpop.permute.xlu0 %7437
    %7439 = vrot.lane.b32.xlu0 %v7431, 126
    %v7440 = vpop.permute.xlu0 %7439
    %7441 = vrot.lane.b32.xlu0 %v7434, 126
    %v7442 = vpop.permute.xlu0 %7441
    %7443 = vrot.lane.b32.xlu0 %v7436, 126
    %v7444 = vpop.permute.xlu0 %7443
    %v7449 = vadd.f32 %v7289, %v7438
    %v7450 = vadd.f32 %v7290, %v7440
    %v7451 = vadd.f32 %v7291, %v7442
    %v7452 = vadd.f32 %v7292, %v7444
    %s7453 = sld [smem:[#allocation15 + $0x7a]]
    %v7454 = vstv %s7453
    %v7455 = vmul.f32 %v7454, %v5415
    %v7456 = vmul.f32 %v7454, %v5416
    %v7457 = vmul.f32 %v7454, %v5417
    %v7458 = vmul.f32 %v7454, %v5418
    %v7459 = vmul.f32 %v7454, %v5419
    %v7460 = vmul.f32 %v7454, %v5420
    %v7467 = vrot.slane %v7455, 1
    %v7468 = vrot.slane %v7456, 1
    %v7469 = vsel %vm881, %v7467, %v7468
    %v7470 = vrot.slane %v7457, 1
    %v7471 = vsel %vm881, %v7468, %v7470
    %v7472 = vrot.slane %v7458, 1
    %v7473 = vrot.slane %v7459, 1
    %v7474 = vsel %vm881, %v7472, %v7473
    %v7475 = vrot.slane %v7460, 1
    %v7476 = vsel %vm881, %v7473, %v7475
    %7477 = vrot.lane.b32.xlu0 %v7469, 126
    %v7478 = vpop.permute.xlu0 %7477
    %7479 = vrot.lane.b32.xlu0 %v7471, 126
    %v7480 = vpop.permute.xlu0 %7479
    %7481 = vrot.lane.b32.xlu0 %v7474, 126
    %v7482 = vpop.permute.xlu0 %7481
    %7483 = vrot.lane.b32.xlu0 %v7476, 126
    %v7484 = vpop.permute.xlu0 %7483
    %v7489 = vadd.f32 %v7329, %v7478
    %v7490 = vadd.f32 %v7330, %v7480
    %v7491 = vadd.f32 %v7331, %v7482
    %v7492 = vadd.f32 %v7332, %v7484
    %s7493 = sld [smem:[#allocation15 + $0xf]]
    %v7494 = vstv %s7493
    %v7495 = vmul.f32 %v7494, %v5415
    %v7496 = vmul.f32 %v7494, %v5416
    %v7497 = vmul.f32 %v7494, %v5417
    %v7498 = vmul.f32 %v7494, %v5418
    %v7499 = vmul.f32 %v7494, %v5419
    %v7500 = vmul.f32 %v7494, %v5420
    %v7507 = vrot.slane %v7495, 2
    %v7508 = vrot.slane %v7496, 2
    %v7509 = vsel %vm1330, %v7507, %v7508
    %v7510 = vrot.slane %v7497, 2
    %v7511 = vsel %vm1330, %v7508, %v7510
    %v7512 = vrot.slane %v7498, 2
    %v7513 = vrot.slane %v7499, 2
    %v7514 = vsel %vm1330, %v7512, %v7513
    %v7515 = vrot.slane %v7500, 2
    %v7516 = vsel %vm1330, %v7513, %v7515
    %v7521 = vadd.f32 %v7369, %v7509
    %v7522 = vadd.f32 %v7370, %v7511
    %v7523 = vadd.f32 %v7371, %v7514
    %v7524 = vadd.f32 %v7372, %v7516
    %s7525 = sld [smem:[#allocation15 + $0x33]]
    %v7526 = vstv %s7525
    %v7527 = vmul.f32 %v7526, %v5415
    %v7528 = vmul.f32 %v7526, %v5416
    %v7529 = vmul.f32 %v7526, %v5417
    %v7530 = vmul.f32 %v7526, %v5418
    %v7531 = vmul.f32 %v7526, %v5419
    %v7532 = vmul.f32 %v7526, %v5420
    %v7539 = vrot.slane %v7527, 2
    %v7540 = vrot.slane %v7528, 2
    %v7541 = vsel %vm1330, %v7539, %v7540
    %v7542 = vrot.slane %v7529, 2
    %v7543 = vsel %vm1330, %v7540, %v7542
    %v7544 = vrot.slane %v7530, 2
    %v7545 = vrot.slane %v7531, 2
    %v7546 = vsel %vm1330, %v7544, %v7545
    %v7547 = vrot.slane %v7532, 2
    %v7548 = vsel %vm1330, %v7545, %v7547
    %v7553 = vadd.f32 %v7409, %v7541
    %v7554 = vadd.f32 %v7410, %v7543
    %v7555 = vadd.f32 %v7411, %v7546
    %v7556 = vadd.f32 %v7412, %v7548
    %s7557 = sld [smem:[#allocation15 + $0x57]]
    %v7558 = vstv %s7557
    %v7559 = vmul.f32 %v7558, %v5415
    %v7560 = vmul.f32 %v7558, %v5416
    %v7561 = vmul.f32 %v7558, %v5417
    %v7562 = vmul.f32 %v7558, %v5418
    %v7563 = vmul.f32 %v7558, %v5419
    %v7564 = vmul.f32 %v7558, %v5420
    %v7571 = vrot.slane %v7559, 2
    %v7572 = vrot.slane %v7560, 2
    %v7573 = vsel %vm1330, %v7571, %v7572
    %v7574 = vrot.slane %v7561, 2
    %v7575 = vsel %vm1330, %v7572, %v7574
    %v7576 = vrot.slane %v7562, 2
    %v7577 = vrot.slane %v7563, 2
    %v7578 = vsel %vm1330, %v7576, %v7577
    %v7579 = vrot.slane %v7564, 2
    %v7580 = vsel %vm1330, %v7577, %v7579
    %v7585 = vadd.f32 %v7449, %v7573
    %v7586 = vadd.f32 %v7450, %v7575
    %v7587 = vadd.f32 %v7451, %v7578
    %v7588 = vadd.f32 %v7452, %v7580
    %s7589 = sld [smem:[#allocation15 + $0x7b]]
    %v7590 = vstv %s7589
    %v7591 = vmul.f32 %v7590, %v5415
    %v7592 = vmul.f32 %v7590, %v5416
    %v7593 = vmul.f32 %v7590, %v5417
    %v7594 = vmul.f32 %v7590, %v5418
    %v7595 = vmul.f32 %v7590, %v5419
    %v7596 = vmul.f32 %v7590, %v5420
    %v7603 = vrot.slane %v7591, 2
    %v7604 = vrot.slane %v7592, 2
    %v7605 = vsel %vm1330, %v7603, %v7604
    %v7606 = vrot.slane %v7593, 2
    %v7607 = vsel %vm1330, %v7604, %v7606
    %v7608 = vrot.slane %v7594, 2
    %v7609 = vrot.slane %v7595, 2
    %v7610 = vsel %vm1330, %v7608, %v7609
    %v7611 = vrot.slane %v7596, 2
    %v7612 = vsel %vm1330, %v7609, %v7611
    %v7617 = vadd.f32 %v7489, %v7605
    %v7618 = vadd.f32 %v7490, %v7607
    %v7619 = vadd.f32 %v7491, %v7610
    %v7620 = vadd.f32 %v7492, %v7612
    %s7621 = sld [smem:[#allocation15 + $0x10]]
    %v7622 = vstv %s7621
    %v7623 = vmul.f32 %v7622, %v5415
    %v7624 = vmul.f32 %v7622, %v5416
    %v7625 = vmul.f32 %v7622, %v5417
    %v7626 = vmul.f32 %v7622, %v5418
    %v7627 = vmul.f32 %v7622, %v5419
    %v7628 = vmul.f32 %v7622, %v5420
    %v7635 = vrot.slane %v7623, 2
    %v7636 = vrot.slane %v7624, 2
    %v7637 = vsel %vm1330, %v7635, %v7636
    %v7638 = vrot.slane %v7625, 2
    %v7639 = vsel %vm1330, %v7636, %v7638
    %v7640 = vrot.slane %v7626, 2
    %v7641 = vrot.slane %v7627, 2
    %v7642 = vsel %vm1330, %v7640, %v7641
    %v7643 = vrot.slane %v7628, 2
    %v7644 = vsel %vm1330, %v7641, %v7643
    %7645 = vrot.lane.b32.xlu0 %v7637, 127
    %v7646 = vpop.permute.xlu0 %7645
    %7647 = vrot.lane.b32.xlu0 %v7639, 127
    %v7648 = vpop.permute.xlu0 %7647
    %7649 = vrot.lane.b32.xlu0 %v7642, 127
    %v7650 = vpop.permute.xlu0 %7649
    %7651 = vrot.lane.b32.xlu0 %v7644, 127
    %v7652 = vpop.permute.xlu0 %7651
    %v7657 = vadd.f32 %v7521, %v7646
    %v7658 = vadd.f32 %v7522, %v7648
    %v7659 = vadd.f32 %v7523, %v7650
    %v7660 = vadd.f32 %v7524, %v7652
    %s7661 = sld [smem:[#allocation15 + $0x34]]
    %v7662 = vstv %s7661
    %v7663 = vmul.f32 %v7662, %v5415
    %v7664 = vmul.f32 %v7662, %v5416
    %v7665 = vmul.f32 %v7662, %v5417
    %v7666 = vmul.f32 %v7662, %v5418
    %v7667 = vmul.f32 %v7662, %v5419
    %v7668 = vmul.f32 %v7662, %v5420
    %v7675 = vrot.slane %v7663, 2
    %v7676 = vrot.slane %v7664, 2
    %v7677 = vsel %vm1330, %v7675, %v7676
    %v7678 = vrot.slane %v7665, 2
    %v7679 = vsel %vm1330, %v7676, %v7678
    %v7680 = vrot.slane %v7666, 2
    %v7681 = vrot.slane %v7667, 2
    %v7682 = vsel %vm1330, %v7680, %v7681
    %v7683 = vrot.slane %v7668, 2
    %v7684 = vsel %vm1330, %v7681, %v7683
    %7685 = vrot.lane.b32.xlu0 %v7677, 127
    %v7686 = vpop.permute.xlu0 %7685
    %7687 = vrot.lane.b32.xlu0 %v7679, 127
    %v7688 = vpop.permute.xlu0 %7687
    %7689 = vrot.lane.b32.xlu0 %v7682, 127
    %v7690 = vpop.permute.xlu0 %7689
    %7691 = vrot.lane.b32.xlu0 %v7684, 127
    %v7692 = vpop.permute.xlu0 %7691
    %v7697 = vadd.f32 %v7553, %v7686
    %v7698 = vadd.f32 %v7554, %v7688
    %v7699 = vadd.f32 %v7555, %v7690
    %v7700 = vadd.f32 %v7556, %v7692
    %s7701 = sld [smem:[#allocation15 + $0x58]]
    %v7702 = vstv %s7701
    %v7703 = vmul.f32 %v7702, %v5415
    %v7704 = vmul.f32 %v7702, %v5416
    %v7705 = vmul.f32 %v7702, %v5417
    %v7706 = vmul.f32 %v7702, %v5418
    %v7707 = vmul.f32 %v7702, %v5419
    %v7708 = vmul.f32 %v7702, %v5420
    %v7715 = vrot.slane %v7703, 2
    %v7716 = vrot.slane %v7704, 2
    %v7717 = vsel %vm1330, %v7715, %v7716
    %v7718 = vrot.slane %v7705, 2
    %v7719 = vsel %vm1330, %v7716, %v7718
    %v7720 = vrot.slane %v7706, 2
    %v7721 = vrot.slane %v7707, 2
    %v7722 = vsel %vm1330, %v7720, %v7721
    %v7723 = vrot.slane %v7708, 2
    %v7724 = vsel %vm1330, %v7721, %v7723
    %7725 = vrot.lane.b32.xlu0 %v7717, 127
    %v7726 = vpop.permute.xlu0 %7725
    %7727 = vrot.lane.b32.xlu0 %v7719, 127
    %v7728 = vpop.permute.xlu0 %7727
    %7729 = vrot.lane.b32.xlu0 %v7722, 127
    %v7730 = vpop.permute.xlu0 %7729
    %7731 = vrot.lane.b32.xlu0 %v7724, 127
    %v7732 = vpop.permute.xlu0 %7731
    %v7737 = vadd.f32 %v7585, %v7726
    %v7738 = vadd.f32 %v7586, %v7728
    %v7739 = vadd.f32 %v7587, %v7730
    %v7740 = vadd.f32 %v7588, %v7732
    %s7741 = sld [smem:[#allocation15 + $0x7c]]
    %v7742 = vstv %s7741
    %v7743 = vmul.f32 %v7742, %v5415
    %v7744 = vmul.f32 %v7742, %v5416
    %v7745 = vmul.f32 %v7742, %v5417
    %v7746 = vmul.f32 %v7742, %v5418
    %v7747 = vmul.f32 %v7742, %v5419
    %v7748 = vmul.f32 %v7742, %v5420
    %v7755 = vrot.slane %v7743, 2
    %v7756 = vrot.slane %v7744, 2
    %v7757 = vsel %vm1330, %v7755, %v7756
    %v7758 = vrot.slane %v7745, 2
    %v7759 = vsel %vm1330, %v7756, %v7758
    %v7760 = vrot.slane %v7746, 2
    %v7761 = vrot.slane %v7747, 2
    %v7762 = vsel %vm1330, %v7760, %v7761
    %v7763 = vrot.slane %v7748, 2
    %v7764 = vsel %vm1330, %v7761, %v7763
    %7765 = vrot.lane.b32.xlu0 %v7757, 127
    %v7766 = vpop.permute.xlu0 %7765
    %7767 = vrot.lane.b32.xlu0 %v7759, 127
    %v7768 = vpop.permute.xlu0 %7767
    %7769 = vrot.lane.b32.xlu0 %v7762, 127
    %v7770 = vpop.permute.xlu0 %7769
    %7771 = vrot.lane.b32.xlu0 %v7764, 127
    %v7772 = vpop.permute.xlu0 %7771
    %v7777 = vadd.f32 %v7617, %v7766
    %v7778 = vadd.f32 %v7618, %v7768
    %v7779 = vadd.f32 %v7619, %v7770
    %v7780 = vadd.f32 %v7620, %v7772
    %s7781 = sld [smem:[#allocation15 + $0x11]]
    %v7782 = vstv %s7781
    %v7783 = vmul.f32 %v7782, %v5415
    %v7784 = vmul.f32 %v7782, %v5416
    %v7785 = vmul.f32 %v7782, %v5417
    %v7786 = vmul.f32 %v7782, %v5418
    %v7787 = vmul.f32 %v7782, %v5419
    %v7788 = vmul.f32 %v7782, %v5420
    %v7795 = vrot.slane %v7783, 2
    %v7796 = vrot.slane %v7784, 2
    %v7797 = vsel %vm1330, %v7795, %v7796
    %v7798 = vrot.slane %v7785, 2
    %v7799 = vsel %vm1330, %v7796, %v7798
    %v7800 = vrot.slane %v7786, 2
    %v7801 = vrot.slane %v7787, 2
    %v7802 = vsel %vm1330, %v7800, %v7801
    %v7803 = vrot.slane %v7788, 2
    %v7804 = vsel %vm1330, %v7801, %v7803
    %7805 = vrot.lane.b32.xlu0 %v7797, 126
    %v7806 = vpop.permute.xlu0 %7805
    %7807 = vrot.lane.b32.xlu0 %v7799, 126
    %v7808 = vpop.permute.xlu0 %7807
    %7809 = vrot.lane.b32.xlu0 %v7802, 126
    %v7810 = vpop.permute.xlu0 %7809
    %7811 = vrot.lane.b32.xlu0 %v7804, 126
    %v7812 = vpop.permute.xlu0 %7811
    %v7817 = vadd.f32 %v7657, %v7806
    %v7818 = vadd.f32 %v7658, %v7808
    %v7819 = vadd.f32 %v7659, %v7810
    %v7820 = vadd.f32 %v7660, %v7812
    %s7821 = sld [smem:[#allocation15 + $0x35]]
    %v7822 = vstv %s7821
    %v7823 = vmul.f32 %v7822, %v5415
    %v7824 = vmul.f32 %v7822, %v5416
    %v7825 = vmul.f32 %v7822, %v5417
    %v7826 = vmul.f32 %v7822, %v5418
    %v7827 = vmul.f32 %v7822, %v5419
    %v7828 = vmul.f32 %v7822, %v5420
    %v7835 = vrot.slane %v7823, 2
    %v7836 = vrot.slane %v7824, 2
    %v7837 = vsel %vm1330, %v7835, %v7836
    %v7838 = vrot.slane %v7825, 2
    %v7839 = vsel %vm1330, %v7836, %v7838
    %v7840 = vrot.slane %v7826, 2
    %v7841 = vrot.slane %v7827, 2
    %v7842 = vsel %vm1330, %v7840, %v7841
    %v7843 = vrot.slane %v7828, 2
    %v7844 = vsel %vm1330, %v7841, %v7843
    %7845 = vrot.lane.b32.xlu0 %v7837, 126
    %v7846 = vpop.permute.xlu0 %7845
    %7847 = vrot.lane.b32.xlu0 %v7839, 126
    %v7848 = vpop.permute.xlu0 %7847
    %7849 = vrot.lane.b32.xlu0 %v7842, 126
    %v7850 = vpop.permute.xlu0 %7849
    %7851 = vrot.lane.b32.xlu0 %v7844, 126
    %v7852 = vpop.permute.xlu0 %7851
    %v7857 = vadd.f32 %v7697, %v7846
    %v7858 = vadd.f32 %v7698, %v7848
    %v7859 = vadd.f32 %v7699, %v7850
    %v7860 = vadd.f32 %v7700, %v7852
    %s7861 = sld [smem:[#allocation15 + $0x59]]
    %v7862 = vstv %s7861
    %v7863 = vmul.f32 %v7862, %v5415
    %v7864 = vmul.f32 %v7862, %v5416
    %v7865 = vmul.f32 %v7862, %v5417
    %v7866 = vmul.f32 %v7862, %v5418
    %v7867 = vmul.f32 %v7862, %v5419
    %v7868 = vmul.f32 %v7862, %v5420
    %v7875 = vrot.slane %v7863, 2
    %v7876 = vrot.slane %v7864, 2
    %v7877 = vsel %vm1330, %v7875, %v7876
    %v7878 = vrot.slane %v7865, 2
    %v7879 = vsel %vm1330, %v7876, %v7878
    %v7880 = vrot.slane %v7866, 2
    %v7881 = vrot.slane %v7867, 2
    %v7882 = vsel %vm1330, %v7880, %v7881
    %v7883 = vrot.slane %v7868, 2
    %v7884 = vsel %vm1330, %v7881, %v7883
    %7885 = vrot.lane.b32.xlu0 %v7877, 126
    %v7886 = vpop.permute.xlu0 %7885
    %7887 = vrot.lane.b32.xlu0 %v7879, 126
    %v7888 = vpop.permute.xlu0 %7887
    %7889 = vrot.lane.b32.xlu0 %v7882, 126
    %v7890 = vpop.permute.xlu0 %7889
    %7891 = vrot.lane.b32.xlu0 %v7884, 126
    %v7892 = vpop.permute.xlu0 %7891
    %v7897 = vadd.f32 %v7737, %v7886
    %v7898 = vadd.f32 %v7738, %v7888
    %v7899 = vadd.f32 %v7739, %v7890
    %v7900 = vadd.f32 %v7740, %v7892
    %s7901 = sld [smem:[#allocation15 + $0x7d]]
    %v7902 = vstv %s7901
    %v7903 = vmul.f32 %v7902, %v5415
    %v7904 = vmul.f32 %v7902, %v5416
    %v7905 = vmul.f32 %v7902, %v5417
    %v7906 = vmul.f32 %v7902, %v5418
    %v7907 = vmul.f32 %v7902, %v5419
    %v7908 = vmul.f32 %v7902, %v5420
    %v7915 = vrot.slane %v7903, 2
    %v7916 = vrot.slane %v7904, 2
    %v7917 = vsel %vm1330, %v7915, %v7916
    %v7918 = vrot.slane %v7905, 2
    %v7919 = vsel %vm1330, %v7916, %v7918
    %v7920 = vrot.slane %v7906, 2
    %v7921 = vrot.slane %v7907, 2
    %v7922 = vsel %vm1330, %v7920, %v7921
    %v7923 = vrot.slane %v7908, 2
    %v7924 = vsel %vm1330, %v7921, %v7923
    %7925 = vrot.lane.b32.xlu0 %v7917, 126
    %v7926 = vpop.permute.xlu0 %7925
    %7927 = vrot.lane.b32.xlu0 %v7919, 126
    %v7928 = vpop.permute.xlu0 %7927
    %7929 = vrot.lane.b32.xlu0 %v7922, 126
    %v7930 = vpop.permute.xlu0 %7929
    %7931 = vrot.lane.b32.xlu0 %v7924, 126
    %v7932 = vpop.permute.xlu0 %7931
    %v7937 = vadd.f32 %v7777, %v7926
    %v7938 = vadd.f32 %v7778, %v7928
    %v7939 = vadd.f32 %v7779, %v7930
    %v7940 = vadd.f32 %v7780, %v7932
    %s7941 = sld [smem:[#allocation15 + $0x12]]
    %v7942 = vstv %s7941
    %v7943 = vmul.f32 %v7942, %v5527
    %v7944 = vmul.f32 %v7942, %v5528
    %v7945 = vmul.f32 %v7942, %v5530
    %v7946 = vmul.f32 %v7942, %v5531
    %v7947 = vadd.f32 %v7817, %v7943
    %v7948 = vadd.f32 %v7818, %v7944
    %v7949 = vadd.f32 %v7819, %v7945
    %v7950 = vadd.f32 %v7820, %v7946
    %s7951 = sld [smem:[#allocation15 + $0x36]]
    %v7952 = vstv %s7951
    %v7953 = vmul.f32 %v7952, %v5527
    %v7954 = vmul.f32 %v7952, %v5528
    %v7955 = vmul.f32 %v7952, %v5530
    %v7956 = vmul.f32 %v7952, %v5531
    %v7957 = vadd.f32 %v7857, %v7953
    %v7958 = vadd.f32 %v7858, %v7954
    %v7959 = vadd.f32 %v7859, %v7955
    %v7960 = vadd.f32 %v7860, %v7956
    %s7961 = sld [smem:[#allocation15 + $0x5a]]
    %v7962 = vstv %s7961
    %v7963 = vmul.f32 %v7962, %v5527
    %v7964 = vmul.f32 %v7962, %v5528
    %v7965 = vmul.f32 %v7962, %v5530
    %v7966 = vmul.f32 %v7962, %v5531
    %v7967 = vadd.f32 %v7897, %v7963
    %v7968 = vadd.f32 %v7898, %v7964
    %v7969 = vadd.f32 %v7899, %v7965
    %v7970 = vadd.f32 %v7900, %v7966
    %s7971 = sld [smem:[#allocation15 + $0x7e]]
    %v7972 = vstv %s7971
    %v7973 = vmul.f32 %v7972, %v5527
    %v7974 = vmul.f32 %v7972, %v5528
    %v7975 = vmul.f32 %v7972, %v5530
    %v7976 = vmul.f32 %v7972, %v5531
    %v7977 = vadd.f32 %v7937, %v7973
    %v7978 = vadd.f32 %v7938, %v7974
    %v7979 = vadd.f32 %v7939, %v7975
    %v7980 = vadd.f32 %v7940, %v7976
    %s7981 = sld [smem:[#allocation15 + $0x13]]
    %v7982 = vstv %s7981
    %v7983 = vmul.f32 %v7982, %v5527
    %v7984 = vmul.f32 %v7982, %v5528
    %v7985 = vmul.f32 %v7982, %v5530
    %v7986 = vmul.f32 %v7982, %v5531
    %7991 = vrot.lane.b32.xlu0 %v7983, 127
    %v7992 = vpop.permute.xlu0 %7991
    %7993 = vrot.lane.b32.xlu0 %v7984, 127
    %v7994 = vpop.permute.xlu0 %7993
    %7995 = vrot.lane.b32.xlu0 %v7985, 127
    %v7996 = vpop.permute.xlu0 %7995
    %7997 = vrot.lane.b32.xlu0 %v7986, 127
    %v7998 = vpop.permute.xlu0 %7997
    %v8003 = vadd.f32 %v7947, %v7992
    %v8004 = vadd.f32 %v7948, %v7994
    %v8005 = vadd.f32 %v7949, %v7996
    %v8006 = vadd.f32 %v7950, %v7998
    %s8007 = sld [smem:[#allocation15 + $0x37]]
    %v8008 = vstv %s8007
    %v8009 = vmul.f32 %v8008, %v5527
    %v8010 = vmul.f32 %v8008, %v5528
    %v8011 = vmul.f32 %v8008, %v5530
    %v8012 = vmul.f32 %v8008, %v5531
    %8017 = vrot.lane.b32.xlu0 %v8009, 127
    %v8018 = vpop.permute.xlu0 %8017
    %8019 = vrot.lane.b32.xlu0 %v8010, 127
    %v8020 = vpop.permute.xlu0 %8019
    %8021 = vrot.lane.b32.xlu0 %v8011, 127
    %v8022 = vpop.permute.xlu0 %8021
    %8023 = vrot.lane.b32.xlu0 %v8012, 127
    %v8024 = vpop.permute.xlu0 %8023
    %v8029 = vadd.f32 %v7957, %v8018
    %v8030 = vadd.f32 %v7958, %v8020
    %v8031 = vadd.f32 %v7959, %v8022
    %v8032 = vadd.f32 %v7960, %v8024
    %s8033 = sld [smem:[#allocation15 + $0x5b]]
    %v8034 = vstv %s8033
    %v8035 = vmul.f32 %v8034, %v5527
    %v8036 = vmul.f32 %v8034, %v5528
    %v8037 = vmul.f32 %v8034, %v5530
    %v8038 = vmul.f32 %v8034, %v5531
    %8043 = vrot.lane.b32.xlu0 %v8035, 127
    %v8044 = vpop.permute.xlu0 %8043
    %8045 = vrot.lane.b32.xlu0 %v8036, 127
    %v8046 = vpop.permute.xlu0 %8045
    %8047 = vrot.lane.b32.xlu0 %v8037, 127
    %v8048 = vpop.permute.xlu0 %8047
    %8049 = vrot.lane.b32.xlu0 %v8038, 127
    %v8050 = vpop.permute.xlu0 %8049
    %v8055 = vadd.f32 %v7967, %v8044
    %v8056 = vadd.f32 %v7968, %v8046
    %v8057 = vadd.f32 %v7969, %v8048
    %v8058 = vadd.f32 %v7970, %v8050
    %s8059 = sld [smem:[#allocation15 + $0x7f]]
    %v8060 = vstv %s8059
    %v8061 = vmul.f32 %v8060, %v5527
    %v8062 = vmul.f32 %v8060, %v5528
    %v8063 = vmul.f32 %v8060, %v5530
    %v8064 = vmul.f32 %v8060, %v5531
    %8069 = vrot.lane.b32.xlu0 %v8061, 127
    %v8070 = vpop.permute.xlu0 %8069
    %8071 = vrot.lane.b32.xlu0 %v8062, 127
    %v8072 = vpop.permute.xlu0 %8071
    %8073 = vrot.lane.b32.xlu0 %v8063, 127
    %v8074 = vpop.permute.xlu0 %8073
    %8075 = vrot.lane.b32.xlu0 %v8064, 127
    %v8076 = vpop.permute.xlu0 %8075
    %v8081 = vadd.f32 %v7977, %v8070
    %v8082 = vadd.f32 %v7978, %v8072
    %v8083 = vadd.f32 %v7979, %v8074
    %v8084 = vadd.f32 %v7980, %v8076
    %s8085 = sld [smem:[#allocation15 + $0x14]]
    %v8086 = vstv %s8085
    %v8087 = vmul.f32 %v8086, %v5527
    %v8088 = vmul.f32 %v8086, %v5528
    %v8089 = vmul.f32 %v8086, %v5530
    %v8090 = vmul.f32 %v8086, %v5531
    %8095 = vrot.lane.b32.xlu0 %v8087, 126
    %v8096 = vpop.permute.xlu0 %8095
    %8097 = vrot.lane.b32.xlu0 %v8088, 126
    %v8098 = vpop.permute.xlu0 %8097
    %8099 = vrot.lane.b32.xlu0 %v8089, 126
    %v8100 = vpop.permute.xlu0 %8099
    %8101 = vrot.lane.b32.xlu0 %v8090, 126
    %v8102 = vpop.permute.xlu0 %8101
    %v8107 = vadd.f32 %v8003, %v8096
    %v8108 = vadd.f32 %v8004, %v8098
    %v8109 = vadd.f32 %v8005, %v8100
    %v8110 = vadd.f32 %v8006, %v8102
    %s8111 = sld [smem:[#allocation15 + $0x38]]
    %v8112 = vstv %s8111
    %v8113 = vmul.f32 %v8112, %v5527
    %v8114 = vmul.f32 %v8112, %v5528
    %v8115 = vmul.f32 %v8112, %v5530
    %v8116 = vmul.f32 %v8112, %v5531
    %8121 = vrot.lane.b32.xlu0 %v8113, 126
    %v8122 = vpop.permute.xlu0 %8121
    %8123 = vrot.lane.b32.xlu0 %v8114, 126
    %v8124 = vpop.permute.xlu0 %8123
    %8125 = vrot.lane.b32.xlu0 %v8115, 126
    %v8126 = vpop.permute.xlu0 %8125
    %8127 = vrot.lane.b32.xlu0 %v8116, 126
    %v8128 = vpop.permute.xlu0 %8127
    %v8133 = vadd.f32 %v8029, %v8122
    %v8134 = vadd.f32 %v8030, %v8124
    %v8135 = vadd.f32 %v8031, %v8126
    %v8136 = vadd.f32 %v8032, %v8128
    %s8137 = sld [smem:[#allocation15 + $0x5c]]
    %v8138 = vstv %s8137
    %v8139 = vmul.f32 %v8138, %v5527
    %v8140 = vmul.f32 %v8138, %v5528
    %v8141 = vmul.f32 %v8138, %v5530
    %v8142 = vmul.f32 %v8138, %v5531
    %8147 = vrot.lane.b32.xlu0 %v8139, 126
    %v8148 = vpop.permute.xlu0 %8147
    %8149 = vrot.lane.b32.xlu0 %v8140, 126
    %v8150 = vpop.permute.xlu0 %8149
    %8151 = vrot.lane.b32.xlu0 %v8141, 126
    %v8152 = vpop.permute.xlu0 %8151
    %8153 = vrot.lane.b32.xlu0 %v8142, 126
    %v8154 = vpop.permute.xlu0 %8153
    %v8159 = vadd.f32 %v8055, %v8148
    %v8160 = vadd.f32 %v8056, %v8150
    %v8161 = vadd.f32 %v8057, %v8152
    %v8162 = vadd.f32 %v8058, %v8154
    %s8163 = sld [smem:[#allocation15 + $0x80]]
    %v8164 = vstv %s8163
    %v8165 = vmul.f32 %v8164, %v5527
    %v8166 = vmul.f32 %v8164, %v5528
    %v8167 = vmul.f32 %v8164, %v5530
    %v8168 = vmul.f32 %v8164, %v5531
    %8173 = vrot.lane.b32.xlu0 %v8165, 126
    %v8174 = vpop.permute.xlu0 %8173
    %8175 = vrot.lane.b32.xlu0 %v8166, 126
    %v8176 = vpop.permute.xlu0 %8175
    %8177 = vrot.lane.b32.xlu0 %v8167, 126
    %v8178 = vpop.permute.xlu0 %8177
    %8179 = vrot.lane.b32.xlu0 %v8168, 126
    %v8180 = vpop.permute.xlu0 %8179
    %v8185 = vadd.f32 %v8081, %v8174
    %v8186 = vadd.f32 %v8082, %v8176
    %v8187 = vadd.f32 %v8083, %v8178
    %v8188 = vadd.f32 %v8084, %v8180
    %s8189 = sld [smem:[#allocation15 + $0x15]]
    %v8190 = vstv %s8189
    %v8191 = vmul.f32 %v8190, %v5527
    %v8192 = vmul.f32 %v8190, %v5528
    %v8193 = vmul.f32 %v8190, %v5529
    %v8194 = vmul.f32 %v8190, %v5530
    %v8195 = vmul.f32 %v8190, %v5531
    %v8196 = vmul.f32 %v8190, %v5532
    %v8203 = vrot.slane %v8191, 1
    %v8204 = vrot.slane %v8192, 1
    %v8205 = vsel %vm881, %v8203, %v8204
    %v8206 = vrot.slane %v8193, 1
    %v8207 = vsel %vm881, %v8204, %v8206
    %v8208 = vrot.slane %v8194, 1
    %v8209 = vrot.slane %v8195, 1
    %v8210 = vsel %vm881, %v8208, %v8209
    %v8211 = vrot.slane %v8196, 1
    %v8212 = vsel %vm881, %v8209, %v8211
    %v8217 = vadd.f32 %v8107, %v8205
    %v8218 = vadd.f32 %v8108, %v8207
    %v8219 = vadd.f32 %v8109, %v8210
    %v8220 = vadd.f32 %v8110, %v8212
    %s8221 = sld [smem:[#allocation15 + $0x39]]
    %v8222 = vstv %s8221
    %v8223 = vmul.f32 %v8222, %v5527
    %v8224 = vmul.f32 %v8222, %v5528
    %v8225 = vmul.f32 %v8222, %v5529
    %v8226 = vmul.f32 %v8222, %v5530
    %v8227 = vmul.f32 %v8222, %v5531
    %v8228 = vmul.f32 %v8222, %v5532
    %v8235 = vrot.slane %v8223, 1
    %v8236 = vrot.slane %v8224, 1
    %v8237 = vsel %vm881, %v8235, %v8236
    %v8238 = vrot.slane %v8225, 1
    %v8239 = vsel %vm881, %v8236, %v8238
    %v8240 = vrot.slane %v8226, 1
    %v8241 = vrot.slane %v8227, 1
    %v8242 = vsel %vm881, %v8240, %v8241
    %v8243 = vrot.slane %v8228, 1
    %v8244 = vsel %vm881, %v8241, %v8243
    %v8249 = vadd.f32 %v8133, %v8237
    %v8250 = vadd.f32 %v8134, %v8239
    %v8251 = vadd.f32 %v8135, %v8242
    %v8252 = vadd.f32 %v8136, %v8244
    %s8253 = sld [smem:[#allocation15 + $0x5d]]
    %v8254 = vstv %s8253
    %v8255 = vmul.f32 %v8254, %v5527
    %v8256 = vmul.f32 %v8254, %v5528
    %v8257 = vmul.f32 %v8254, %v5529
    %v8258 = vmul.f32 %v8254, %v5530
    %v8259 = vmul.f32 %v8254, %v5531
    %v8260 = vmul.f32 %v8254, %v5532
    %v8267 = vrot.slane %v8255, 1
    %v8268 = vrot.slane %v8256, 1
    %v8269 = vsel %vm881, %v8267, %v8268
    %v8270 = vrot.slane %v8257, 1
    %v8271 = vsel %vm881, %v8268, %v8270
    %v8272 = vrot.slane %v8258, 1
    %v8273 = vrot.slane %v8259, 1
    %v8274 = vsel %vm881, %v8272, %v8273
    %v8275 = vrot.slane %v8260, 1
    %v8276 = vsel %vm881, %v8273, %v8275
    %v8281 = vadd.f32 %v8159, %v8269
    %v8282 = vadd.f32 %v8160, %v8271
    %v8283 = vadd.f32 %v8161, %v8274
    %v8284 = vadd.f32 %v8162, %v8276
    %s8285 = sld [smem:[#allocation15 + $0x81]]
    %v8286 = vstv %s8285
    %v8287 = vmul.f32 %v8286, %v5527
    %v8288 = vmul.f32 %v8286, %v5528
    %v8289 = vmul.f32 %v8286, %v5529
    %v8290 = vmul.f32 %v8286, %v5530
    %v8291 = vmul.f32 %v8286, %v5531
    %v8292 = vmul.f32 %v8286, %v5532
    %v8299 = vrot.slane %v8287, 1
    %v8300 = vrot.slane %v8288, 1
    %v8301 = vsel %vm881, %v8299, %v8300
    %v8302 = vrot.slane %v8289, 1
    %v8303 = vsel %vm881, %v8300, %v8302
    %v8304 = vrot.slane %v8290, 1
    %v8305 = vrot.slane %v8291, 1
    %v8306 = vsel %vm881, %v8304, %v8305
    %v8307 = vrot.slane %v8292, 1
    %v8308 = vsel %vm881, %v8305, %v8307
    %v8313 = vadd.f32 %v8185, %v8301
    %v8314 = vadd.f32 %v8186, %v8303
    %v8315 = vadd.f32 %v8187, %v8306
    %v8316 = vadd.f32 %v8188, %v8308
    %s8317 = sld [smem:[#allocation15 + $0x16]]
    %v8318 = vstv %s8317
    %v8319 = vmul.f32 %v8318, %v5527
    %v8320 = vmul.f32 %v8318, %v5528
    %v8321 = vmul.f32 %v8318, %v5529
    %v8322 = vmul.f32 %v8318, %v5530
    %v8323 = vmul.f32 %v8318, %v5531
    %v8324 = vmul.f32 %v8318, %v5532
    %v8331 = vrot.slane %v8319, 1
    %v8332 = vrot.slane %v8320, 1
    %v8333 = vsel %vm881, %v8331, %v8332
    %v8334 = vrot.slane %v8321, 1
    %v8335 = vsel %vm881, %v8332, %v8334
    %v8336 = vrot.slane %v8322, 1
    %v8337 = vrot.slane %v8323, 1
    %v8338 = vsel %vm881, %v8336, %v8337
    %v8339 = vrot.slane %v8324, 1
    %v8340 = vsel %vm881, %v8337, %v8339
    %8341 = vrot.lane.b32.xlu0 %v8333, 127
    %v8342 = vpop.permute.xlu0 %8341
    %8343 = vrot.lane.b32.xlu0 %v8335, 127
    %v8344 = vpop.permute.xlu0 %8343
    %8345 = vrot.lane.b32.xlu0 %v8338, 127
    %v8346 = vpop.permute.xlu0 %8345
    %8347 = vrot.lane.b32.xlu0 %v8340, 127
    %v8348 = vpop.permute.xlu0 %8347
    %v8353 = vadd.f32 %v8217, %v8342
    %v8354 = vadd.f32 %v8218, %v8344
    %v8355 = vadd.f32 %v8219, %v8346
    %v8356 = vadd.f32 %v8220, %v8348
    %s8357 = sld [smem:[#allocation15 + $0x3a]]
    %v8358 = vstv %s8357
    %v8359 = vmul.f32 %v8358, %v5527
    %v8360 = vmul.f32 %v8358, %v5528
    %v8361 = vmul.f32 %v8358, %v5529
    %v8362 = vmul.f32 %v8358, %v5530
    %v8363 = vmul.f32 %v8358, %v5531
    %v8364 = vmul.f32 %v8358, %v5532
    %v8371 = vrot.slane %v8359, 1
    %v8372 = vrot.slane %v8360, 1
    %v8373 = vsel %vm881, %v8371, %v8372
    %v8374 = vrot.slane %v8361, 1
    %v8375 = vsel %vm881, %v8372, %v8374
    %v8376 = vrot.slane %v8362, 1
    %v8377 = vrot.slane %v8363, 1
    %v8378 = vsel %vm881, %v8376, %v8377
    %v8379 = vrot.slane %v8364, 1
    %v8380 = vsel %vm881, %v8377, %v8379
    %8381 = vrot.lane.b32.xlu0 %v8373, 127
    %v8382 = vpop.permute.xlu0 %8381
    %8383 = vrot.lane.b32.xlu0 %v8375, 127
    %v8384 = vpop.permute.xlu0 %8383
    %8385 = vrot.lane.b32.xlu0 %v8378, 127
    %v8386 = vpop.permute.xlu0 %8385
    %8387 = vrot.lane.b32.xlu0 %v8380, 127
    %v8388 = vpop.permute.xlu0 %8387
    %v8393 = vadd.f32 %v8249, %v8382
    %v8394 = vadd.f32 %v8250, %v8384
    %v8395 = vadd.f32 %v8251, %v8386
    %v8396 = vadd.f32 %v8252, %v8388
    %s8397 = sld [smem:[#allocation15 + $0x5e]]
    %v8398 = vstv %s8397
    %v8399 = vmul.f32 %v8398, %v5527
    %v8400 = vmul.f32 %v8398, %v5528
    %v8401 = vmul.f32 %v8398, %v5529
    %v8402 = vmul.f32 %v8398, %v5530
    %v8403 = vmul.f32 %v8398, %v5531
    %v8404 = vmul.f32 %v8398, %v5532
    %v8411 = vrot.slane %v8399, 1
    %v8412 = vrot.slane %v8400, 1
    %v8413 = vsel %vm881, %v8411, %v8412
    %v8414 = vrot.slane %v8401, 1
    %v8415 = vsel %vm881, %v8412, %v8414
    %v8416 = vrot.slane %v8402, 1
    %v8417 = vrot.slane %v8403, 1
    %v8418 = vsel %vm881, %v8416, %v8417
    %v8419 = vrot.slane %v8404, 1
    %v8420 = vsel %vm881, %v8417, %v8419
    %8421 = vrot.lane.b32.xlu0 %v8413, 127
    %v8422 = vpop.permute.xlu0 %8421
    %8423 = vrot.lane.b32.xlu0 %v8415, 127
    %v8424 = vpop.permute.xlu0 %8423
    %8425 = vrot.lane.b32.xlu0 %v8418, 127
    %v8426 = vpop.permute.xlu0 %8425
    %8427 = vrot.lane.b32.xlu0 %v8420, 127
    %v8428 = vpop.permute.xlu0 %8427
    %v8433 = vadd.f32 %v8281, %v8422
    %v8434 = vadd.f32 %v8282, %v8424
    %v8435 = vadd.f32 %v8283, %v8426
    %v8436 = vadd.f32 %v8284, %v8428
    %s8437 = sld [smem:[#allocation15 + $0x82]]
    %v8438 = vstv %s8437
    %v8439 = vmul.f32 %v8438, %v5527
    %v8440 = vmul.f32 %v8438, %v5528
    %v8441 = vmul.f32 %v8438, %v5529
    %v8442 = vmul.f32 %v8438, %v5530
    %v8443 = vmul.f32 %v8438, %v5531
    %v8444 = vmul.f32 %v8438, %v5532
    %v8451 = vrot.slane %v8439, 1
    %v8452 = vrot.slane %v8440, 1
    %v8453 = vsel %vm881, %v8451, %v8452
    %v8454 = vrot.slane %v8441, 1
    %v8455 = vsel %vm881, %v8452, %v8454
    %v8456 = vrot.slane %v8442, 1
    %v8457 = vrot.slane %v8443, 1
    %v8458 = vsel %vm881, %v8456, %v8457
    %v8459 = vrot.slane %v8444, 1
    %v8460 = vsel %vm881, %v8457, %v8459
    %8461 = vrot.lane.b32.xlu0 %v8453, 127
    %v8462 = vpop.permute.xlu0 %8461
    %8463 = vrot.lane.b32.xlu0 %v8455, 127
    %v8464 = vpop.permute.xlu0 %8463
    %8465 = vrot.lane.b32.xlu0 %v8458, 127
    %v8466 = vpop.permute.xlu0 %8465
    %8467 = vrot.lane.b32.xlu0 %v8460, 127
    %v8468 = vpop.permute.xlu0 %8467
    %v8473 = vadd.f32 %v8313, %v8462
    %v8474 = vadd.f32 %v8314, %v8464
    %v8475 = vadd.f32 %v8315, %v8466
    %v8476 = vadd.f32 %v8316, %v8468
    %s8477 = sld [smem:[#allocation15 + $0x17]]
    %v8478 = vstv %s8477
    %v8479 = vmul.f32 %v8478, %v5527
    %v8480 = vmul.f32 %v8478, %v5528
    %v8481 = vmul.f32 %v8478, %v5529
    %v8482 = vmul.f32 %v8478, %v5530
    %v8483 = vmul.f32 %v8478, %v5531
    %v8484 = vmul.f32 %v8478, %v5532
    %v8491 = vrot.slane %v8479, 1
    %v8492 = vrot.slane %v8480, 1
    %v8493 = vsel %vm881, %v8491, %v8492
    %v8494 = vrot.slane %v8481, 1
    %v8495 = vsel %vm881, %v8492, %v8494
    %v8496 = vrot.slane %v8482, 1
    %v8497 = vrot.slane %v8483, 1
    %v8498 = vsel %vm881, %v8496, %v8497
    %v8499 = vrot.slane %v8484, 1
    %v8500 = vsel %vm881, %v8497, %v8499
    %8501 = vrot.lane.b32.xlu0 %v8493, 126
    %v8502 = vpop.permute.xlu0 %8501
    %8503 = vrot.lane.b32.xlu0 %v8495, 126
    %v8504 = vpop.permute.xlu0 %8503
    %8505 = vrot.lane.b32.xlu0 %v8498, 126
    %v8506 = vpop.permute.xlu0 %8505
    %8507 = vrot.lane.b32.xlu0 %v8500, 126
    %v8508 = vpop.permute.xlu0 %8507
    %v8513 = vadd.f32 %v8353, %v8502
    %v8514 = vadd.f32 %v8354, %v8504
    %v8515 = vadd.f32 %v8355, %v8506
    %v8516 = vadd.f32 %v8356, %v8508
    %s8517 = sld [smem:[#allocation15 + $0x3b]]
    %v8518 = vstv %s8517
    %v8519 = vmul.f32 %v8518, %v5527
    %v8520 = vmul.f32 %v8518, %v5528
    %v8521 = vmul.f32 %v8518, %v5529
    %v8522 = vmul.f32 %v8518, %v5530
    %v8523 = vmul.f32 %v8518, %v5531
    %v8524 = vmul.f32 %v8518, %v5532
    %v8531 = vrot.slane %v8519, 1
    %v8532 = vrot.slane %v8520, 1
    %v8533 = vsel %vm881, %v8531, %v8532
    %v8534 = vrot.slane %v8521, 1
    %v8535 = vsel %vm881, %v8532, %v8534
    %v8536 = vrot.slane %v8522, 1
    %v8537 = vrot.slane %v8523, 1
    %v8538 = vsel %vm881, %v8536, %v8537
    %v8539 = vrot.slane %v8524, 1
    %v8540 = vsel %vm881, %v8537, %v8539
    %8541 = vrot.lane.b32.xlu0 %v8533, 126
    %v8542 = vpop.permute.xlu0 %8541
    %8543 = vrot.lane.b32.xlu0 %v8535, 126
    %v8544 = vpop.permute.xlu0 %8543
    %8545 = vrot.lane.b32.xlu0 %v8538, 126
    %v8546 = vpop.permute.xlu0 %8545
    %8547 = vrot.lane.b32.xlu0 %v8540, 126
    %v8548 = vpop.permute.xlu0 %8547
    %v8553 = vadd.f32 %v8393, %v8542
    %v8554 = vadd.f32 %v8394, %v8544
    %v8555 = vadd.f32 %v8395, %v8546
    %v8556 = vadd.f32 %v8396, %v8548
    %s8557 = sld [smem:[#allocation15 + $0x5f]]
    %v8558 = vstv %s8557
    %v8559 = vmul.f32 %v8558, %v5527
    %v8560 = vmul.f32 %v8558, %v5528
    %v8561 = vmul.f32 %v8558, %v5529
    %v8562 = vmul.f32 %v8558, %v5530
    %v8563 = vmul.f32 %v8558, %v5531
    %v8564 = vmul.f32 %v8558, %v5532
    %v8571 = vrot.slane %v8559, 1
    %v8572 = vrot.slane %v8560, 1
    %v8573 = vsel %vm881, %v8571, %v8572
    %v8574 = vrot.slane %v8561, 1
    %v8575 = vsel %vm881, %v8572, %v8574
    %v8576 = vrot.slane %v8562, 1
    %v8577 = vrot.slane %v8563, 1
    %v8578 = vsel %vm881, %v8576, %v8577
    %v8579 = vrot.slane %v8564, 1
    %v8580 = vsel %vm881, %v8577, %v8579
    %8581 = vrot.lane.b32.xlu0 %v8573, 126
    %v8582 = vpop.permute.xlu0 %8581
    %8583 = vrot.lane.b32.xlu0 %v8575, 126
    %v8584 = vpop.permute.xlu0 %8583
    %8585 = vrot.lane.b32.xlu0 %v8578, 126
    %v8586 = vpop.permute.xlu0 %8585
    %8587 = vrot.lane.b32.xlu0 %v8580, 126
    %v8588 = vpop.permute.xlu0 %8587
    %v8593 = vadd.f32 %v8433, %v8582
    %v8594 = vadd.f32 %v8434, %v8584
    %v8595 = vadd.f32 %v8435, %v8586
    %v8596 = vadd.f32 %v8436, %v8588
    %s8597 = sld [smem:[#allocation15 + $0x83]]
    %v8598 = vstv %s8597
    %v8599 = vmul.f32 %v8598, %v5527
    %v8600 = vmul.f32 %v8598, %v5528
    %v8601 = vmul.f32 %v8598, %v5529
    %v8602 = vmul.f32 %v8598, %v5530
    %v8603 = vmul.f32 %v8598, %v5531
    %v8604 = vmul.f32 %v8598, %v5532
    %v8611 = vrot.slane %v8599, 1
    %v8612 = vrot.slane %v8600, 1
    %v8613 = vsel %vm881, %v8611, %v8612
    %v8614 = vrot.slane %v8601, 1
    %v8615 = vsel %vm881, %v8612, %v8614
    %v8616 = vrot.slane %v8602, 1
    %v8617 = vrot.slane %v8603, 1
    %v8618 = vsel %vm881, %v8616, %v8617
    %v8619 = vrot.slane %v8604, 1
    %v8620 = vsel %vm881, %v8617, %v8619
    %8621 = vrot.lane.b32.xlu0 %v8613, 126
    %v8622 = vpop.permute.xlu0 %8621
    %8623 = vrot.lane.b32.xlu0 %v8615, 126
    %v8624 = vpop.permute.xlu0 %8623
    %8625 = vrot.lane.b32.xlu0 %v8618, 126
    %v8626 = vpop.permute.xlu0 %8625
    %8627 = vrot.lane.b32.xlu0 %v8620, 126
    %v8628 = vpop.permute.xlu0 %8627
    %v8633 = vadd.f32 %v8473, %v8622
    %v8634 = vadd.f32 %v8474, %v8624
    %v8635 = vadd.f32 %v8475, %v8626
    %v8636 = vadd.f32 %v8476, %v8628
    %s8637 = sld [smem:[#allocation15 + $0x18]]
    %v8638 = vstv %s8637
    %v8639 = vmul.f32 %v8638, %v5527
    %v8640 = vmul.f32 %v8638, %v5528
    %v8641 = vmul.f32 %v8638, %v5529
    %v8642 = vmul.f32 %v8638, %v5530
    %v8643 = vmul.f32 %v8638, %v5531
    %v8644 = vmul.f32 %v8638, %v5532
    %v8651 = vrot.slane %v8639, 2
    %v8652 = vrot.slane %v8640, 2
    %v8653 = vsel %vm1330, %v8651, %v8652
    %v8654 = vrot.slane %v8641, 2
    %v8655 = vsel %vm1330, %v8652, %v8654
    %v8656 = vrot.slane %v8642, 2
    %v8657 = vrot.slane %v8643, 2
    %v8658 = vsel %vm1330, %v8656, %v8657
    %v8659 = vrot.slane %v8644, 2
    %v8660 = vsel %vm1330, %v8657, %v8659
    %v8665 = vadd.f32 %v8513, %v8653
    %v8666 = vadd.f32 %v8514, %v8655
    %v8667 = vadd.f32 %v8515, %v8658
    %v8668 = vadd.f32 %v8516, %v8660
    %s8669 = sld [smem:[#allocation15 + $0x3c]]
    %v8670 = vstv %s8669
    %v8671 = vmul.f32 %v8670, %v5527
    %v8672 = vmul.f32 %v8670, %v5528
    %v8673 = vmul.f32 %v8670, %v5529
    %v8674 = vmul.f32 %v8670, %v5530
    %v8675 = vmul.f32 %v8670, %v5531
    %v8676 = vmul.f32 %v8670, %v5532
    %v8683 = vrot.slane %v8671, 2
    %v8684 = vrot.slane %v8672, 2
    %v8685 = vsel %vm1330, %v8683, %v8684
    %v8686 = vrot.slane %v8673, 2
    %v8687 = vsel %vm1330, %v8684, %v8686
    %v8688 = vrot.slane %v8674, 2
    %v8689 = vrot.slane %v8675, 2
    %v8690 = vsel %vm1330, %v8688, %v8689
    %v8691 = vrot.slane %v8676, 2
    %v8692 = vsel %vm1330, %v8689, %v8691
    %v8697 = vadd.f32 %v8553, %v8685
    %v8698 = vadd.f32 %v8554, %v8687
    %v8699 = vadd.f32 %v8555, %v8690
    %v8700 = vadd.f32 %v8556, %v8692
    %s8701 = sld [smem:[#allocation15 + $0x60]]
    %v8702 = vstv %s8701
    %v8703 = vmul.f32 %v8702, %v5527
    %v8704 = vmul.f32 %v8702, %v5528
    %v8705 = vmul.f32 %v8702, %v5529
    %v8706 = vmul.f32 %v8702, %v5530
    %v8707 = vmul.f32 %v8702, %v5531
    %v8708 = vmul.f32 %v8702, %v5532
    %v8715 = vrot.slane %v8703, 2
    %v8716 = vrot.slane %v8704, 2
    %v8717 = vsel %vm1330, %v8715, %v8716
    %v8718 = vrot.slane %v8705, 2
    %v8719 = vsel %vm1330, %v8716, %v8718
    %v8720 = vrot.slane %v8706, 2
    %v8721 = vrot.slane %v8707, 2
    %v8722 = vsel %vm1330, %v8720, %v8721
    %v8723 = vrot.slane %v8708, 2
    %v8724 = vsel %vm1330, %v8721, %v8723
    %v8729 = vadd.f32 %v8593, %v8717
    %v8730 = vadd.f32 %v8594, %v8719
    %v8731 = vadd.f32 %v8595, %v8722
    %v8732 = vadd.f32 %v8596, %v8724
    %s8733 = sld [smem:[#allocation15 + $0x84]]
    %v8734 = vstv %s8733
    %v8735 = vmul.f32 %v8734, %v5527
    %v8736 = vmul.f32 %v8734, %v5528
    %v8737 = vmul.f32 %v8734, %v5529
    %v8738 = vmul.f32 %v8734, %v5530
    %v8739 = vmul.f32 %v8734, %v5531
    %v8740 = vmul.f32 %v8734, %v5532
    %v8747 = vrot.slane %v8735, 2
    %v8748 = vrot.slane %v8736, 2
    %v8749 = vsel %vm1330, %v8747, %v8748
    %v8750 = vrot.slane %v8737, 2
    %v8751 = vsel %vm1330, %v8748, %v8750
    %v8752 = vrot.slane %v8738, 2
    %v8753 = vrot.slane %v8739, 2
    %v8754 = vsel %vm1330, %v8752, %v8753
    %v8755 = vrot.slane %v8740, 2
    %v8756 = vsel %vm1330, %v8753, %v8755
    %v8761 = vadd.f32 %v8633, %v8749
    %v8762 = vadd.f32 %v8634, %v8751
    %v8763 = vadd.f32 %v8635, %v8754
    %v8764 = vadd.f32 %v8636, %v8756
    %s8765 = sld [smem:[#allocation15 + $0x19]]
    %v8766 = vstv %s8765
    %v8767 = vmul.f32 %v8766, %v5527
    %v8768 = vmul.f32 %v8766, %v5528
    %v8769 = vmul.f32 %v8766, %v5529
    %v8770 = vmul.f32 %v8766, %v5530
    %v8771 = vmul.f32 %v8766, %v5531
    %v8772 = vmul.f32 %v8766, %v5532
    %v8779 = vrot.slane %v8767, 2
    %v8780 = vrot.slane %v8768, 2
    %v8781 = vsel %vm1330, %v8779, %v8780
    %v8782 = vrot.slane %v8769, 2
    %v8783 = vsel %vm1330, %v8780, %v8782
    %v8784 = vrot.slane %v8770, 2
    %v8785 = vrot.slane %v8771, 2
    %v8786 = vsel %vm1330, %v8784, %v8785
    %v8787 = vrot.slane %v8772, 2
    %v8788 = vsel %vm1330, %v8785, %v8787
    %8789 = vrot.lane.b32.xlu0 %v8781, 127
    %v8790 = vpop.permute.xlu0 %8789
    %8791 = vrot.lane.b32.xlu0 %v8783, 127
    %v8792 = vpop.permute.xlu0 %8791
    %8793 = vrot.lane.b32.xlu0 %v8786, 127
    %v8794 = vpop.permute.xlu0 %8793
    %8795 = vrot.lane.b32.xlu0 %v8788, 127
    %v8796 = vpop.permute.xlu0 %8795
    %v8801 = vadd.f32 %v8665, %v8790
    %v8802 = vadd.f32 %v8666, %v8792
    %v8803 = vadd.f32 %v8667, %v8794
    %v8804 = vadd.f32 %v8668, %v8796
    %s8805 = sld [smem:[#allocation15 + $0x3d]]
    %v8806 = vstv %s8805
    %v8807 = vmul.f32 %v8806, %v5527
    %v8808 = vmul.f32 %v8806, %v5528
    %v8809 = vmul.f32 %v8806, %v5529
    %v8810 = vmul.f32 %v8806, %v5530
    %v8811 = vmul.f32 %v8806, %v5531
    %v8812 = vmul.f32 %v8806, %v5532
    %v8819 = vrot.slane %v8807, 2
    %v8820 = vrot.slane %v8808, 2
    %v8821 = vsel %vm1330, %v8819, %v8820
    %v8822 = vrot.slane %v8809, 2
    %v8823 = vsel %vm1330, %v8820, %v8822
    %v8824 = vrot.slane %v8810, 2
    %v8825 = vrot.slane %v8811, 2
    %v8826 = vsel %vm1330, %v8824, %v8825
    %v8827 = vrot.slane %v8812, 2
    %v8828 = vsel %vm1330, %v8825, %v8827
    %8829 = vrot.lane.b32.xlu0 %v8821, 127
    %v8830 = vpop.permute.xlu0 %8829
    %8831 = vrot.lane.b32.xlu0 %v8823, 127
    %v8832 = vpop.permute.xlu0 %8831
    %8833 = vrot.lane.b32.xlu0 %v8826, 127
    %v8834 = vpop.permute.xlu0 %8833
    %8835 = vrot.lane.b32.xlu0 %v8828, 127
    %v8836 = vpop.permute.xlu0 %8835
    %v8841 = vadd.f32 %v8697, %v8830
    %v8842 = vadd.f32 %v8698, %v8832
    %v8843 = vadd.f32 %v8699, %v8834
    %v8844 = vadd.f32 %v8700, %v8836
    %s8845 = sld [smem:[#allocation15 + $0x61]]
    %v8846 = vstv %s8845
    %v8847 = vmul.f32 %v8846, %v5527
    %v8848 = vmul.f32 %v8846, %v5528
    %v8849 = vmul.f32 %v8846, %v5529
    %v8850 = vmul.f32 %v8846, %v5530
    %v8851 = vmul.f32 %v8846, %v5531
    %v8852 = vmul.f32 %v8846, %v5532
    %v8859 = vrot.slane %v8847, 2
    %v8860 = vrot.slane %v8848, 2
    %v8861 = vsel %vm1330, %v8859, %v8860
    %v8862 = vrot.slane %v8849, 2
    %v8863 = vsel %vm1330, %v8860, %v8862
    %v8864 = vrot.slane %v8850, 2
    %v8865 = vrot.slane %v8851, 2
    %v8866 = vsel %vm1330, %v8864, %v8865
    %v8867 = vrot.slane %v8852, 2
    %v8868 = vsel %vm1330, %v8865, %v8867
    %8869 = vrot.lane.b32.xlu0 %v8861, 127
    %v8870 = vpop.permute.xlu0 %8869
    %8871 = vrot.lane.b32.xlu0 %v8863, 127
    %v8872 = vpop.permute.xlu0 %8871
    %8873 = vrot.lane.b32.xlu0 %v8866, 127
    %v8874 = vpop.permute.xlu0 %8873
    %8875 = vrot.lane.b32.xlu0 %v8868, 127
    %v8876 = vpop.permute.xlu0 %8875
    %v8881 = vadd.f32 %v8729, %v8870
    %v8882 = vadd.f32 %v8730, %v8872
    %v8883 = vadd.f32 %v8731, %v8874
    %v8884 = vadd.f32 %v8732, %v8876
    %s8885 = sld [smem:[#allocation15 + $0x85]]
    %v8886 = vstv %s8885
    %v8887 = vmul.f32 %v8886, %v5527
    %v8888 = vmul.f32 %v8886, %v5528
    %v8889 = vmul.f32 %v8886, %v5529
    %v8890 = vmul.f32 %v8886, %v5530
    %v8891 = vmul.f32 %v8886, %v5531
    %v8892 = vmul.f32 %v8886, %v5532
    %v8899 = vrot.slane %v8887, 2
    %v8900 = vrot.slane %v8888, 2
    %v8901 = vsel %vm1330, %v8899, %v8900
    %v8902 = vrot.slane %v8889, 2
    %v8903 = vsel %vm1330, %v8900, %v8902
    %v8904 = vrot.slane %v8890, 2
    %v8905 = vrot.slane %v8891, 2
    %v8906 = vsel %vm1330, %v8904, %v8905
    %v8907 = vrot.slane %v8892, 2
    %v8908 = vsel %vm1330, %v8905, %v8907
    %8909 = vrot.lane.b32.xlu0 %v8901, 127
    %v8910 = vpop.permute.xlu0 %8909
    %8911 = vrot.lane.b32.xlu0 %v8903, 127
    %v8912 = vpop.permute.xlu0 %8911
    %8913 = vrot.lane.b32.xlu0 %v8906, 127
    %v8914 = vpop.permute.xlu0 %8913
    %8915 = vrot.lane.b32.xlu0 %v8908, 127
    %v8916 = vpop.permute.xlu0 %8915
    %v8921 = vadd.f32 %v8761, %v8910
    %v8922 = vadd.f32 %v8762, %v8912
    %v8923 = vadd.f32 %v8763, %v8914
    %v8924 = vadd.f32 %v8764, %v8916
    %s8925 = sld [smem:[#allocation15 + $0x1a]]
    %v8926 = vstv %s8925
    %v8927 = vmul.f32 %v8926, %v5527
    %v8928 = vmul.f32 %v8926, %v5528
    %v8929 = vmul.f32 %v8926, %v5529
    %v8930 = vmul.f32 %v8926, %v5530
    %v8931 = vmul.f32 %v8926, %v5531
    %v8932 = vmul.f32 %v8926, %v5532
    %v8939 = vrot.slane %v8927, 2
    %v8940 = vrot.slane %v8928, 2
    %v8941 = vsel %vm1330, %v8939, %v8940
    %v8942 = vrot.slane %v8929, 2
    %v8943 = vsel %vm1330, %v8940, %v8942
    %v8944 = vrot.slane %v8930, 2
    %v8945 = vrot.slane %v8931, 2
    %v8946 = vsel %vm1330, %v8944, %v8945
    %v8947 = vrot.slane %v8932, 2
    %v8948 = vsel %vm1330, %v8945, %v8947
    %8949 = vrot.lane.b32.xlu0 %v8941, 126
    %v8950 = vpop.permute.xlu0 %8949
    %8951 = vrot.lane.b32.xlu0 %v8943, 126
    %v8952 = vpop.permute.xlu0 %8951
    %8953 = vrot.lane.b32.xlu0 %v8946, 126
    %v8954 = vpop.permute.xlu0 %8953
    %8955 = vrot.lane.b32.xlu0 %v8948, 126
    %v8956 = vpop.permute.xlu0 %8955
    %v8961 = vadd.f32 %v8801, %v8950
    %v8962 = vadd.f32 %v8802, %v8952
    %v8963 = vadd.f32 %v8803, %v8954
    %v8964 = vadd.f32 %v8804, %v8956
    %s8965 = sld [smem:[#allocation15 + $0x3e]]
    %v8966 = vstv %s8965
    %v8967 = vmul.f32 %v8966, %v5527
    %v8968 = vmul.f32 %v8966, %v5528
    %v8969 = vmul.f32 %v8966, %v5529
    %v8970 = vmul.f32 %v8966, %v5530
    %v8971 = vmul.f32 %v8966, %v5531
    %v8972 = vmul.f32 %v8966, %v5532
    %v8979 = vrot.slane %v8967, 2
    %v8980 = vrot.slane %v8968, 2
    %v8981 = vsel %vm1330, %v8979, %v8980
    %v8982 = vrot.slane %v8969, 2
    %v8983 = vsel %vm1330, %v8980, %v8982
    %v8984 = vrot.slane %v8970, 2
    %v8985 = vrot.slane %v8971, 2
    %v8986 = vsel %vm1330, %v8984, %v8985
    %v8987 = vrot.slane %v8972, 2
    %v8988 = vsel %vm1330, %v8985, %v8987
    %8989 = vrot.lane.b32.xlu0 %v8981, 126
    %v8990 = vpop.permute.xlu0 %8989
    %8991 = vrot.lane.b32.xlu0 %v8983, 126
    %v8992 = vpop.permute.xlu0 %8991
    %8993 = vrot.lane.b32.xlu0 %v8986, 126
    %v8994 = vpop.permute.xlu0 %8993
    %8995 = vrot.lane.b32.xlu0 %v8988, 126
    %v8996 = vpop.permute.xlu0 %8995
    %v9001 = vadd.f32 %v8841, %v8990
    %v9002 = vadd.f32 %v8842, %v8992
    %v9003 = vadd.f32 %v8843, %v8994
    %v9004 = vadd.f32 %v8844, %v8996
    %s9005 = sld [smem:[#allocation15 + $0x62]]
    %v9006 = vstv %s9005
    %v9007 = vmul.f32 %v9006, %v5527
    %v9008 = vmul.f32 %v9006, %v5528
    %v9009 = vmul.f32 %v9006, %v5529
    %v9010 = vmul.f32 %v9006, %v5530
    %v9011 = vmul.f32 %v9006, %v5531
    %v9012 = vmul.f32 %v9006, %v5532
    %v9019 = vrot.slane %v9007, 2
    %v9020 = vrot.slane %v9008, 2
    %v9021 = vsel %vm1330, %v9019, %v9020
    %v9022 = vrot.slane %v9009, 2
    %v9023 = vsel %vm1330, %v9020, %v9022
    %v9024 = vrot.slane %v9010, 2
    %v9025 = vrot.slane %v9011, 2
    %v9026 = vsel %vm1330, %v9024, %v9025
    %v9027 = vrot.slane %v9012, 2
    %v9028 = vsel %vm1330, %v9025, %v9027
    %9029 = vrot.lane.b32.xlu0 %v9021, 126
    %v9030 = vpop.permute.xlu0 %9029
    %9031 = vrot.lane.b32.xlu0 %v9023, 126
    %v9032 = vpop.permute.xlu0 %9031
    %9033 = vrot.lane.b32.xlu0 %v9026, 126
    %v9034 = vpop.permute.xlu0 %9033
    %9035 = vrot.lane.b32.xlu0 %v9028, 126
    %v9036 = vpop.permute.xlu0 %9035
    %v9041 = vadd.f32 %v8881, %v9030
    %v9042 = vadd.f32 %v8882, %v9032
    %v9043 = vadd.f32 %v8883, %v9034
    %v9044 = vadd.f32 %v8884, %v9036
    %s9045 = sld [smem:[#allocation15 + $0x86]]
    %v9046 = vstv %s9045
    %v9047 = vmul.f32 %v9046, %v5527
    %v9048 = vmul.f32 %v9046, %v5528
    %v9049 = vmul.f32 %v9046, %v5529
    %v9050 = vmul.f32 %v9046, %v5530
    %v9051 = vmul.f32 %v9046, %v5531
    %v9052 = vmul.f32 %v9046, %v5532
    %v9059 = vrot.slane %v9047, 2
    %v9060 = vrot.slane %v9048, 2
    %v9061 = vsel %vm1330, %v9059, %v9060
    %v9062 = vrot.slane %v9049, 2
    %v9063 = vsel %vm1330, %v9060, %v9062
    %v9064 = vrot.slane %v9050, 2
    %v9065 = vrot.slane %v9051, 2
    %v9066 = vsel %vm1330, %v9064, %v9065
    %v9067 = vrot.slane %v9052, 2
    %v9068 = vsel %vm1330, %v9065, %v9067
    %9069 = vrot.lane.b32.xlu0 %v9061, 126
    %v9070 = vpop.permute.xlu0 %9069
    %9071 = vrot.lane.b32.xlu0 %v9063, 126
    %v9072 = vpop.permute.xlu0 %9071
    %9073 = vrot.lane.b32.xlu0 %v9066, 126
    %v9074 = vpop.permute.xlu0 %9073
    %9075 = vrot.lane.b32.xlu0 %v9068, 126
    %v9076 = vpop.permute.xlu0 %9075
    %v9081 = vadd.f32 %v8921, %v9070
    %v9082 = vadd.f32 %v8922, %v9072
    %v9083 = vadd.f32 %v8923, %v9074
    %v9084 = vadd.f32 %v8924, %v9076
    %s9085 = sld [smem:[#allocation15 + $0x1b]]
    %v9086 = vstv %s9085
    %v9087 = vmul.f32 %v9086, %v5639
    %v9088 = vmul.f32 %v9086, %v5640
    %v9089 = vmul.f32 %v9086, %v5642
    %v9090 = vmul.f32 %v9086, %v5643
    %v9091 = vadd.f32 %v8961, %v9087
    %v9092 = vadd.f32 %v8962, %v9088
    %v9093 = vadd.f32 %v8963, %v9089
    %v9094 = vadd.f32 %v8964, %v9090
    %s9095 = sld [smem:[#allocation15 + $0x3f]]
    %v9096 = vstv %s9095
    %v9097 = vmul.f32 %v9096, %v5639
    %v9098 = vmul.f32 %v9096, %v5640
    %v9099 = vmul.f32 %v9096, %v5642
    %v9100 = vmul.f32 %v9096, %v5643
    %v9101 = vadd.f32 %v9001, %v9097
    %v9102 = vadd.f32 %v9002, %v9098
    %v9103 = vadd.f32 %v9003, %v9099
    %v9104 = vadd.f32 %v9004, %v9100
    %s9105 = sld [smem:[#allocation15 + $0x63]]
    %v9106 = vstv %s9105
    %v9107 = vmul.f32 %v9106, %v5639
    %v9108 = vmul.f32 %v9106, %v5640
    %v9109 = vmul.f32 %v9106, %v5642
    %v9110 = vmul.f32 %v9106, %v5643
    %v9111 = vadd.f32 %v9041, %v9107
    %v9112 = vadd.f32 %v9042, %v9108
    %v9113 = vadd.f32 %v9043, %v9109
    %v9114 = vadd.f32 %v9044, %v9110
    %s9115 = sld [smem:[#allocation15 + $0x87]]
    %v9116 = vstv %s9115
    %v9117 = vmul.f32 %v9116, %v5639
    %v9118 = vmul.f32 %v9116, %v5640
    %v9119 = vmul.f32 %v9116, %v5642
    %v9120 = vmul.f32 %v9116, %v5643
    %v9121 = vadd.f32 %v9081, %v9117
    %v9122 = vadd.f32 %v9082, %v9118
    %v9123 = vadd.f32 %v9083, %v9119
    %v9124 = vadd.f32 %v9084, %v9120
    %s9125 = sld [smem:[#allocation15 + $0x1c]]
    %v9126 = vstv %s9125
    %v9127 = vmul.f32 %v9126, %v5639
    %v9128 = vmul.f32 %v9126, %v5640
    %v9129 = vmul.f32 %v9126, %v5642
    %v9130 = vmul.f32 %v9126, %v5643
    %9135 = vrot.lane.b32.xlu0 %v9127, 127
    %v9136 = vpop.permute.xlu0 %9135
    %9137 = vrot.lane.b32.xlu0 %v9128, 127
    %v9138 = vpop.permute.xlu0 %9137
    %9139 = vrot.lane.b32.xlu0 %v9129, 127
    %v9140 = vpop.permute.xlu0 %9139
    %9141 = vrot.lane.b32.xlu0 %v9130, 127
    %v9142 = vpop.permute.xlu0 %9141
    %v9147 = vadd.f32 %v9091, %v9136
    %v9148 = vadd.f32 %v9092, %v9138
    %v9149 = vadd.f32 %v9093, %v9140
    %v9150 = vadd.f32 %v9094, %v9142
    %s9151 = sld [smem:[#allocation15 + $0x40]]
    %v9152 = vstv %s9151
    %v9153 = vmul.f32 %v9152, %v5639
    %v9154 = vmul.f32 %v9152, %v5640
    %v9155 = vmul.f32 %v9152, %v5642
    %v9156 = vmul.f32 %v9152, %v5643
    %9161 = vrot.lane.b32.xlu0 %v9153, 127
    %v9162 = vpop.permute.xlu0 %9161
    %9163 = vrot.lane.b32.xlu0 %v9154, 127
    %v9164 = vpop.permute.xlu0 %9163
    %9165 = vrot.lane.b32.xlu0 %v9155, 127
    %v9166 = vpop.permute.xlu0 %9165
    %9167 = vrot.lane.b32.xlu0 %v9156, 127
    %v9168 = vpop.permute.xlu0 %9167
    %v9173 = vadd.f32 %v9101, %v9162
    %v9174 = vadd.f32 %v9102, %v9164
    %v9175 = vadd.f32 %v9103, %v9166
    %v9176 = vadd.f32 %v9104, %v9168
    %s9177 = sld [smem:[#allocation15 + $0x64]]
    %v9178 = vstv %s9177
    %v9179 = vmul.f32 %v9178, %v5639
    %v9180 = vmul.f32 %v9178, %v5640
    %v9181 = vmul.f32 %v9178, %v5642
    %v9182 = vmul.f32 %v9178, %v5643
    %9187 = vrot.lane.b32.xlu0 %v9179, 127
    %v9188 = vpop.permute.xlu0 %9187
    %9189 = vrot.lane.b32.xlu0 %v9180, 127
    %v9190 = vpop.permute.xlu0 %9189
    %9191 = vrot.lane.b32.xlu0 %v9181, 127
    %v9192 = vpop.permute.xlu0 %9191
    %9193 = vrot.lane.b32.xlu0 %v9182, 127
    %v9194 = vpop.permute.xlu0 %9193
    %v9199 = vadd.f32 %v9111, %v9188
    %v9200 = vadd.f32 %v9112, %v9190
    %v9201 = vadd.f32 %v9113, %v9192
    %v9202 = vadd.f32 %v9114, %v9194
    %s9203 = sld [smem:[#allocation15 + $0x88]]
    %v9204 = vstv %s9203
    %v9205 = vmul.f32 %v9204, %v5639
    %v9206 = vmul.f32 %v9204, %v5640
    %v9207 = vmul.f32 %v9204, %v5642
    %v9208 = vmul.f32 %v9204, %v5643
    %9213 = vrot.lane.b32.xlu0 %v9205, 127
    %v9214 = vpop.permute.xlu0 %9213
    %9215 = vrot.lane.b32.xlu0 %v9206, 127
    %v9216 = vpop.permute.xlu0 %9215
    %9217 = vrot.lane.b32.xlu0 %v9207, 127
    %v9218 = vpop.permute.xlu0 %9217
    %9219 = vrot.lane.b32.xlu0 %v9208, 127
    %v9220 = vpop.permute.xlu0 %9219
    %v9225 = vadd.f32 %v9121, %v9214
    %v9226 = vadd.f32 %v9122, %v9216
    %v9227 = vadd.f32 %v9123, %v9218
    %v9228 = vadd.f32 %v9124, %v9220
    %s9229 = sld [smem:[#allocation15 + $0x1d]]
    %v9230 = vstv %s9229
    %v9231 = vmul.f32 %v9230, %v5639
    %v9232 = vmul.f32 %v9230, %v5640
    %v9233 = vmul.f32 %v9230, %v5642
    %v9234 = vmul.f32 %v9230, %v5643
    %9239 = vrot.lane.b32.xlu0 %v9231, 126
    %v9240 = vpop.permute.xlu0 %9239
    %9241 = vrot.lane.b32.xlu0 %v9232, 126
    %v9242 = vpop.permute.xlu0 %9241
    %9243 = vrot.lane.b32.xlu0 %v9233, 126
    %v9244 = vpop.permute.xlu0 %9243
    %9245 = vrot.lane.b32.xlu0 %v9234, 126
    %v9246 = vpop.permute.xlu0 %9245
    %v9251 = vadd.f32 %v9147, %v9240
    %v9252 = vadd.f32 %v9148, %v9242
    %v9253 = vadd.f32 %v9149, %v9244
    %v9254 = vadd.f32 %v9150, %v9246
    %s9255 = sld [smem:[#allocation15 + $0x41]]
    %v9256 = vstv %s9255
    %v9257 = vmul.f32 %v9256, %v5639
    %v9258 = vmul.f32 %v9256, %v5640
    %v9259 = vmul.f32 %v9256, %v5642
    %v9260 = vmul.f32 %v9256, %v5643
    %9265 = vrot.lane.b32.xlu0 %v9257, 126
    %v9266 = vpop.permute.xlu0 %9265
    %9267 = vrot.lane.b32.xlu0 %v9258, 126
    %v9268 = vpop.permute.xlu0 %9267
    %9269 = vrot.lane.b32.xlu0 %v9259, 126
    %v9270 = vpop.permute.xlu0 %9269
    %9271 = vrot.lane.b32.xlu0 %v9260, 126
    %v9272 = vpop.permute.xlu0 %9271
    %v9277 = vadd.f32 %v9173, %v9266
    %v9278 = vadd.f32 %v9174, %v9268
    %v9279 = vadd.f32 %v9175, %v9270
    %v9280 = vadd.f32 %v9176, %v9272
    %s9281 = sld [smem:[#allocation15 + $0x65]]
    %v9282 = vstv %s9281
    %v9283 = vmul.f32 %v9282, %v5639
    %v9284 = vmul.f32 %v9282, %v5640
    %v9285 = vmul.f32 %v9282, %v5642
    %v9286 = vmul.f32 %v9282, %v5643
    %9291 = vrot.lane.b32.xlu0 %v9283, 126
    %v9292 = vpop.permute.xlu0 %9291
    %9293 = vrot.lane.b32.xlu0 %v9284, 126
    %v9294 = vpop.permute.xlu0 %9293
    %9295 = vrot.lane.b32.xlu0 %v9285, 126
    %v9296 = vpop.permute.xlu0 %9295
    %9297 = vrot.lane.b32.xlu0 %v9286, 126
    %v9298 = vpop.permute.xlu0 %9297
    %v9303 = vadd.f32 %v9199, %v9292
    %v9304 = vadd.f32 %v9200, %v9294
    %v9305 = vadd.f32 %v9201, %v9296
    %v9306 = vadd.f32 %v9202, %v9298
    %s9307 = sld [smem:[#allocation15 + $0x89]]
    %v9308 = vstv %s9307
    %v9309 = vmul.f32 %v9308, %v5639
    %v9310 = vmul.f32 %v9308, %v5640
    %v9311 = vmul.f32 %v9308, %v5642
    %v9312 = vmul.f32 %v9308, %v5643
    %9317 = vrot.lane.b32.xlu0 %v9309, 126
    %v9318 = vpop.permute.xlu0 %9317
    %9319 = vrot.lane.b32.xlu0 %v9310, 126
    %v9320 = vpop.permute.xlu0 %9319
    %9321 = vrot.lane.b32.xlu0 %v9311, 126
    %v9322 = vpop.permute.xlu0 %9321
    %9323 = vrot.lane.b32.xlu0 %v9312, 126
    %v9324 = vpop.permute.xlu0 %9323
    %v9329 = vadd.f32 %v9225, %v9318
    %v9330 = vadd.f32 %v9226, %v9320
    %v9331 = vadd.f32 %v9227, %v9322
    %v9332 = vadd.f32 %v9228, %v9324
    %s9333 = sld [smem:[#allocation15 + $0x1e]]
    %v9334 = vstv %s9333
    %v9335 = vmul.f32 %v9334, %v5639
    %v9336 = vmul.f32 %v9334, %v5640
    %v9337 = vmul.f32 %v9334, %v5641
    %v9338 = vmul.f32 %v9334, %v5642
    %v9339 = vmul.f32 %v9334, %v5643
    %v9340 = vmul.f32 %v9334, %v5644
    %v9347 = vrot.slane %v9335, 1
    %v9348 = vrot.slane %v9336, 1
    %v9349 = vsel %vm881, %v9347, %v9348
    %v9350 = vrot.slane %v9337, 1
    %v9351 = vsel %vm881, %v9348, %v9350
    %v9352 = vrot.slane %v9338, 1
    %v9353 = vrot.slane %v9339, 1
    %v9354 = vsel %vm881, %v9352, %v9353
    %v9355 = vrot.slane %v9340, 1
    %v9356 = vsel %vm881, %v9353, %v9355
    %v9361 = vadd.f32 %v9251, %v9349
    %v9362 = vadd.f32 %v9252, %v9351
    %v9363 = vadd.f32 %v9253, %v9354
    %v9364 = vadd.f32 %v9254, %v9356
    %s9365 = sld [smem:[#allocation15 + $0x42]]
    %v9366 = vstv %s9365
    %v9367 = vmul.f32 %v9366, %v5639
    %v9368 = vmul.f32 %v9366, %v5640
    %v9369 = vmul.f32 %v9366, %v5641
    %v9370 = vmul.f32 %v9366, %v5642
    %v9371 = vmul.f32 %v9366, %v5643
    %v9372 = vmul.f32 %v9366, %v5644
    %v9379 = vrot.slane %v9367, 1
    %v9380 = vrot.slane %v9368, 1
    %v9381 = vsel %vm881, %v9379, %v9380
    %v9382 = vrot.slane %v9369, 1
    %v9383 = vsel %vm881, %v9380, %v9382
    %v9384 = vrot.slane %v9370, 1
    %v9385 = vrot.slane %v9371, 1
    %v9386 = vsel %vm881, %v9384, %v9385
    %v9387 = vrot.slane %v9372, 1
    %v9388 = vsel %vm881, %v9385, %v9387
    %v9393 = vadd.f32 %v9277, %v9381
    %v9394 = vadd.f32 %v9278, %v9383
    %v9395 = vadd.f32 %v9279, %v9386
    %v9396 = vadd.f32 %v9280, %v9388
    %s9397 = sld [smem:[#allocation15 + $0x66]]
    %v9398 = vstv %s9397
    %v9399 = vmul.f32 %v9398, %v5639
    %v9400 = vmul.f32 %v9398, %v5640
    %v9401 = vmul.f32 %v9398, %v5641
    %v9402 = vmul.f32 %v9398, %v5642
    %v9403 = vmul.f32 %v9398, %v5643
    %v9404 = vmul.f32 %v9398, %v5644
    %v9411 = vrot.slane %v9399, 1
    %v9412 = vrot.slane %v9400, 1
    %v9413 = vsel %vm881, %v9411, %v9412
    %v9414 = vrot.slane %v9401, 1
    %v9415 = vsel %vm881, %v9412, %v9414
    %v9416 = vrot.slane %v9402, 1
    %v9417 = vrot.slane %v9403, 1
    %v9418 = vsel %vm881, %v9416, %v9417
    %v9419 = vrot.slane %v9404, 1
    %v9420 = vsel %vm881, %v9417, %v9419
    %v9425 = vadd.f32 %v9303, %v9413
    %v9426 = vadd.f32 %v9304, %v9415
    %v9427 = vadd.f32 %v9305, %v9418
    %v9428 = vadd.f32 %v9306, %v9420
    %s9429 = sld [smem:[#allocation15 + $0x8a]]
    %v9430 = vstv %s9429
    %v9431 = vmul.f32 %v9430, %v5639
    %v9432 = vmul.f32 %v9430, %v5640
    %v9433 = vmul.f32 %v9430, %v5641
    %v9434 = vmul.f32 %v9430, %v5642
    %v9435 = vmul.f32 %v9430, %v5643
    %v9436 = vmul.f32 %v9430, %v5644
    %v9443 = vrot.slane %v9431, 1
    %v9444 = vrot.slane %v9432, 1
    %v9445 = vsel %vm881, %v9443, %v9444
    %v9446 = vrot.slane %v9433, 1
    %v9447 = vsel %vm881, %v9444, %v9446
    %v9448 = vrot.slane %v9434, 1
    %v9449 = vrot.slane %v9435, 1
    %v9450 = vsel %vm881, %v9448, %v9449
    %v9451 = vrot.slane %v9436, 1
    %v9452 = vsel %vm881, %v9449, %v9451
    %v9457 = vadd.f32 %v9329, %v9445
    %v9458 = vadd.f32 %v9330, %v9447
    %v9459 = vadd.f32 %v9331, %v9450
    %v9460 = vadd.f32 %v9332, %v9452
    %s9461 = sld [smem:[#allocation15 + $0x1f]]
    %v9462 = vstv %s9461
    %v9463 = vmul.f32 %v9462, %v5639
    %v9464 = vmul.f32 %v9462, %v5640
    %v9465 = vmul.f32 %v9462, %v5641
    %v9466 = vmul.f32 %v9462, %v5642
    %v9467 = vmul.f32 %v9462, %v5643
    %v9468 = vmul.f32 %v9462, %v5644
    %v9475 = vrot.slane %v9463, 1
    %v9476 = vrot.slane %v9464, 1
    %v9477 = vsel %vm881, %v9475, %v9476
    %v9478 = vrot.slane %v9465, 1
    %v9479 = vsel %vm881, %v9476, %v9478
    %v9480 = vrot.slane %v9466, 1
    %v9481 = vrot.slane %v9467, 1
    %v9482 = vsel %vm881, %v9480, %v9481
    %v9483 = vrot.slane %v9468, 1
    %v9484 = vsel %vm881, %v9481, %v9483
    %9485 = vrot.lane.b32.xlu0 %v9477, 127
    %v9486 = vpop.permute.xlu0 %9485
    %9487 = vrot.lane.b32.xlu0 %v9479, 127
    %v9488 = vpop.permute.xlu0 %9487
    %9489 = vrot.lane.b32.xlu0 %v9482, 127
    %v9490 = vpop.permute.xlu0 %9489
    %9491 = vrot.lane.b32.xlu0 %v9484, 127
    %v9492 = vpop.permute.xlu0 %9491
    %v9497 = vadd.f32 %v9361, %v9486
    %v9498 = vadd.f32 %v9362, %v9488
    %v9499 = vadd.f32 %v9363, %v9490
    %v9500 = vadd.f32 %v9364, %v9492
    %s9501 = sld [smem:[#allocation15 + $0x43]]
    %v9502 = vstv %s9501
    %v9503 = vmul.f32 %v9502, %v5639
    %v9504 = vmul.f32 %v9502, %v5640
    %v9505 = vmul.f32 %v9502, %v5641
    %v9506 = vmul.f32 %v9502, %v5642
    %v9507 = vmul.f32 %v9502, %v5643
    %v9508 = vmul.f32 %v9502, %v5644
    %v9515 = vrot.slane %v9503, 1
    %v9516 = vrot.slane %v9504, 1
    %v9517 = vsel %vm881, %v9515, %v9516
    %v9518 = vrot.slane %v9505, 1
    %v9519 = vsel %vm881, %v9516, %v9518
    %v9520 = vrot.slane %v9506, 1
    %v9521 = vrot.slane %v9507, 1
    %v9522 = vsel %vm881, %v9520, %v9521
    %v9523 = vrot.slane %v9508, 1
    %v9524 = vsel %vm881, %v9521, %v9523
    %9525 = vrot.lane.b32.xlu0 %v9517, 127
    %v9526 = vpop.permute.xlu0 %9525
    %9527 = vrot.lane.b32.xlu0 %v9519, 127
    %v9528 = vpop.permute.xlu0 %9527
    %9529 = vrot.lane.b32.xlu0 %v9522, 127
    %v9530 = vpop.permute.xlu0 %9529
    %9531 = vrot.lane.b32.xlu0 %v9524, 127
    %v9532 = vpop.permute.xlu0 %9531
    %v9537 = vadd.f32 %v9393, %v9526
    %v9538 = vadd.f32 %v9394, %v9528
    %v9539 = vadd.f32 %v9395, %v9530
    %v9540 = vadd.f32 %v9396, %v9532
    %s9541 = sld [smem:[#allocation15 + $0x67]]
    %v9542 = vstv %s9541
    %v9543 = vmul.f32 %v9542, %v5639
    %v9544 = vmul.f32 %v9542, %v5640
    %v9545 = vmul.f32 %v9542, %v5641
    %v9546 = vmul.f32 %v9542, %v5642
    %v9547 = vmul.f32 %v9542, %v5643
    %v9548 = vmul.f32 %v9542, %v5644
    %v9555 = vrot.slane %v9543, 1
    %v9556 = vrot.slane %v9544, 1
    %v9557 = vsel %vm881, %v9555, %v9556
    %v9558 = vrot.slane %v9545, 1
    %v9559 = vsel %vm881, %v9556, %v9558
    %v9560 = vrot.slane %v9546, 1
    %v9561 = vrot.slane %v9547, 1
    %v9562 = vsel %vm881, %v9560, %v9561
    %v9563 = vrot.slane %v9548, 1
    %v9564 = vsel %vm881, %v9561, %v9563
    %9565 = vrot.lane.b32.xlu0 %v9557, 127
    %v9566 = vpop.permute.xlu0 %9565
    %9567 = vrot.lane.b32.xlu0 %v9559, 127
    %v9568 = vpop.permute.xlu0 %9567
    %9569 = vrot.lane.b32.xlu0 %v9562, 127
    %v9570 = vpop.permute.xlu0 %9569
    %9571 = vrot.lane.b32.xlu0 %v9564, 127
    %v9572 = vpop.permute.xlu0 %9571
    %v9577 = vadd.f32 %v9425, %v9566
    %v9578 = vadd.f32 %v9426, %v9568
    %v9579 = vadd.f32 %v9427, %v9570
    %v9580 = vadd.f32 %v9428, %v9572
    %s9581 = sld [smem:[#allocation15 + $0x8b]]
    %v9582 = vstv %s9581
    %v9583 = vmul.f32 %v9582, %v5639
    %v9584 = vmul.f32 %v9582, %v5640
    %v9585 = vmul.f32 %v9582, %v5641
    %v9586 = vmul.f32 %v9582, %v5642
    %v9587 = vmul.f32 %v9582, %v5643
    %v9588 = vmul.f32 %v9582, %v5644
    %v9595 = vrot.slane %v9583, 1
    %v9596 = vrot.slane %v9584, 1
    %v9597 = vsel %vm881, %v9595, %v9596
    %v9598 = vrot.slane %v9585, 1
    %v9599 = vsel %vm881, %v9596, %v9598
    %v9600 = vrot.slane %v9586, 1
    %v9601 = vrot.slane %v9587, 1
    %v9602 = vsel %vm881, %v9600, %v9601
    %v9603 = vrot.slane %v9588, 1
    %v9604 = vsel %vm881, %v9601, %v9603
    %9605 = vrot.lane.b32.xlu0 %v9597, 127
    %v9606 = vpop.permute.xlu0 %9605
    %9607 = vrot.lane.b32.xlu0 %v9599, 127
    %v9608 = vpop.permute.xlu0 %9607
    %9609 = vrot.lane.b32.xlu0 %v9602, 127
    %v9610 = vpop.permute.xlu0 %9609
    %9611 = vrot.lane.b32.xlu0 %v9604, 127
    %v9612 = vpop.permute.xlu0 %9611
    %v9617 = vadd.f32 %v9457, %v9606
    %v9618 = vadd.f32 %v9458, %v9608
    %v9619 = vadd.f32 %v9459, %v9610
    %v9620 = vadd.f32 %v9460, %v9612
    %s9621 = sld [smem:[#allocation15 + $0x20]]
    %v9622 = vstv %s9621
    %v9623 = vmul.f32 %v9622, %v5639
    %v9624 = vmul.f32 %v9622, %v5640
    %v9625 = vmul.f32 %v9622, %v5641
    %v9626 = vmul.f32 %v9622, %v5642
    %v9627 = vmul.f32 %v9622, %v5643
    %v9628 = vmul.f32 %v9622, %v5644
    %v9635 = vrot.slane %v9623, 1
    %v9636 = vrot.slane %v9624, 1
    %v9637 = vsel %vm881, %v9635, %v9636
    %v9638 = vrot.slane %v9625, 1
    %v9639 = vsel %vm881, %v9636, %v9638
    %v9640 = vrot.slane %v9626, 1
    %v9641 = vrot.slane %v9627, 1
    %v9642 = vsel %vm881, %v9640, %v9641
    %v9643 = vrot.slane %v9628, 1
    %v9644 = vsel %vm881, %v9641, %v9643
    %9645 = vrot.lane.b32.xlu0 %v9637, 126
    %v9646 = vpop.permute.xlu0 %9645
    %9647 = vrot.lane.b32.xlu0 %v9639, 126
    %v9648 = vpop.permute.xlu0 %9647
    %9649 = vrot.lane.b32.xlu0 %v9642, 126
    %v9650 = vpop.permute.xlu0 %9649
    %9651 = vrot.lane.b32.xlu0 %v9644, 126
    %v9652 = vpop.permute.xlu0 %9651
    %v9657 = vadd.f32 %v9497, %v9646
    %v9658 = vadd.f32 %v9498, %v9648
    %v9659 = vadd.f32 %v9499, %v9650
    %v9660 = vadd.f32 %v9500, %v9652
    %s9661 = sld [smem:[#allocation15 + $0x44]]
    %v9662 = vstv %s9661
    %v9663 = vmul.f32 %v9662, %v5639
    %v9664 = vmul.f32 %v9662, %v5640
    %v9665 = vmul.f32 %v9662, %v5641
    %v9666 = vmul.f32 %v9662, %v5642
    %v9667 = vmul.f32 %v9662, %v5643
    %v9668 = vmul.f32 %v9662, %v5644
    %v9675 = vrot.slane %v9663, 1
    %v9676 = vrot.slane %v9664, 1
    %v9677 = vsel %vm881, %v9675, %v9676
    %v9678 = vrot.slane %v9665, 1
    %v9679 = vsel %vm881, %v9676, %v9678
    %v9680 = vrot.slane %v9666, 1
    %v9681 = vrot.slane %v9667, 1
    %v9682 = vsel %vm881, %v9680, %v9681
    %v9683 = vrot.slane %v9668, 1
    %v9684 = vsel %vm881, %v9681, %v9683
    %9685 = vrot.lane.b32.xlu0 %v9677, 126
    %v9686 = vpop.permute.xlu0 %9685
    %9687 = vrot.lane.b32.xlu0 %v9679, 126
    %v9688 = vpop.permute.xlu0 %9687
    %9689 = vrot.lane.b32.xlu0 %v9682, 126
    %v9690 = vpop.permute.xlu0 %9689
    %9691 = vrot.lane.b32.xlu0 %v9684, 126
    %v9692 = vpop.permute.xlu0 %9691
    %v9697 = vadd.f32 %v9537, %v9686
    %v9698 = vadd.f32 %v9538, %v9688
    %v9699 = vadd.f32 %v9539, %v9690
    %v9700 = vadd.f32 %v9540, %v9692
    %s9701 = sld [smem:[#allocation15 + $0x68]]
    %v9702 = vstv %s9701
    %v9703 = vmul.f32 %v9702, %v5639
    %v9704 = vmul.f32 %v9702, %v5640
    %v9705 = vmul.f32 %v9702, %v5641
    %v9706 = vmul.f32 %v9702, %v5642
    %v9707 = vmul.f32 %v9702, %v5643
    %v9708 = vmul.f32 %v9702, %v5644
    %v9715 = vrot.slane %v9703, 1
    %v9716 = vrot.slane %v9704, 1
    %v9717 = vsel %vm881, %v9715, %v9716
    %v9718 = vrot.slane %v9705, 1
    %v9719 = vsel %vm881, %v9716, %v9718
    %v9720 = vrot.slane %v9706, 1
    %v9721 = vrot.slane %v9707, 1
    %v9722 = vsel %vm881, %v9720, %v9721
    %v9723 = vrot.slane %v9708, 1
    %v9724 = vsel %vm881, %v9721, %v9723
    %9725 = vrot.lane.b32.xlu0 %v9717, 126
    %v9726 = vpop.permute.xlu0 %9725
    %9727 = vrot.lane.b32.xlu0 %v9719, 126
    %v9728 = vpop.permute.xlu0 %9727
    %9729 = vrot.lane.b32.xlu0 %v9722, 126
    %v9730 = vpop.permute.xlu0 %9729
    %9731 = vrot.lane.b32.xlu0 %v9724, 126
    %v9732 = vpop.permute.xlu0 %9731
    %v9737 = vadd.f32 %v9577, %v9726
    %v9738 = vadd.f32 %v9578, %v9728
    %v9739 = vadd.f32 %v9579, %v9730
    %v9740 = vadd.f32 %v9580, %v9732
    %s9741 = sld [smem:[#allocation15 + $0x8c]]
    %v9742 = vstv %s9741
    %v9743 = vmul.f32 %v9742, %v5639
    %v9744 = vmul.f32 %v9742, %v5640
    %v9745 = vmul.f32 %v9742, %v5641
    %v9746 = vmul.f32 %v9742, %v5642
    %v9747 = vmul.f32 %v9742, %v5643
    %v9748 = vmul.f32 %v9742, %v5644
    %v9755 = vrot.slane %v9743, 1
    %v9756 = vrot.slane %v9744, 1
    %v9757 = vsel %vm881, %v9755, %v9756
    %v9758 = vrot.slane %v9745, 1
    %v9759 = vsel %vm881, %v9756, %v9758
    %v9760 = vrot.slane %v9746, 1
    %v9761 = vrot.slane %v9747, 1
    %v9762 = vsel %vm881, %v9760, %v9761
    %v9763 = vrot.slane %v9748, 1
    %v9764 = vsel %vm881, %v9761, %v9763
    %9765 = vrot.lane.b32.xlu0 %v9757, 126
    %v9766 = vpop.permute.xlu0 %9765
    %9767 = vrot.lane.b32.xlu0 %v9759, 126
    %v9768 = vpop.permute.xlu0 %9767
    %9769 = vrot.lane.b32.xlu0 %v9762, 126
    %v9770 = vpop.permute.xlu0 %9769
    %9771 = vrot.lane.b32.xlu0 %v9764, 126
    %v9772 = vpop.permute.xlu0 %9771
    %v9777 = vadd.f32 %v9617, %v9766
    %v9778 = vadd.f32 %v9618, %v9768
    %v9779 = vadd.f32 %v9619, %v9770
    %v9780 = vadd.f32 %v9620, %v9772
    %s9781 = sld [smem:[#allocation15 + $0x21]]
    %v9782 = vstv %s9781
    %v9783 = vmul.f32 %v9782, %v5639
    %v9784 = vmul.f32 %v9782, %v5640
    %v9785 = vmul.f32 %v9782, %v5641
    %v9786 = vmul.f32 %v9782, %v5642
    %v9787 = vmul.f32 %v9782, %v5643
    %v9788 = vmul.f32 %v9782, %v5644
    %v9795 = vrot.slane %v9783, 2
    %v9796 = vrot.slane %v9784, 2
    %v9797 = vsel %vm1330, %v9795, %v9796
    %v9798 = vrot.slane %v9785, 2
    %v9799 = vsel %vm1330, %v9796, %v9798
    %v9800 = vrot.slane %v9786, 2
    %v9801 = vrot.slane %v9787, 2
    %v9802 = vsel %vm1330, %v9800, %v9801
    %v9803 = vrot.slane %v9788, 2
    %v9804 = vsel %vm1330, %v9801, %v9803
    %v9809 = vadd.f32 %v9657, %v9797
    %v9810 = vadd.f32 %v9658, %v9799
    %v9811 = vadd.f32 %v9659, %v9802
    %v9812 = vadd.f32 %v9660, %v9804
    %s9813 = sld [smem:[#allocation15 + $0x45]]
    %v9814 = vstv %s9813
    %v9815 = vmul.f32 %v9814, %v5639
    %v9816 = vmul.f32 %v9814, %v5640
    %v9817 = vmul.f32 %v9814, %v5641
    %v9818 = vmul.f32 %v9814, %v5642
    %v9819 = vmul.f32 %v9814, %v5643
    %v9820 = vmul.f32 %v9814, %v5644
    %v9827 = vrot.slane %v9815, 2
    %v9828 = vrot.slane %v9816, 2
    %v9829 = vsel %vm1330, %v9827, %v9828
    %v9830 = vrot.slane %v9817, 2
    %v9831 = vsel %vm1330, %v9828, %v9830
    %v9832 = vrot.slane %v9818, 2
    %v9833 = vrot.slane %v9819, 2
    %v9834 = vsel %vm1330, %v9832, %v9833
    %v9835 = vrot.slane %v9820, 2
    %v9836 = vsel %vm1330, %v9833, %v9835
    %v9841 = vadd.f32 %v9697, %v9829
    %v9842 = vadd.f32 %v9698, %v9831
    %v9843 = vadd.f32 %v9699, %v9834
    %v9844 = vadd.f32 %v9700, %v9836
    %s9845 = sld [smem:[#allocation15 + $0x69]]
    %v9846 = vstv %s9845
    %v9847 = vmul.f32 %v9846, %v5639
    %v9848 = vmul.f32 %v9846, %v5640
    %v9849 = vmul.f32 %v9846, %v5641
    %v9850 = vmul.f32 %v9846, %v5642
    %v9851 = vmul.f32 %v9846, %v5643
    %v9852 = vmul.f32 %v9846, %v5644
    %v9859 = vrot.slane %v9847, 2
    %v9860 = vrot.slane %v9848, 2
    %v9861 = vsel %vm1330, %v9859, %v9860
    %v9862 = vrot.slane %v9849, 2
    %v9863 = vsel %vm1330, %v9860, %v9862
    %v9864 = vrot.slane %v9850, 2
    %v9865 = vrot.slane %v9851, 2
    %v9866 = vsel %vm1330, %v9864, %v9865
    %v9867 = vrot.slane %v9852, 2
    %v9868 = vsel %vm1330, %v9865, %v9867
    %v9873 = vadd.f32 %v9737, %v9861
    %v9874 = vadd.f32 %v9738, %v9863
    %v9875 = vadd.f32 %v9739, %v9866
    %v9876 = vadd.f32 %v9740, %v9868
    %s9877 = sld [smem:[#allocation15 + $0x8d]]
    %v9878 = vstv %s9877
    %v9879 = vmul.f32 %v9878, %v5639
    %v9880 = vmul.f32 %v9878, %v5640
    %v9881 = vmul.f32 %v9878, %v5641
    %v9882 = vmul.f32 %v9878, %v5642
    %v9883 = vmul.f32 %v9878, %v5643
    %v9884 = vmul.f32 %v9878, %v5644
    %v9891 = vrot.slane %v9879, 2
    %v9892 = vrot.slane %v9880, 2
    %v9893 = vsel %vm1330, %v9891, %v9892
    %v9894 = vrot.slane %v9881, 2
    %v9895 = vsel %vm1330, %v9892, %v9894
    %v9896 = vrot.slane %v9882, 2
    %v9897 = vrot.slane %v9883, 2
    %v9898 = vsel %vm1330, %v9896, %v9897
    %v9899 = vrot.slane %v9884, 2
    %v9900 = vsel %vm1330, %v9897, %v9899
    %v9905 = vadd.f32 %v9777, %v9893
    %v9906 = vadd.f32 %v9778, %v9895
    %v9907 = vadd.f32 %v9779, %v9898
    %v9908 = vadd.f32 %v9780, %v9900
    %s9909 = sld [smem:[#allocation15 + $0x22]]
    %v9910 = vstv %s9909
    %v9911 = vmul.f32 %v9910, %v5639
    %v9912 = vmul.f32 %v9910, %v5640
    %v9913 = vmul.f32 %v9910, %v5641
    %v9914 = vmul.f32 %v9910, %v5642
    %v9915 = vmul.f32 %v9910, %v5643
    %v9916 = vmul.f32 %v9910, %v5644
    %v9923 = vrot.slane %v9911, 2
    %v9924 = vrot.slane %v9912, 2
    %v9925 = vsel %vm1330, %v9923, %v9924
    %v9926 = vrot.slane %v9913, 2
    %v9927 = vsel %vm1330, %v9924, %v9926
    %v9928 = vrot.slane %v9914, 2
    %v9929 = vrot.slane %v9915, 2
    %v9930 = vsel %vm1330, %v9928, %v9929
    %v9931 = vrot.slane %v9916, 2
    %v9932 = vsel %vm1330, %v9929, %v9931
    %9933 = vrot.lane.b32.xlu0 %v9925, 127
    %v9934 = vpop.permute.xlu0 %9933
    %9935 = vrot.lane.b32.xlu0 %v9927, 127
    %v9936 = vpop.permute.xlu0 %9935
    %9937 = vrot.lane.b32.xlu0 %v9930, 127
    %v9938 = vpop.permute.xlu0 %9937
    %9939 = vrot.lane.b32.xlu0 %v9932, 127
    %v9940 = vpop.permute.xlu0 %9939
    %v9945 = vadd.f32 %v9809, %v9934
    %v9946 = vadd.f32 %v9810, %v9936
    %v9947 = vadd.f32 %v9811, %v9938
    %v9948 = vadd.f32 %v9812, %v9940
    %s9949 = sld [smem:[#allocation15 + $0x46]]
    %v9950 = vstv %s9949
    %v9951 = vmul.f32 %v9950, %v5639
    %v9952 = vmul.f32 %v9950, %v5640
    %v9953 = vmul.f32 %v9950, %v5641
    %v9954 = vmul.f32 %v9950, %v5642
    %v9955 = vmul.f32 %v9950, %v5643
    %v9956 = vmul.f32 %v9950, %v5644
    %v9963 = vrot.slane %v9951, 2
    %v9964 = vrot.slane %v9952, 2
    %v9965 = vsel %vm1330, %v9963, %v9964
    %v9966 = vrot.slane %v9953, 2
    %v9967 = vsel %vm1330, %v9964, %v9966
    %v9968 = vrot.slane %v9954, 2
    %v9969 = vrot.slane %v9955, 2
    %v9970 = vsel %vm1330, %v9968, %v9969
    %v9971 = vrot.slane %v9956, 2
    %v9972 = vsel %vm1330, %v9969, %v9971
    %9973 = vrot.lane.b32.xlu0 %v9965, 127
    %v9974 = vpop.permute.xlu0 %9973
    %9975 = vrot.lane.b32.xlu0 %v9967, 127
    %v9976 = vpop.permute.xlu0 %9975
    %9977 = vrot.lane.b32.xlu0 %v9970, 127
    %v9978 = vpop.permute.xlu0 %9977
    %9979 = vrot.lane.b32.xlu0 %v9972, 127
    %v9980 = vpop.permute.xlu0 %9979
    %v9985 = vadd.f32 %v9841, %v9974
    %v9986 = vadd.f32 %v9842, %v9976
    %v9987 = vadd.f32 %v9843, %v9978
    %v9988 = vadd.f32 %v9844, %v9980
    %s9989 = sld [smem:[#allocation15 + $0x6a]]
    %v9990 = vstv %s9989
    %v9991 = vmul.f32 %v9990, %v5639
    %v9992 = vmul.f32 %v9990, %v5640
    %v9993 = vmul.f32 %v9990, %v5641
    %v9994 = vmul.f32 %v9990, %v5642
    %v9995 = vmul.f32 %v9990, %v5643
    %v9996 = vmul.f32 %v9990, %v5644
    %v10003 = vrot.slane %v9991, 2
    %v10004 = vrot.slane %v9992, 2
    %v10005 = vsel %vm1330, %v10003, %v10004
    %v10006 = vrot.slane %v9993, 2
    %v10007 = vsel %vm1330, %v10004, %v10006
    %v10008 = vrot.slane %v9994, 2
    %v10009 = vrot.slane %v9995, 2
    %v10010 = vsel %vm1330, %v10008, %v10009
    %v10011 = vrot.slane %v9996, 2
    %v10012 = vsel %vm1330, %v10009, %v10011
    %10013 = vrot.lane.b32.xlu0 %v10005, 127
    %v10014 = vpop.permute.xlu0 %10013
    %10015 = vrot.lane.b32.xlu0 %v10007, 127
    %v10016 = vpop.permute.xlu0 %10015
    %10017 = vrot.lane.b32.xlu0 %v10010, 127
    %v10018 = vpop.permute.xlu0 %10017
    %10019 = vrot.lane.b32.xlu0 %v10012, 127
    %v10020 = vpop.permute.xlu0 %10019
    %v10025 = vadd.f32 %v9873, %v10014
    %v10026 = vadd.f32 %v9874, %v10016
    %v10027 = vadd.f32 %v9875, %v10018
    %v10028 = vadd.f32 %v9876, %v10020
    %s10029 = sld [smem:[#allocation15 + $0x8e]]
    %v10030 = vstv %s10029
    %v10031 = vmul.f32 %v10030, %v5639
    %v10032 = vmul.f32 %v10030, %v5640
    %v10033 = vmul.f32 %v10030, %v5641
    %v10034 = vmul.f32 %v10030, %v5642
    %v10035 = vmul.f32 %v10030, %v5643
    %v10036 = vmul.f32 %v10030, %v5644
    %v10043 = vrot.slane %v10031, 2
    %v10044 = vrot.slane %v10032, 2
    %v10045 = vsel %vm1330, %v10043, %v10044
    %v10046 = vrot.slane %v10033, 2
    %v10047 = vsel %vm1330, %v10044, %v10046
    %v10048 = vrot.slane %v10034, 2
    %v10049 = vrot.slane %v10035, 2
    %v10050 = vsel %vm1330, %v10048, %v10049
    %v10051 = vrot.slane %v10036, 2
    %v10052 = vsel %vm1330, %v10049, %v10051
    %10053 = vrot.lane.b32.xlu0 %v10045, 127
    %v10054 = vpop.permute.xlu0 %10053
    %10055 = vrot.lane.b32.xlu0 %v10047, 127
    %v10056 = vpop.permute.xlu0 %10055
    %10057 = vrot.lane.b32.xlu0 %v10050, 127
    %v10058 = vpop.permute.xlu0 %10057
    %10059 = vrot.lane.b32.xlu0 %v10052, 127
    %v10060 = vpop.permute.xlu0 %10059
    %v10065 = vadd.f32 %v9905, %v10054
    %v10066 = vadd.f32 %v9906, %v10056
    %v10067 = vadd.f32 %v9907, %v10058
    %v10068 = vadd.f32 %v9908, %v10060
    %s10069 = sld [smem:[#allocation15 + $0x23]]
    %v10070 = vstv %s10069
    %v10071 = vmul.f32 %v10070, %v5639
    %v10072 = vmul.f32 %v10070, %v5640
    %v10073 = vmul.f32 %v10070, %v5641
    %v10074 = vmul.f32 %v10070, %v5642
    %v10075 = vmul.f32 %v10070, %v5643
    %v10076 = vmul.f32 %v10070, %v5644
    %v10083 = vrot.slane %v10071, 2
    %v10084 = vrot.slane %v10072, 2
    %v10085 = vsel %vm1330, %v10083, %v10084
    %v10086 = vrot.slane %v10073, 2
    %v10087 = vsel %vm1330, %v10084, %v10086
    %v10088 = vrot.slane %v10074, 2
    %v10089 = vrot.slane %v10075, 2
    %v10090 = vsel %vm1330, %v10088, %v10089
    %v10091 = vrot.slane %v10076, 2
    %v10092 = vsel %vm1330, %v10089, %v10091
    %10093 = vrot.lane.b32.xlu0 %v10085, 126
    %v10094 = vpop.permute.xlu0 %10093
    %10095 = vrot.lane.b32.xlu0 %v10087, 126
    %v10096 = vpop.permute.xlu0 %10095
    %10097 = vrot.lane.b32.xlu0 %v10090, 126
    %v10098 = vpop.permute.xlu0 %10097
    %10099 = vrot.lane.b32.xlu0 %v10092, 126
    %v10100 = vpop.permute.xlu0 %10099
    %v10105 = vadd.f32 %v9945, %v10094
    %v10106 = vadd.f32 %v9946, %v10096
    %v10107 = vadd.f32 %v9947, %v10098
    %v10108 = vadd.f32 %v9948, %v10100
    %s10109 = sld [smem:[#allocation15 + $0x47]]
    %v10110 = vstv %s10109
    %v10111 = vmul.f32 %v10110, %v5639
    %v10112 = vmul.f32 %v10110, %v5640
    %v10113 = vmul.f32 %v10110, %v5641
    %v10114 = vmul.f32 %v10110, %v5642
    %v10115 = vmul.f32 %v10110, %v5643
    %v10116 = vmul.f32 %v10110, %v5644
    %v10123 = vrot.slane %v10111, 2
    %v10124 = vrot.slane %v10112, 2
    %v10125 = vsel %vm1330, %v10123, %v10124
    %v10126 = vrot.slane %v10113, 2
    %v10127 = vsel %vm1330, %v10124, %v10126
    %v10128 = vrot.slane %v10114, 2
    %v10129 = vrot.slane %v10115, 2
    %v10130 = vsel %vm1330, %v10128, %v10129
    %v10131 = vrot.slane %v10116, 2
    %v10132 = vsel %vm1330, %v10129, %v10131
    %10133 = vrot.lane.b32.xlu0 %v10125, 126
    %v10134 = vpop.permute.xlu0 %10133
    %10135 = vrot.lane.b32.xlu0 %v10127, 126
    %v10136 = vpop.permute.xlu0 %10135
    %10137 = vrot.lane.b32.xlu0 %v10130, 126
    %v10138 = vpop.permute.xlu0 %10137
    %10139 = vrot.lane.b32.xlu0 %v10132, 126
    %v10140 = vpop.permute.xlu0 %10139
    %v10145 = vadd.f32 %v9985, %v10134
    %v10146 = vadd.f32 %v9986, %v10136
    %v10147 = vadd.f32 %v9987, %v10138
    %v10148 = vadd.f32 %v9988, %v10140
    %s10149 = sld [smem:[#allocation15 + $0x6b]]
    %v10150 = vstv %s10149
    %v10151 = vmul.f32 %v10150, %v5639
    %v10152 = vmul.f32 %v10150, %v5640
    %v10153 = vmul.f32 %v10150, %v5641
    %v10154 = vmul.f32 %v10150, %v5642
    %v10155 = vmul.f32 %v10150, %v5643
    %v10156 = vmul.f32 %v10150, %v5644
    %v10163 = vrot.slane %v10151, 2
    %v10164 = vrot.slane %v10152, 2
    %v10165 = vsel %vm1330, %v10163, %v10164
    %v10166 = vrot.slane %v10153, 2
    %v10167 = vsel %vm1330, %v10164, %v10166
    %v10168 = vrot.slane %v10154, 2
    %v10169 = vrot.slane %v10155, 2
    %v10170 = vsel %vm1330, %v10168, %v10169
    %v10171 = vrot.slane %v10156, 2
    %v10172 = vsel %vm1330, %v10169, %v10171
    %10173 = vrot.lane.b32.xlu0 %v10165, 126
    %v10174 = vpop.permute.xlu0 %10173
    %10175 = vrot.lane.b32.xlu0 %v10167, 126
    %v10176 = vpop.permute.xlu0 %10175
    %10177 = vrot.lane.b32.xlu0 %v10170, 126
    %v10178 = vpop.permute.xlu0 %10177
    %10179 = vrot.lane.b32.xlu0 %v10172, 126
    %v10180 = vpop.permute.xlu0 %10179
    %v10185 = vadd.f32 %v10025, %v10174
    %v10186 = vadd.f32 %v10026, %v10176
    %v10187 = vadd.f32 %v10027, %v10178
    %v10188 = vadd.f32 %v10028, %v10180
    %s10189 = sld [smem:[#allocation15 + $0x8f]]
    %v10190 = vstv %s10189
    %v10191 = vmul.f32 %v10190, %v5639
    %v10192 = vmul.f32 %v10190, %v5640
    %v10193 = vmul.f32 %v10190, %v5641
    %v10194 = vmul.f32 %v10190, %v5642
    %v10195 = vmul.f32 %v10190, %v5643
    %v10196 = vmul.f32 %v10190, %v5644
    %v10203 = vrot.slane %v10191, 2
    %v10204 = vrot.slane %v10192, 2
    %v10205 = vsel %vm1330, %v10203, %v10204
    %v10206 = vrot.slane %v10193, 2
    %v10207 = vsel %vm1330, %v10204, %v10206
    %v10208 = vrot.slane %v10194, 2
    %v10209 = vrot.slane %v10195, 2
    %v10210 = vsel %vm1330, %v10208, %v10209
    %v10211 = vrot.slane %v10196, 2
    %v10212 = vsel %vm1330, %v10209, %v10211
    %10213 = vrot.lane.b32.xlu0 %v10205, 126
    %v10214 = vpop.permute.xlu0 %10213
    %10215 = vrot.lane.b32.xlu0 %v10207, 126
    %v10216 = vpop.permute.xlu0 %10215
    %10217 = vrot.lane.b32.xlu0 %v10210, 126
    %v10218 = vpop.permute.xlu0 %10217
    %10219 = vrot.lane.b32.xlu0 %v10212, 126
    %v10220 = vpop.permute.xlu0 %10219
    %v10225 = vadd.f32 %v10065, %v10214
    %v10226 = vadd.f32 %v10066, %v10216
    %v10227 = vadd.f32 %v10067, %v10218
    %v10228 = vadd.f32 %v10068, %v10220
    %v10229 = vld [vmem:[#allocation2] sm:$0xff]
    %v10230 = vld [vmem:[#allocation2 + $0x8] sm:$0xff]
    %v10231 = vld [vmem:[#allocation2 + $0x10] sm:$0xff]
    %v10232 = vld [vmem:[#allocation2 + $0x18] sm:$0xff]
    %v10233 = vld [vmem:[#allocation2 + $0x20] sm:$0xff]
    %v10234 = vld [vmem:[#allocation2 + $0x28] sm:$0xff]
    %v10235 = vld [vmem:[#allocation2 + $0x30] sm:$0xff]
    %v10236 = vld [vmem:[#allocation2 + $0x38] sm:$0xff]
    %v10237 = vld [vmem:[#allocation2 + $0x40] sm:$0xff]
    %v10238 = vld [vmem:[#allocation2 + $0x48] sm:$0xff]
    %v10239 = vld [vmem:[#allocation2 + $0x50] sm:$0xff]
    %v10240 = vld [vmem:[#allocation2 + $0x58] sm:$0xff]
    %v10241 = vld [vmem:[#allocation2 + $0x60] sm:$0xff]
    %v10242 = vld [vmem:[#allocation2 + $0x68] sm:$0xff]
    %v10243 = vld [vmem:[#allocation2 + $0x70] sm:$0xff]
    %v10244 = vld [vmem:[#allocation2 + $0x78] sm:$0xff]
    %v10245 = vadd.f32 %v10105, %v10229
    %v10246 = vadd.f32 %v10106, %v10230
    %v10247 = vadd.f32 %v10145, %v10231
    %v10248 = vadd.f32 %v10146, %v10232
    %v10249 = vadd.f32 %v10185, %v10233
    %v10250 = vadd.f32 %v10186, %v10234
    %v10251 = vadd.f32 %v10225, %v10235
    %v10252 = vadd.f32 %v10226, %v10236
    %v10253 = vadd.f32 %v10107, %v10237
    %v10254 = vadd.f32 %v10108, %v10238
    %v10255 = vadd.f32 %v10147, %v10239
    %v10256 = vadd.f32 %v10148, %v10240
    %v10257 = vadd.f32 %v10187, %v10241
    %v10258 = vadd.f32 %v10188, %v10242
    %v10259 = vadd.f32 %v10227, %v10243
    %v10260 = vadd.f32 %v10228, %v10244
    %vm10261 = vcmask 130048
    %10262 = vst.msk [vmem:[#allocation18] sm:$0xff] %vm10261, %v10245
    %10263 = vst.msk [vmem:[#allocation18 + $0x8] sm:$0xff] %vm10261, %v10246
    %10264 = vst.msk [vmem:[#allocation18 + $0x10] sm:$0xff] %vm10261, %v10247
    %10265 = vst.msk [vmem:[#allocation18 + $0x18] sm:$0xff] %vm10261, %v10248
    %10266 = vst.msk [vmem:[#allocation18 + $0x20] sm:$0xff] %vm10261, %v10249
    %10267 = vst.msk [vmem:[#allocation18 + $0x28] sm:$0xff] %vm10261, %v10250
    %10268 = vst.msk [vmem:[#allocation18 + $0x30] sm:$0xff] %vm10261, %v10251
    %10269 = vst.msk [vmem:[#allocation18 + $0x38] sm:$0xff] %vm10261, %v10252
    %10270 = vst.msk [vmem:[#allocation18 + $0x40] sm:$0xff] %vm10261, %v10253
    %10271 = vst.msk [vmem:[#allocation18 + $0x48] sm:$0xff] %vm10261, %v10254
    %10272 = vst.msk [vmem:[#allocation18 + $0x50] sm:$0xff] %vm10261, %v10255
    %10273 = vst.msk [vmem:[#allocation18 + $0x58] sm:$0xff] %vm10261, %v10256
    %10274 = vst.msk [vmem:[#allocation18 + $0x60] sm:$0xff] %vm10261, %v10257
    %10275 = vst.msk [vmem:[#allocation18 + $0x68] sm:$0xff] %vm10261, %v10258
    %10276 = vst.msk [vmem:[#allocation18 + $0x70] sm:$0xff] %vm10261, %v10259
    %10277 = vst.msk [vmem:[#allocation18 + $0x78] sm:$0xff] %vm10261, %v10260
    // Predicated region
    $region74: #{tpu_custom_call.1} parent=1 // pred_check
      _
    $region75: #{tpu_custom_call.1} parent=1 // pred_check_branch
      %10279 = sbr.rel (0) target = $region77
    $region76: #{tpu_custom_call.1} parent=1 // pred_region
      %s10281 = ssub.s32 2048, 2048
      %10282 = vsyncadd [#allocation4], %s10281
      %s10283 = sshll.u32 [#allocation18], 4
      %s10284 = int_to_ptr.vmem [resolvable:$true] %s10283
      %10289 = dma.vmem_to_hbm [thread:$0]  %s10284, 2048, %s9, [#allocation4], 128, 128, 8
    $region77: #{tpu_custom_call.1} parent=1 // pred_fallthru
      _
    // Predicated region
    $region78: #{tpu_custom_call.1} parent=1 // pred_check
      _
    $region79: #{tpu_custom_call.1} parent=1 // pred_check_branch
      %10291 = sbr.rel (0) target = $region81
    $region80: #{tpu_custom_call.1} parent=1 // pred_region
      %10292 = dma.done [#allocation4], 2048
    $region81: #{tpu_custom_call.1} parent=1 // pred_fallthru
      _
    %10293 = vsyncpa [#allocation3], 1
    %10294 = vsyncpa [#allocation4], 1
    %10295 = vsyncpa [#allocation5], 1
    %10296 = vsyncpa [#allocation8], 1
    %10297 = vsyncpa [#allocation11], 1
    %10298 = vsyncpa [#allocation14], 1
    %10299 = vsyncpa [#allocation17], 1

</llo_original>
